<compile_context>
chip_gen: v6e
topology: v6e:2x2x1
jax: 0.10.0
libtpu: 0.0.40
codegen_flags: <defaults>
</compile_context>

<pallas_src>
import functools
import math

import jax
import jax.numpy as jnp
from jax.experimental import pallas as pl
from jax.experimental.pallas import tpu as pltpu


# --------------------------------------------------------------------------------------
# Kernel
# --------------------------------------------------------------------------------------
def _window_attn_kernel(x_ref, wqkv_ref, bqkv_ref, wproj_ref, bproj_ref, bias_ref,
                        o_ref, qkv_ref, ctx_ref, *, num_heads, head_dim, bw):
    """One grid step == `bw` windows sharing one bias/mask slab.

    x_ref    : (bw, 1, N, C)  original input dtype (cast to compute dtype in-kernel)
    wqkv_ref : (C, 3C)  bqkv_ref : (1, 3C)   compute dtype, q columns pre-scaled 1/sqrt(D)
    wproj_ref: (C, C)   bproj_ref: (1, C)    compute dtype
    bias_ref : (1, H, N, N)  f32 relative-position bias (+ mask) for this window type
    o_ref    : (bw, 1, N, C)  original input dtype
    qkv_ref  : (M, 3C) VMEM scratch, compute dtype   (M = bw * N)
    ctx_ref  : (M, C)  VMEM scratch, compute dtype   (per-head context "concat" buffer)
    """
    H, D = num_heads, head_dim
    C = H * D
    N = x_ref.shape[2]
    M = bw * N
    cd = wqkv_ref.dtype                                  # compute (matmul operand) dtype

    # ---- QKV projection on the flattened (M, C) slab (fills the MXU M dimension) ----
    x2d = x_ref[...].reshape(M, C).astype(cd)            # in-kernel cast (no wrapper pass)
    qkv_f32 = jnp.dot(x2d, wqkv_ref[...], preferred_element_type=jnp.float32)
    qkv_f32 = qkv_f32 + bqkv_ref[...].astype(jnp.float32)            # (M, 3C) f32

    # Single bulk downcast; staging in VMEM ends the f32 slab's live range here.
    qkv_ref[...] = qkv_f32.astype(cd)

    # ---- per-head attention; context written straight into the (M, C) concat buffer ----
    for h in range(H):                                   # static unroll (H is small)
        lo = h * D
        qh = qkv_ref[:, lo:lo + D].reshape(bw, N, D)
        kh = qkv_ref[:, C + lo:C + lo + D].reshape(bw, N, D)
        vh = qkv_ref[:, 2 * C + lo:2 * C + lo + D].reshape(bw, N, D)

        # scores (bw, N, N), f32 accumulation (q already carries the 1/sqrt(D) scale)
        s = jnp.einsum('bnd,bmd->bnm', qh, kh, preferred_element_type=jnp.float32)
        s = s + bias_ref[0, h][None]                     # f32 bias slice, no bulk upcast

        # numerically-stable softmax, elementwise math in f32; reciprocal on the EUP
        s = s - jnp.max(s, axis=-1, keepdims=True)
        p = jnp.exp(s)
        p = p * pl.reciprocal(jnp.sum(p, axis=-1, keepdims=True), approx=True)

        ctx = jnp.einsum('bnm,bmd->bnd', p.astype(cd), vh,
                         preferred_element_type=jnp.float32)         # (bw, N, D) f32
        ctx_ref[:, lo:lo + D] = ctx.reshape(M, D).astype(cd)

    # ---- ONE output-projection matmul with a full K=C contraction ----
    out = jnp.dot(ctx_ref[...], wproj_ref[...], preferred_element_type=jnp.float32)
    out = out + bproj_ref[...].astype(jnp.float32)
    o_ref[...] = out.reshape(o_ref.shape).astype(o_ref.dtype)


# --------------------------------------------------------------------------------------
# Helpers
# --------------------------------------------------------------------------------------
def make_relative_position_index(window_size):
    """Same construction as the PyTorch __init__ (pure glue, done once)."""
    w = window_size
    coords = jnp.stack(jnp.meshgrid(jnp.arange(w), jnp.arange(w), indexing='ij'))
    coords_flatten = coords.reshape(2, -1)                           # (2, N)
    rel = coords_flatten[:, :, None] - coords_flatten[:, None, :]    # (2, N, N)
    rel = rel.transpose(1, 2, 0)                                     # (N, N, 2)
    rel = rel.at[..., 0].add(w - 1)
    rel = rel.at[..., 1].add(w - 1)
    rel = rel.at[..., 0].multiply(2 * w - 1)
    return rel.sum(-1)                                               # (N, N) int32


def _vmem_capacity_bytes():
    """Physical VMEM of this generation; conservative 64 MiB (v7x per-TC) fallback."""
    try:
        cap = int(pltpu.get_tpu_info().vmem_capacity_bytes)
        if cap > 0:
            return cap
    except Exception:
        pass
    return 64 * 2**20


def _padded_tile_bytes(shape, itemsize):
    """Rough VMEM footprint of an array with (sublane, lane) tile padding."""
    shape = list(shape)
    sub = max(1, (8 * 4) // itemsize)                  # 8 for f32, 16 for bf16
    if len(shape) >= 1:
        shape[-1] = -(-shape[-1] // 128) * 128
    if len(shape) >= 2:
        shape[-2] = -(-shape[-2] // sub) * sub
    n = 1
    for s in shape:
        n *= s
    return n * itemsize


def _step_vmem_bytes(bw, N, C, H, x_size, cd_size, out_size):
    """Conservative per-grid-step VMEM estimate."""
    D = C // H
    M = bw * N
    # x / out blocks: double-buffered by the pipeline
    dbl = 2 * (_padded_tile_bytes((bw, 1, N, C), x_size)
               + _padded_tile_bytes((bw, 1, N, C), out_size))
    # grid-invariant operands: single-buffered (pl.Buffered(1))
    consts = (_padded_tile_bytes((1, H, N, N), 4)
              + _padded_tile_bytes((C, 3 * C), cd_size)
              + _padded_tile_bytes((1, 3 * C), cd_size)
              + _padded_tile_bytes((C, C), cd_size)
              + _padded_tile_bytes((1, C), cd_size))
    # explicit VMEM scratch
    scratch = (_padded_tile_bytes((M, 3 * C), cd_size)
               + _padded_tile_bytes((M, C), cd_size))
    # transient f32 intermediates
    inter = (_padded_tile_bytes((M, 3 * C), 4)                    # qkv f32
             + _padded_tile_bytes((M, C), 4)                      # projected out f32
             + 3 * _padded_tile_bytes((bw, N, N), 4)              # scores / probs
             + 6 * _padded_tile_bytes((bw, N, D), 4))             # per-head q/k/v/ctx
    return dbl + consts + scratch + inter


def _choose_windows_per_step(b, nW, N, C, H, x_size, cd_size, out_size,
                             cap, budget_bytes, want_two_steps):
    """Largest window block fitting the VMEM budget; bw need NOT divide b (we pad).

    Minimizes total (padded) windows processed, tie-breaking toward bigger bw
    (fewer grid steps, fuller MXU M dimension).
    """
    best_bw, best_work = 1, None
    for bw in range(1, max(1, min(b, cap)) + 1):
        if _step_vmem_bytes(bw, N, C, H, x_size, cd_size, out_size) > budget_bytes:
            break                                       # monotone in bw
        nb = -(-b // bw)
        if want_two_steps and nW * b >= 2 and nW * nb < 2:
            continue                                    # keep both v7x TensorCores busy
        work = nb * bw                                  # padded windows actually computed
        if best_work is None or work < best_work or (work == best_work and bw > best_bw):
            best_bw, best_work = bw, work
    return best_bw


# --------------------------------------------------------------------------------------
# One-time parameter preparation (hoisted out of the per-call path)
# --------------------------------------------------------------------------------------
def prepare_window_attention_params(params, *, window_size, num_heads,
                                    compute_dtype=jnp.bfloat16):
    """Scale/cast weights and gather the relative-position bias ONCE."""
    C = params['wqkv'].shape[0]
    assert C % num_heads == 0
    H = num_heads
    D = C // H
    N = window_size * window_size
    scale = 1.0 / math.sqrt(D)

    rel_index = make_relative_position_index(window_size)               # (N, N)
    bias = params['rel_pos_table'][rel_index.reshape(-1)]               # (N*N, H)
    bias = bias.reshape(N, N, H).transpose(2, 0, 1).astype(jnp.float32)  # (H, N, N) f32

    # fold 1/sqrt(D) into the q part of the qkv projection (free, done once on weights)
    wqkv = params['wqkv'].at[:, :C].multiply(scale).astype(compute_dtype)        # (C, 3C)
    bqkv = params['bqkv'].at[:C].multiply(scale).reshape(1, 3 * C).astype(compute_dtype)
    wproj = params['wproj'].astype(compute_dtype)                                # (C, C)
    bproj = params['bproj'].reshape(1, C).astype(compute_dtype)

    return dict(wqkv=wqkv, bqkv=bqkv, wproj=wproj, bproj=bproj, bias=bias,
                window_size=window_size, num_heads=num_heads,
                compute_dtype=jnp.dtype(compute_dtype))


# --------------------------------------------------------------------------------------
# Wrapper
# --------------------------------------------------------------------------------------
def window_attention(x, prepared, *, mask=None, max_windows_per_step=16):
    """Pallas-backed forward matching WindowAttention.forward (dropout = identity)."""
    B_, N, C = x.shape
    H = prepared['num_heads']
    ws = prepared['window_size']
    cd = prepared['compute_dtype']
    assert N == ws * ws
    assert C % H == 0
    D = C // H

    # ---- combine bias with the per-window-type mask (f32 end-to-end) ----
    if mask is not None:
        nW = mask.shape[0]
        assert B_ % nW == 0
        bias_all = prepared['bias'][None] + mask[:, None].astype(jnp.float32)  # (nW,H,N,N)
    else:
        nW = 1
        bias_all = prepared['bias'][None]                                      # (1,H,N,N)
    b = B_ // nW

    # ---- generation-aware block / VMEM sizing ----
    cap_bytes = _vmem_capacity_bytes()
    want_two_steps = cap_bytes <= 64 * 2**20        # 64 MiB class == v7x (2 TCs / chip)
    budget_bytes = cap_bytes // 3                   # per-step budget (~21 MiB v7x, ~42 MiB v5e/v6e)
    x_size = jnp.dtype(x.dtype).itemsize
    cd_size = jnp.dtype(cd).itemsize

    bw = _choose_windows_per_step(b, nW, N, C, H, x_size, cd_size, x_size,
                                  cap=max_windows_per_step, budget_bytes=budget_bytes,
                                  want_two_steps=want_two_steps)
    nb = -(-b // bw)
    b_pad = nb * bw
    M = bw * N

    # x stays in its original dtype (no extra HBM pass); reshape is free metadata.
    x4 = x.reshape(b, nW, N, C)
    if b_pad != b:
        x4 = jnp.pad(x4, ((0, b_pad - b), (0, 0), (0, 0), (0, 0)))

    est = _step_vmem_bytes(bw, N, C, H, x_size, cd_size, x_size)
    vmem_limit = int(min(int(cap_bytes * 0.85), max(32 * 2**20, 2 * est)))

    flops = int(b_pad * nW * (8 * N * C * C + 4 * N * N * C))
    transcendentals = int(b_pad * nW * H * N * N)
    bytes_accessed = int(2 * b_pad * nW * N * C * x_size
                         + nW * H * N * N * 4
                         + (4 * C * C + 4 * C) * cd_size)

    kernel = functools.partial(_window_attn_kernel, num_heads=H, head_dim=D, bw=bw)

    out4 = pl.pallas_call(
        kernel,
        out_shape=jax.ShapeDtypeStruct((b_pad, nW, N, C), x.dtype),
        grid_spec=pltpu.PrefetchScalarGridSpec(
            num_scalar_prefetch=0,
            grid=(nW, nb),                                   # inner axis: window blocks
            in_specs=[
                pl.BlockSpec((bw, 1, N, C), lambda w, j: (j, w, 0, 0)),           # x
                pl.BlockSpec((C, 3 * C), lambda w, j: (0, 0),
                             pipeline_mode=pl.Buffered(1)),                       # wqkv
                pl.BlockSpec((1, 3 * C), lambda w, j: (0, 0),
                             pipeline_mode=pl.Buffered(1)),                       # bqkv
                pl.BlockSpec((C, C), lambda w, j: (0, 0),
                             pipeline_mode=pl.Buffered(1)),                       # wproj
                pl.BlockSpec((1, C), lambda w, j: (0, 0),
                             pipeline_mode=pl.Buffered(1)),                       # bproj
                pl.BlockSpec((1, H, N, N), lambda w, j: (w, 0, 0, 0),
                             pipeline_mode=pl.Buffered(1)),                       # bias
            ],
            out_specs=pl.BlockSpec((bw, 1, N, C), lambda w, j: (j, w, 0, 0)),
            scratch_shapes=[pltpu.VMEM((M, 3 * C), cd),      # staged qkv (compute dtype)
                            pltpu.VMEM((M, C), cd)],         # per-head context concat
        ),
        compiler_params=pltpu.CompilerParams(
            dimension_semantics=("parallel", "parallel"),
            vmem_limit_bytes=vmem_limit),
        cost_estimate=pl.CostEstimate(flops=flops,
                                      transcendentals=transcendentals,
                                      bytes_accessed=bytes_accessed),
    )(x4, prepared['wqkv'], prepared['bqkv'], prepared['wproj'], prepared['bproj'],
      bias_all)

    if b_pad != b:
        out4 = out4[:b]
    return out4.reshape(B_, N, C)


# --------------------------------------------------------------------------------------
# Pure-JAX reference (mirrors the PyTorch forward)
# --------------------------------------------------------------------------------------
def reference_window_attention(x, params, *, window_size, num_heads, mask=None):
    B_, N, C = x.shape
    H = num_heads
    D = C // H
    qkv = x @ params['wqkv'] + params['bqkv']                       # (B_, N, 3C)
    qkv = qkv.reshape(B_, N, 3, H, D).transpose(2, 0, 3, 1, 4)
    Q, K, V = qkv[0], qkv[1], qkv[2]                                # (B_, H, N, D)
    attn = jnp.einsum('bhnd,bhmd->bhnm', Q, K) * (D ** -0.5)

    rel_index = make_relative_position_index(window_size)
    bias = params['rel_pos_table'][rel_index.reshape(-1)]
    bias = bias.reshape(N, N, H).transpose(2, 0, 1)                 # (H, N, N)
    attn = attn + bias[None]
    if mask is not None:
        nW = mask.shape[0]
        b = B_ // nW
        attn = attn.reshape(b, nW, H, N, N) + mask[None, :, None]
        attn = attn.reshape(B_, H, N, N)
    attn = jax.nn.softmax(attn, axis=-1)
    out = jnp.einsum('bhnm,bhmd->bhnd', attn, V)                    # (B_, H, N, D)
    out = out.transpose(0, 2, 1, 3).reshape(B_, N, C)
    return out @ params['wproj'] + params['bproj']


# --------------------------------------------------------------------------------------
# Demo / checks
# --------------------------------------------------------------------------------------
if __name__ == "__main__":
    # Small config: dim=32, window_size=8 -> N=64 tokens per window, 4 heads.
    dim = 32
    window_size = 8
    num_heads = 4
    N = window_size * window_size
    B_ = 8                                                # 8 windows (no mask)

    key = jax.random.PRNGKey(0)
    k_x, k_wqkv, k_bqkv, k_wproj, k_bproj, k_tab, k_xm, k_mask = jax.random.split(key, 8)

    params = {
        # Linear weights stored as (in, out); init ~ torch default scale 1/sqrt(in).
        'wqkv': jax.random.normal(k_wqkv, (dim, 3 * dim), jnp.float32) / math.sqrt(dim),
        'bqkv': jax.random.normal(k_bqkv, (3 * dim,), jnp.float32) * 0.02,
        'wproj': jax.random.normal(k_wproj, (dim, dim), jnp.float32) / math.sqrt(dim),
        'bproj': jax.random.normal(k_bproj, (dim,), jnp.float32) * 0.02,
        # trunc_normal_(std=0.02) approximated by a plain normal * 0.02 (synthetic init).
        'rel_pos_table': jax.random.normal(
            k_tab, ((2 * window_size - 1) ** 2, num_heads), jnp.float32) * 0.02,
    }

    x = jax.random.normal(k_x, (B_, N, dim), jnp.float32)
    ref = reference_window_attention(x, params, window_size=window_size,
                                     num_heads=num_heads)

    # ---- f32 compute path: tight-ish correctness check ----
    prep_f32 = prepare_window_attention_params(params, window_size=window_size,
                                               num_heads=num_heads,
                                               compute_dtype=jnp.float32)
    out_f32 = window_attention(x, prep_f32)
    out_f32 = jax.block_until_ready(out_f32)
    assert out_f32.shape == (B_, N, dim)
    assert jnp.allclose(out_f32, ref, atol=2e-2, rtol=2e-2), \
        f"f32 path max abs err {jnp.max(jnp.abs(out_f32 - ref))}"

    # ---- bf16 compute path (production config): looser numeric check ----
    prep_bf16 = prepare_window_attention_params(params, window_size=window_size,
                                                num_heads=num_heads,
                                                compute_dtype=jnp.bfloat16)
    out_bf16 = window_attention(x, prep_bf16)
    out_bf16 = jax.block_until_ready(out_bf16)
    assert jnp.allclose(out_bf16, ref, atol=8e-2, rtol=8e-2), \
        f"bf16 path max abs err {jnp.max(jnp.abs(out_bf16 - ref))}"

    # ---- masked case (Swin shifted windows): nW window types, bf16, bw>1 per step ----
    nW = 2
    B_m = 4
    xm = jax.random.normal(k_xm, (B_m, N, dim), jnp.float32)
    mask = jnp.where(jax.random.bernoulli(k_mask, 0.5, (nW, N, N)),
                     0.0, -100.0).astype(jnp.float32)
    out_m = window_attention(xm, prep_bf16, mask=mask)
    out_m = jax.block_until_ready(out_m)
    ref_m = reference_window_attention(xm, params, window_size=window_size,
                                       num_heads=num_heads, mask=mask)
    assert jnp.allclose(out_m, ref_m, atol=8e-2, rtol=8e-2), \
        f"masked path max abs err {jnp.max(jnp.abs(out_m - ref_m))}"

    print("KERNEL_OK")
</pallas_src>

<mosaic_0001>
module attributes {stable_mosaic.version = 11 : i64} {
  func.func @_window_attn_kernel(%arg0: i32, %arg1: i32, %arg2: memref<4x1x64x32xf32, #tpu.memory_space<vmem>>, %arg3: memref<32x96xf32, #tpu.memory_space<vmem>>, %arg4: memref<1x96xf32, #tpu.memory_space<vmem>>, %arg5: memref<32x32xf32, #tpu.memory_space<vmem>>, %arg6: memref<1x32xf32, #tpu.memory_space<vmem>>, %arg7: memref<1x4x64x64xf32, #tpu.memory_space<vmem>>, %arg8: memref<4x1x64x32xf32, #tpu.memory_space<vmem>>, %arg9: memref<256x96xf32, #tpu.memory_space<vmem>>, %arg10: memref<256x32xf32, #tpu.memory_space<vmem>>) attributes {dimension_semantics = [#tpu.dimension_semantics<parallel>, #tpu.dimension_semantics<parallel>], iteration_bounds = array<i64: 1, 2>, scalar_prefetch = 0 : i64, scratch_operands = 2 : i64, tpu.core_type = #tpu.core_type<tc>, window_params = [{transform_indices = @transform_0, window_bounds = array<i64: 4, 1, 64, 32>}, {pipeline_mode = #tpu.pipeline_mode<synchronous>, transform_indices = @transform_1, window_bounds = array<i64: 32, 96>}, {pipeline_mode = #tpu.pipeline_mode<synchronous>, transform_indices = @transform_2, window_bounds = array<i64: 1, 96>}, {pipeline_mode = #tpu.pipeline_mode<synchronous>, transform_indices = @transform_3, window_bounds = array<i64: 32, 32>}, {pipeline_mode = #tpu.pipeline_mode<synchronous>, transform_indices = @transform_4, window_bounds = array<i64: 1, 32>}, {pipeline_mode = #tpu.pipeline_mode<synchronous>, transform_indices = @transform_5, window_bounds = array<i64: 1, 4, 64, 64>}, {transform_indices = @transform_6, window_bounds = array<i64: 4, 1, 64, 32>}]} {
    %c0 = arith.constant 0 : index
    %c0_0 = arith.constant 0 : index
    %c0_1 = arith.constant 0 : index
    %c0_2 = arith.constant 0 : index
    %0 = vector.load %arg2[%c0, %c0_0, %c0_1, %c0_2] : memref<4x1x64x32xf32, #tpu.memory_space<vmem>>, vector<4x1x64x32xf32>
    %1 = vector.shape_cast %0 : vector<4x1x64x32xf32> to vector<256x32xf32>
    %c0_3 = arith.constant 0 : index
    %c0_4 = arith.constant 0 : index
    %2 = vector.load %arg3[%c0_3, %c0_4] : memref<32x96xf32, #tpu.memory_space<vmem>>, vector<32x96xf32>
    %cst = arith.constant dense<0.000000e+00> : vector<256x96xf32>
    %3 = tpu.matmul %1, %2, %cst {dimension_numbers = #tpu.dot_dimension_numbers<[1], [0], [0], [1], [0, 0, 1, 1], [], []>} : vector<256x32xf32>, vector<32x96xf32>, vector<256x96xf32> -> vector<256x96xf32>
    %c0_5 = arith.constant 0 : index
    %c0_6 = arith.constant 0 : index
    %4 = vector.load %arg4[%c0_5, %c0_6] : memref<1x96xf32, #tpu.memory_space<vmem>>, vector<1x96xf32>
    %5 = vector.broadcast %4 : vector<1x96xf32> to vector<256x96xf32>
    %6 = arith.addf %3, %5 : vector<256x96xf32>
    %c0_7 = arith.constant 0 : index
    %c0_8 = arith.constant 0 : index
    %7 = vector.load %arg9[%c0_7, %c0_8] : memref<256x96xf32, #tpu.memory_space<vmem>>, vector<256x96xf32>
    tpu.vector_store %arg9[%c0_7, %c0_8], %6 {strides = array<i32>} : memref<256x96xf32, #tpu.memory_space<vmem>>, vector<256x96xf32>,
    %c0_9 = arith.constant 0 : index
    %c0_10 = arith.constant 0 : index
    %8 = vector.load %arg9[%c0_9, %c0_10] : memref<256x96xf32, #tpu.memory_space<vmem>>, vector<256x8xf32>
    %9 = vector.shape_cast %8 : vector<256x8xf32> to vector<4x64x8xf32>
    %c0_11 = arith.constant 0 : index
    %c32 = arith.constant 32 : index
    %10 = vector.load %arg9[%c0_11, %c32] : memref<256x96xf32, #tpu.memory_space<vmem>>, vector<256x8xf32>
    %11 = vector.shape_cast %10 : vector<256x8xf32> to vector<4x64x8xf32>
    %c0_12 = arith.constant 0 : index
    %c64 = arith.constant 64 : index
    %12 = vector.load %arg9[%c0_12, %c64] : memref<256x96xf32, #tpu.memory_space<vmem>>, vector<256x8xf32>
    %13 = vector.shape_cast %12 : vector<256x8xf32> to vector<4x64x8xf32>
    "tpu.trace_start"() <{level = 10 : i32, message = "bnd,bmd->bnm"}> : () -> ()
    %cst_13 = arith.constant dense<0.000000e+00> : vector<4x64x64xf32>
    %14 = tpu.matmul %9, %11, %cst_13 {dimension_numbers = #tpu.dot_dimension_numbers<[2], [2], [1], [1], [0, 0, 0, 1, 1, 1], [0], [0]>} : vector<4x64x8xf32>, vector<4x64x8xf32>, vector<4x64x64xf32> -> vector<4x64x64xf32>
    "tpu.trace_stop"() : () -> ()
    %c0_14 = arith.constant 0 : index
    %c0_15 = arith.constant 0 : index
    %c0_16 = arith.constant 0 : index
    %c0_17 = arith.constant 0 : index
    %15 = vector.load %arg7[%c0_14, %c0_15, %c0_16, %c0_17] : memref<1x4x64x64xf32, #tpu.memory_space<vmem>>, vector<1x1x64x64xf32>
    %16 = vector.shape_cast %15 : vector<1x1x64x64xf32> to vector<64x64xf32>
    %17 = vector.shape_cast %16 : vector<64x64xf32> to vector<1x64x64xf32>
    %18 = vector.broadcast %17 : vector<1x64x64xf32> to vector<4x64x64xf32>
    %19 = arith.addf %14, %18 : vector<4x64x64xf32>
    %cst_18 = arith.constant dense<0xFF800000> : vector<4x64xf32>
    %20 = vector.multi_reduction <maximumf>, %19, %cst_18 [2] : vector<4x64x64xf32> to vector<4x64xf32>
    %21 = vector.shape_cast %20 : vector<4x64xf32> to vector<4x64x1xf32>
    %22 = vector.broadcast %21 : vector<4x64x1xf32> to vector<4x64x64xf32>
    %23 = arith.subf %19, %22 : vector<4x64x64xf32>
    %24 = math.exp %23 : vector<4x64x64xf32>
    %cst_19 = arith.constant dense<0.000000e+00> : vector<4x64xf32>
    %25 = vector.multi_reduction <add>, %24, %cst_19 [2] : vector<4x64x64xf32> to vector<4x64xf32>
    %26 = vector.shape_cast %25 : vector<4x64xf32> to vector<4x64x1xf32>
    %27 = tpu.reciprocal %26 {approx = true} : vector<4x64x1xf32> -> vector<4x64x1xf32>
    %28 = vector.broadcast %27 : vector<4x64x1xf32> to vector<4x64x64xf32>
    %29 = arith.mulf %24, %28 : vector<4x64x64xf32>
    "tpu.trace_start"() <{level = 10 : i32, message = "bnm,bmd->bnd"}> : () -> ()
    %cst_20 = arith.constant dense<0.000000e+00> : vector<4x64x8xf32>
    %30 = tpu.matmul %29, %13, %cst_20 {dimension_numbers = #tpu.dot_dimension_numbers<[2], [1], [1], [2], [0, 0, 0, 1, 1, 2], [0], [0]>} : vector<4x64x64xf32>, vector<4x64x8xf32>, vector<4x64x8xf32> -> vector<4x64x8xf32>
    "tpu.trace_stop"() : () -> ()
    %31 = vector.shape_cast %30 : vector<4x64x8xf32> to vector<256x8xf32>
    %c0_21 = arith.constant 0 : index
    %c0_22 = arith.constant 0 : index
    %32 = vector.load %arg10[%c0_21, %c0_22] : memref<256x32xf32, #tpu.memory_space<vmem>>, vector<256x8xf32>
    tpu.vector_store %arg10[%c0_21, %c0_22], %31 {strides = array<i32>} : memref<256x32xf32, #tpu.memory_space<vmem>>, vector<256x8xf32>,
    %c0_23 = arith.constant 0 : index
    %c8 = arith.constant 8 : index
    %33 = vector.load %arg9[%c0_23, %c8] : memref<256x96xf32, #tpu.memory_space<vmem>>, vector<256x8xf32>
    %34 = vector.shape_cast %33 : vector<256x8xf32> to vector<4x64x8xf32>
    %c0_24 = arith.constant 0 : index
    %c40 = arith.constant 40 : index
    %35 = vector.load %arg9[%c0_24, %c40] : memref<256x96xf32, #tpu.memory_space<vmem>>, vector<256x8xf32>
    %36 = vector.shape_cast %35 : vector<256x8xf32> to vector<4x64x8xf32>
    %c0_25 = arith.constant 0 : index
    %c72 = arith.constant 72 : index
    %37 = vector.load %arg9[%c0_25, %c72] : memref<256x96xf32, #tpu.memory_space<vmem>>, vector<256x8xf32>
    %38 = vector.shape_cast %37 : vector<256x8xf32> to vector<4x64x8xf32>
    "tpu.trace_start"() <{level = 10 : i32, message = "bnd,bmd->bnm"}> : () -> ()
    %cst_26 = arith.constant dense<0.000000e+00> : vector<4x64x64xf32>
    %39 = tpu.matmul %34, %36, %cst_26 {dimension_numbers = #tpu.dot_dimension_numbers<[2], [2], [1], [1], [0, 0, 0, 1, 1, 1], [0], [0]>} : vector<4x64x8xf32>, vector<4x64x8xf32>, vector<4x64x64xf32> -> vector<4x64x64xf32>
    "tpu.trace_stop"() : () -> ()
    %c0_27 = arith.constant 0 : index
    %c1 = arith.constant 1 : index
    %c0_28 = arith.constant 0 : index
    %c0_29 = arith.constant 0 : index
    %40 = vector.load %arg7[%c0_27, %c1, %c0_28, %c0_29] : memref<1x4x64x64xf32, #tpu.memory_space<vmem>>, vector<1x1x64x64xf32>
    %41 = vector.shape_cast %40 : vector<1x1x64x64xf32> to vector<64x64xf32>
    %42 = vector.shape_cast %41 : vector<64x64xf32> to vector<1x64x64xf32>
    %43 = vector.broadcast %42 : vector<1x64x64xf32> to vector<4x64x64xf32>
    %44 = arith.addf %39, %43 : vector<4x64x64xf32>
    %cst_30 = arith.constant dense<0xFF800000> : vector<4x64xf32>
    %45 = vector.multi_reduction <maximumf>, %44, %cst_30 [2] : vector<4x64x64xf32> to vector<4x64xf32>
    %46 = vector.shape_cast %45 : vector<4x64xf32> to vector<4x64x1xf32>
    %47 = vector.broadcast %46 : vector<4x64x1xf32> to vector<4x64x64xf32>
    %48 = arith.subf %44, %47 : vector<4x64x64xf32>
    %49 = math.exp %48 : vector<4x64x64xf32>
    %cst_31 = arith.constant dense<0.000000e+00> : vector<4x64xf32>
    %50 = vector.multi_reduction <add>, %49, %cst_31 [2] : vector<4x64x64xf32> to vector<4x64xf32>
    %51 = vector.shape_cast %50 : vector<4x64xf32> to vector<4x64x1xf32>
    %52 = tpu.reciprocal %51 {approx = true} : vector<4x64x1xf32> -> vector<4x64x1xf32>
    %53 = vector.broadcast %52 : vector<4x64x1xf32> to vector<4x64x64xf32>
    %54 = arith.mulf %49, %53 : vector<4x64x64xf32>
    "tpu.trace_start"() <{level = 10 : i32, message = "bnm,bmd->bnd"}> : () -> ()
    %cst_32 = arith.constant dense<0.000000e+00> : vector<4x64x8xf32>
    %55 = tpu.matmul %54, %38, %cst_32 {dimension_numbers = #tpu.dot_dimension_numbers<[2], [1], [1], [2], [0, 0, 0, 1, 1, 2], [0], [0]>} : vector<4x64x64xf32>, vector<4x64x8xf32>, vector<4x64x8xf32> -> vector<4x64x8xf32>
    "tpu.trace_stop"() : () -> ()
    %56 = vector.shape_cast %55 : vector<4x64x8xf32> to vector<256x8xf32>
    %c0_33 = arith.constant 0 : index
    %c8_34 = arith.constant 8 : index
    %57 = vector.load %arg10[%c0_33, %c8_34] : memref<256x32xf32, #tpu.memory_space<vmem>>, vector<256x8xf32>
    tpu.vector_store %arg10[%c0_33, %c8_34], %56 {strides = array<i32>} : memref<256x32xf32, #tpu.memory_space<vmem>>, vector<256x8xf32>,
    %c0_35 = arith.constant 0 : index
    %c16 = arith.constant 16 : index
    %58 = vector.load %arg9[%c0_35, %c16] : memref<256x96xf32, #tpu.memory_space<vmem>>, vector<256x8xf32>
    %59 = vector.shape_cast %58 : vector<256x8xf32> to vector<4x64x8xf32>
    %c0_36 = arith.constant 0 : index
    %c48 = arith.constant 48 : index
    %60 = vector.load %arg9[%c0_36, %c48] : memref<256x96xf32, #tpu.memory_space<vmem>>, vector<256x8xf32>
    %61 = vector.shape_cast %60 : vector<256x8xf32> to vector<4x64x8xf32>
    %c0_37 = arith.constant 0 : index
    %c80 = arith.constant 80 : index
    %62 = vector.load %arg9[%c0_37, %c80] : memref<256x96xf32, #tpu.memory_space<vmem>>, vector<256x8xf32>
    %63 = vector.shape_cast %62 : vector<256x8xf32> to vector<4x64x8xf32>
    "tpu.trace_start"() <{level = 10 : i32, message = "bnd,bmd->bnm"}> : () -> ()
    %cst_38 = arith.constant dense<0.000000e+00> : vector<4x64x64xf32>
    %64 = tpu.matmul %59, %61, %cst_38 {dimension_numbers = #tpu.dot_dimension_numbers<[2], [2], [1], [1], [0, 0, 0, 1, 1, 1], [0], [0]>} : vector<4x64x8xf32>, vector<4x64x8xf32>, vector<4x64x64xf32> -> vector<4x64x64xf32>
    "tpu.trace_stop"() : () -> ()
    %c0_39 = arith.constant 0 : index
    %c2 = arith.constant 2 : index
    %c0_40 = arith.constant 0 : index
    %c0_41 = arith.constant 0 : index
    %65 = vector.load %arg7[%c0_39, %c2, %c0_40, %c0_41] : memref<1x4x64x64xf32, #tpu.memory_space<vmem>>, vector<1x1x64x64xf32>
    %66 = vector.shape_cast %65 : vector<1x1x64x64xf32> to vector<64x64xf32>
    %67 = vector.shape_cast %66 : vector<64x64xf32> to vector<1x64x64xf32>
    %68 = vector.broadcast %67 : vector<1x64x64xf32> to vector<4x64x64xf32>
    %69 = arith.addf %64, %68 : vector<4x64x64xf32>
    %cst_42 = arith.constant dense<0xFF800000> : vector<4x64xf32>
    %70 = vector.multi_reduction <maximumf>, %69, %cst_42 [2] : vector<4x64x64xf32> to vector<4x64xf32>
    %71 = vector.shape_cast %70 : vector<4x64xf32> to vector<4x64x1xf32>
    %72 = vector.broadcast %71 : vector<4x64x1xf32> to vector<4x64x64xf32>
    %73 = arith.subf %69, %72 : vector<4x64x64xf32>
    %74 = math.exp %73 : vector<4x64x64xf32>
    %cst_43 = arith.constant dense<0.000000e+00> : vector<4x64xf32>
    %75 = vector.multi_reduction <add>, %74, %cst_43 [2] : vector<4x64x64xf32> to vector<4x64xf32>
    %76 = vector.shape_cast %75 : vector<4x64xf32> to vector<4x64x1xf32>
    %77 = tpu.reciprocal %76 {approx = true} : vector<4x64x1xf32> -> vector<4x64x1xf32>
    %78 = vector.broadcast %77 : vector<4x64x1xf32> to vector<4x64x64xf32>
    %79 = arith.mulf %74, %78 : vector<4x64x64xf32>
    "tpu.trace_start"() <{level = 10 : i32, message = "bnm,bmd->bnd"}> : () -> ()
    %cst_44 = arith.constant dense<0.000000e+00> : vector<4x64x8xf32>
    %80 = tpu.matmul %79, %63, %cst_44 {dimension_numbers = #tpu.dot_dimension_numbers<[2], [1], [1], [2], [0, 0, 0, 1, 1, 2], [0], [0]>} : vector<4x64x64xf32>, vector<4x64x8xf32>, vector<4x64x8xf32> -> vector<4x64x8xf32>
    "tpu.trace_stop"() : () -> ()
    %81 = vector.shape_cast %80 : vector<4x64x8xf32> to vector<256x8xf32>
    %c0_45 = arith.constant 0 : index
    %c16_46 = arith.constant 16 : index
    %82 = vector.load %arg10[%c0_45, %c16_46] : memref<256x32xf32, #tpu.memory_space<vmem>>, vector<256x8xf32>
    tpu.vector_store %arg10[%c0_45, %c16_46], %81 {strides = array<i32>} : memref<256x32xf32, #tpu.memory_space<vmem>>, vector<256x8xf32>,
    %c0_47 = arith.constant 0 : index
    %c24 = arith.constant 24 : index
    %83 = vector.load %arg9[%c0_47, %c24] : memref<256x96xf32, #tpu.memory_space<vmem>>, vector<256x8xf32>
    %84 = vector.shape_cast %83 : vector<256x8xf32> to vector<4x64x8xf32>
    %c0_48 = arith.constant 0 : index
    %c56 = arith.constant 56 : index
    %85 = vector.load %arg9[%c0_48, %c56] : memref<256x96xf32, #tpu.memory_space<vmem>>, vector<256x8xf32>
    %86 = vector.shape_cast %85 : vector<256x8xf32> to vector<4x64x8xf32>
    %c0_49 = arith.constant 0 : index
    %c88 = arith.constant 88 : index
    %87 = vector.load %arg9[%c0_49, %c88] : memref<256x96xf32, #tpu.memory_space<vmem>>, vector<256x8xf32>
    %88 = vector.shape_cast %87 : vector<256x8xf32> to vector<4x64x8xf32>
    "tpu.trace_start"() <{level = 10 : i32, message = "bnd,bmd->bnm"}> : () -> ()
    %cst_50 = arith.constant dense<0.000000e+00> : vector<4x64x64xf32>
    %89 = tpu.matmul %84, %86, %cst_50 {dimension_numbers = #tpu.dot_dimension_numbers<[2], [2], [1], [1], [0, 0, 0, 1, 1, 1], [0], [0]>} : vector<4x64x8xf32>, vector<4x64x8xf32>, vector<4x64x64xf32> -> vector<4x64x64xf32>
    "tpu.trace_stop"() : () -> ()
    %c0_51 = arith.constant 0 : index
    %c3 = arith.constant 3 : index
    %c0_52 = arith.constant 0 : index
    %c0_53 = arith.constant 0 : index
    %90 = vector.load %arg7[%c0_51, %c3, %c0_52, %c0_53] : memref<1x4x64x64xf32, #tpu.memory_space<vmem>>, vector<1x1x64x64xf32>
    %91 = vector.shape_cast %90 : vector<1x1x64x64xf32> to vector<64x64xf32>
    %92 = vector.shape_cast %91 : vector<64x64xf32> to vector<1x64x64xf32>
    %93 = vector.broadcast %92 : vector<1x64x64xf32> to vector<4x64x64xf32>
    %94 = arith.addf %89, %93 : vector<4x64x64xf32>
    %cst_54 = arith.constant dense<0xFF800000> : vector<4x64xf32>
    %95 = vector.multi_reduction <maximumf>, %94, %cst_54 [2] : vector<4x64x64xf32> to vector<4x64xf32>
    %96 = vector.shape_cast %95 : vector<4x64xf32> to vector<4x64x1xf32>
    %97 = vector.broadcast %96 : vector<4x64x1xf32> to vector<4x64x64xf32>
    %98 = arith.subf %94, %97 : vector<4x64x64xf32>
    %99 = math.exp %98 : vector<4x64x64xf32>
    %cst_55 = arith.constant dense<0.000000e+00> : vector<4x64xf32>
    %100 = vector.multi_reduction <add>, %99, %cst_55 [2] : vector<4x64x64xf32> to vector<4x64xf32>
    %101 = vector.shape_cast %100 : vector<4x64xf32> to vector<4x64x1xf32>
    %102 = tpu.reciprocal %101 {approx = true} : vector<4x64x1xf32> -> vector<4x64x1xf32>
    %103 = vector.broadcast %102 : vector<4x64x1xf32> to vector<4x64x64xf32>
    %104 = arith.mulf %99, %103 : vector<4x64x64xf32>
    "tpu.trace_start"() <{level = 10 : i32, message = "bnm,bmd->bnd"}> : () -> ()
    %cst_56 = arith.constant dense<0.000000e+00> : vector<4x64x8xf32>
    %105 = tpu.matmul %104, %88, %cst_56 {dimension_numbers = #tpu.dot_dimension_numbers<[2], [1], [1], [2], [0, 0, 0, 1, 1, 2], [0], [0]>} : vector<4x64x64xf32>, vector<4x64x8xf32>, vector<4x64x8xf32> -> vector<4x64x8xf32>
    "tpu.trace_stop"() : () -> ()
    %106 = vector.shape_cast %105 : vector<4x64x8xf32> to vector<256x8xf32>
    %c0_57 = arith.constant 0 : index
    %c24_58 = arith.constant 24 : index
    %107 = vector.load %arg10[%c0_57, %c24_58] : memref<256x32xf32, #tpu.memory_space<vmem>>, vector<256x8xf32>
    tpu.vector_store %arg10[%c0_57, %c24_58], %106 {strides = array<i32>} : memref<256x32xf32, #tpu.memory_space<vmem>>, vector<256x8xf32>,
    %c0_59 = arith.constant 0 : index
    %c0_60 = arith.constant 0 : index
    %108 = vector.load %arg10[%c0_59, %c0_60] : memref<256x32xf32, #tpu.memory_space<vmem>>, vector<256x32xf32>
    %c0_61 = arith.constant 0 : index
    %c0_62 = arith.constant 0 : index
    %109 = vector.load %arg5[%c0_61, %c0_62] : memref<32x32xf32, #tpu.memory_space<vmem>>, vector<32x32xf32>
    %cst_63 = arith.constant dense<0.000000e+00> : vector<256x32xf32>
    %110 = tpu.matmul %108, %109, %cst_63 {dimension_numbers = #tpu.dot_dimension_numbers<[1], [0], [0], [1], [0, 0, 1, 1], [], []>} : vector<256x32xf32>, vector<32x32xf32>, vector<256x32xf32> -> vector<256x32xf32>
    %c0_64 = arith.constant 0 : index
    %c0_65 = arith.constant 0 : index
    %111 = vector.load %arg6[%c0_64, %c0_65] : memref<1x32xf32, #tpu.memory_space<vmem>>, vector<1x32xf32>
    %112 = vector.broadcast %111 : vector<1x32xf32> to vector<256x32xf32>
    %113 = arith.addf %110, %112 : vector<256x32xf32>
    %114 = vector.shape_cast %113 : vector<256x32xf32> to vector<4x1x64x32xf32>
    %c0_66 = arith.constant 0 : index
    %c0_67 = arith.constant 0 : index
    %c0_68 = arith.constant 0 : index
    %c0_69 = arith.constant 0 : index
    %115 = vector.load %arg8[%c0_66, %c0_67, %c0_68, %c0_69] : memref<4x1x64x32xf32, #tpu.memory_space<vmem>>, vector<4x1x64x32xf32>
    tpu.vector_store %arg8[%c0_66, %c0_67, %c0_68, %c0_69], %114 {strides = array<i32>} : memref<4x1x64x32xf32, #tpu.memory_space<vmem>>, vector<4x1x64x32xf32>,
    return
  }
  func.func @transform_0(%arg0: i32, %arg1: i32) -> (i32, i32, i32, i32) {
    %c0_i32 = arith.constant 0 : i32
    %c0_i32_0 = arith.constant 0 : i32
    %c0_i32_1 = arith.constant 0 : i32
    return %arg1, %arg0, %c0_i32, %c0_i32_0 : i32, i32, i32, i32
  }
  func.func @transform_1(%arg0: i32, %arg1: i32) -> (i32, i32) {
    %c0_i32 = arith.constant 0 : i32
    %c0_i32_0 = arith.constant 0 : i32
    %c0_i32_1 = arith.constant 0 : i32
    return %c0_i32, %c0_i32_0 : i32, i32
  }
  func.func @transform_2(%arg0: i32, %arg1: i32) -> (i32, i32) {
    %c0_i32 = arith.constant 0 : i32
    %c0_i32_0 = arith.constant 0 : i32
    %c0_i32_1 = arith.constant 0 : i32
    return %c0_i32, %c0_i32_0 : i32, i32
  }
  func.func @transform_3(%arg0: i32, %arg1: i32) -> (i32, i32) {
    %c0_i32 = arith.constant 0 : i32
    %c0_i32_0 = arith.constant 0 : i32
    %c0_i32_1 = arith.constant 0 : i32
    return %c0_i32, %c0_i32_0 : i32, i32
  }
  func.func @transform_4(%arg0: i32, %arg1: i32) -> (i32, i32) {
    %c0_i32 = arith.constant 0 : i32
    %c0_i32_0 = arith.constant 0 : i32
    %c0_i32_1 = arith.constant 0 : i32
    return %c0_i32, %c0_i32_0 : i32, i32
  }
  func.func @transform_5(%arg0: i32, %arg1: i32) -> (i32, i32, i32, i32) {
    %c0_i32 = arith.constant 0 : i32
    %c0_i32_0 = arith.constant 0 : i32
    %c0_i32_1 = arith.constant 0 : i32
    %c0_i32_2 = arith.constant 0 : i32
    return %arg0, %c0_i32, %c0_i32_0, %c0_i32_1 : i32, i32, i32, i32
  }
  func.func @transform_6(%arg0: i32, %arg1: i32) -> (i32, i32, i32, i32) {
    %c0_i32 = arith.constant 0 : i32
    %c0_i32_0 = arith.constant 0 : i32
    %c0_i32_1 = arith.constant 0 : i32
    return %arg1, %arg0, %c0_i32, %c0_i32_0 : i32, i32, i32, i32
  }
}

</mosaic_0001>

<llo_original>
// kernel: tpu_custom_call.1
$region0: #{tpu_custom_call.1}
  #allocation0 [shape = 'u32[]', space=smem, size = 0x4, offset = 0x4, fixed_abs, tag = 'smem constant byte address 0x4 - core index']
  #allocation1 [shape = 'u32[144,128]{1,0:T(1,128)}', space=vmem, size = 0x12000, scoped, tag = 'internal scratch']
  #allocation2 [shape = 'f32[256,96]{1,0:T(8,128)}', space=vmem, size = 0x20000, scoped, tag = 'scratch operand']
  #allocation3 [shape = 'f32[256,32]{1,0:T(8,128)}', space=vmem, size = 0x20000, scoped, tag = 'scratch operand']
  %s0 = inlined_call_operand.vmem [shape: f32[8,1,64,32], index: 0, kind: input, shape index: {}]
  %s1 = inlined_call_operand.vmem [shape: f32[32,96], index: 1, kind: input, shape index: {}]
  %s2 = inlined_call_operand.vmem [shape: f32[1,96], index: 2, kind: input, shape index: {}]
  %s3 = inlined_call_operand.vmem [shape: f32[32,32], index: 3, kind: input, shape index: {}]
  %s4 = inlined_call_operand.vmem [shape: f32[1,32], index: 4, kind: input, shape index: {}]
  %s5 = inlined_call_operand.vmem [shape: f32[1,4,64,64], index: 5, kind: input, shape index: {}]
  %s6 = inlined_call_operand.vmem [shape: f32[8,1,64,32], index: 6, kind: output, shape index: {}]
  %s7 = sld [smem:[#allocation0]]
  $region57: #{tpu_custom_call.1} parent=0
    _
  %s9 = ssub.s32 1, %s7
  %s10 = scalar_select 0, %s9, %s7
  loop: start=0, step=1, limit=4
  $region2: #{tpu_custom_call.1} parent=0 // loop_pre_header
    _
  $region3: #{tpu_custom_call.1} parent=0 // loop_header
    %s12 = sphi 0, %s16
    %p13 = scmp.ge.s32.totalorder %s12, 4
    %s19 = sphi 0, %s31
    %s20 = sphi 0, %s27
    %s21 = sphi 0, %s19
    %s22 = sphi 0, %s20
    %s23 = sphi 0, %s21
    %s24 = sphi 0, %s22
    %s36 = sphi 0, %s38
    %s39 = sphi 0, %s36
    %s40 = sphi 0, %s39
    %s56 = sphi 0, %s40
    %s60 = sphi 0, %s60
    %s62 = sphi 0, %s60
    %s63 = sphi 0, %s62
    %s77 = sphi 0, %s63
    %s81 = sphi 0, %s81
    %s83 = sphi 0, %s81
    %s84 = sphi 0, %s83
    %s98 = sphi 0, %s84
    %s102 = sphi 0, %s102
    %s104 = sphi 0, %s102
    %s105 = sphi 0, %s104
    %s119 = sphi 0, %s105
    %s123 = sphi 0, %s123
    %s125 = sphi 0, %s123
    %s126 = sphi 0, %s125
    %s140 = sphi 0, %s126
    %s146 = sphi 0, %s148
    %s149 = sphi 0, %s146
    %s150 = sphi 0, %s149
    %s166 = sphi 0, %s150
    %s174 = sphi 0, %s176
    %s177 = sphi 0, %s174
    %s178 = sphi 0, %s177
    %s194 = sphi 0, %s178
  $region4: #{tpu_custom_call.1} parent=0 // loop_header_branch
    %15 = sbr.rel (%p13) target = $region8
  $region5: #{tpu_custom_call.1} parent=0 // loop_body
    %s17 = ssub.s32 %s12, 1
    %s18 = ssub.s32 %s12, 2
    %s25 = sadd.s32 1, %s20
    %p26 = scmp.ge.s32.totalorder %s25, 2
    %s27 = scalar_select %p26, 0, %s25
    %s28 = sadd.s32 1, %s19
    %s29 = scalar_select %p26, %s28, %s19
    %p30 = scmp.ge.s32.totalorder %s29, 1
    %s31 = scalar_select %p30, 0, %s29
    %s32 = ssub.s32 %s20, %s27
    %s33 = ssub.s32 %s19, %s31
    %s34 = sor.u32 %s32, %s33
    %p35 = scmp.eq.s32.totalorder %s34, 0
    %s37 = sadd.s32 %s36, 1
    %s38 = scalar_select %p35, %s36, %s37
    %p41 = pneg %p35
    %p42 = scmp.eq.s32.totalorder %s12, 1
    %p43 = por %p41, %p42
    %p44 = scmp.ne.s32.totalorder %s36, %s39
    %p45 = scmp.eq.s32.totalorder %s12, 0
    %p46 = por %p44, %p45
    %p47 = scmp.ne.s32.totalorder %s36, %s39
    %p48 = scmp.eq.s32.totalorder %s17, 1
    %p49 = por %p47, %p48
    %p50 = scmp.ne.s32.totalorder %s39, %s40
    %p51 = scmp.eq.s32.totalorder %s17, 0
    %p52 = por %p50, %p51
    %p53 = scmp.ne.s32.totalorder %s39, %s40
    %p54 = scmp.eq.s32.totalorder %s18, 1
    %p55 = por %p53, %p54
    %p57 = scmp.ne.s32.totalorder %s40, %s56
    %p58 = scmp.eq.s32.totalorder %s18, 0
    %p59 = por %p57, %p58
    %s61 = sadd.s32 %s60, 1
    %p64 = scmp.eq.s32.totalorder %s12, 1
    %p65 = scmp.ne.s32.totalorder %s60, %s62
    %p66 = scmp.eq.s32.totalorder %s12, 0
    %p67 = por %p65, %p66
    %p68 = scmp.ne.s32.totalorder %s60, %s62
    %p69 = scmp.eq.s32.totalorder %s17, 1
    %p70 = por %p68, %p69
    %p71 = scmp.ne.s32.totalorder %s62, %s63
    %p72 = scmp.eq.s32.totalorder %s17, 0
    %p73 = por %p71, %p72
    %p74 = scmp.ne.s32.totalorder %s62, %s63
    %p75 = scmp.eq.s32.totalorder %s18, 1
    %p76 = por %p74, %p75
    %p78 = scmp.ne.s32.totalorder %s63, %s77
    %p79 = scmp.eq.s32.totalorder %s18, 0
    %p80 = por %p78, %p79
    %s82 = sadd.s32 %s81, 1
    %p85 = scmp.eq.s32.totalorder %s12, 1
    %p86 = scmp.ne.s32.totalorder %s81, %s83
    %p87 = scmp.eq.s32.totalorder %s12, 0
    %p88 = por %p86, %p87
    %p89 = scmp.ne.s32.totalorder %s81, %s83
    %p90 = scmp.eq.s32.totalorder %s17, 1
    %p91 = por %p89, %p90
    %p92 = scmp.ne.s32.totalorder %s83, %s84
    %p93 = scmp.eq.s32.totalorder %s17, 0
    %p94 = por %p92, %p93
    %p95 = scmp.ne.s32.totalorder %s83, %s84
    %p96 = scmp.eq.s32.totalorder %s18, 1
    %p97 = por %p95, %p96
    %p99 = scmp.ne.s32.totalorder %s84, %s98
    %p100 = scmp.eq.s32.totalorder %s18, 0
    %p101 = por %p99, %p100
    %s103 = sadd.s32 %s102, 1
    %p106 = scmp.eq.s32.totalorder %s12, 1
    %p107 = scmp.ne.s32.totalorder %s102, %s104
    %p108 = scmp.eq.s32.totalorder %s12, 0
    %p109 = por %p107, %p108
    %p110 = scmp.ne.s32.totalorder %s102, %s104
    %p111 = scmp.eq.s32.totalorder %s17, 1
    %p112 = por %p110, %p111
    %p113 = scmp.ne.s32.totalorder %s104, %s105
    %p114 = scmp.eq.s32.totalorder %s17, 0
    %p115 = por %p113, %p114
    %p116 = scmp.ne.s32.totalorder %s104, %s105
    %p117 = scmp.eq.s32.totalorder %s18, 1
    %p118 = por %p116, %p117
    %p120 = scmp.ne.s32.totalorder %s105, %s119
    %p121 = scmp.eq.s32.totalorder %s18, 0
    %p122 = por %p120, %p121
    %s124 = sadd.s32 %s123, 1
    %p127 = scmp.eq.s32.totalorder %s12, 1
    %p128 = scmp.ne.s32.totalorder %s123, %s125
    %p129 = scmp.eq.s32.totalorder %s12, 0
    %p130 = por %p128, %p129
    %p131 = scmp.ne.s32.totalorder %s123, %s125
    %p132 = scmp.eq.s32.totalorder %s17, 1
    %p133 = por %p131, %p132
    %p134 = scmp.ne.s32.totalorder %s125, %s126
    %p135 = scmp.eq.s32.totalorder %s17, 0
    %p136 = por %p134, %p135
    %p137 = scmp.ne.s32.totalorder %s125, %s126
    %p138 = scmp.eq.s32.totalorder %s18, 1
    %p139 = por %p137, %p138
    %p141 = scmp.ne.s32.totalorder %s126, %s140
    %p142 = scmp.eq.s32.totalorder %s18, 0
    %p143 = por %p141, %p142
    %s144 = ssub.s32 %s19, %s31
    %p145 = scmp.eq.s32.totalorder %s144, 0
    %s147 = sadd.s32 %s146, 1
    %s148 = scalar_select %p145, %s146, %s147
    %p151 = pneg %p145
    %p152 = scmp.eq.s32.totalorder %s12, 1
    %p153 = por %p151, %p152
    %p154 = scmp.ne.s32.totalorder %s146, %s149
    %p155 = scmp.eq.s32.totalorder %s12, 0
    %p156 = por %p154, %p155
    %p157 = scmp.ne.s32.totalorder %s146, %s149
    %p158 = scmp.eq.s32.totalorder %s17, 1
    %p159 = por %p157, %p158
    %p160 = scmp.ne.s32.totalorder %s149, %s150
    %p161 = scmp.eq.s32.totalorder %s17, 0
    %p162 = por %p160, %p161
    %p163 = scmp.ne.s32.totalorder %s149, %s150
    %p164 = scmp.eq.s32.totalorder %s18, 1
    %p165 = por %p163, %p164
    %p167 = scmp.ne.s32.totalorder %s150, %s166
    %p168 = scmp.eq.s32.totalorder %s18, 0
    %p169 = por %p167, %p168
    %s170 = ssub.s32 %s20, %s27
    %s171 = ssub.s32 %s19, %s31
    %s172 = sor.u32 %s170, %s171
    %p173 = scmp.eq.s32.totalorder %s172, 0
    %s175 = sadd.s32 %s174, 1
    %s176 = scalar_select %p173, %s174, %s175
    %p179 = pneg %p173
    %p180 = scmp.eq.s32.totalorder %s12, 1
    %p181 = por %p179, %p180
    %p182 = scmp.ne.s32.totalorder %s174, %s177
    %p183 = scmp.eq.s32.totalorder %s12, 0
    %p184 = por %p182, %p183
    %p185 = scmp.ne.s32.totalorder %s174, %s177
    %p186 = scmp.eq.s32.totalorder %s17, 1
    %p187 = por %p185, %p186
    %p188 = scmp.ne.s32.totalorder %s177, %s178
    %p189 = scmp.eq.s32.totalorder %s17, 0
    %p190 = por %p188, %p189
    %p191 = scmp.ne.s32.totalorder %s177, %s178
    %p192 = scmp.eq.s32.totalorder %s18, 1
    %p193 = por %p191, %p192
    %p195 = scmp.ne.s32.totalorder %s178, %s194
    %p196 = scmp.eq.s32.totalorder %s18, 0
    %p197 = por %p195, %p196
    %p198 = scmp.le.s32.totalorder 1, %s12
    %p199 = scmp.lt.s32.totalorder %s12, 3
    %p200 = pnand %p198, %p199
    %p201 = pneg %p200
    // Predicated region
    $region9: #{tpu_custom_call.1} parent=5 // pred_check
      _
    $region10: #{tpu_custom_call.1} parent=5 // pred_check_branch
      %203 = sbr.rel (%p200) target = $region12
    $region11: #{tpu_custom_call.1} parent=5 // pred_region
      %s204 = ssub.s32 %s12, 1
      // Predicated region
      $region13: #{tpu_custom_call.1} parent=11 // pred_check
        %p205 = pneg %p73
      $region14: #{tpu_custom_call.1} parent=11 // pred_check_branch
        %207 = sbr.rel (%p205) target = $region16
      $region15: #{tpu_custom_call.1} parent=11 // pred_region
        _
      $region16: #{tpu_custom_call.1} parent=11 // pred_fallthru
        _
      // Predicated region
      $region17: #{tpu_custom_call.1} parent=11 // pred_check
        %p208 = pneg %p94
      $region18: #{tpu_custom_call.1} parent=11 // pred_check_branch
        %210 = sbr.rel (%p208) target = $region20
      $region19: #{tpu_custom_call.1} parent=11 // pred_region
        _
      $region20: #{tpu_custom_call.1} parent=11 // pred_fallthru
        _
      // Predicated region
      $region21: #{tpu_custom_call.1} parent=11 // pred_check
        %p211 = pneg %p115
      $region22: #{tpu_custom_call.1} parent=11 // pred_check_branch
        %213 = sbr.rel (%p211) target = $region24
      $region23: #{tpu_custom_call.1} parent=11 // pred_region
        _
      $region24: #{tpu_custom_call.1} parent=11 // pred_fallthru
        _
      // Predicated region
      $region25: #{tpu_custom_call.1} parent=11 // pred_check
        %p214 = pneg %p136
      $region26: #{tpu_custom_call.1} parent=11 // pred_check_branch
        %216 = sbr.rel (%p214) target = $region28
      $region27: #{tpu_custom_call.1} parent=11 // pred_region
        _
      $region28: #{tpu_custom_call.1} parent=11 // pred_fallthru
        _
      // Predicated region
      $region29: #{tpu_custom_call.1} parent=11 // pred_check
        %p217 = pneg %p162
      $region30: #{tpu_custom_call.1} parent=11 // pred_check_branch
        %219 = sbr.rel (%p217) target = $region32
      $region31: #{tpu_custom_call.1} parent=11 // pred_region
        %p220 = scmp.lt.s32.totalorder %s21, 0
        %s221 = scalar_select %p220, %s21, 0
        %s222 = smul.addr %s221, 32
        %s223 = smul.addr %s222, 8
        %s224 = scalar_lea.vmem %s5, %s223
      $region32: #{tpu_custom_call.1} parent=11 // pred_fallthru
        _
    $region12: #{tpu_custom_call.1} parent=5 // pred_fallthru
      _
    %p225 = scmp.lt.s32.totalorder %s12, 2
    // Predicated region
    $region33: #{tpu_custom_call.1} parent=5 // pred_check
      %p226 = pneg %p225
    $region34: #{tpu_custom_call.1} parent=5 // pred_check_branch
      %228 = sbr.rel (%p226) target = $region36
    $region35: #{tpu_custom_call.1} parent=5 // pred_region
      // Predicated region
      $region37: #{tpu_custom_call.1} parent=35 // pred_check
        %p229 = pneg %p46
      $region38: #{tpu_custom_call.1} parent=35 // pred_check_branch
        %231 = sbr.rel (%p229) target = $region40
      $region39: #{tpu_custom_call.1} parent=35 // pred_region
        %s232 = smul.u32 4, %s20
        %p233 = scmp.lt.s32.totalorder %s232, 7
        %s234 = scalar_select %p233, %s232, 7
        %p235 = scmp.lt.s32.totalorder %s19, 0
        %s236 = scalar_select %p235, %s19, 0
        %s237 = smul.addr %s236, 8
        %s238 = smul.addr %s234, 8
        %s239 = sadd.s32 %s237, %s238
        %s240 = smul.addr %s239, 8
        %s241 = scalar_lea.vmem %s0, %s240
        %s242 = smul.u32 4, %s20
      $region40: #{tpu_custom_call.1} parent=35 // pred_fallthru
        _
    $region36: #{tpu_custom_call.1} parent=5 // pred_fallthru
      _
    %p243 = scmp.le.s32.totalorder 1, %s12
    %p244 = scmp.lt.s32.totalorder %s12, 3
    %p245 = pnand %p243, %p244
    %p246 = pneg %p245
    // Predicated region
    $region41: #{tpu_custom_call.1} parent=5 // pred_check
      _
    $region42: #{tpu_custom_call.1} parent=5 // pred_check_branch
      %248 = sbr.rel (%p245) target = $region44
    $region43: #{tpu_custom_call.1} parent=5 // pred_region
      %s249 = ssub.s32 %s12, 1
      %s250 = smul.u32 4, %s22
      %p251 = scmp.lt.s32.totalorder %s250, 7
      %s252 = scalar_select %p251, %s250, 7
      %p253 = scmp.lt.s32.totalorder %s21, 0
      %s254 = scalar_select %p253, %s21, 0
      %s255 = smul.addr %s254, 8
      %s256 = smul.addr %s252, 8
      %s257 = sadd.s32 %s255, %s256
      %s258 = smul.addr %s257, 8
      %s259 = scalar_lea.vmem %s0, %s258
      %p260 = pneg %p52
      %p261 = pneg %p49
      %p262 = pneg %p73
      %p263 = pneg %p70
      %p264 = pneg %p94
      %p265 = pneg %p91
      %p266 = pneg %p115
      %p267 = pneg %p112
      %p268 = pneg %p136
      %p269 = pneg %p133
      %p270 = scmp.lt.s32.totalorder %s21, 0
      %s271 = scalar_select %p270, %s21, 0
      %s272 = smul.addr %s271, 32
      %s273 = smul.addr %s272, 8
      %s274 = scalar_lea.vmem %s5, %s273
      %p275 = pneg %p162
      %p276 = pneg %p159
      %p277 = pneg %p190
      %p278 = pneg %p187
      %s279 = smul.u32 4, %s22
      %p280 = scmp.lt.s32.totalorder %s279, 7
      %s281 = scalar_select %p280, %s279, 7
      %p282 = scmp.lt.s32.totalorder %s21, 0
      %s283 = scalar_select %p282, %s21, 0
      %s284 = smul.addr %s283, 8
      %s285 = smul.addr %s281, 8
      %s286 = sadd.s32 %s284, %s285
      %s287 = smul.addr %s286, 8
      %s288 = scalar_lea.vmem %s6, %s287
      %s289 = smul.u32 4, %s22
      %p290 = scmp.lt.s32.totalorder %s289, 7
      %s291 = scalar_select %p290, %s289, 7
      %p292 = scmp.lt.s32.totalorder %s21, 0
      %s293 = scalar_select %p292, %s21, 0
      %s294 = smul.addr %s293, 8
      %s295 = smul.addr %s291, 8
      %s296 = sadd.s32 %s294, %s295
      %s297 = smul.addr %s296, 8
      %s298 = scalar_lea.vmem %s0, %s297
      %s299 = smul.u32 4, %s22
      %p300 = scmp.lt.s32.totalorder %s21, 0
      %s301 = scalar_select %p300, %s21, 0
      %s302 = smul.addr %s301, 32
      %s303 = smul.addr %s302, 8
      %s304 = scalar_lea.vmem %s5, %s303
      %s305 = smul.u32 4, %s22
      %p306 = scmp.lt.s32.totalorder %s305, 7
      %s307 = scalar_select %p306, %s305, 7
      %p308 = scmp.lt.s32.totalorder %s21, 0
      %s309 = scalar_select %p308, %s21, 0
      %s310 = smul.addr %s309, 8
      %s311 = smul.addr %s307, 8
      %s312 = sadd.s32 %s310, %s311
      %s313 = smul.addr %s312, 8
      %s314 = scalar_lea.vmem %s6, %s313
      %s315 = smul.u32 4, %s22
      %v316 = vld [vmem:[%s298] sm:$0xff]
      %v317 = vld [vmem:[%s298 + $0x8] sm:$0xff]
      %v318 = vld [vmem:[%s298 + $0x10] sm:$0xff]
      %v319 = vld [vmem:[%s298 + $0x18] sm:$0xff]
      %v320 = vld [vmem:[%s298 + $0x20] sm:$0xff]
      %v321 = vld [vmem:[%s298 + $0x28] sm:$0xff]
      %v322 = vld [vmem:[%s298 + $0x30] sm:$0xff]
      %v323 = vld [vmem:[%s298 + $0x38] sm:$0xff]
      %v324 = vld [vmem:[%s298 + $0x40] sm:$0xff]
      %v325 = vld [vmem:[%s298 + $0x48] sm:$0xff]
      %v326 = vld [vmem:[%s298 + $0x50] sm:$0xff]
      %v327 = vld [vmem:[%s298 + $0x58] sm:$0xff]
      %v328 = vld [vmem:[%s298 + $0x60] sm:$0xff]
      %v329 = vld [vmem:[%s298 + $0x68] sm:$0xff]
      %v330 = vld [vmem:[%s298 + $0x70] sm:$0xff]
      %v331 = vld [vmem:[%s298 + $0x78] sm:$0xff]
      %v332 = vld [vmem:[%s298 + $0x80] sm:$0xff]
      %v333 = vld [vmem:[%s298 + $0x88] sm:$0xff]
      %v334 = vld [vmem:[%s298 + $0x90] sm:$0xff]
      %v335 = vld [vmem:[%s298 + $0x98] sm:$0xff]
      %v336 = vld [vmem:[%s298 + $0xa0] sm:$0xff]
      %v337 = vld [vmem:[%s298 + $0xa8] sm:$0xff]
      %v338 = vld [vmem:[%s298 + $0xb0] sm:$0xff]
      %v339 = vld [vmem:[%s298 + $0xb8] sm:$0xff]
      %v340 = vld [vmem:[%s298 + $0xc0] sm:$0xff]
      %v341 = vld [vmem:[%s298 + $0xc8] sm:$0xff]
      %v342 = vld [vmem:[%s298 + $0xd0] sm:$0xff]
      %v343 = vld [vmem:[%s298 + $0xd8] sm:$0xff]
      %v344 = vld [vmem:[%s298 + $0xe0] sm:$0xff]
      %v345 = vld [vmem:[%s298 + $0xe8] sm:$0xff]
      %v346 = vld [vmem:[%s298 + $0xf0] sm:$0xff]
      %v347 = vld [vmem:[%s298 + $0xf8] sm:$0xff]
      %v348 = vld [vmem:[%s1] sm:$0xff]
      %v349 = vld [vmem:[%s1 + $0x8] sm:$0xff]
      %v350 = vld [vmem:[%s1 + $0x10] sm:$0xff]
      %v351 = vld [vmem:[%s1 + $0x18] sm:$0xff]
      %v352 = vld [vmem:[%s2] sm:$0x1]
      %v354 = vlaneseq
      %v355 = vshrl.u32 %v354, 7
      %v356 = vsub.s32 0, %v355
      %v357 = vrot.slane %v352, %v356
      %vm359 = vcmask 261120
      %v361 = vsel %vm359, %v316, 0
      %v364 = vsel %vm359, %v317, 0
      %v367 = vsel %vm359, %v318, 0
      %v370 = vsel %vm359, %v319, 0
      %v373 = vsel %vm359, %v320, 0
      %v376 = vsel %vm359, %v321, 0
      %v379 = vsel %vm359, %v322, 0
      %v382 = vsel %vm359, %v323, 0
      %v385 = vsel %vm359, %v324, 0
      %v388 = vsel %vm359, %v325, 0
      %v391 = vsel %vm359, %v326, 0
      %v394 = vsel %vm359, %v327, 0
      %v397 = vsel %vm359, %v328, 0
      %v400 = vsel %vm359, %v329, 0
      %v403 = vsel %vm359, %v330, 0
      %v406 = vsel %vm359, %v331, 0
      %v409 = vsel %vm359, %v332, 0
      %v412 = vsel %vm359, %v333, 0
      %v415 = vsel %vm359, %v334, 0
      %v418 = vsel %vm359, %v335, 0
      %v421 = vsel %vm359, %v336, 0
      %v424 = vsel %vm359, %v337, 0
      %v427 = vsel %vm359, %v338, 0
      %v430 = vsel %vm359, %v339, 0
      %v433 = vsel %vm359, %v340, 0
      %v436 = vsel %vm359, %v341, 0
      %v439 = vsel %vm359, %v342, 0
      %v442 = vsel %vm359, %v343, 0
      %v445 = vsel %vm359, %v344, 0
      %v448 = vsel %vm359, %v345, 0
      %v451 = vsel %vm359, %v346, 0
      %v454 = vsel %vm359, %v347, 0
      %456 = vmatprep.subr.mxu0 0.0
      %457 = vmatpush1.msra.mxu0 0.0
      %458 = vmatprep.subr.mxu0 0.0
      %459 = vmatpush1.msra.mxu0 0.0
      %460 = vmatprep.subr.mxu0 0.0
      %461 = vmatpush1.msra.mxu0 0.0
      %462 = vmatprep.subr.mxu0 0.0
      %463 = vmatpush1.msra.mxu0 0.0
      %464 = vmatprep.subr.mxu0 0.0
      %465 = vmatpush1.msra.mxu0 0.0
      %466 = vmatprep.subr.mxu0 0.0
      %467 = vmatpush1.msra.mxu0 0.0
      %468 = vmatprep.subr.mxu0 0.0
      %469 = vmatpush1.msra.mxu0 0.0
      %470 = vmatprep.subr.mxu0 0.0
      %471 = vmatpush1.msra.mxu0 0.0
      %472 = vmatprep.subr.mxu0 0.0
      %473 = vmatpush1.msra.mxu0 0.0
      %474 = vmatprep.subr.mxu0 0.0
      %475 = vmatpush1.msra.mxu0 0.0
      %476 = vmatprep.subr.mxu0 0.0
      %477 = vmatpush1.msra.mxu0 0.0
      %478 = vmatprep.subr.mxu0 0.0
      %479 = vmatpush1.msra.mxu0 0.0
      %480 = vmatprep.subr.mxu0 0.0
      %481 = vmatpush1.msra.mxu0 %v351
      %482 = vmatprep.subr.mxu0 0.0
      %483 = vmatpush1.msra.mxu0 %v350
      %484 = vmatprep.subr.mxu0 0.0
      %485 = vmatpush1.msra.mxu0 %v349
      %486 = vmatprep.subr.mxu0 0.0
      %487 = vmatpush1.msra.mxu0 %v348
      %488 = vmatprep.subr.mxu0 0.0
      %489 = vmatpush2.msra.mxu0 0.0
      %490 = vmatprep.subr.mxu0 0.0
      %491 = vmatpush2.msra.mxu0 0.0
      %492 = vmatprep.subr.mxu0 0.0
      %493 = vmatpush2.msra.mxu0 0.0
      %494 = vmatprep.subr.mxu0 0.0
      %495 = vmatpush2.msra.mxu0 0.0
      %496 = vmatprep.subr.mxu0 0.0
      %497 = vmatpush2.msra.mxu0 0.0
      %498 = vmatprep.subr.mxu0 0.0
      %499 = vmatpush2.msra.mxu0 0.0
      %500 = vmatprep.subr.mxu0 0.0
      %501 = vmatpush2.msra.mxu0 0.0
      %502 = vmatprep.subr.mxu0 0.0
      %503 = vmatpush2.msra.mxu0 0.0
      %504 = vmatprep.subr.mxu0 0.0
      %505 = vmatpush2.msra.mxu0 0.0
      %506 = vmatprep.subr.mxu0 0.0
      %507 = vmatpush2.msra.mxu0 0.0
      %508 = vmatprep.subr.mxu0 0.0
      %509 = vmatpush2.msra.mxu0 0.0
      %510 = vmatprep.subr.mxu0 0.0
      %511 = vmatpush2.msra.mxu0 0.0
      %512 = vmatprep.subr.mxu0 0.0
      %513 = vmatpush2.msra.mxu0 0.0
      %514 = vmatprep.subr.mxu0 0.0
      %515 = vmatpush2.msra.mxu0 0.0
      %516 = vmatprep.subr.mxu0 0.0
      %517 = vmatpush2.msra.mxu0 0.0
      %518 = vmatprep.subr.mxu0 0.0
      %519 = vmatpush2.msra.mxu0 0.0
      %520 = vmatprep.mubr.f32.mxu0 0.0
      %521 = vmatmul.mubr.f32.gmra.mxu0 %v361
      %v522 = vpop.f32.mrf.mxu0
      %v523 = vadd.f32 %v357, %v522
      %v524 = vpop.f32.mrf.mxu0
      %525 = vmatprep.mubr.f32.mxu0 0.0
      %526 = vmatmul.mubr.f32.gmra.mxu0 %v364
      %v527 = vpop.f32.mrf.mxu0
      %v528 = vadd.f32 %v357, %v527
      %v529 = vpop.f32.mrf.mxu0
      %530 = vmatprep.mubr.f32.mxu0 0.0
      %531 = vmatmul.mubr.f32.gmra.mxu0 %v367
      %v532 = vpop.f32.mrf.mxu0
      %v533 = vadd.f32 %v357, %v532
      %v534 = vpop.f32.mrf.mxu0
      %535 = vmatprep.mubr.f32.mxu0 0.0
      %536 = vmatmul.mubr.f32.gmra.mxu0 %v370
      %v537 = vpop.f32.mrf.mxu0
      %v538 = vadd.f32 %v357, %v537
      %v539 = vpop.f32.mrf.mxu0
      %540 = vmatprep.mubr.f32.mxu0 0.0
      %541 = vmatmul.mubr.f32.gmra.mxu0 %v373
      %v542 = vpop.f32.mrf.mxu0
      %v543 = vadd.f32 %v357, %v542
      %v544 = vpop.f32.mrf.mxu0
      %545 = vmatprep.mubr.f32.mxu0 0.0
      %546 = vmatmul.mubr.f32.gmra.mxu0 %v376
      %v547 = vpop.f32.mrf.mxu0
      %v548 = vadd.f32 %v357, %v547
      %v549 = vpop.f32.mrf.mxu0
      %550 = vmatprep.mubr.f32.mxu0 0.0
      %551 = vmatmul.mubr.f32.gmra.mxu0 %v379
      %v552 = vpop.f32.mrf.mxu0
      %v553 = vadd.f32 %v357, %v552
      %v554 = vpop.f32.mrf.mxu0
      %555 = vmatprep.mubr.f32.mxu0 0.0
      %556 = vmatmul.mubr.f32.gmra.mxu0 %v382
      %v557 = vpop.f32.mrf.mxu0
      %v558 = vadd.f32 %v357, %v557
      %v559 = vpop.f32.mrf.mxu0
      %560 = vmatprep.mubr.f32.mxu0 0.0
      %561 = vmatmul.mubr.f32.gmra.mxu0 %v385
      %v562 = vpop.f32.mrf.mxu0
      %v563 = vadd.f32 %v357, %v562
      %v564 = vpop.f32.mrf.mxu0
      %565 = vmatprep.mubr.f32.mxu0 0.0
      %566 = vmatmul.mubr.f32.gmra.mxu0 %v388
      %v567 = vpop.f32.mrf.mxu0
      %v568 = vadd.f32 %v357, %v567
      %v569 = vpop.f32.mrf.mxu0
      %570 = vmatprep.mubr.f32.mxu0 0.0
      %571 = vmatmul.mubr.f32.gmra.mxu0 %v391
      %v572 = vpop.f32.mrf.mxu0
      %v573 = vadd.f32 %v357, %v572
      %v574 = vpop.f32.mrf.mxu0
      %575 = vmatprep.mubr.f32.mxu0 0.0
      %576 = vmatmul.mubr.f32.gmra.mxu0 %v394
      %v577 = vpop.f32.mrf.mxu0
      %v578 = vadd.f32 %v357, %v577
      %v579 = vpop.f32.mrf.mxu0
      %580 = vmatprep.mubr.f32.mxu0 0.0
      %581 = vmatmul.mubr.f32.gmra.mxu0 %v397
      %v582 = vpop.f32.mrf.mxu0
      %v583 = vadd.f32 %v357, %v582
      %v584 = vpop.f32.mrf.mxu0
      %585 = vmatprep.mubr.f32.mxu0 0.0
      %586 = vmatmul.mubr.f32.gmra.mxu0 %v400
      %v587 = vpop.f32.mrf.mxu0
      %v588 = vadd.f32 %v357, %v587
      %v589 = vpop.f32.mrf.mxu0
      %590 = vmatprep.mubr.f32.mxu0 0.0
      %591 = vmatmul.mubr.f32.gmra.mxu0 %v403
      %v592 = vpop.f32.mrf.mxu0
      %v593 = vadd.f32 %v357, %v592
      %v594 = vpop.f32.mrf.mxu0
      %595 = vmatprep.mubr.f32.mxu0 0.0
      %596 = vmatmul.mubr.f32.gmra.mxu0 %v406
      %v597 = vpop.f32.mrf.mxu0
      %v598 = vadd.f32 %v357, %v597
      %v599 = vpop.f32.mrf.mxu0
      %600 = vmatprep.mubr.f32.mxu0 0.0
      %601 = vmatmul.mubr.f32.gmra.mxu0 %v409
      %v602 = vpop.f32.mrf.mxu0
      %v603 = vadd.f32 %v357, %v602
      %v604 = vpop.f32.mrf.mxu0
      %605 = vmatprep.mubr.f32.mxu0 0.0
      %606 = vmatmul.mubr.f32.gmra.mxu0 %v412
      %v607 = vpop.f32.mrf.mxu0
      %v608 = vadd.f32 %v357, %v607
      %v609 = vpop.f32.mrf.mxu0
      %610 = vmatprep.mubr.f32.mxu0 0.0
      %611 = vmatmul.mubr.f32.gmra.mxu0 %v415
      %v612 = vpop.f32.mrf.mxu0
      %v613 = vadd.f32 %v357, %v612
      %v614 = vpop.f32.mrf.mxu0
      %615 = vmatprep.mubr.f32.mxu0 0.0
      %616 = vmatmul.mubr.f32.gmra.mxu0 %v418
      %v617 = vpop.f32.mrf.mxu0
      %v618 = vadd.f32 %v357, %v617
      %v619 = vpop.f32.mrf.mxu0
      %620 = vmatprep.mubr.f32.mxu0 0.0
      %621 = vmatmul.mubr.f32.gmra.mxu0 %v421
      %v622 = vpop.f32.mrf.mxu0
      %v623 = vadd.f32 %v357, %v622
      %v624 = vpop.f32.mrf.mxu0
      %625 = vmatprep.mubr.f32.mxu0 0.0
      %626 = vmatmul.mubr.f32.gmra.mxu0 %v424
      %v627 = vpop.f32.mrf.mxu0
      %v628 = vadd.f32 %v357, %v627
      %v629 = vpop.f32.mrf.mxu0
      %630 = vmatprep.mubr.f32.mxu0 0.0
      %631 = vmatmul.mubr.f32.gmra.mxu0 %v427
      %v632 = vpop.f32.mrf.mxu0
      %v633 = vadd.f32 %v357, %v632
      %v634 = vpop.f32.mrf.mxu0
      %635 = vmatprep.mubr.f32.mxu0 0.0
      %636 = vmatmul.mubr.f32.gmra.mxu0 %v430
      %v637 = vpop.f32.mrf.mxu0
      %v638 = vadd.f32 %v357, %v637
      %v639 = vpop.f32.mrf.mxu0
      %640 = vmatprep.mubr.f32.mxu0 0.0
      %641 = vmatmul.mubr.f32.gmra.mxu0 %v433
      %v642 = vpop.f32.mrf.mxu0
      %v643 = vadd.f32 %v357, %v642
      %v644 = vpop.f32.mrf.mxu0
      %645 = vmatprep.mubr.f32.mxu0 0.0
      %646 = vmatmul.mubr.f32.gmra.mxu0 %v436
      %v647 = vpop.f32.mrf.mxu0
      %v648 = vadd.f32 %v357, %v647
      %v649 = vpop.f32.mrf.mxu0
      %650 = vmatprep.mubr.f32.mxu0 0.0
      %651 = vmatmul.mubr.f32.gmra.mxu0 %v439
      %v652 = vpop.f32.mrf.mxu0
      %v653 = vadd.f32 %v357, %v652
      %v654 = vpop.f32.mrf.mxu0
      %655 = vmatprep.mubr.f32.mxu0 0.0
      %656 = vmatmul.mubr.f32.gmra.mxu0 %v442
      %v657 = vpop.f32.mrf.mxu0
      %v658 = vadd.f32 %v357, %v657
      %v659 = vpop.f32.mrf.mxu0
      %660 = vmatprep.mubr.f32.mxu0 0.0
      %661 = vmatmul.mubr.f32.gmra.mxu0 %v445
      %v662 = vpop.f32.mrf.mxu0
      %v663 = vadd.f32 %v357, %v662
      %v664 = vpop.f32.mrf.mxu0
      %665 = vmatprep.mubr.f32.mxu0 0.0
      %666 = vmatmul.mubr.f32.gmra.mxu0 %v448
      %v667 = vpop.f32.mrf.mxu0
      %v668 = vadd.f32 %v357, %v667
      %v669 = vpop.f32.mrf.mxu0
      %670 = vmatprep.mubr.f32.mxu0 0.0
      %671 = vmatmul.mubr.f32.gmra.mxu0 %v451
      %v672 = vpop.f32.mrf.mxu0
      %v673 = vadd.f32 %v357, %v672
      %v674 = vpop.f32.mrf.mxu0
      %675 = vmatprep.mubr.f32.mxu0 0.0
      %676 = vmatmul.mubr.f32.gmra.mxu0 %v454
      %v677 = vpop.f32.mrf.mxu0
      %v678 = vadd.f32 %v357, %v677
      %v679 = vpop.f32.mrf.mxu0
      %680 = vdwg.mxu0
      %vm681 = vcmask 785408
      %682 = vst.msk [vmem:[#allocation2] sm:$0xff] %vm681, %v523
      %683 = vst.msk [vmem:[#allocation2 + $0x8] sm:$0xff] %vm681, %v528
      %684 = vst.msk [vmem:[#allocation2 + $0x10] sm:$0xff] %vm681, %v533
      %685 = vst.msk [vmem:[#allocation2 + $0x18] sm:$0xff] %vm681, %v538
      %686 = vst.msk [vmem:[#allocation2 + $0x20] sm:$0xff] %vm681, %v543
      %687 = vst.msk [vmem:[#allocation2 + $0x28] sm:$0xff] %vm681, %v548
      %688 = vst.msk [vmem:[#allocation2 + $0x30] sm:$0xff] %vm681, %v553
      %689 = vst.msk [vmem:[#allocation2 + $0x38] sm:$0xff] %vm681, %v558
      %690 = vst.msk [vmem:[#allocation2 + $0x40] sm:$0xff] %vm681, %v563
      %691 = vst.msk [vmem:[#allocation2 + $0x48] sm:$0xff] %vm681, %v568
      %692 = vst.msk [vmem:[#allocation2 + $0x50] sm:$0xff] %vm681, %v573
      %693 = vst.msk [vmem:[#allocation2 + $0x58] sm:$0xff] %vm681, %v578
      %694 = vst.msk [vmem:[#allocation2 + $0x60] sm:$0xff] %vm681, %v583
      %695 = vst.msk [vmem:[#allocation2 + $0x68] sm:$0xff] %vm681, %v588
      %696 = vst.msk [vmem:[#allocation2 + $0x70] sm:$0xff] %vm681, %v593
      %697 = vst.msk [vmem:[#allocation2 + $0x78] sm:$0xff] %vm681, %v598
      %698 = vst.msk [vmem:[#allocation2 + $0x80] sm:$0xff] %vm681, %v603
      %699 = vst.msk [vmem:[#allocation2 + $0x88] sm:$0xff] %vm681, %v608
      %700 = vst.msk [vmem:[#allocation2 + $0x90] sm:$0xff] %vm681, %v613
      %701 = vst.msk [vmem:[#allocation2 + $0x98] sm:$0xff] %vm681, %v618
      %702 = vst.msk [vmem:[#allocation2 + $0xa0] sm:$0xff] %vm681, %v623
      %703 = vst.msk [vmem:[#allocation2 + $0xa8] sm:$0xff] %vm681, %v628
      %704 = vst.msk [vmem:[#allocation2 + $0xb0] sm:$0xff] %vm681, %v633
      %705 = vst.msk [vmem:[#allocation2 + $0xb8] sm:$0xff] %vm681, %v638
      %706 = vst.msk [vmem:[#allocation2 + $0xc0] sm:$0xff] %vm681, %v643
      %707 = vst.msk [vmem:[#allocation2 + $0xc8] sm:$0xff] %vm681, %v648
      %708 = vst.msk [vmem:[#allocation2 + $0xd0] sm:$0xff] %vm681, %v653
      %709 = vst.msk [vmem:[#allocation2 + $0xd8] sm:$0xff] %vm681, %v658
      %710 = vst.msk [vmem:[#allocation2 + $0xe0] sm:$0xff] %vm681, %v663
      %711 = vst.msk [vmem:[#allocation2 + $0xe8] sm:$0xff] %vm681, %v668
      %712 = vst.msk [vmem:[#allocation2 + $0xf0] sm:$0xff] %vm681, %v673
      %713 = vst.msk [vmem:[#allocation2 + $0xf8] sm:$0xff] %vm681, %v678
      %v714 = vld [vmem:[#allocation2] sm:$0xff]
      %v715 = vld [vmem:[#allocation2 + $0x8] sm:$0xff]
      %v716 = vld [vmem:[#allocation2 + $0x10] sm:$0xff]
      %v717 = vld [vmem:[#allocation2 + $0x18] sm:$0xff]
      %v718 = vld [vmem:[#allocation2 + $0x20] sm:$0xff]
      %v719 = vld [vmem:[#allocation2 + $0x28] sm:$0xff]
      %v720 = vld [vmem:[#allocation2 + $0x30] sm:$0xff]
      %v721 = vld [vmem:[#allocation2 + $0x38] sm:$0xff]
      %v722 = vld [vmem:[#allocation2 + $0x40] sm:$0xff]
      %v723 = vld [vmem:[#allocation2 + $0x48] sm:$0xff]
      %v724 = vld [vmem:[#allocation2 + $0x50] sm:$0xff]
      %v725 = vld [vmem:[#allocation2 + $0x58] sm:$0xff]
      %v726 = vld [vmem:[#allocation2 + $0x60] sm:$0xff]
      %v727 = vld [vmem:[#allocation2 + $0x68] sm:$0xff]
      %v728 = vld [vmem:[#allocation2 + $0x70] sm:$0xff]
      %v729 = vld [vmem:[#allocation2 + $0x78] sm:$0xff]
      %v730 = vld [vmem:[#allocation2 + $0x80] sm:$0xff]
      %v731 = vld [vmem:[#allocation2 + $0x88] sm:$0xff]
      %v732 = vld [vmem:[#allocation2 + $0x90] sm:$0xff]
      %v733 = vld [vmem:[#allocation2 + $0x98] sm:$0xff]
      %v734 = vld [vmem:[#allocation2 + $0xa0] sm:$0xff]
      %v735 = vld [vmem:[#allocation2 + $0xa8] sm:$0xff]
      %v736 = vld [vmem:[#allocation2 + $0xb0] sm:$0xff]
      %v737 = vld [vmem:[#allocation2 + $0xb8] sm:$0xff]
      %v738 = vld [vmem:[#allocation2 + $0xc0] sm:$0xff]
      %v739 = vld [vmem:[#allocation2 + $0xc8] sm:$0xff]
      %v740 = vld [vmem:[#allocation2 + $0xd0] sm:$0xff]
      %v741 = vld [vmem:[#allocation2 + $0xd8] sm:$0xff]
      %v742 = vld [vmem:[#allocation2 + $0xe0] sm:$0xff]
      %v743 = vld [vmem:[#allocation2 + $0xe8] sm:$0xff]
      %v744 = vld [vmem:[#allocation2 + $0xf0] sm:$0xff]
      %v745 = vld [vmem:[#allocation2 + $0xf8] sm:$0xff]
      %v746 = vld [vmem:[%s304] sm:$0xff]
      %v747 = vld [vmem:[%s304 + $0x8] sm:$0xff]
      %v748 = vld [vmem:[%s304 + $0x10] sm:$0xff]
      %v749 = vld [vmem:[%s304 + $0x18] sm:$0xff]
      %v750 = vld [vmem:[%s304 + $0x20] sm:$0xff]
      %v751 = vld [vmem:[%s304 + $0x28] sm:$0xff]
      %v752 = vld [vmem:[%s304 + $0x30] sm:$0xff]
      %v753 = vld [vmem:[%s304 + $0x38] sm:$0xff]
      %762 = vrot.lane.b32.xlu0 %v714, 96
      %v763 = vpop.permute.xlu0 %762
      %764 = vrot.lane.b32.xlu0 %v715, 96
      %v765 = vpop.permute.xlu0 %764
      %766 = vrot.lane.b32.xlu0 %v716, 96
      %v767 = vpop.permute.xlu0 %766
      %768 = vrot.lane.b32.xlu0 %v717, 96
      %v769 = vpop.permute.xlu0 %768
      %770 = vrot.lane.b32.xlu0 %v718, 96
      %v771 = vpop.permute.xlu0 %770
      %772 = vrot.lane.b32.xlu0 %v719, 96
      %v773 = vpop.permute.xlu0 %772
      %774 = vrot.lane.b32.xlu0 %v720, 96
      %v775 = vpop.permute.xlu0 %774
      %776 = vrot.lane.b32.xlu0 %v721, 96
      %v777 = vpop.permute.xlu0 %776
      %vm778 = vcmask 64512
      %v779 = vsel %vm778, %v714, 0
      %v781 = vsel %vm778, %v715, 0
      %v783 = vsel %vm778, %v716, 0
      %v785 = vsel %vm778, %v717, 0
      %v787 = vsel %vm778, %v718, 0
      %v789 = vsel %vm778, %v719, 0
      %v791 = vsel %vm778, %v720, 0
      %v793 = vsel %vm778, %v721, 0
      %v795 = vsel %vm778, %v763, 0
      %v797 = vsel %vm778, %v765, 0
      %v799 = vsel %vm778, %v767, 0
      %v801 = vsel %vm778, %v769, 0
      %v803 = vsel %vm778, %v771, 0
      %v805 = vsel %vm778, %v773, 0
      %v807 = vsel %vm778, %v775, 0
      %v809 = vsel %vm778, %v777, 0
      %811 = vmatprep.subr.mxu0 0.0
      %812 = vmatpush1.xpose.msra.mxu0 0.0
      %813 = vmatprep.subr.mxu0 0.0
      %814 = vmatpush1.xpose.msra.mxu0 0.0
      %815 = vmatprep.subr.mxu0 0.0
      %816 = vmatpush1.xpose.msra.mxu0 0.0
      %817 = vmatprep.subr.mxu0 0.0
      %818 = vmatpush1.xpose.msra.mxu0 0.0
      %819 = vmatprep.subr.mxu0 0.0
      %820 = vmatpush1.xpose.msra.mxu0 0.0
      %821 = vmatprep.subr.mxu0 0.0
      %822 = vmatpush1.xpose.msra.mxu0 0.0
      %823 = vmatprep.subr.mxu0 0.0
      %824 = vmatpush1.xpose.msra.mxu0 0.0
      %825 = vmatprep.subr.mxu0 0.0
      %826 = vmatpush1.xpose.msra.mxu0 0.0
      %827 = vmatprep.subr.mxu0 0.0
      %828 = vmatpush1.xpose.msra.mxu0 %v809
      %829 = vmatprep.subr.mxu0 0.0
      %830 = vmatpush1.xpose.msra.mxu0 %v807
      %831 = vmatprep.subr.mxu0 0.0
      %832 = vmatpush1.xpose.msra.mxu0 %v805
      %833 = vmatprep.subr.mxu0 0.0
      %834 = vmatpush1.xpose.msra.mxu0 %v803
      %835 = vmatprep.subr.mxu0 0.0
      %836 = vmatpush1.xpose.msra.mxu0 %v801
      %837 = vmatprep.subr.mxu0 0.0
      %838 = vmatpush1.xpose.msra.mxu0 %v799
      %839 = vmatprep.subr.mxu0 0.0
      %840 = vmatpush1.xpose.msra.mxu0 %v797
      %841 = vmatprep.subr.mxu0 0.0
      %842 = vmatpush1.xpose.msra.mxu0 %v795
      %843 = vmatprep.subr.mxu0 0.0
      %844 = vmatpush2.xpose.msra.mxu0 0.0
      %845 = vmatprep.subr.mxu0 0.0
      %846 = vmatpush2.xpose.msra.mxu0 0.0
      %847 = vmatprep.subr.mxu0 0.0
      %848 = vmatpush2.xpose.msra.mxu0 0.0
      %849 = vmatprep.subr.mxu0 0.0
      %850 = vmatpush2.xpose.msra.mxu0 0.0
      %851 = vmatprep.subr.mxu0 0.0
      %852 = vmatpush2.xpose.msra.mxu0 0.0
      %853 = vmatprep.subr.mxu0 0.0
      %854 = vmatpush2.xpose.msra.mxu0 0.0
      %855 = vmatprep.subr.mxu0 0.0
      %856 = vmatpush2.xpose.msra.mxu0 0.0
      %857 = vmatprep.subr.mxu0 0.0
      %858 = vmatpush2.xpose.msra.mxu0 0.0
      %859 = vmatprep.subr.mxu0 0.0
      %860 = vmatpush2.xpose.msra.mxu0 0.0
      %861 = vmatprep.subr.mxu0 0.0
      %862 = vmatpush2.xpose.msra.mxu0 0.0
      %863 = vmatprep.subr.mxu0 0.0
      %864 = vmatpush2.xpose.msra.mxu0 0.0
      %865 = vmatprep.subr.mxu0 0.0
      %866 = vmatpush2.xpose.msra.mxu0 0.0
      %867 = vmatprep.subr.mxu0 0.0
      %868 = vmatpush2.xpose.msra.mxu0 0.0
      %869 = vmatprep.subr.mxu0 0.0
      %870 = vmatpush2.xpose.msra.mxu0 0.0
      %871 = vmatprep.subr.mxu0 0.0
      %872 = vmatpush2.xpose.msra.mxu0 0.0
      %873 = vmatprep.subr.mxu0 0.0
      %874 = vmatpush2.xpose.msra.mxu0 0.0
      %875 = vmatprep.mubr.f32.mxu0 0.0
      %876 = vmatmul.mubr.f32.gmra.mxu0 %v779
      %v877 = vpop.f32.mrf.mxu0
      %v878 = vadd.f32 %v746, %v877
      %v879 = vpop.f32.mrf.mxu0
      %880 = vmatprep.mubr.f32.mxu0 0.0
      %881 = vmatmul.mubr.f32.gmra.mxu0 %v781
      %v882 = vpop.f32.mrf.mxu0
      %v883 = vadd.f32 %v747, %v882
      %v884 = vpop.f32.mrf.mxu0
      %885 = vmatprep.mubr.f32.mxu0 0.0
      %886 = vmatmul.mubr.f32.gmra.mxu0 %v783
      %v887 = vpop.f32.mrf.mxu0
      %v888 = vadd.f32 %v748, %v887
      %v889 = vpop.f32.mrf.mxu0
      %890 = vmatprep.mubr.f32.mxu0 0.0
      %891 = vmatmul.mubr.f32.gmra.mxu0 %v785
      %v892 = vpop.f32.mrf.mxu0
      %v893 = vadd.f32 %v749, %v892
      %v894 = vpop.f32.mrf.mxu0
      %895 = vmatprep.mubr.f32.mxu0 0.0
      %896 = vmatmul.mubr.f32.gmra.mxu0 %v787
      %v897 = vpop.f32.mrf.mxu0
      %v898 = vadd.f32 %v750, %v897
      %v899 = vpop.f32.mrf.mxu0
      %900 = vmatprep.mubr.f32.mxu0 0.0
      %901 = vmatmul.mubr.f32.gmra.mxu0 %v789
      %v902 = vpop.f32.mrf.mxu0
      %v903 = vadd.f32 %v751, %v902
      %v904 = vpop.f32.mrf.mxu0
      %905 = vmatprep.mubr.f32.mxu0 0.0
      %906 = vmatmul.mubr.f32.gmra.mxu0 %v791
      %v907 = vpop.f32.mrf.mxu0
      %v908 = vadd.f32 %v752, %v907
      %v909 = vpop.f32.mrf.mxu0
      %910 = vmatprep.mubr.f32.mxu0 0.0
      %911 = vmatmul.mubr.f32.gmra.mxu0 %v793
      %v912 = vpop.f32.mrf.mxu0
      %v913 = vadd.f32 %v753, %v912
      %v914 = vpop.f32.mrf.mxu0
      %915 = vdwg.mxu0
      %924 = vrot.lane.b32.xlu0 %v722, 96
      %v925 = vpop.permute.xlu0 %924
      %926 = vrot.lane.b32.xlu0 %v723, 96
      %v927 = vpop.permute.xlu0 %926
      %928 = vrot.lane.b32.xlu0 %v724, 96
      %v929 = vpop.permute.xlu0 %928
      %930 = vrot.lane.b32.xlu0 %v725, 96
      %v931 = vpop.permute.xlu0 %930
      %932 = vrot.lane.b32.xlu0 %v726, 96
      %v933 = vpop.permute.xlu0 %932
      %934 = vrot.lane.b32.xlu0 %v727, 96
      %v935 = vpop.permute.xlu0 %934
      %936 = vrot.lane.b32.xlu0 %v728, 96
      %v937 = vpop.permute.xlu0 %936
      %938 = vrot.lane.b32.xlu0 %v729, 96
      %v939 = vpop.permute.xlu0 %938
      %v940 = vsel %vm778, %v722, 0
      %v942 = vsel %vm778, %v723, 0
      %v944 = vsel %vm778, %v724, 0
      %v946 = vsel %vm778, %v725, 0
      %v948 = vsel %vm778, %v726, 0
      %v950 = vsel %vm778, %v727, 0
      %v952 = vsel %vm778, %v728, 0
      %v954 = vsel %vm778, %v729, 0
      %v956 = vsel %vm778, %v925, 0
      %v958 = vsel %vm778, %v927, 0
      %v960 = vsel %vm778, %v929, 0
      %v962 = vsel %vm778, %v931, 0
      %v964 = vsel %vm778, %v933, 0
      %v966 = vsel %vm778, %v935, 0
      %v968 = vsel %vm778, %v937, 0
      %v970 = vsel %vm778, %v939, 0
      %972 = vmatprep.subr.mxu0 0.0
      %973 = vmatpush1.xpose.msra.mxu0 0.0
      %974 = vmatprep.subr.mxu0 0.0
      %975 = vmatpush1.xpose.msra.mxu0 0.0
      %976 = vmatprep.subr.mxu0 0.0
      %977 = vmatpush1.xpose.msra.mxu0 0.0
      %978 = vmatprep.subr.mxu0 0.0
      %979 = vmatpush1.xpose.msra.mxu0 0.0
      %980 = vmatprep.subr.mxu0 0.0
      %981 = vmatpush1.xpose.msra.mxu0 0.0
      %982 = vmatprep.subr.mxu0 0.0
      %983 = vmatpush1.xpose.msra.mxu0 0.0
      %984 = vmatprep.subr.mxu0 0.0
      %985 = vmatpush1.xpose.msra.mxu0 0.0
      %986 = vmatprep.subr.mxu0 0.0
      %987 = vmatpush1.xpose.msra.mxu0 0.0
      %988 = vmatprep.subr.mxu0 0.0
      %989 = vmatpush1.xpose.msra.mxu0 %v970
      %990 = vmatprep.subr.mxu0 0.0
      %991 = vmatpush1.xpose.msra.mxu0 %v968
      %992 = vmatprep.subr.mxu0 0.0
      %993 = vmatpush1.xpose.msra.mxu0 %v966
      %994 = vmatprep.subr.mxu0 0.0
      %995 = vmatpush1.xpose.msra.mxu0 %v964
      %996 = vmatprep.subr.mxu0 0.0
      %997 = vmatpush1.xpose.msra.mxu0 %v962
      %998 = vmatprep.subr.mxu0 0.0
      %999 = vmatpush1.xpose.msra.mxu0 %v960
      %1000 = vmatprep.subr.mxu0 0.0
      %1001 = vmatpush1.xpose.msra.mxu0 %v958
      %1002 = vmatprep.subr.mxu0 0.0
      %1003 = vmatpush1.xpose.msra.mxu0 %v956
      %1004 = vmatprep.subr.mxu0 0.0
      %1005 = vmatpush2.xpose.msra.mxu0 0.0
      %1006 = vmatprep.subr.mxu0 0.0
      %1007 = vmatpush2.xpose.msra.mxu0 0.0
      %1008 = vmatprep.subr.mxu0 0.0
      %1009 = vmatpush2.xpose.msra.mxu0 0.0
      %1010 = vmatprep.subr.mxu0 0.0
      %1011 = vmatpush2.xpose.msra.mxu0 0.0
      %1012 = vmatprep.subr.mxu0 0.0
      %1013 = vmatpush2.xpose.msra.mxu0 0.0
      %1014 = vmatprep.subr.mxu0 0.0
      %1015 = vmatpush2.xpose.msra.mxu0 0.0
      %1016 = vmatprep.subr.mxu0 0.0
      %1017 = vmatpush2.xpose.msra.mxu0 0.0
      %1018 = vmatprep.subr.mxu0 0.0
      %1019 = vmatpush2.xpose.msra.mxu0 0.0
      %1020 = vmatprep.subr.mxu0 0.0
      %1021 = vmatpush2.xpose.msra.mxu0 0.0
      %1022 = vmatprep.subr.mxu0 0.0
      %1023 = vmatpush2.xpose.msra.mxu0 0.0
      %1024 = vmatprep.subr.mxu0 0.0
      %1025 = vmatpush2.xpose.msra.mxu0 0.0
      %1026 = vmatprep.subr.mxu0 0.0
      %1027 = vmatpush2.xpose.msra.mxu0 0.0
      %1028 = vmatprep.subr.mxu0 0.0
      %1029 = vmatpush2.xpose.msra.mxu0 0.0
      %1030 = vmatprep.subr.mxu0 0.0
      %1031 = vmatpush2.xpose.msra.mxu0 0.0
      %1032 = vmatprep.subr.mxu0 0.0
      %1033 = vmatpush2.xpose.msra.mxu0 0.0
      %1034 = vmatprep.subr.mxu0 0.0
      %1035 = vmatpush2.xpose.msra.mxu0 0.0
      %1036 = vmatprep.mubr.f32.mxu0 0.0
      %1037 = vmatmul.mubr.f32.gmra.mxu0 %v940
      %v1038 = vpop.f32.mrf.mxu0
      %v1039 = vadd.f32 %v746, %v1038
      %v1040 = vpop.f32.mrf.mxu0
      %1041 = vmatprep.mubr.f32.mxu0 0.0
      %1042 = vmatmul.mubr.f32.gmra.mxu0 %v942
      %v1043 = vpop.f32.mrf.mxu0
      %v1044 = vadd.f32 %v747, %v1043
      %v1045 = vpop.f32.mrf.mxu0
      %1046 = vmatprep.mubr.f32.mxu0 0.0
      %1047 = vmatmul.mubr.f32.gmra.mxu0 %v944
      %v1048 = vpop.f32.mrf.mxu0
      %v1049 = vadd.f32 %v748, %v1048
      %v1050 = vpop.f32.mrf.mxu0
      %1051 = vmatprep.mubr.f32.mxu0 0.0
      %1052 = vmatmul.mubr.f32.gmra.mxu0 %v946
      %v1053 = vpop.f32.mrf.mxu0
      %v1054 = vadd.f32 %v749, %v1053
      %v1055 = vpop.f32.mrf.mxu0
      %1056 = vmatprep.mubr.f32.mxu0 0.0
      %1057 = vmatmul.mubr.f32.gmra.mxu0 %v948
      %v1058 = vpop.f32.mrf.mxu0
      %v1059 = vadd.f32 %v750, %v1058
      %v1060 = vpop.f32.mrf.mxu0
      %1061 = vmatprep.mubr.f32.mxu0 0.0
      %1062 = vmatmul.mubr.f32.gmra.mxu0 %v950
      %v1063 = vpop.f32.mrf.mxu0
      %v1064 = vadd.f32 %v751, %v1063
      %v1065 = vpop.f32.mrf.mxu0
      %1066 = vmatprep.mubr.f32.mxu0 0.0
      %1067 = vmatmul.mubr.f32.gmra.mxu0 %v952
      %v1068 = vpop.f32.mrf.mxu0
      %v1069 = vadd.f32 %v752, %v1068
      %v1070 = vpop.f32.mrf.mxu0
      %1071 = vmatprep.mubr.f32.mxu0 0.0
      %1072 = vmatmul.mubr.f32.gmra.mxu0 %v954
      %v1073 = vpop.f32.mrf.mxu0
      %v1074 = vadd.f32 %v753, %v1073
      %v1075 = vpop.f32.mrf.mxu0
      %1076 = vdwg.mxu0
      %1085 = vrot.lane.b32.xlu0 %v730, 96
      %v1086 = vpop.permute.xlu0 %1085
      %1087 = vrot.lane.b32.xlu0 %v731, 96
      %v1088 = vpop.permute.xlu0 %1087
      %1089 = vrot.lane.b32.xlu0 %v732, 96
      %v1090 = vpop.permute.xlu0 %1089
      %1091 = vrot.lane.b32.xlu0 %v733, 96
      %v1092 = vpop.permute.xlu0 %1091
      %1093 = vrot.lane.b32.xlu0 %v734, 96
      %v1094 = vpop.permute.xlu0 %1093
      %1095 = vrot.lane.b32.xlu0 %v735, 96
      %v1096 = vpop.permute.xlu0 %1095
      %1097 = vrot.lane.b32.xlu0 %v736, 96
      %v1098 = vpop.permute.xlu0 %1097
      %1099 = vrot.lane.b32.xlu0 %v737, 96
      %v1100 = vpop.permute.xlu0 %1099
      %v1101 = vsel %vm778, %v730, 0
      %v1103 = vsel %vm778, %v731, 0
      %v1105 = vsel %vm778, %v732, 0
      %v1107 = vsel %vm778, %v733, 0
      %v1109 = vsel %vm778, %v734, 0
      %v1111 = vsel %vm778, %v735, 0
      %v1113 = vsel %vm778, %v736, 0
      %v1115 = vsel %vm778, %v737, 0
      %v1117 = vsel %vm778, %v1086, 0
      %v1119 = vsel %vm778, %v1088, 0
      %v1121 = vsel %vm778, %v1090, 0
      %v1123 = vsel %vm778, %v1092, 0
      %v1125 = vsel %vm778, %v1094, 0
      %v1127 = vsel %vm778, %v1096, 0
      %v1129 = vsel %vm778, %v1098, 0
      %v1131 = vsel %vm778, %v1100, 0
      %1133 = vmatprep.subr.mxu0 0.0
      %1134 = vmatpush1.xpose.msra.mxu0 0.0
      %1135 = vmatprep.subr.mxu0 0.0
      %1136 = vmatpush1.xpose.msra.mxu0 0.0
      %1137 = vmatprep.subr.mxu0 0.0
      %1138 = vmatpush1.xpose.msra.mxu0 0.0
      %1139 = vmatprep.subr.mxu0 0.0
      %1140 = vmatpush1.xpose.msra.mxu0 0.0
      %1141 = vmatprep.subr.mxu0 0.0
      %1142 = vmatpush1.xpose.msra.mxu0 0.0
      %1143 = vmatprep.subr.mxu0 0.0
      %1144 = vmatpush1.xpose.msra.mxu0 0.0
      %1145 = vmatprep.subr.mxu0 0.0
      %1146 = vmatpush1.xpose.msra.mxu0 0.0
      %1147 = vmatprep.subr.mxu0 0.0
      %1148 = vmatpush1.xpose.msra.mxu0 0.0
      %1149 = vmatprep.subr.mxu0 0.0
      %1150 = vmatpush1.xpose.msra.mxu0 %v1131
      %1151 = vmatprep.subr.mxu0 0.0
      %1152 = vmatpush1.xpose.msra.mxu0 %v1129
      %1153 = vmatprep.subr.mxu0 0.0
      %1154 = vmatpush1.xpose.msra.mxu0 %v1127
      %1155 = vmatprep.subr.mxu0 0.0
      %1156 = vmatpush1.xpose.msra.mxu0 %v1125
      %1157 = vmatprep.subr.mxu0 0.0
      %1158 = vmatpush1.xpose.msra.mxu0 %v1123
      %1159 = vmatprep.subr.mxu0 0.0
      %1160 = vmatpush1.xpose.msra.mxu0 %v1121
      %1161 = vmatprep.subr.mxu0 0.0
      %1162 = vmatpush1.xpose.msra.mxu0 %v1119
      %1163 = vmatprep.subr.mxu0 0.0
      %1164 = vmatpush1.xpose.msra.mxu0 %v1117
      %1165 = vmatprep.subr.mxu0 0.0
      %1166 = vmatpush2.xpose.msra.mxu0 0.0
      %1167 = vmatprep.subr.mxu0 0.0
      %1168 = vmatpush2.xpose.msra.mxu0 0.0
      %1169 = vmatprep.subr.mxu0 0.0
      %1170 = vmatpush2.xpose.msra.mxu0 0.0
      %1171 = vmatprep.subr.mxu0 0.0
      %1172 = vmatpush2.xpose.msra.mxu0 0.0
      %1173 = vmatprep.subr.mxu0 0.0
      %1174 = vmatpush2.xpose.msra.mxu0 0.0
      %1175 = vmatprep.subr.mxu0 0.0
      %1176 = vmatpush2.xpose.msra.mxu0 0.0
      %1177 = vmatprep.subr.mxu0 0.0
      %1178 = vmatpush2.xpose.msra.mxu0 0.0
      %1179 = vmatprep.subr.mxu0 0.0
      %1180 = vmatpush2.xpose.msra.mxu0 0.0
      %1181 = vmatprep.subr.mxu0 0.0
      %1182 = vmatpush2.xpose.msra.mxu0 0.0
      %1183 = vmatprep.subr.mxu0 0.0
      %1184 = vmatpush2.xpose.msra.mxu0 0.0
      %1185 = vmatprep.subr.mxu0 0.0
      %1186 = vmatpush2.xpose.msra.mxu0 0.0
      %1187 = vmatprep.subr.mxu0 0.0
      %1188 = vmatpush2.xpose.msra.mxu0 0.0
      %1189 = vmatprep.subr.mxu0 0.0
      %1190 = vmatpush2.xpose.msra.mxu0 0.0
      %1191 = vmatprep.subr.mxu0 0.0
      %1192 = vmatpush2.xpose.msra.mxu0 0.0
      %1193 = vmatprep.subr.mxu0 0.0
      %1194 = vmatpush2.xpose.msra.mxu0 0.0
      %1195 = vmatprep.subr.mxu0 0.0
      %1196 = vmatpush2.xpose.msra.mxu0 0.0
      %1197 = vmatprep.mubr.f32.mxu0 0.0
      %1198 = vmatmul.mubr.f32.gmra.mxu0 %v1101
      %v1199 = vpop.f32.mrf.mxu0
      %v1200 = vadd.f32 %v746, %v1199
      %v1201 = vpop.f32.mrf.mxu0
      %1202 = vmatprep.mubr.f32.mxu0 0.0
      %1203 = vmatmul.mubr.f32.gmra.mxu0 %v1103
      %v1204 = vpop.f32.mrf.mxu0
      %v1205 = vadd.f32 %v747, %v1204
      %v1206 = vpop.f32.mrf.mxu0
      %1207 = vmatprep.mubr.f32.mxu0 0.0
      %1208 = vmatmul.mubr.f32.gmra.mxu0 %v1105
      %v1209 = vpop.f32.mrf.mxu0
      %v1210 = vadd.f32 %v748, %v1209
      %v1211 = vpop.f32.mrf.mxu0
      %1212 = vmatprep.mubr.f32.mxu0 0.0
      %1213 = vmatmul.mubr.f32.gmra.mxu0 %v1107
      %v1214 = vpop.f32.mrf.mxu0
      %v1215 = vadd.f32 %v749, %v1214
      %v1216 = vpop.f32.mrf.mxu0
      %1217 = vmatprep.mubr.f32.mxu0 0.0
      %1218 = vmatmul.mubr.f32.gmra.mxu0 %v1109
      %v1219 = vpop.f32.mrf.mxu0
      %v1220 = vadd.f32 %v750, %v1219
      %v1221 = vpop.f32.mrf.mxu0
      %1222 = vmatprep.mubr.f32.mxu0 0.0
      %1223 = vmatmul.mubr.f32.gmra.mxu0 %v1111
      %v1224 = vpop.f32.mrf.mxu0
      %v1225 = vadd.f32 %v751, %v1224
      %v1226 = vpop.f32.mrf.mxu0
      %1227 = vmatprep.mubr.f32.mxu0 0.0
      %1228 = vmatmul.mubr.f32.gmra.mxu0 %v1113
      %v1229 = vpop.f32.mrf.mxu0
      %v1230 = vadd.f32 %v752, %v1229
      %v1231 = vpop.f32.mrf.mxu0
      %1232 = vmatprep.mubr.f32.mxu0 0.0
      %1233 = vmatmul.mubr.f32.gmra.mxu0 %v1115
      %v1234 = vpop.f32.mrf.mxu0
      %v1235 = vadd.f32 %v753, %v1234
      %v1236 = vpop.f32.mrf.mxu0
      %1237 = vdwg.mxu0
      %1246 = vrot.lane.b32.xlu0 %v738, 96
      %v1247 = vpop.permute.xlu0 %1246
      %1248 = vrot.lane.b32.xlu0 %v739, 96
      %v1249 = vpop.permute.xlu0 %1248
      %1250 = vrot.lane.b32.xlu0 %v740, 96
      %v1251 = vpop.permute.xlu0 %1250
      %1252 = vrot.lane.b32.xlu0 %v741, 96
      %v1253 = vpop.permute.xlu0 %1252
      %1254 = vrot.lane.b32.xlu0 %v742, 96
      %v1255 = vpop.permute.xlu0 %1254
      %1256 = vrot.lane.b32.xlu0 %v743, 96
      %v1257 = vpop.permute.xlu0 %1256
      %1258 = vrot.lane.b32.xlu0 %v744, 96
      %v1259 = vpop.permute.xlu0 %1258
      %1260 = vrot.lane.b32.xlu0 %v745, 96
      %v1261 = vpop.permute.xlu0 %1260
      %v1262 = vsel %vm778, %v738, 0
      %v1264 = vsel %vm778, %v739, 0
      %v1266 = vsel %vm778, %v740, 0
      %v1268 = vsel %vm778, %v741, 0
      %v1270 = vsel %vm778, %v742, 0
      %v1272 = vsel %vm778, %v743, 0
      %v1274 = vsel %vm778, %v744, 0
      %v1276 = vsel %vm778, %v745, 0
      %v1278 = vsel %vm778, %v1247, 0
      %v1280 = vsel %vm778, %v1249, 0
      %v1282 = vsel %vm778, %v1251, 0
      %v1284 = vsel %vm778, %v1253, 0
      %v1286 = vsel %vm778, %v1255, 0
      %v1288 = vsel %vm778, %v1257, 0
      %v1290 = vsel %vm778, %v1259, 0
      %v1292 = vsel %vm778, %v1261, 0
      %1294 = vmatprep.subr.mxu0 0.0
      %1295 = vmatpush1.xpose.msra.mxu0 0.0
      %1296 = vmatprep.subr.mxu0 0.0
      %1297 = vmatpush1.xpose.msra.mxu0 0.0
      %1298 = vmatprep.subr.mxu0 0.0
      %1299 = vmatpush1.xpose.msra.mxu0 0.0
      %1300 = vmatprep.subr.mxu0 0.0
      %1301 = vmatpush1.xpose.msra.mxu0 0.0
      %1302 = vmatprep.subr.mxu0 0.0
      %1303 = vmatpush1.xpose.msra.mxu0 0.0
      %1304 = vmatprep.subr.mxu0 0.0
      %1305 = vmatpush1.xpose.msra.mxu0 0.0
      %1306 = vmatprep.subr.mxu0 0.0
      %1307 = vmatpush1.xpose.msra.mxu0 0.0
      %1308 = vmatprep.subr.mxu0 0.0
      %1309 = vmatpush1.xpose.msra.mxu0 0.0
      %1310 = vmatprep.subr.mxu0 0.0
      %1311 = vmatpush1.xpose.msra.mxu0 %v1292
      %1312 = vmatprep.subr.mxu0 0.0
      %1313 = vmatpush1.xpose.msra.mxu0 %v1290
      %1314 = vmatprep.subr.mxu0 0.0
      %1315 = vmatpush1.xpose.msra.mxu0 %v1288
      %1316 = vmatprep.subr.mxu0 0.0
      %1317 = vmatpush1.xpose.msra.mxu0 %v1286
      %1318 = vmatprep.subr.mxu0 0.0
      %1319 = vmatpush1.xpose.msra.mxu0 %v1284
      %1320 = vmatprep.subr.mxu0 0.0
      %1321 = vmatpush1.xpose.msra.mxu0 %v1282
      %1322 = vmatprep.subr.mxu0 0.0
      %1323 = vmatpush1.xpose.msra.mxu0 %v1280
      %1324 = vmatprep.subr.mxu0 0.0
      %1325 = vmatpush1.xpose.msra.mxu0 %v1278
      %1326 = vmatprep.subr.mxu0 0.0
      %1327 = vmatpush2.xpose.msra.mxu0 0.0
      %1328 = vmatprep.subr.mxu0 0.0
      %1329 = vmatpush2.xpose.msra.mxu0 0.0
      %1330 = vmatprep.subr.mxu0 0.0
      %1331 = vmatpush2.xpose.msra.mxu0 0.0
      %1332 = vmatprep.subr.mxu0 0.0
      %1333 = vmatpush2.xpose.msra.mxu0 0.0
      %1334 = vmatprep.subr.mxu0 0.0
      %1335 = vmatpush2.xpose.msra.mxu0 0.0
      %1336 = vmatprep.subr.mxu0 0.0
      %1337 = vmatpush2.xpose.msra.mxu0 0.0
      %1338 = vmatprep.subr.mxu0 0.0
      %1339 = vmatpush2.xpose.msra.mxu0 0.0
      %1340 = vmatprep.subr.mxu0 0.0
      %1341 = vmatpush2.xpose.msra.mxu0 0.0
      %1342 = vmatprep.subr.mxu0 0.0
      %1343 = vmatpush2.xpose.msra.mxu0 0.0
      %1344 = vmatprep.subr.mxu0 0.0
      %1345 = vmatpush2.xpose.msra.mxu0 0.0
      %1346 = vmatprep.subr.mxu0 0.0
      %1347 = vmatpush2.xpose.msra.mxu0 0.0
      %1348 = vmatprep.subr.mxu0 0.0
      %1349 = vmatpush2.xpose.msra.mxu0 0.0
      %1350 = vmatprep.subr.mxu0 0.0
      %1351 = vmatpush2.xpose.msra.mxu0 0.0
      %1352 = vmatprep.subr.mxu0 0.0
      %1353 = vmatpush2.xpose.msra.mxu0 0.0
      %1354 = vmatprep.subr.mxu0 0.0
      %1355 = vmatpush2.xpose.msra.mxu0 0.0
      %1356 = vmatprep.subr.mxu0 0.0
      %1357 = vmatpush2.xpose.msra.mxu0 0.0
      %1358 = vmatprep.mubr.f32.mxu0 0.0
      %1359 = vmatmul.mubr.f32.gmra.mxu0 %v1262
      %v1360 = vpop.f32.mrf.mxu0
      %v1361 = vadd.f32 %v746, %v1360
      %v1362 = vpop.f32.mrf.mxu0
      %1363 = vmatprep.mubr.f32.mxu0 0.0
      %1364 = vmatmul.mubr.f32.gmra.mxu0 %v1264
      %v1365 = vpop.f32.mrf.mxu0
      %v1366 = vadd.f32 %v747, %v1365
      %v1367 = vpop.f32.mrf.mxu0
      %1368 = vmatprep.mubr.f32.mxu0 0.0
      %1369 = vmatmul.mubr.f32.gmra.mxu0 %v1266
      %v1370 = vpop.f32.mrf.mxu0
      %v1371 = vadd.f32 %v748, %v1370
      %v1372 = vpop.f32.mrf.mxu0
      %1373 = vmatprep.mubr.f32.mxu0 0.0
      %1374 = vmatmul.mubr.f32.gmra.mxu0 %v1268
      %v1375 = vpop.f32.mrf.mxu0
      %v1376 = vadd.f32 %v749, %v1375
      %v1377 = vpop.f32.mrf.mxu0
      %1378 = vmatprep.mubr.f32.mxu0 0.0
      %1379 = vmatmul.mubr.f32.gmra.mxu0 %v1270
      %v1380 = vpop.f32.mrf.mxu0
      %v1381 = vadd.f32 %v750, %v1380
      %v1382 = vpop.f32.mrf.mxu0
      %1383 = vmatprep.mubr.f32.mxu0 0.0
      %1384 = vmatmul.mubr.f32.gmra.mxu0 %v1272
      %v1385 = vpop.f32.mrf.mxu0
      %v1386 = vadd.f32 %v751, %v1385
      %v1387 = vpop.f32.mrf.mxu0
      %1388 = vmatprep.mubr.f32.mxu0 0.0
      %1389 = vmatmul.mubr.f32.gmra.mxu0 %v1274
      %v1390 = vpop.f32.mrf.mxu0
      %v1391 = vadd.f32 %v752, %v1390
      %v1392 = vpop.f32.mrf.mxu0
      %1393 = vmatprep.mubr.f32.mxu0 0.0
      %1394 = vmatmul.mubr.f32.gmra.mxu0 %v1276
      %v1395 = vpop.f32.mrf.mxu0
      %v1396 = vadd.f32 %v753, %v1395
      %v1397 = vpop.f32.mrf.mxu0
      %1398 = vdwg.mxu0
      %vm1399 = vcmask 523264
      %v1400 = vsel %vm1399, %v878, -inf
      %1401 = vmax.xlane.f32.xlu0 %v1400
      %v1402 = vpop.xlane.xlu0 %1401
      %v1403 = vsel %vm1399, %v883, -inf
      %1404 = vmax.xlane.f32.xlu0 %v1403
      %v1405 = vpop.xlane.xlu0 %1404
      %v1406 = vsel %vm1399, %v888, -inf
      %1407 = vmax.xlane.f32.xlu0 %v1406
      %v1408 = vpop.xlane.xlu0 %1407
      %v1409 = vsel %vm1399, %v893, -inf
      %1410 = vmax.xlane.f32.xlu0 %v1409
      %v1411 = vpop.xlane.xlu0 %1410
      %v1412 = vsel %vm1399, %v898, -inf
      %1413 = vmax.xlane.f32.xlu0 %v1412
      %v1414 = vpop.xlane.xlu0 %1413
      %v1415 = vsel %vm1399, %v903, -inf
      %1416 = vmax.xlane.f32.xlu0 %v1415
      %v1417 = vpop.xlane.xlu0 %1416
      %v1418 = vsel %vm1399, %v908, -inf
      %1419 = vmax.xlane.f32.xlu0 %v1418
      %v1420 = vpop.xlane.xlu0 %1419
      %v1421 = vsel %vm1399, %v913, -inf
      %1422 = vmax.xlane.f32.xlu0 %v1421
      %v1423 = vpop.xlane.xlu0 %1422
      %v1424 = vsel %vm1399, %v1039, -inf
      %1425 = vmax.xlane.f32.xlu0 %v1424
      %v1426 = vpop.xlane.xlu0 %1425
      %v1427 = vsel %vm1399, %v1044, -inf
      %1428 = vmax.xlane.f32.xlu0 %v1427
      %v1429 = vpop.xlane.xlu0 %1428
      %v1430 = vsel %vm1399, %v1049, -inf
      %1431 = vmax.xlane.f32.xlu0 %v1430
      %v1432 = vpop.xlane.xlu0 %1431
      %v1433 = vsel %vm1399, %v1054, -inf
      %1434 = vmax.xlane.f32.xlu0 %v1433
      %v1435 = vpop.xlane.xlu0 %1434
      %v1436 = vsel %vm1399, %v1059, -inf
      %1437 = vmax.xlane.f32.xlu0 %v1436
      %v1438 = vpop.xlane.xlu0 %1437
      %v1439 = vsel %vm1399, %v1064, -inf
      %1440 = vmax.xlane.f32.xlu0 %v1439
      %v1441 = vpop.xlane.xlu0 %1440
      %v1442 = vsel %vm1399, %v1069, -inf
      %1443 = vmax.xlane.f32.xlu0 %v1442
      %v1444 = vpop.xlane.xlu0 %1443
      %v1445 = vsel %vm1399, %v1074, -inf
      %1446 = vmax.xlane.f32.xlu0 %v1445
      %v1447 = vpop.xlane.xlu0 %1446
      %v1448 = vsel %vm1399, %v1200, -inf
      %1449 = vmax.xlane.f32.xlu0 %v1448
      %v1450 = vpop.xlane.xlu0 %1449
      %v1451 = vsel %vm1399, %v1205, -inf
      %1452 = vmax.xlane.f32.xlu0 %v1451
      %v1453 = vpop.xlane.xlu0 %1452
      %v1454 = vsel %vm1399, %v1210, -inf
      %1455 = vmax.xlane.f32.xlu0 %v1454
      %v1456 = vpop.xlane.xlu0 %1455
      %v1457 = vsel %vm1399, %v1215, -inf
      %1458 = vmax.xlane.f32.xlu0 %v1457
      %v1459 = vpop.xlane.xlu0 %1458
      %v1460 = vsel %vm1399, %v1220, -inf
      %1461 = vmax.xlane.f32.xlu0 %v1460
      %v1462 = vpop.xlane.xlu0 %1461
      %v1463 = vsel %vm1399, %v1225, -inf
      %1464 = vmax.xlane.f32.xlu0 %v1463
      %v1465 = vpop.xlane.xlu0 %1464
      %v1466 = vsel %vm1399, %v1230, -inf
      %1467 = vmax.xlane.f32.xlu0 %v1466
      %v1468 = vpop.xlane.xlu0 %1467
      %v1469 = vsel %vm1399, %v1235, -inf
      %1470 = vmax.xlane.f32.xlu0 %v1469
      %v1471 = vpop.xlane.xlu0 %1470
      %v1472 = vsel %vm1399, %v1361, -inf
      %1473 = vmax.xlane.f32.xlu0 %v1472
      %v1474 = vpop.xlane.xlu0 %1473
      %v1475 = vsel %vm1399, %v1366, -inf
      %1476 = vmax.xlane.f32.xlu0 %v1475
      %v1477 = vpop.xlane.xlu0 %1476
      %v1478 = vsel %vm1399, %v1371, -inf
      %1479 = vmax.xlane.f32.xlu0 %v1478
      %v1480 = vpop.xlane.xlu0 %1479
      %v1481 = vsel %vm1399, %v1376, -inf
      %1482 = vmax.xlane.f32.xlu0 %v1481
      %v1483 = vpop.xlane.xlu0 %1482
      %v1484 = vsel %vm1399, %v1381, -inf
      %1485 = vmax.xlane.f32.xlu0 %v1484
      %v1486 = vpop.xlane.xlu0 %1485
      %v1487 = vsel %vm1399, %v1386, -inf
      %1488 = vmax.xlane.f32.xlu0 %v1487
      %v1489 = vpop.xlane.xlu0 %1488
      %v1490 = vsel %vm1399, %v1391, -inf
      %1491 = vmax.xlane.f32.xlu0 %v1490
      %v1492 = vpop.xlane.xlu0 %1491
      %v1493 = vsel %vm1399, %v1396, -inf
      %1494 = vmax.xlane.f32.xlu0 %v1493
      %v1495 = vpop.xlane.xlu0 %1494
      %v1496 = vsub.f32 %v878, %v1402
      %v1497 = vsub.f32 %v883, %v1405
      %v1498 = vsub.f32 %v888, %v1408
      %v1499 = vsub.f32 %v893, %v1411
      %v1500 = vsub.f32 %v898, %v1414
      %v1501 = vsub.f32 %v903, %v1417
      %v1502 = vsub.f32 %v908, %v1420
      %v1503 = vsub.f32 %v913, %v1423
      %v1504 = vsub.f32 %v1039, %v1426
      %v1505 = vsub.f32 %v1044, %v1429
      %v1506 = vsub.f32 %v1049, %v1432
      %v1507 = vsub.f32 %v1054, %v1435
      %v1508 = vsub.f32 %v1059, %v1438
      %v1509 = vsub.f32 %v1064, %v1441
      %v1510 = vsub.f32 %v1069, %v1444
      %v1511 = vsub.f32 %v1074, %v1447
      %v1512 = vsub.f32 %v1200, %v1450
      %v1513 = vsub.f32 %v1205, %v1453
      %v1514 = vsub.f32 %v1210, %v1456
      %v1515 = vsub.f32 %v1215, %v1459
      %v1516 = vsub.f32 %v1220, %v1462
      %v1517 = vsub.f32 %v1225, %v1465
      %v1518 = vsub.f32 %v1230, %v1468
      %v1519 = vsub.f32 %v1235, %v1471
      %v1520 = vsub.f32 %v1361, %v1474
      %v1521 = vsub.f32 %v1366, %v1477
      %v1522 = vsub.f32 %v1371, %v1480
      %v1523 = vsub.f32 %v1376, %v1483
      %v1524 = vsub.f32 %v1381, %v1486
      %v1525 = vsub.f32 %v1386, %v1489
      %v1526 = vsub.f32 %v1391, %v1492
      %v1527 = vsub.f32 %v1396, %v1495
      %v1528 = vmul.f32 %v1496, 1.442695
      %v1529 = vpow.pop %v1528
      %v1530 = vmul.f32 %v1497, 1.442695
      %v1531 = vpow.pop %v1530
      %v1532 = vmul.f32 %v1498, 1.442695
      %v1533 = vpow.pop %v1532
      %v1534 = vmul.f32 %v1499, 1.442695
      %v1535 = vpow.pop %v1534
      %v1536 = vmul.f32 %v1500, 1.442695
      %v1537 = vpow.pop %v1536
      %v1538 = vmul.f32 %v1501, 1.442695
      %v1539 = vpow.pop %v1538
      %v1540 = vmul.f32 %v1502, 1.442695
      %v1541 = vpow.pop %v1540
      %v1542 = vmul.f32 %v1503, 1.442695
      %v1543 = vpow.pop %v1542
      %v1544 = vmul.f32 %v1504, 1.442695
      %v1545 = vpow.pop %v1544
      %v1546 = vmul.f32 %v1505, 1.442695
      %v1547 = vpow.pop %v1546
      %v1548 = vmul.f32 %v1506, 1.442695
      %v1549 = vpow.pop %v1548
      %v1550 = vmul.f32 %v1507, 1.442695
      %v1551 = vpow.pop %v1550
      %v1552 = vmul.f32 %v1508, 1.442695
      %v1553 = vpow.pop %v1552
      %v1554 = vmul.f32 %v1509, 1.442695
      %v1555 = vpow.pop %v1554
      %v1556 = vmul.f32 %v1510, 1.442695
      %v1557 = vpow.pop %v1556
      %v1558 = vmul.f32 %v1511, 1.442695
      %v1559 = vpow.pop %v1558
      %v1560 = vmul.f32 %v1512, 1.442695
      %v1561 = vpow.pop %v1560
      %v1562 = vmul.f32 %v1513, 1.442695
      %v1563 = vpow.pop %v1562
      %v1564 = vmul.f32 %v1514, 1.442695
      %v1565 = vpow.pop %v1564
      %v1566 = vmul.f32 %v1515, 1.442695
      %v1567 = vpow.pop %v1566
      %v1568 = vmul.f32 %v1516, 1.442695
      %v1569 = vpow.pop %v1568
      %v1570 = vmul.f32 %v1517, 1.442695
      %v1571 = vpow.pop %v1570
      %v1572 = vmul.f32 %v1518, 1.442695
      %v1573 = vpow.pop %v1572
      %v1574 = vmul.f32 %v1519, 1.442695
      %v1575 = vpow.pop %v1574
      %v1576 = vmul.f32 %v1520, 1.442695
      %v1577 = vpow.pop %v1576
      %v1578 = vmul.f32 %v1521, 1.442695
      %v1579 = vpow.pop %v1578
      %v1580 = vmul.f32 %v1522, 1.442695
      %v1581 = vpow.pop %v1580
      %v1582 = vmul.f32 %v1523, 1.442695
      %v1583 = vpow.pop %v1582
      %v1584 = vmul.f32 %v1524, 1.442695
      %v1585 = vpow.pop %v1584
      %v1586 = vmul.f32 %v1525, 1.442695
      %v1587 = vpow.pop %v1586
      %v1588 = vmul.f32 %v1526, 1.442695
      %v1589 = vpow.pop %v1588
      %v1590 = vmul.f32 %v1527, 1.442695
      %v1591 = vpow.pop %v1590
      %v1592 = vsel %vm1399, %v1529, 0.0
      %1593 = vadd.xlane.f32.xlu0 %v1592
      %v1594 = vpop.xlane.xlu0 %1593
      %v1595 = vsel %vm1399, %v1531, 0.0
      %1596 = vadd.xlane.f32.xlu0 %v1595
      %v1597 = vpop.xlane.xlu0 %1596
      %v1598 = vsel %vm1399, %v1533, 0.0
      %1599 = vadd.xlane.f32.xlu0 %v1598
      %v1600 = vpop.xlane.xlu0 %1599
      %v1601 = vsel %vm1399, %v1535, 0.0
      %1602 = vadd.xlane.f32.xlu0 %v1601
      %v1603 = vpop.xlane.xlu0 %1602
      %v1604 = vsel %vm1399, %v1537, 0.0
      %1605 = vadd.xlane.f32.xlu0 %v1604
      %v1606 = vpop.xlane.xlu0 %1605
      %v1607 = vsel %vm1399, %v1539, 0.0
      %1608 = vadd.xlane.f32.xlu0 %v1607
      %v1609 = vpop.xlane.xlu0 %1608
      %v1610 = vsel %vm1399, %v1541, 0.0
      %1611 = vadd.xlane.f32.xlu0 %v1610
      %v1612 = vpop.xlane.xlu0 %1611
      %v1613 = vsel %vm1399, %v1543, 0.0
      %1614 = vadd.xlane.f32.xlu0 %v1613
      %v1615 = vpop.xlane.xlu0 %1614
      %v1616 = vsel %vm1399, %v1545, 0.0
      %1617 = vadd.xlane.f32.xlu0 %v1616
      %v1618 = vpop.xlane.xlu0 %1617
      %v1619 = vsel %vm1399, %v1547, 0.0
      %1620 = vadd.xlane.f32.xlu0 %v1619
      %v1621 = vpop.xlane.xlu0 %1620
      %v1622 = vsel %vm1399, %v1549, 0.0
      %1623 = vadd.xlane.f32.xlu0 %v1622
      %v1624 = vpop.xlane.xlu0 %1623
      %v1625 = vsel %vm1399, %v1551, 0.0
      %1626 = vadd.xlane.f32.xlu0 %v1625
      %v1627 = vpop.xlane.xlu0 %1626
      %v1628 = vsel %vm1399, %v1553, 0.0
      %1629 = vadd.xlane.f32.xlu0 %v1628
      %v1630 = vpop.xlane.xlu0 %1629
      %v1631 = vsel %vm1399, %v1555, 0.0
      %1632 = vadd.xlane.f32.xlu0 %v1631
      %v1633 = vpop.xlane.xlu0 %1632
      %v1634 = vsel %vm1399, %v1557, 0.0
      %1635 = vadd.xlane.f32.xlu0 %v1634
      %v1636 = vpop.xlane.xlu0 %1635
      %v1637 = vsel %vm1399, %v1559, 0.0
      %1638 = vadd.xlane.f32.xlu0 %v1637
      %v1639 = vpop.xlane.xlu0 %1638
      %v1640 = vsel %vm1399, %v1561, 0.0
      %1641 = vadd.xlane.f32.xlu0 %v1640
      %v1642 = vpop.xlane.xlu0 %1641
      %v1643 = vsel %vm1399, %v1563, 0.0
      %1644 = vadd.xlane.f32.xlu0 %v1643
      %v1645 = vpop.xlane.xlu0 %1644
      %v1646 = vsel %vm1399, %v1565, 0.0
      %1647 = vadd.xlane.f32.xlu0 %v1646
      %v1648 = vpop.xlane.xlu0 %1647
      %v1649 = vsel %vm1399, %v1567, 0.0
      %1650 = vadd.xlane.f32.xlu0 %v1649
      %v1651 = vpop.xlane.xlu0 %1650
      %v1652 = vsel %vm1399, %v1569, 0.0
      %1653 = vadd.xlane.f32.xlu0 %v1652
      %v1654 = vpop.xlane.xlu0 %1653
      %v1655 = vsel %vm1399, %v1571, 0.0
      %1656 = vadd.xlane.f32.xlu0 %v1655
      %v1657 = vpop.xlane.xlu0 %1656
      %v1658 = vsel %vm1399, %v1573, 0.0
      %1659 = vadd.xlane.f32.xlu0 %v1658
      %v1660 = vpop.xlane.xlu0 %1659
      %v1661 = vsel %vm1399, %v1575, 0.0
      %1662 = vadd.xlane.f32.xlu0 %v1661
      %v1663 = vpop.xlane.xlu0 %1662
      %v1664 = vsel %vm1399, %v1577, 0.0
      %1665 = vadd.xlane.f32.xlu0 %v1664
      %v1666 = vpop.xlane.xlu0 %1665
      %v1667 = vsel %vm1399, %v1579, 0.0
      %1668 = vadd.xlane.f32.xlu0 %v1667
      %v1669 = vpop.xlane.xlu0 %1668
      %v1670 = vsel %vm1399, %v1581, 0.0
      %1671 = vadd.xlane.f32.xlu0 %v1670
      %v1672 = vpop.xlane.xlu0 %1671
      %v1673 = vsel %vm1399, %v1583, 0.0
      %1674 = vadd.xlane.f32.xlu0 %v1673
      %v1675 = vpop.xlane.xlu0 %1674
      %v1676 = vsel %vm1399, %v1585, 0.0
      %1677 = vadd.xlane.f32.xlu0 %v1676
      %v1678 = vpop.xlane.xlu0 %1677
      %v1679 = vsel %vm1399, %v1587, 0.0
      %1680 = vadd.xlane.f32.xlu0 %v1679
      %v1681 = vpop.xlane.xlu0 %1680
      %v1682 = vsel %vm1399, %v1589, 0.0
      %1683 = vadd.xlane.f32.xlu0 %v1682
      %v1684 = vpop.xlane.xlu0 %1683
      %v1685 = vsel %vm1399, %v1591, 0.0
      %1686 = vadd.xlane.f32.xlu0 %v1685
      %v1687 = vpop.xlane.xlu0 %1686
      %v1688 = vrcp.pop %v1594
      %v1689 = vrcp.pop %v1597
      %v1690 = vrcp.pop %v1600
      %v1691 = vrcp.pop %v1603
      %v1692 = vrcp.pop %v1606
      %v1693 = vrcp.pop %v1609
      %v1694 = vrcp.pop %v1612
      %v1695 = vrcp.pop %v1615
      %v1696 = vrcp.pop %v1618
      %v1697 = vrcp.pop %v1621
      %v1698 = vrcp.pop %v1624
      %v1699 = vrcp.pop %v1627
      %v1700 = vrcp.pop %v1630
      %v1701 = vrcp.pop %v1633
      %v1702 = vrcp.pop %v1636
      %v1703 = vrcp.pop %v1639
      %v1704 = vrcp.pop %v1642
      %v1705 = vrcp.pop %v1645
      %v1706 = vrcp.pop %v1648
      %v1707 = vrcp.pop %v1651
      %v1708 = vrcp.pop %v1654
      %v1709 = vrcp.pop %v1657
      %v1710 = vrcp.pop %v1660
      %v1711 = vrcp.pop %v1663
      %v1712 = vrcp.pop %v1666
      %v1713 = vrcp.pop %v1669
      %v1714 = vrcp.pop %v1672
      %v1715 = vrcp.pop %v1675
      %v1716 = vrcp.pop %v1678
      %v1717 = vrcp.pop %v1681
      %v1718 = vrcp.pop %v1684
      %v1719 = vrcp.pop %v1687
      %v1720 = vmul.f32 %v1529, %v1688
      %v1721 = vmul.f32 %v1531, %v1689
      %v1722 = vmul.f32 %v1533, %v1690
      %v1723 = vmul.f32 %v1535, %v1691
      %v1724 = vmul.f32 %v1537, %v1692
      %v1725 = vmul.f32 %v1539, %v1693
      %v1726 = vmul.f32 %v1541, %v1694
      %v1727 = vmul.f32 %v1543, %v1695
      %v1728 = vmul.f32 %v1545, %v1696
      %v1729 = vmul.f32 %v1547, %v1697
      %v1730 = vmul.f32 %v1549, %v1698
      %v1731 = vmul.f32 %v1551, %v1699
      %v1732 = vmul.f32 %v1553, %v1700
      %v1733 = vmul.f32 %v1555, %v1701
      %v1734 = vmul.f32 %v1557, %v1702
      %v1735 = vmul.f32 %v1559, %v1703
      %v1736 = vmul.f32 %v1561, %v1704
      %v1737 = vmul.f32 %v1563, %v1705
      %v1738 = vmul.f32 %v1565, %v1706
      %v1739 = vmul.f32 %v1567, %v1707
      %v1740 = vmul.f32 %v1569, %v1708
      %v1741 = vmul.f32 %v1571, %v1709
      %v1742 = vmul.f32 %v1573, %v1710
      %v1743 = vmul.f32 %v1575, %v1711
      %v1744 = vmul.f32 %v1577, %v1712
      %v1745 = vmul.f32 %v1579, %v1713
      %v1746 = vmul.f32 %v1581, %v1714
      %v1747 = vmul.f32 %v1583, %v1715
      %v1748 = vmul.f32 %v1585, %v1716
      %v1749 = vmul.f32 %v1587, %v1717
      %v1750 = vmul.f32 %v1589, %v1718
      %v1751 = vmul.f32 %v1591, %v1719
      %1752 = vrot.lane.b32.xlu0 %v714, 64
      %v1753 = vpop.permute.xlu0 %1752
      %1754 = vrot.lane.b32.xlu0 %v715, 64
      %v1755 = vpop.permute.xlu0 %1754
      %1756 = vrot.lane.b32.xlu0 %v716, 64
      %v1757 = vpop.permute.xlu0 %1756
      %1758 = vrot.lane.b32.xlu0 %v717, 64
      %v1759 = vpop.permute.xlu0 %1758
      %1760 = vrot.lane.b32.xlu0 %v718, 64
      %v1761 = vpop.permute.xlu0 %1760
      %1762 = vrot.lane.b32.xlu0 %v719, 64
      %v1763 = vpop.permute.xlu0 %1762
      %1764 = vrot.lane.b32.xlu0 %v720, 64
      %v1765 = vpop.permute.xlu0 %1764
      %1766 = vrot.lane.b32.xlu0 %v721, 64
      %v1767 = vpop.permute.xlu0 %1766
      %v1777 = vsel %vm1399, %v1720, 0
      %v1780 = vsel %vm1399, %v1721, 0
      %v1783 = vsel %vm1399, %v1722, 0
      %v1786 = vsel %vm1399, %v1723, 0
      %v1789 = vsel %vm1399, %v1724, 0
      %v1792 = vsel %vm1399, %v1725, 0
      %v1795 = vsel %vm1399, %v1726, 0
      %v1798 = vsel %vm1399, %v1727, 0
      %1800 = vmatprep.subr.mxu0 0.0
      %1801 = vmatpush1.msra.mxu0 0.0
      %1802 = vmatprep.subr.mxu0 0.0
      %1803 = vmatpush1.msra.mxu0 0.0
      %1804 = vmatprep.subr.mxu0 0.0
      %1805 = vmatpush1.msra.mxu0 0.0
      %1806 = vmatprep.subr.mxu0 0.0
      %1807 = vmatpush1.msra.mxu0 0.0
      %1808 = vmatprep.subr.mxu0 0.0
      %1809 = vmatpush1.msra.mxu0 0.0
      %1810 = vmatprep.subr.mxu0 0.0
      %1811 = vmatpush1.msra.mxu0 0.0
      %1812 = vmatprep.subr.mxu0 0.0
      %1813 = vmatpush1.msra.mxu0 0.0
      %1814 = vmatprep.subr.mxu0 0.0
      %1815 = vmatpush1.msra.mxu0 0.0
      %1816 = vmatprep.subr.mxu0 0.0
      %1817 = vmatpush1.msra.mxu0 %v1767
      %1818 = vmatprep.subr.mxu0 0.0
      %1819 = vmatpush1.msra.mxu0 %v1765
      %1820 = vmatprep.subr.mxu0 0.0
      %1821 = vmatpush1.msra.mxu0 %v1763
      %1822 = vmatprep.subr.mxu0 0.0
      %1823 = vmatpush1.msra.mxu0 %v1761
      %1824 = vmatprep.subr.mxu0 0.0
      %1825 = vmatpush1.msra.mxu0 %v1759
      %1826 = vmatprep.subr.mxu0 0.0
      %1827 = vmatpush1.msra.mxu0 %v1757
      %1828 = vmatprep.subr.mxu0 0.0
      %1829 = vmatpush1.msra.mxu0 %v1755
      %1830 = vmatprep.subr.mxu0 0.0
      %1831 = vmatpush1.msra.mxu0 %v1753
      %1832 = vmatprep.subr.mxu0 0.0
      %1833 = vmatpush2.msra.mxu0 0.0
      %1834 = vmatprep.subr.mxu0 0.0
      %1835 = vmatpush2.msra.mxu0 0.0
      %1836 = vmatprep.subr.mxu0 0.0
      %1837 = vmatpush2.msra.mxu0 0.0
      %1838 = vmatprep.subr.mxu0 0.0
      %1839 = vmatpush2.msra.mxu0 0.0
      %1840 = vmatprep.subr.mxu0 0.0
      %1841 = vmatpush2.msra.mxu0 0.0
      %1842 = vmatprep.subr.mxu0 0.0
      %1843 = vmatpush2.msra.mxu0 0.0
      %1844 = vmatprep.subr.mxu0 0.0
      %1845 = vmatpush2.msra.mxu0 0.0
      %1846 = vmatprep.subr.mxu0 0.0
      %1847 = vmatpush2.msra.mxu0 0.0
      %1848 = vmatprep.subr.mxu0 0.0
      %1849 = vmatpush2.msra.mxu0 0.0
      %1850 = vmatprep.subr.mxu0 0.0
      %1851 = vmatpush2.msra.mxu0 0.0
      %1852 = vmatprep.subr.mxu0 0.0
      %1853 = vmatpush2.msra.mxu0 0.0
      %1854 = vmatprep.subr.mxu0 0.0
      %1855 = vmatpush2.msra.mxu0 0.0
      %1856 = vmatprep.subr.mxu0 0.0
      %1857 = vmatpush2.msra.mxu0 0.0
      %1858 = vmatprep.subr.mxu0 0.0
      %1859 = vmatpush2.msra.mxu0 0.0
      %1860 = vmatprep.subr.mxu0 0.0
      %1861 = vmatpush2.msra.mxu0 0.0
      %1862 = vmatprep.subr.mxu0 0.0
      %1863 = vmatpush2.msra.mxu0 0.0
      %1864 = vmatprep.mubr.f32.mxu0 0.0
      %1865 = vmatmul.mubr.f32.gmra.mxu0 %v1777
      %v1866 = vpop.f32.mrf.mxu0
      %v1867 = vadd.f32 0.0, %v1866
      %v1868 = vpop.f32.mrf.mxu0
      %1869 = vmatprep.mubr.f32.mxu0 0.0
      %1870 = vmatmul.mubr.f32.gmra.mxu0 %v1780
      %v1871 = vpop.f32.mrf.mxu0
      %v1872 = vadd.f32 0.0, %v1871
      %v1873 = vpop.f32.mrf.mxu0
      %1874 = vmatprep.mubr.f32.mxu0 0.0
      %1875 = vmatmul.mubr.f32.gmra.mxu0 %v1783
      %v1876 = vpop.f32.mrf.mxu0
      %v1877 = vadd.f32 0.0, %v1876
      %v1878 = vpop.f32.mrf.mxu0
      %1879 = vmatprep.mubr.f32.mxu0 0.0
      %1880 = vmatmul.mubr.f32.gmra.mxu0 %v1786
      %v1881 = vpop.f32.mrf.mxu0
      %v1882 = vadd.f32 0.0, %v1881
      %v1883 = vpop.f32.mrf.mxu0
      %1884 = vmatprep.mubr.f32.mxu0 0.0
      %1885 = vmatmul.mubr.f32.gmra.mxu0 %v1789
      %v1886 = vpop.f32.mrf.mxu0
      %v1887 = vadd.f32 0.0, %v1886
      %v1888 = vpop.f32.mrf.mxu0
      %1889 = vmatprep.mubr.f32.mxu0 0.0
      %1890 = vmatmul.mubr.f32.gmra.mxu0 %v1792
      %v1891 = vpop.f32.mrf.mxu0
      %v1892 = vadd.f32 0.0, %v1891
      %v1893 = vpop.f32.mrf.mxu0
      %1894 = vmatprep.mubr.f32.mxu0 0.0
      %1895 = vmatmul.mubr.f32.gmra.mxu0 %v1795
      %v1896 = vpop.f32.mrf.mxu0
      %v1897 = vadd.f32 0.0, %v1896
      %v1898 = vpop.f32.mrf.mxu0
      %1899 = vmatprep.mubr.f32.mxu0 0.0
      %1900 = vmatmul.mubr.f32.gmra.mxu0 %v1798
      %v1901 = vpop.f32.mrf.mxu0
      %v1902 = vadd.f32 0.0, %v1901
      %v1903 = vpop.f32.mrf.mxu0
      %1904 = vdwg.mxu0
      %1905 = vrot.lane.b32.xlu0 %v722, 64
      %v1906 = vpop.permute.xlu0 %1905
      %1907 = vrot.lane.b32.xlu0 %v723, 64
      %v1908 = vpop.permute.xlu0 %1907
      %1909 = vrot.lane.b32.xlu0 %v724, 64
      %v1910 = vpop.permute.xlu0 %1909
      %1911 = vrot.lane.b32.xlu0 %v725, 64
      %v1912 = vpop.permute.xlu0 %1911
      %1913 = vrot.lane.b32.xlu0 %v726, 64
      %v1914 = vpop.permute.xlu0 %1913
      %1915 = vrot.lane.b32.xlu0 %v727, 64
      %v1916 = vpop.permute.xlu0 %1915
      %1917 = vrot.lane.b32.xlu0 %v728, 64
      %v1918 = vpop.permute.xlu0 %1917
      %1919 = vrot.lane.b32.xlu0 %v729, 64
      %v1920 = vpop.permute.xlu0 %1919
      %v1930 = vsel %vm1399, %v1728, 0
      %v1933 = vsel %vm1399, %v1729, 0
      %v1936 = vsel %vm1399, %v1730, 0
      %v1939 = vsel %vm1399, %v1731, 0
      %v1942 = vsel %vm1399, %v1732, 0
      %v1945 = vsel %vm1399, %v1733, 0
      %v1948 = vsel %vm1399, %v1734, 0
      %v1951 = vsel %vm1399, %v1735, 0
      %1953 = vmatprep.subr.mxu0 0.0
      %1954 = vmatpush1.msra.mxu0 0.0
      %1955 = vmatprep.subr.mxu0 0.0
      %1956 = vmatpush1.msra.mxu0 0.0
      %1957 = vmatprep.subr.mxu0 0.0
      %1958 = vmatpush1.msra.mxu0 0.0
      %1959 = vmatprep.subr.mxu0 0.0
      %1960 = vmatpush1.msra.mxu0 0.0
      %1961 = vmatprep.subr.mxu0 0.0
      %1962 = vmatpush1.msra.mxu0 0.0
      %1963 = vmatprep.subr.mxu0 0.0
      %1964 = vmatpush1.msra.mxu0 0.0
      %1965 = vmatprep.subr.mxu0 0.0
      %1966 = vmatpush1.msra.mxu0 0.0
      %1967 = vmatprep.subr.mxu0 0.0
      %1968 = vmatpush1.msra.mxu0 0.0
      %1969 = vmatprep.subr.mxu0 0.0
      %1970 = vmatpush1.msra.mxu0 %v1920
      %1971 = vmatprep.subr.mxu0 0.0
      %1972 = vmatpush1.msra.mxu0 %v1918
      %1973 = vmatprep.subr.mxu0 0.0
      %1974 = vmatpush1.msra.mxu0 %v1916
      %1975 = vmatprep.subr.mxu0 0.0
      %1976 = vmatpush1.msra.mxu0 %v1914
      %1977 = vmatprep.subr.mxu0 0.0
      %1978 = vmatpush1.msra.mxu0 %v1912
      %1979 = vmatprep.subr.mxu0 0.0
      %1980 = vmatpush1.msra.mxu0 %v1910
      %1981 = vmatprep.subr.mxu0 0.0
      %1982 = vmatpush1.msra.mxu0 %v1908
      %1983 = vmatprep.subr.mxu0 0.0
      %1984 = vmatpush1.msra.mxu0 %v1906
      %1985 = vmatprep.subr.mxu0 0.0
      %1986 = vmatpush2.msra.mxu0 0.0
      %1987 = vmatprep.subr.mxu0 0.0
      %1988 = vmatpush2.msra.mxu0 0.0
      %1989 = vmatprep.subr.mxu0 0.0
      %1990 = vmatpush2.msra.mxu0 0.0
      %1991 = vmatprep.subr.mxu0 0.0
      %1992 = vmatpush2.msra.mxu0 0.0
      %1993 = vmatprep.subr.mxu0 0.0
      %1994 = vmatpush2.msra.mxu0 0.0
      %1995 = vmatprep.subr.mxu0 0.0
      %1996 = vmatpush2.msra.mxu0 0.0
      %1997 = vmatprep.subr.mxu0 0.0
      %1998 = vmatpush2.msra.mxu0 0.0
      %1999 = vmatprep.subr.mxu0 0.0
      %2000 = vmatpush2.msra.mxu0 0.0
      %2001 = vmatprep.subr.mxu0 0.0
      %2002 = vmatpush2.msra.mxu0 0.0
      %2003 = vmatprep.subr.mxu0 0.0
      %2004 = vmatpush2.msra.mxu0 0.0
      %2005 = vmatprep.subr.mxu0 0.0
      %2006 = vmatpush2.msra.mxu0 0.0
      %2007 = vmatprep.subr.mxu0 0.0
      %2008 = vmatpush2.msra.mxu0 0.0
      %2009 = vmatprep.subr.mxu0 0.0
      %2010 = vmatpush2.msra.mxu0 0.0
      %2011 = vmatprep.subr.mxu0 0.0
      %2012 = vmatpush2.msra.mxu0 0.0
      %2013 = vmatprep.subr.mxu0 0.0
      %2014 = vmatpush2.msra.mxu0 0.0
      %2015 = vmatprep.subr.mxu0 0.0
      %2016 = vmatpush2.msra.mxu0 0.0
      %2017 = vmatprep.mubr.f32.mxu0 0.0
      %2018 = vmatmul.mubr.f32.gmra.mxu0 %v1930
      %v2019 = vpop.f32.mrf.mxu0
      %v2020 = vadd.f32 0.0, %v2019
      %v2021 = vpop.f32.mrf.mxu0
      %2022 = vmatprep.mubr.f32.mxu0 0.0
      %2023 = vmatmul.mubr.f32.gmra.mxu0 %v1933
      %v2024 = vpop.f32.mrf.mxu0
      %v2025 = vadd.f32 0.0, %v2024
      %v2026 = vpop.f32.mrf.mxu0
      %2027 = vmatprep.mubr.f32.mxu0 0.0
      %2028 = vmatmul.mubr.f32.gmra.mxu0 %v1936
      %v2029 = vpop.f32.mrf.mxu0
      %v2030 = vadd.f32 0.0, %v2029
      %v2031 = vpop.f32.mrf.mxu0
      %2032 = vmatprep.mubr.f32.mxu0 0.0
      %2033 = vmatmul.mubr.f32.gmra.mxu0 %v1939
      %v2034 = vpop.f32.mrf.mxu0
      %v2035 = vadd.f32 0.0, %v2034
      %v2036 = vpop.f32.mrf.mxu0
      %2037 = vmatprep.mubr.f32.mxu0 0.0
      %2038 = vmatmul.mubr.f32.gmra.mxu0 %v1942
      %v2039 = vpop.f32.mrf.mxu0
      %v2040 = vadd.f32 0.0, %v2039
      %v2041 = vpop.f32.mrf.mxu0
      %2042 = vmatprep.mubr.f32.mxu0 0.0
      %2043 = vmatmul.mubr.f32.gmra.mxu0 %v1945
      %v2044 = vpop.f32.mrf.mxu0
      %v2045 = vadd.f32 0.0, %v2044
      %v2046 = vpop.f32.mrf.mxu0
      %2047 = vmatprep.mubr.f32.mxu0 0.0
      %2048 = vmatmul.mubr.f32.gmra.mxu0 %v1948
      %v2049 = vpop.f32.mrf.mxu0
      %v2050 = vadd.f32 0.0, %v2049
      %v2051 = vpop.f32.mrf.mxu0
      %2052 = vmatprep.mubr.f32.mxu0 0.0
      %2053 = vmatmul.mubr.f32.gmra.mxu0 %v1951
      %v2054 = vpop.f32.mrf.mxu0
      %v2055 = vadd.f32 0.0, %v2054
      %v2056 = vpop.f32.mrf.mxu0
      %2057 = vdwg.mxu0
      %2058 = vrot.lane.b32.xlu0 %v730, 64
      %v2059 = vpop.permute.xlu0 %2058
      %2060 = vrot.lane.b32.xlu0 %v731, 64
      %v2061 = vpop.permute.xlu0 %2060
      %2062 = vrot.lane.b32.xlu0 %v732, 64
      %v2063 = vpop.permute.xlu0 %2062
      %2064 = vrot.lane.b32.xlu0 %v733, 64
      %v2065 = vpop.permute.xlu0 %2064
      %2066 = vrot.lane.b32.xlu0 %v734, 64
      %v2067 = vpop.permute.xlu0 %2066
      %2068 = vrot.lane.b32.xlu0 %v735, 64
      %v2069 = vpop.permute.xlu0 %2068
      %2070 = vrot.lane.b32.xlu0 %v736, 64
      %v2071 = vpop.permute.xlu0 %2070
      %2072 = vrot.lane.b32.xlu0 %v737, 64
      %v2073 = vpop.permute.xlu0 %2072
      %v2083 = vsel %vm1399, %v1736, 0
      %v2086 = vsel %vm1399, %v1737, 0
      %v2089 = vsel %vm1399, %v1738, 0
      %v2092 = vsel %vm1399, %v1739, 0
      %v2095 = vsel %vm1399, %v1740, 0
      %v2098 = vsel %vm1399, %v1741, 0
      %v2101 = vsel %vm1399, %v1742, 0
      %v2104 = vsel %vm1399, %v1743, 0
      %2106 = vmatprep.subr.mxu0 0.0
      %2107 = vmatpush1.msra.mxu0 0.0
      %2108 = vmatprep.subr.mxu0 0.0
      %2109 = vmatpush1.msra.mxu0 0.0
      %2110 = vmatprep.subr.mxu0 0.0
      %2111 = vmatpush1.msra.mxu0 0.0
      %2112 = vmatprep.subr.mxu0 0.0
      %2113 = vmatpush1.msra.mxu0 0.0
      %2114 = vmatprep.subr.mxu0 0.0
      %2115 = vmatpush1.msra.mxu0 0.0
      %2116 = vmatprep.subr.mxu0 0.0
      %2117 = vmatpush1.msra.mxu0 0.0
      %2118 = vmatprep.subr.mxu0 0.0
      %2119 = vmatpush1.msra.mxu0 0.0
      %2120 = vmatprep.subr.mxu0 0.0
      %2121 = vmatpush1.msra.mxu0 0.0
      %2122 = vmatprep.subr.mxu0 0.0
      %2123 = vmatpush1.msra.mxu0 %v2073
      %2124 = vmatprep.subr.mxu0 0.0
      %2125 = vmatpush1.msra.mxu0 %v2071
      %2126 = vmatprep.subr.mxu0 0.0
      %2127 = vmatpush1.msra.mxu0 %v2069
      %2128 = vmatprep.subr.mxu0 0.0
      %2129 = vmatpush1.msra.mxu0 %v2067
      %2130 = vmatprep.subr.mxu0 0.0
      %2131 = vmatpush1.msra.mxu0 %v2065
      %2132 = vmatprep.subr.mxu0 0.0
      %2133 = vmatpush1.msra.mxu0 %v2063
      %2134 = vmatprep.subr.mxu0 0.0
      %2135 = vmatpush1.msra.mxu0 %v2061
      %2136 = vmatprep.subr.mxu0 0.0
      %2137 = vmatpush1.msra.mxu0 %v2059
      %2138 = vmatprep.subr.mxu0 0.0
      %2139 = vmatpush2.msra.mxu0 0.0
      %2140 = vmatprep.subr.mxu0 0.0
      %2141 = vmatpush2.msra.mxu0 0.0
      %2142 = vmatprep.subr.mxu0 0.0
      %2143 = vmatpush2.msra.mxu0 0.0
      %2144 = vmatprep.subr.mxu0 0.0
      %2145 = vmatpush2.msra.mxu0 0.0
      %2146 = vmatprep.subr.mxu0 0.0
      %2147 = vmatpush2.msra.mxu0 0.0
      %2148 = vmatprep.subr.mxu0 0.0
      %2149 = vmatpush2.msra.mxu0 0.0
      %2150 = vmatprep.subr.mxu0 0.0
      %2151 = vmatpush2.msra.mxu0 0.0
      %2152 = vmatprep.subr.mxu0 0.0
      %2153 = vmatpush2.msra.mxu0 0.0
      %2154 = vmatprep.subr.mxu0 0.0
      %2155 = vmatpush2.msra.mxu0 0.0
      %2156 = vmatprep.subr.mxu0 0.0
      %2157 = vmatpush2.msra.mxu0 0.0
      %2158 = vmatprep.subr.mxu0 0.0
      %2159 = vmatpush2.msra.mxu0 0.0
      %2160 = vmatprep.subr.mxu0 0.0
      %2161 = vmatpush2.msra.mxu0 0.0
      %2162 = vmatprep.subr.mxu0 0.0
      %2163 = vmatpush2.msra.mxu0 0.0
      %2164 = vmatprep.subr.mxu0 0.0
      %2165 = vmatpush2.msra.mxu0 0.0
      %2166 = vmatprep.subr.mxu0 0.0
      %2167 = vmatpush2.msra.mxu0 0.0
      %2168 = vmatprep.subr.mxu0 0.0
      %2169 = vmatpush2.msra.mxu0 0.0
      %2170 = vmatprep.mubr.f32.mxu0 0.0
      %2171 = vmatmul.mubr.f32.gmra.mxu0 %v2083
      %v2172 = vpop.f32.mrf.mxu0
      %v2173 = vadd.f32 0.0, %v2172
      %v2174 = vpop.f32.mrf.mxu0
      %2175 = vmatprep.mubr.f32.mxu0 0.0
      %2176 = vmatmul.mubr.f32.gmra.mxu0 %v2086
      %v2177 = vpop.f32.mrf.mxu0
      %v2178 = vadd.f32 0.0, %v2177
      %v2179 = vpop.f32.mrf.mxu0
      %2180 = vmatprep.mubr.f32.mxu0 0.0
      %2181 = vmatmul.mubr.f32.gmra.mxu0 %v2089
      %v2182 = vpop.f32.mrf.mxu0
      %v2183 = vadd.f32 0.0, %v2182
      %v2184 = vpop.f32.mrf.mxu0
      %2185 = vmatprep.mubr.f32.mxu0 0.0
      %2186 = vmatmul.mubr.f32.gmra.mxu0 %v2092
      %v2187 = vpop.f32.mrf.mxu0
      %v2188 = vadd.f32 0.0, %v2187
      %v2189 = vpop.f32.mrf.mxu0
      %2190 = vmatprep.mubr.f32.mxu0 0.0
      %2191 = vmatmul.mubr.f32.gmra.mxu0 %v2095
      %v2192 = vpop.f32.mrf.mxu0
      %v2193 = vadd.f32 0.0, %v2192
      %v2194 = vpop.f32.mrf.mxu0
      %2195 = vmatprep.mubr.f32.mxu0 0.0
      %2196 = vmatmul.mubr.f32.gmra.mxu0 %v2098
      %v2197 = vpop.f32.mrf.mxu0
      %v2198 = vadd.f32 0.0, %v2197
      %v2199 = vpop.f32.mrf.mxu0
      %2200 = vmatprep.mubr.f32.mxu0 0.0
      %2201 = vmatmul.mubr.f32.gmra.mxu0 %v2101
      %v2202 = vpop.f32.mrf.mxu0
      %v2203 = vadd.f32 0.0, %v2202
      %v2204 = vpop.f32.mrf.mxu0
      %2205 = vmatprep.mubr.f32.mxu0 0.0
      %2206 = vmatmul.mubr.f32.gmra.mxu0 %v2104
      %v2207 = vpop.f32.mrf.mxu0
      %v2208 = vadd.f32 0.0, %v2207
      %v2209 = vpop.f32.mrf.mxu0
      %2210 = vdwg.mxu0
      %2211 = vrot.lane.b32.xlu0 %v738, 64
      %v2212 = vpop.permute.xlu0 %2211
      %2213 = vrot.lane.b32.xlu0 %v739, 64
      %v2214 = vpop.permute.xlu0 %2213
      %2215 = vrot.lane.b32.xlu0 %v740, 64
      %v2216 = vpop.permute.xlu0 %2215
      %2217 = vrot.lane.b32.xlu0 %v741, 64
      %v2218 = vpop.permute.xlu0 %2217
      %2219 = vrot.lane.b32.xlu0 %v742, 64
      %v2220 = vpop.permute.xlu0 %2219
      %2221 = vrot.lane.b32.xlu0 %v743, 64
      %v2222 = vpop.permute.xlu0 %2221
      %2223 = vrot.lane.b32.xlu0 %v744, 64
      %v2224 = vpop.permute.xlu0 %2223
      %2225 = vrot.lane.b32.xlu0 %v745, 64
      %v2226 = vpop.permute.xlu0 %2225
      %v2236 = vsel %vm1399, %v1744, 0
      %v2239 = vsel %vm1399, %v1745, 0
      %v2242 = vsel %vm1399, %v1746, 0
      %v2245 = vsel %vm1399, %v1747, 0
      %v2248 = vsel %vm1399, %v1748, 0
      %v2251 = vsel %vm1399, %v1749, 0
      %v2254 = vsel %vm1399, %v1750, 0
      %v2257 = vsel %vm1399, %v1751, 0
      %2259 = vmatprep.subr.mxu0 0.0
      %2260 = vmatpush1.msra.mxu0 0.0
      %2261 = vmatprep.subr.mxu0 0.0
      %2262 = vmatpush1.msra.mxu0 0.0
      %2263 = vmatprep.subr.mxu0 0.0
      %2264 = vmatpush1.msra.mxu0 0.0
      %2265 = vmatprep.subr.mxu0 0.0
      %2266 = vmatpush1.msra.mxu0 0.0
      %2267 = vmatprep.subr.mxu0 0.0
      %2268 = vmatpush1.msra.mxu0 0.0
      %2269 = vmatprep.subr.mxu0 0.0
      %2270 = vmatpush1.msra.mxu0 0.0
      %2271 = vmatprep.subr.mxu0 0.0
      %2272 = vmatpush1.msra.mxu0 0.0
      %2273 = vmatprep.subr.mxu0 0.0
      %2274 = vmatpush1.msra.mxu0 0.0
      %2275 = vmatprep.subr.mxu0 0.0
      %2276 = vmatpush1.msra.mxu0 %v2226
      %2277 = vmatprep.subr.mxu0 0.0
      %2278 = vmatpush1.msra.mxu0 %v2224
      %2279 = vmatprep.subr.mxu0 0.0
      %2280 = vmatpush1.msra.mxu0 %v2222
      %2281 = vmatprep.subr.mxu0 0.0
      %2282 = vmatpush1.msra.mxu0 %v2220
      %2283 = vmatprep.subr.mxu0 0.0
      %2284 = vmatpush1.msra.mxu0 %v2218
      %2285 = vmatprep.subr.mxu0 0.0
      %2286 = vmatpush1.msra.mxu0 %v2216
      %2287 = vmatprep.subr.mxu0 0.0
      %2288 = vmatpush1.msra.mxu0 %v2214
      %2289 = vmatprep.subr.mxu0 0.0
      %2290 = vmatpush1.msra.mxu0 %v2212
      %2291 = vmatprep.subr.mxu0 0.0
      %2292 = vmatpush2.msra.mxu0 0.0
      %2293 = vmatprep.subr.mxu0 0.0
      %2294 = vmatpush2.msra.mxu0 0.0
      %2295 = vmatprep.subr.mxu0 0.0
      %2296 = vmatpush2.msra.mxu0 0.0
      %2297 = vmatprep.subr.mxu0 0.0
      %2298 = vmatpush2.msra.mxu0 0.0
      %2299 = vmatprep.subr.mxu0 0.0
      %2300 = vmatpush2.msra.mxu0 0.0
      %2301 = vmatprep.subr.mxu0 0.0
      %2302 = vmatpush2.msra.mxu0 0.0
      %2303 = vmatprep.subr.mxu0 0.0
      %2304 = vmatpush2.msra.mxu0 0.0
      %2305 = vmatprep.subr.mxu0 0.0
      %2306 = vmatpush2.msra.mxu0 0.0
      %2307 = vmatprep.subr.mxu0 0.0
      %2308 = vmatpush2.msra.mxu0 0.0
      %2309 = vmatprep.subr.mxu0 0.0
      %2310 = vmatpush2.msra.mxu0 0.0
      %2311 = vmatprep.subr.mxu0 0.0
      %2312 = vmatpush2.msra.mxu0 0.0
      %2313 = vmatprep.subr.mxu0 0.0
      %2314 = vmatpush2.msra.mxu0 0.0
      %2315 = vmatprep.subr.mxu0 0.0
      %2316 = vmatpush2.msra.mxu0 0.0
      %2317 = vmatprep.subr.mxu0 0.0
      %2318 = vmatpush2.msra.mxu0 0.0
      %2319 = vmatprep.subr.mxu0 0.0
      %2320 = vmatpush2.msra.mxu0 0.0
      %2321 = vmatprep.subr.mxu0 0.0
      %2322 = vmatpush2.msra.mxu0 0.0
      %2323 = vmatprep.mubr.f32.mxu0 0.0
      %2324 = vmatmul.mubr.f32.gmra.mxu0 %v2236
      %v2325 = vpop.f32.mrf.mxu0
      %v2326 = vadd.f32 0.0, %v2325
      %v2327 = vpop.f32.mrf.mxu0
      %2328 = vmatprep.mubr.f32.mxu0 0.0
      %2329 = vmatmul.mubr.f32.gmra.mxu0 %v2239
      %v2330 = vpop.f32.mrf.mxu0
      %v2331 = vadd.f32 0.0, %v2330
      %v2332 = vpop.f32.mrf.mxu0
      %2333 = vmatprep.mubr.f32.mxu0 0.0
      %2334 = vmatmul.mubr.f32.gmra.mxu0 %v2242
      %v2335 = vpop.f32.mrf.mxu0
      %v2336 = vadd.f32 0.0, %v2335
      %v2337 = vpop.f32.mrf.mxu0
      %2338 = vmatprep.mubr.f32.mxu0 0.0
      %2339 = vmatmul.mubr.f32.gmra.mxu0 %v2245
      %v2340 = vpop.f32.mrf.mxu0
      %v2341 = vadd.f32 0.0, %v2340
      %v2342 = vpop.f32.mrf.mxu0
      %2343 = vmatprep.mubr.f32.mxu0 0.0
      %2344 = vmatmul.mubr.f32.gmra.mxu0 %v2248
      %v2345 = vpop.f32.mrf.mxu0
      %v2346 = vadd.f32 0.0, %v2345
      %v2347 = vpop.f32.mrf.mxu0
      %2348 = vmatprep.mubr.f32.mxu0 0.0
      %2349 = vmatmul.mubr.f32.gmra.mxu0 %v2251
      %v2350 = vpop.f32.mrf.mxu0
      %v2351 = vadd.f32 0.0, %v2350
      %v2352 = vpop.f32.mrf.mxu0
      %2353 = vmatprep.mubr.f32.mxu0 0.0
      %2354 = vmatmul.mubr.f32.gmra.mxu0 %v2254
      %v2355 = vpop.f32.mrf.mxu0
      %v2356 = vadd.f32 0.0, %v2355
      %v2357 = vpop.f32.mrf.mxu0
      %2358 = vmatprep.mubr.f32.mxu0 0.0
      %2359 = vmatmul.mubr.f32.gmra.mxu0 %v2257
      %v2360 = vpop.f32.mrf.mxu0
      %v2361 = vadd.f32 0.0, %v2360
      %v2362 = vpop.f32.mrf.mxu0
      %2363 = vdwg.mxu0
      %2364 = vst.msk [vmem:[#allocation3] sm:$0xff] %vm778, %v1867
      %2365 = vst.msk [vmem:[#allocation3 + $0x8] sm:$0xff] %vm778, %v1872
      %2366 = vst.msk [vmem:[#allocation3 + $0x10] sm:$0xff] %vm778, %v1877
      %2367 = vst.msk [vmem:[#allocation3 + $0x18] sm:$0xff] %vm778, %v1882
      %2368 = vst.msk [vmem:[#allocation3 + $0x20] sm:$0xff] %vm778, %v1887
      %2369 = vst.msk [vmem:[#allocation3 + $0x28] sm:$0xff] %vm778, %v1892
      %2370 = vst.msk [vmem:[#allocation3 + $0x30] sm:$0xff] %vm778, %v1897
      %2371 = vst.msk [vmem:[#allocation3 + $0x38] sm:$0xff] %vm778, %v1902
      %2372 = vst.msk [vmem:[#allocation3 + $0x40] sm:$0xff] %vm778, %v2020
      %2373 = vst.msk [vmem:[#allocation3 + $0x48] sm:$0xff] %vm778, %v2025
      %2374 = vst.msk [vmem:[#allocation3 + $0x50] sm:$0xff] %vm778, %v2030
      %2375 = vst.msk [vmem:[#allocation3 + $0x58] sm:$0xff] %vm778, %v2035
      %2376 = vst.msk [vmem:[#allocation3 + $0x60] sm:$0xff] %vm778, %v2040
      %2377 = vst.msk [vmem:[#allocation3 + $0x68] sm:$0xff] %vm778, %v2045
      %2378 = vst.msk [vmem:[#allocation3 + $0x70] sm:$0xff] %vm778, %v2050
      %2379 = vst.msk [vmem:[#allocation3 + $0x78] sm:$0xff] %vm778, %v2055
      %2380 = vst.msk [vmem:[#allocation3 + $0x80] sm:$0xff] %vm778, %v2173
      %2381 = vst.msk [vmem:[#allocation3 + $0x88] sm:$0xff] %vm778, %v2178
      %2382 = vst.msk [vmem:[#allocation3 + $0x90] sm:$0xff] %vm778, %v2183
      %2383 = vst.msk [vmem:[#allocation3 + $0x98] sm:$0xff] %vm778, %v2188
      %2384 = vst.msk [vmem:[#allocation3 + $0xa0] sm:$0xff] %vm778, %v2193
      %2385 = vst.msk [vmem:[#allocation3 + $0xa8] sm:$0xff] %vm778, %v2198
      %2386 = vst.msk [vmem:[#allocation3 + $0xb0] sm:$0xff] %vm778, %v2203
      %2387 = vst.msk [vmem:[#allocation3 + $0xb8] sm:$0xff] %vm778, %v2208
      %2388 = vst.msk [vmem:[#allocation3 + $0xc0] sm:$0xff] %vm778, %v2326
      %2389 = vst.msk [vmem:[#allocation3 + $0xc8] sm:$0xff] %vm778, %v2331
      %2390 = vst.msk [vmem:[#allocation3 + $0xd0] sm:$0xff] %vm778, %v2336
      %2391 = vst.msk [vmem:[#allocation3 + $0xd8] sm:$0xff] %vm778, %v2341
      %2392 = vst.msk [vmem:[#allocation3 + $0xe0] sm:$0xff] %vm778, %v2346
      %2393 = vst.msk [vmem:[#allocation3 + $0xe8] sm:$0xff] %vm778, %v2351
      %2394 = vst.msk [vmem:[#allocation3 + $0xf0] sm:$0xff] %vm778, %v2356
      %2395 = vst.msk [vmem:[#allocation3 + $0xf8] sm:$0xff] %vm778, %v2361
      %v2396 = vld [vmem:[#allocation2] sm:$0xff]
      %v2397 = vld [vmem:[#allocation2 + $0x8] sm:$0xff]
      %v2398 = vld [vmem:[#allocation2 + $0x10] sm:$0xff]
      %v2399 = vld [vmem:[#allocation2 + $0x18] sm:$0xff]
      %v2400 = vld [vmem:[#allocation2 + $0x20] sm:$0xff]
      %v2401 = vld [vmem:[#allocation2 + $0x28] sm:$0xff]
      %v2402 = vld [vmem:[#allocation2 + $0x30] sm:$0xff]
      %v2403 = vld [vmem:[#allocation2 + $0x38] sm:$0xff]
      %v2404 = vld [vmem:[#allocation2 + $0x40] sm:$0xff]
      %v2405 = vld [vmem:[#allocation2 + $0x48] sm:$0xff]
      %v2406 = vld [vmem:[#allocation2 + $0x50] sm:$0xff]
      %v2407 = vld [vmem:[#allocation2 + $0x58] sm:$0xff]
      %v2408 = vld [vmem:[#allocation2 + $0x60] sm:$0xff]
      %v2409 = vld [vmem:[#allocation2 + $0x68] sm:$0xff]
      %v2410 = vld [vmem:[#allocation2 + $0x70] sm:$0xff]
      %v2411 = vld [vmem:[#allocation2 + $0x78] sm:$0xff]
      %v2412 = vld [vmem:[#allocation2 + $0x80] sm:$0xff]
      %v2413 = vld [vmem:[#allocation2 + $0x88] sm:$0xff]
      %v2414 = vld [vmem:[#allocation2 + $0x90] sm:$0xff]
      %v2415 = vld [vmem:[#allocation2 + $0x98] sm:$0xff]
      %v2416 = vld [vmem:[#allocation2 + $0xa0] sm:$0xff]
      %v2417 = vld [vmem:[#allocation2 + $0xa8] sm:$0xff]
      %v2418 = vld [vmem:[#allocation2 + $0xb0] sm:$0xff]
      %v2419 = vld [vmem:[#allocation2 + $0xb8] sm:$0xff]
      %v2420 = vld [vmem:[#allocation2 + $0xc0] sm:$0xff]
      %v2421 = vld [vmem:[#allocation2 + $0xc8] sm:$0xff]
      %v2422 = vld [vmem:[#allocation2 + $0xd0] sm:$0xff]
      %v2423 = vld [vmem:[#allocation2 + $0xd8] sm:$0xff]
      %v2424 = vld [vmem:[#allocation2 + $0xe0] sm:$0xff]
      %v2425 = vld [vmem:[#allocation2 + $0xe8] sm:$0xff]
      %v2426 = vld [vmem:[#allocation2 + $0xf0] sm:$0xff]
      %v2427 = vld [vmem:[#allocation2 + $0xf8] sm:$0xff]
      %s2428 = scalar_lea.vmem %s304, 64
      %v2429 = vld [vmem:[%s2428] sm:$0xff]
      %v2430 = vld [vmem:[%s2428 + $0x8] sm:$0xff]
      %v2431 = vld [vmem:[%s2428 + $0x10] sm:$0xff]
      %v2432 = vld [vmem:[%s2428 + $0x18] sm:$0xff]
      %v2433 = vld [vmem:[%s2428 + $0x20] sm:$0xff]
      %v2434 = vld [vmem:[%s2428 + $0x28] sm:$0xff]
      %v2435 = vld [vmem:[%s2428 + $0x30] sm:$0xff]
      %v2436 = vld [vmem:[%s2428 + $0x38] sm:$0xff]
      %2445 = vrot.lane.b32.xlu0 %v2396, 120
      %v2446 = vpop.permute.xlu0 %2445
      %2447 = vrot.lane.b32.xlu0 %v2397, 120
      %v2448 = vpop.permute.xlu0 %2447
      %2449 = vrot.lane.b32.xlu0 %v2398, 120
      %v2450 = vpop.permute.xlu0 %2449
      %2451 = vrot.lane.b32.xlu0 %v2399, 120
      %v2452 = vpop.permute.xlu0 %2451
      %2453 = vrot.lane.b32.xlu0 %v2400, 120
      %v2454 = vpop.permute.xlu0 %2453
      %2455 = vrot.lane.b32.xlu0 %v2401, 120
      %v2456 = vpop.permute.xlu0 %2455
      %2457 = vrot.lane.b32.xlu0 %v2402, 120
      %v2458 = vpop.permute.xlu0 %2457
      %2459 = vrot.lane.b32.xlu0 %v2403, 120
      %v2460 = vpop.permute.xlu0 %2459
      %2461 = vrot.lane.b32.xlu0 %v2396, 88
      %v2462 = vpop.permute.xlu0 %2461
      %2463 = vrot.lane.b32.xlu0 %v2397, 88
      %v2464 = vpop.permute.xlu0 %2463
      %2465 = vrot.lane.b32.xlu0 %v2398, 88
      %v2466 = vpop.permute.xlu0 %2465
      %2467 = vrot.lane.b32.xlu0 %v2399, 88
      %v2468 = vpop.permute.xlu0 %2467
      %2469 = vrot.lane.b32.xlu0 %v2400, 88
      %v2470 = vpop.permute.xlu0 %2469
      %2471 = vrot.lane.b32.xlu0 %v2401, 88
      %v2472 = vpop.permute.xlu0 %2471
      %2473 = vrot.lane.b32.xlu0 %v2402, 88
      %v2474 = vpop.permute.xlu0 %2473
      %2475 = vrot.lane.b32.xlu0 %v2403, 88
      %v2476 = vpop.permute.xlu0 %2475
      %v2477 = vsel %vm778, %v2446, 0
      %v2479 = vsel %vm778, %v2448, 0
      %v2481 = vsel %vm778, %v2450, 0
      %v2483 = vsel %vm778, %v2452, 0
      %v2485 = vsel %vm778, %v2454, 0
      %v2487 = vsel %vm778, %v2456, 0
      %v2489 = vsel %vm778, %v2458, 0
      %v2491 = vsel %vm778, %v2460, 0
      %v2493 = vsel %vm778, %v2462, 0
      %v2495 = vsel %vm778, %v2464, 0
      %v2497 = vsel %vm778, %v2466, 0
      %v2499 = vsel %vm778, %v2468, 0
      %v2501 = vsel %vm778, %v2470, 0
      %v2503 = vsel %vm778, %v2472, 0
      %v2505 = vsel %vm778, %v2474, 0
      %v2507 = vsel %vm778, %v2476, 0
      %2509 = vmatprep.subr.mxu0 0.0
      %2510 = vmatpush1.xpose.msra.mxu0 0.0
      %2511 = vmatprep.subr.mxu0 0.0
      %2512 = vmatpush1.xpose.msra.mxu0 0.0
      %2513 = vmatprep.subr.mxu0 0.0
      %2514 = vmatpush1.xpose.msra.mxu0 0.0
      %2515 = vmatprep.subr.mxu0 0.0
      %2516 = vmatpush1.xpose.msra.mxu0 0.0
      %2517 = vmatprep.subr.mxu0 0.0
      %2518 = vmatpush1.xpose.msra.mxu0 0.0
      %2519 = vmatprep.subr.mxu0 0.0
      %2520 = vmatpush1.xpose.msra.mxu0 0.0
      %2521 = vmatprep.subr.mxu0 0.0
      %2522 = vmatpush1.xpose.msra.mxu0 0.0
      %2523 = vmatprep.subr.mxu0 0.0
      %2524 = vmatpush1.xpose.msra.mxu0 0.0
      %2525 = vmatprep.subr.mxu0 0.0
      %2526 = vmatpush1.xpose.msra.mxu0 %v2507
      %2527 = vmatprep.subr.mxu0 0.0
      %2528 = vmatpush1.xpose.msra.mxu0 %v2505
      %2529 = vmatprep.subr.mxu0 0.0
      %2530 = vmatpush1.xpose.msra.mxu0 %v2503
      %2531 = vmatprep.subr.mxu0 0.0
      %2532 = vmatpush1.xpose.msra.mxu0 %v2501
      %2533 = vmatprep.subr.mxu0 0.0
      %2534 = vmatpush1.xpose.msra.mxu0 %v2499
      %2535 = vmatprep.subr.mxu0 0.0
      %2536 = vmatpush1.xpose.msra.mxu0 %v2497
      %2537 = vmatprep.subr.mxu0 0.0
      %2538 = vmatpush1.xpose.msra.mxu0 %v2495
      %2539 = vmatprep.subr.mxu0 0.0
      %2540 = vmatpush1.xpose.msra.mxu0 %v2493
      %2541 = vmatprep.subr.mxu0 0.0
      %2542 = vmatpush2.xpose.msra.mxu0 0.0
      %2543 = vmatprep.subr.mxu0 0.0
      %2544 = vmatpush2.xpose.msra.mxu0 0.0
      %2545 = vmatprep.subr.mxu0 0.0
      %2546 = vmatpush2.xpose.msra.mxu0 0.0
      %2547 = vmatprep.subr.mxu0 0.0
      %2548 = vmatpush2.xpose.msra.mxu0 0.0
      %2549 = vmatprep.subr.mxu0 0.0
      %2550 = vmatpush2.xpose.msra.mxu0 0.0
      %2551 = vmatprep.subr.mxu0 0.0
      %2552 = vmatpush2.xpose.msra.mxu0 0.0
      %2553 = vmatprep.subr.mxu0 0.0
      %2554 = vmatpush2.xpose.msra.mxu0 0.0
      %2555 = vmatprep.subr.mxu0 0.0
      %2556 = vmatpush2.xpose.msra.mxu0 0.0
      %2557 = vmatprep.subr.mxu0 0.0
      %2558 = vmatpush2.xpose.msra.mxu0 0.0
      %2559 = vmatprep.subr.mxu0 0.0
      %2560 = vmatpush2.xpose.msra.mxu0 0.0
      %2561 = vmatprep.subr.mxu0 0.0
      %2562 = vmatpush2.xpose.msra.mxu0 0.0
      %2563 = vmatprep.subr.mxu0 0.0
      %2564 = vmatpush2.xpose.msra.mxu0 0.0
      %2565 = vmatprep.subr.mxu0 0.0
      %2566 = vmatpush2.xpose.msra.mxu0 0.0
      %2567 = vmatprep.subr.mxu0 0.0
      %2568 = vmatpush2.xpose.msra.mxu0 0.0
      %2569 = vmatprep.subr.mxu0 0.0
      %2570 = vmatpush2.xpose.msra.mxu0 0.0
      %2571 = vmatprep.subr.mxu0 0.0
      %2572 = vmatpush2.xpose.msra.mxu0 0.0
      %2573 = vmatprep.mubr.f32.mxu0 0.0
      %2574 = vmatmul.mubr.f32.gmra.mxu0 %v2477
      %v2575 = vpop.f32.mrf.mxu0
      %v2576 = vadd.f32 %v2429, %v2575
      %v2577 = vpop.f32.mrf.mxu0
      %2578 = vmatprep.mubr.f32.mxu0 0.0
      %2579 = vmatmul.mubr.f32.gmra.mxu0 %v2479
      %v2580 = vpop.f32.mrf.mxu0
      %v2581 = vadd.f32 %v2430, %v2580
      %v2582 = vpop.f32.mrf.mxu0
      %2583 = vmatprep.mubr.f32.mxu0 0.0
      %2584 = vmatmul.mubr.f32.gmra.mxu0 %v2481
      %v2585 = vpop.f32.mrf.mxu0
      %v2586 = vadd.f32 %v2431, %v2585
      %v2587 = vpop.f32.mrf.mxu0
      %2588 = vmatprep.mubr.f32.mxu0 0.0
      %2589 = vmatmul.mubr.f32.gmra.mxu0 %v2483
      %v2590 = vpop.f32.mrf.mxu0
      %v2591 = vadd.f32 %v2432, %v2590
      %v2592 = vpop.f32.mrf.mxu0
      %2593 = vmatprep.mubr.f32.mxu0 0.0
      %2594 = vmatmul.mubr.f32.gmra.mxu0 %v2485
      %v2595 = vpop.f32.mrf.mxu0
      %v2596 = vadd.f32 %v2433, %v2595
      %v2597 = vpop.f32.mrf.mxu0
      %2598 = vmatprep.mubr.f32.mxu0 0.0
      %2599 = vmatmul.mubr.f32.gmra.mxu0 %v2487
      %v2600 = vpop.f32.mrf.mxu0
      %v2601 = vadd.f32 %v2434, %v2600
      %v2602 = vpop.f32.mrf.mxu0
      %2603 = vmatprep.mubr.f32.mxu0 0.0
      %2604 = vmatmul.mubr.f32.gmra.mxu0 %v2489
      %v2605 = vpop.f32.mrf.mxu0
      %v2606 = vadd.f32 %v2435, %v2605
      %v2607 = vpop.f32.mrf.mxu0
      %2608 = vmatprep.mubr.f32.mxu0 0.0
      %2609 = vmatmul.mubr.f32.gmra.mxu0 %v2491
      %v2610 = vpop.f32.mrf.mxu0
      %v2611 = vadd.f32 %v2436, %v2610
      %v2612 = vpop.f32.mrf.mxu0
      %2613 = vdwg.mxu0
      %2622 = vrot.lane.b32.xlu0 %v2404, 120
      %v2623 = vpop.permute.xlu0 %2622
      %2624 = vrot.lane.b32.xlu0 %v2405, 120
      %v2625 = vpop.permute.xlu0 %2624
      %2626 = vrot.lane.b32.xlu0 %v2406, 120
      %v2627 = vpop.permute.xlu0 %2626
      %2628 = vrot.lane.b32.xlu0 %v2407, 120
      %v2629 = vpop.permute.xlu0 %2628
      %2630 = vrot.lane.b32.xlu0 %v2408, 120
      %v2631 = vpop.permute.xlu0 %2630
      %2632 = vrot.lane.b32.xlu0 %v2409, 120
      %v2633 = vpop.permute.xlu0 %2632
      %2634 = vrot.lane.b32.xlu0 %v2410, 120
      %v2635 = vpop.permute.xlu0 %2634
      %2636 = vrot.lane.b32.xlu0 %v2411, 120
      %v2637 = vpop.permute.xlu0 %2636
      %2638 = vrot.lane.b32.xlu0 %v2404, 88
      %v2639 = vpop.permute.xlu0 %2638
      %2640 = vrot.lane.b32.xlu0 %v2405, 88
      %v2641 = vpop.permute.xlu0 %2640
      %2642 = vrot.lane.b32.xlu0 %v2406, 88
      %v2643 = vpop.permute.xlu0 %2642
      %2644 = vrot.lane.b32.xlu0 %v2407, 88
      %v2645 = vpop.permute.xlu0 %2644
      %2646 = vrot.lane.b32.xlu0 %v2408, 88
      %v2647 = vpop.permute.xlu0 %2646
      %2648 = vrot.lane.b32.xlu0 %v2409, 88
      %v2649 = vpop.permute.xlu0 %2648
      %2650 = vrot.lane.b32.xlu0 %v2410, 88
      %v2651 = vpop.permute.xlu0 %2650
      %2652 = vrot.lane.b32.xlu0 %v2411, 88
      %v2653 = vpop.permute.xlu0 %2652
      %v2654 = vsel %vm778, %v2623, 0
      %v2656 = vsel %vm778, %v2625, 0
      %v2658 = vsel %vm778, %v2627, 0
      %v2660 = vsel %vm778, %v2629, 0
      %v2662 = vsel %vm778, %v2631, 0
      %v2664 = vsel %vm778, %v2633, 0
      %v2666 = vsel %vm778, %v2635, 0
      %v2668 = vsel %vm778, %v2637, 0
      %v2670 = vsel %vm778, %v2639, 0
      %v2672 = vsel %vm778, %v2641, 0
      %v2674 = vsel %vm778, %v2643, 0
      %v2676 = vsel %vm778, %v2645, 0
      %v2678 = vsel %vm778, %v2647, 0
      %v2680 = vsel %vm778, %v2649, 0
      %v2682 = vsel %vm778, %v2651, 0
      %v2684 = vsel %vm778, %v2653, 0
      %2686 = vmatprep.subr.mxu0 0.0
      %2687 = vmatpush1.xpose.msra.mxu0 0.0
      %2688 = vmatprep.subr.mxu0 0.0
      %2689 = vmatpush1.xpose.msra.mxu0 0.0
      %2690 = vmatprep.subr.mxu0 0.0
      %2691 = vmatpush1.xpose.msra.mxu0 0.0
      %2692 = vmatprep.subr.mxu0 0.0
      %2693 = vmatpush1.xpose.msra.mxu0 0.0
      %2694 = vmatprep.subr.mxu0 0.0
      %2695 = vmatpush1.xpose.msra.mxu0 0.0
      %2696 = vmatprep.subr.mxu0 0.0
      %2697 = vmatpush1.xpose.msra.mxu0 0.0
      %2698 = vmatprep.subr.mxu0 0.0
      %2699 = vmatpush1.xpose.msra.mxu0 0.0
      %2700 = vmatprep.subr.mxu0 0.0
      %2701 = vmatpush1.xpose.msra.mxu0 0.0
      %2702 = vmatprep.subr.mxu0 0.0
      %2703 = vmatpush1.xpose.msra.mxu0 %v2684
      %2704 = vmatprep.subr.mxu0 0.0
      %2705 = vmatpush1.xpose.msra.mxu0 %v2682
      %2706 = vmatprep.subr.mxu0 0.0
      %2707 = vmatpush1.xpose.msra.mxu0 %v2680
      %2708 = vmatprep.subr.mxu0 0.0
      %2709 = vmatpush1.xpose.msra.mxu0 %v2678
      %2710 = vmatprep.subr.mxu0 0.0
      %2711 = vmatpush1.xpose.msra.mxu0 %v2676
      %2712 = vmatprep.subr.mxu0 0.0
      %2713 = vmatpush1.xpose.msra.mxu0 %v2674
      %2714 = vmatprep.subr.mxu0 0.0
      %2715 = vmatpush1.xpose.msra.mxu0 %v2672
      %2716 = vmatprep.subr.mxu0 0.0
      %2717 = vmatpush1.xpose.msra.mxu0 %v2670
      %2718 = vmatprep.subr.mxu0 0.0
      %2719 = vmatpush2.xpose.msra.mxu0 0.0
      %2720 = vmatprep.subr.mxu0 0.0
      %2721 = vmatpush2.xpose.msra.mxu0 0.0
      %2722 = vmatprep.subr.mxu0 0.0
      %2723 = vmatpush2.xpose.msra.mxu0 0.0
      %2724 = vmatprep.subr.mxu0 0.0
      %2725 = vmatpush2.xpose.msra.mxu0 0.0
      %2726 = vmatprep.subr.mxu0 0.0
      %2727 = vmatpush2.xpose.msra.mxu0 0.0
      %2728 = vmatprep.subr.mxu0 0.0
      %2729 = vmatpush2.xpose.msra.mxu0 0.0
      %2730 = vmatprep.subr.mxu0 0.0
      %2731 = vmatpush2.xpose.msra.mxu0 0.0
      %2732 = vmatprep.subr.mxu0 0.0
      %2733 = vmatpush2.xpose.msra.mxu0 0.0
      %2734 = vmatprep.subr.mxu0 0.0
      %2735 = vmatpush2.xpose.msra.mxu0 0.0
      %2736 = vmatprep.subr.mxu0 0.0
      %2737 = vmatpush2.xpose.msra.mxu0 0.0
      %2738 = vmatprep.subr.mxu0 0.0
      %2739 = vmatpush2.xpose.msra.mxu0 0.0
      %2740 = vmatprep.subr.mxu0 0.0
      %2741 = vmatpush2.xpose.msra.mxu0 0.0
      %2742 = vmatprep.subr.mxu0 0.0
      %2743 = vmatpush2.xpose.msra.mxu0 0.0
      %2744 = vmatprep.subr.mxu0 0.0
      %2745 = vmatpush2.xpose.msra.mxu0 0.0
      %2746 = vmatprep.subr.mxu0 0.0
      %2747 = vmatpush2.xpose.msra.mxu0 0.0
      %2748 = vmatprep.subr.mxu0 0.0
      %2749 = vmatpush2.xpose.msra.mxu0 0.0
      %2750 = vmatprep.mubr.f32.mxu0 0.0
      %2751 = vmatmul.mubr.f32.gmra.mxu0 %v2654
      %v2752 = vpop.f32.mrf.mxu0
      %v2753 = vadd.f32 %v2429, %v2752
      %v2754 = vpop.f32.mrf.mxu0
      %2755 = vmatprep.mubr.f32.mxu0 0.0
      %2756 = vmatmul.mubr.f32.gmra.mxu0 %v2656
      %v2757 = vpop.f32.mrf.mxu0
      %v2758 = vadd.f32 %v2430, %v2757
      %v2759 = vpop.f32.mrf.mxu0
      %2760 = vmatprep.mubr.f32.mxu0 0.0
      %2761 = vmatmul.mubr.f32.gmra.mxu0 %v2658
      %v2762 = vpop.f32.mrf.mxu0
      %v2763 = vadd.f32 %v2431, %v2762
      %v2764 = vpop.f32.mrf.mxu0
      %2765 = vmatprep.mubr.f32.mxu0 0.0
      %2766 = vmatmul.mubr.f32.gmra.mxu0 %v2660
      %v2767 = vpop.f32.mrf.mxu0
      %v2768 = vadd.f32 %v2432, %v2767
      %v2769 = vpop.f32.mrf.mxu0
      %2770 = vmatprep.mubr.f32.mxu0 0.0
      %2771 = vmatmul.mubr.f32.gmra.mxu0 %v2662
      %v2772 = vpop.f32.mrf.mxu0
      %v2773 = vadd.f32 %v2433, %v2772
      %v2774 = vpop.f32.mrf.mxu0
      %2775 = vmatprep.mubr.f32.mxu0 0.0
      %2776 = vmatmul.mubr.f32.gmra.mxu0 %v2664
      %v2777 = vpop.f32.mrf.mxu0
      %v2778 = vadd.f32 %v2434, %v2777
      %v2779 = vpop.f32.mrf.mxu0
      %2780 = vmatprep.mubr.f32.mxu0 0.0
      %2781 = vmatmul.mubr.f32.gmra.mxu0 %v2666
      %v2782 = vpop.f32.mrf.mxu0
      %v2783 = vadd.f32 %v2435, %v2782
      %v2784 = vpop.f32.mrf.mxu0
      %2785 = vmatprep.mubr.f32.mxu0 0.0
      %2786 = vmatmul.mubr.f32.gmra.mxu0 %v2668
      %v2787 = vpop.f32.mrf.mxu0
      %v2788 = vadd.f32 %v2436, %v2787
      %v2789 = vpop.f32.mrf.mxu0
      %2790 = vdwg.mxu0
      %2799 = vrot.lane.b32.xlu0 %v2412, 120
      %v2800 = vpop.permute.xlu0 %2799
      %2801 = vrot.lane.b32.xlu0 %v2413, 120
      %v2802 = vpop.permute.xlu0 %2801
      %2803 = vrot.lane.b32.xlu0 %v2414, 120
      %v2804 = vpop.permute.xlu0 %2803
      %2805 = vrot.lane.b32.xlu0 %v2415, 120
      %v2806 = vpop.permute.xlu0 %2805
      %2807 = vrot.lane.b32.xlu0 %v2416, 120
      %v2808 = vpop.permute.xlu0 %2807
      %2809 = vrot.lane.b32.xlu0 %v2417, 120
      %v2810 = vpop.permute.xlu0 %2809
      %2811 = vrot.lane.b32.xlu0 %v2418, 120
      %v2812 = vpop.permute.xlu0 %2811
      %2813 = vrot.lane.b32.xlu0 %v2419, 120
      %v2814 = vpop.permute.xlu0 %2813
      %2815 = vrot.lane.b32.xlu0 %v2412, 88
      %v2816 = vpop.permute.xlu0 %2815
      %2817 = vrot.lane.b32.xlu0 %v2413, 88
      %v2818 = vpop.permute.xlu0 %2817
      %2819 = vrot.lane.b32.xlu0 %v2414, 88
      %v2820 = vpop.permute.xlu0 %2819
      %2821 = vrot.lane.b32.xlu0 %v2415, 88
      %v2822 = vpop.permute.xlu0 %2821
      %2823 = vrot.lane.b32.xlu0 %v2416, 88
      %v2824 = vpop.permute.xlu0 %2823
      %2825 = vrot.lane.b32.xlu0 %v2417, 88
      %v2826 = vpop.permute.xlu0 %2825
      %2827 = vrot.lane.b32.xlu0 %v2418, 88
      %v2828 = vpop.permute.xlu0 %2827
      %2829 = vrot.lane.b32.xlu0 %v2419, 88
      %v2830 = vpop.permute.xlu0 %2829
      %v2831 = vsel %vm778, %v2800, 0
      %v2833 = vsel %vm778, %v2802, 0
      %v2835 = vsel %vm778, %v2804, 0
      %v2837 = vsel %vm778, %v2806, 0
      %v2839 = vsel %vm778, %v2808, 0
      %v2841 = vsel %vm778, %v2810, 0
      %v2843 = vsel %vm778, %v2812, 0
      %v2845 = vsel %vm778, %v2814, 0
      %v2847 = vsel %vm778, %v2816, 0
      %v2849 = vsel %vm778, %v2818, 0
      %v2851 = vsel %vm778, %v2820, 0
      %v2853 = vsel %vm778, %v2822, 0
      %v2855 = vsel %vm778, %v2824, 0
      %v2857 = vsel %vm778, %v2826, 0
      %v2859 = vsel %vm778, %v2828, 0
      %v2861 = vsel %vm778, %v2830, 0
      %2863 = vmatprep.subr.mxu0 0.0
      %2864 = vmatpush1.xpose.msra.mxu0 0.0
      %2865 = vmatprep.subr.mxu0 0.0
      %2866 = vmatpush1.xpose.msra.mxu0 0.0
      %2867 = vmatprep.subr.mxu0 0.0
      %2868 = vmatpush1.xpose.msra.mxu0 0.0
      %2869 = vmatprep.subr.mxu0 0.0
      %2870 = vmatpush1.xpose.msra.mxu0 0.0
      %2871 = vmatprep.subr.mxu0 0.0
      %2872 = vmatpush1.xpose.msra.mxu0 0.0
      %2873 = vmatprep.subr.mxu0 0.0
      %2874 = vmatpush1.xpose.msra.mxu0 0.0
      %2875 = vmatprep.subr.mxu0 0.0
      %2876 = vmatpush1.xpose.msra.mxu0 0.0
      %2877 = vmatprep.subr.mxu0 0.0
      %2878 = vmatpush1.xpose.msra.mxu0 0.0
      %2879 = vmatprep.subr.mxu0 0.0
      %2880 = vmatpush1.xpose.msra.mxu0 %v2861
      %2881 = vmatprep.subr.mxu0 0.0
      %2882 = vmatpush1.xpose.msra.mxu0 %v2859
      %2883 = vmatprep.subr.mxu0 0.0
      %2884 = vmatpush1.xpose.msra.mxu0 %v2857
      %2885 = vmatprep.subr.mxu0 0.0
      %2886 = vmatpush1.xpose.msra.mxu0 %v2855
      %2887 = vmatprep.subr.mxu0 0.0
      %2888 = vmatpush1.xpose.msra.mxu0 %v2853
      %2889 = vmatprep.subr.mxu0 0.0
      %2890 = vmatpush1.xpose.msra.mxu0 %v2851
      %2891 = vmatprep.subr.mxu0 0.0
      %2892 = vmatpush1.xpose.msra.mxu0 %v2849
      %2893 = vmatprep.subr.mxu0 0.0
      %2894 = vmatpush1.xpose.msra.mxu0 %v2847
      %2895 = vmatprep.subr.mxu0 0.0
      %2896 = vmatpush2.xpose.msra.mxu0 0.0
      %2897 = vmatprep.subr.mxu0 0.0
      %2898 = vmatpush2.xpose.msra.mxu0 0.0
      %2899 = vmatprep.subr.mxu0 0.0
      %2900 = vmatpush2.xpose.msra.mxu0 0.0
      %2901 = vmatprep.subr.mxu0 0.0
      %2902 = vmatpush2.xpose.msra.mxu0 0.0
      %2903 = vmatprep.subr.mxu0 0.0
      %2904 = vmatpush2.xpose.msra.mxu0 0.0
      %2905 = vmatprep.subr.mxu0 0.0
      %2906 = vmatpush2.xpose.msra.mxu0 0.0
      %2907 = vmatprep.subr.mxu0 0.0
      %2908 = vmatpush2.xpose.msra.mxu0 0.0
      %2909 = vmatprep.subr.mxu0 0.0
      %2910 = vmatpush2.xpose.msra.mxu0 0.0
      %2911 = vmatprep.subr.mxu0 0.0
      %2912 = vmatpush2.xpose.msra.mxu0 0.0
      %2913 = vmatprep.subr.mxu0 0.0
      %2914 = vmatpush2.xpose.msra.mxu0 0.0
      %2915 = vmatprep.subr.mxu0 0.0
      %2916 = vmatpush2.xpose.msra.mxu0 0.0
      %2917 = vmatprep.subr.mxu0 0.0
      %2918 = vmatpush2.xpose.msra.mxu0 0.0
      %2919 = vmatprep.subr.mxu0 0.0
      %2920 = vmatpush2.xpose.msra.mxu0 0.0
      %2921 = vmatprep.subr.mxu0 0.0
      %2922 = vmatpush2.xpose.msra.mxu0 0.0
      %2923 = vmatprep.subr.mxu0 0.0
      %2924 = vmatpush2.xpose.msra.mxu0 0.0
      %2925 = vmatprep.subr.mxu0 0.0
      %2926 = vmatpush2.xpose.msra.mxu0 0.0
      %2927 = vmatprep.mubr.f32.mxu0 0.0
      %2928 = vmatmul.mubr.f32.gmra.mxu0 %v2831
      %v2929 = vpop.f32.mrf.mxu0
      %v2930 = vadd.f32 %v2429, %v2929
      %v2931 = vpop.f32.mrf.mxu0
      %2932 = vmatprep.mubr.f32.mxu0 0.0
      %2933 = vmatmul.mubr.f32.gmra.mxu0 %v2833
      %v2934 = vpop.f32.mrf.mxu0
      %v2935 = vadd.f32 %v2430, %v2934
      %v2936 = vpop.f32.mrf.mxu0
      %2937 = vmatprep.mubr.f32.mxu0 0.0
      %2938 = vmatmul.mubr.f32.gmra.mxu0 %v2835
      %v2939 = vpop.f32.mrf.mxu0
      %v2940 = vadd.f32 %v2431, %v2939
      %v2941 = vpop.f32.mrf.mxu0
      %2942 = vmatprep.mubr.f32.mxu0 0.0
      %2943 = vmatmul.mubr.f32.gmra.mxu0 %v2837
      %v2944 = vpop.f32.mrf.mxu0
      %v2945 = vadd.f32 %v2432, %v2944
      %v2946 = vpop.f32.mrf.mxu0
      %2947 = vmatprep.mubr.f32.mxu0 0.0
      %2948 = vmatmul.mubr.f32.gmra.mxu0 %v2839
      %v2949 = vpop.f32.mrf.mxu0
      %v2950 = vadd.f32 %v2433, %v2949
      %v2951 = vpop.f32.mrf.mxu0
      %2952 = vmatprep.mubr.f32.mxu0 0.0
      %2953 = vmatmul.mubr.f32.gmra.mxu0 %v2841
      %v2954 = vpop.f32.mrf.mxu0
      %v2955 = vadd.f32 %v2434, %v2954
      %v2956 = vpop.f32.mrf.mxu0
      %2957 = vmatprep.mubr.f32.mxu0 0.0
      %2958 = vmatmul.mubr.f32.gmra.mxu0 %v2843
      %v2959 = vpop.f32.mrf.mxu0
      %v2960 = vadd.f32 %v2435, %v2959
      %v2961 = vpop.f32.mrf.mxu0
      %2962 = vmatprep.mubr.f32.mxu0 0.0
      %2963 = vmatmul.mubr.f32.gmra.mxu0 %v2845
      %v2964 = vpop.f32.mrf.mxu0
      %v2965 = vadd.f32 %v2436, %v2964
      %v2966 = vpop.f32.mrf.mxu0
      %2967 = vdwg.mxu0
      %2976 = vrot.lane.b32.xlu0 %v2420, 120
      %v2977 = vpop.permute.xlu0 %2976
      %2978 = vrot.lane.b32.xlu0 %v2421, 120
      %v2979 = vpop.permute.xlu0 %2978
      %2980 = vrot.lane.b32.xlu0 %v2422, 120
      %v2981 = vpop.permute.xlu0 %2980
      %2982 = vrot.lane.b32.xlu0 %v2423, 120
      %v2983 = vpop.permute.xlu0 %2982
      %2984 = vrot.lane.b32.xlu0 %v2424, 120
      %v2985 = vpop.permute.xlu0 %2984
      %2986 = vrot.lane.b32.xlu0 %v2425, 120
      %v2987 = vpop.permute.xlu0 %2986
      %2988 = vrot.lane.b32.xlu0 %v2426, 120
      %v2989 = vpop.permute.xlu0 %2988
      %2990 = vrot.lane.b32.xlu0 %v2427, 120
      %v2991 = vpop.permute.xlu0 %2990
      %2992 = vrot.lane.b32.xlu0 %v2420, 88
      %v2993 = vpop.permute.xlu0 %2992
      %2994 = vrot.lane.b32.xlu0 %v2421, 88
      %v2995 = vpop.permute.xlu0 %2994
      %2996 = vrot.lane.b32.xlu0 %v2422, 88
      %v2997 = vpop.permute.xlu0 %2996
      %2998 = vrot.lane.b32.xlu0 %v2423, 88
      %v2999 = vpop.permute.xlu0 %2998
      %3000 = vrot.lane.b32.xlu0 %v2424, 88
      %v3001 = vpop.permute.xlu0 %3000
      %3002 = vrot.lane.b32.xlu0 %v2425, 88
      %v3003 = vpop.permute.xlu0 %3002
      %3004 = vrot.lane.b32.xlu0 %v2426, 88
      %v3005 = vpop.permute.xlu0 %3004
      %3006 = vrot.lane.b32.xlu0 %v2427, 88
      %v3007 = vpop.permute.xlu0 %3006
      %v3008 = vsel %vm778, %v2977, 0
      %v3010 = vsel %vm778, %v2979, 0
      %v3012 = vsel %vm778, %v2981, 0
      %v3014 = vsel %vm778, %v2983, 0
      %v3016 = vsel %vm778, %v2985, 0
      %v3018 = vsel %vm778, %v2987, 0
      %v3020 = vsel %vm778, %v2989, 0
      %v3022 = vsel %vm778, %v2991, 0
      %v3024 = vsel %vm778, %v2993, 0
      %v3026 = vsel %vm778, %v2995, 0
      %v3028 = vsel %vm778, %v2997, 0
      %v3030 = vsel %vm778, %v2999, 0
      %v3032 = vsel %vm778, %v3001, 0
      %v3034 = vsel %vm778, %v3003, 0
      %v3036 = vsel %vm778, %v3005, 0
      %v3038 = vsel %vm778, %v3007, 0
      %3040 = vmatprep.subr.mxu0 0.0
      %3041 = vmatpush1.xpose.msra.mxu0 0.0
      %3042 = vmatprep.subr.mxu0 0.0
      %3043 = vmatpush1.xpose.msra.mxu0 0.0
      %3044 = vmatprep.subr.mxu0 0.0
      %3045 = vmatpush1.xpose.msra.mxu0 0.0
      %3046 = vmatprep.subr.mxu0 0.0
      %3047 = vmatpush1.xpose.msra.mxu0 0.0
      %3048 = vmatprep.subr.mxu0 0.0
      %3049 = vmatpush1.xpose.msra.mxu0 0.0
      %3050 = vmatprep.subr.mxu0 0.0
      %3051 = vmatpush1.xpose.msra.mxu0 0.0
      %3052 = vmatprep.subr.mxu0 0.0
      %3053 = vmatpush1.xpose.msra.mxu0 0.0
      %3054 = vmatprep.subr.mxu0 0.0
      %3055 = vmatpush1.xpose.msra.mxu0 0.0
      %3056 = vmatprep.subr.mxu0 0.0
      %3057 = vmatpush1.xpose.msra.mxu0 %v3038
      %3058 = vmatprep.subr.mxu0 0.0
      %3059 = vmatpush1.xpose.msra.mxu0 %v3036
      %3060 = vmatprep.subr.mxu0 0.0
      %3061 = vmatpush1.xpose.msra.mxu0 %v3034
      %3062 = vmatprep.subr.mxu0 0.0
      %3063 = vmatpush1.xpose.msra.mxu0 %v3032
      %3064 = vmatprep.subr.mxu0 0.0
      %3065 = vmatpush1.xpose.msra.mxu0 %v3030
      %3066 = vmatprep.subr.mxu0 0.0
      %3067 = vmatpush1.xpose.msra.mxu0 %v3028
      %3068 = vmatprep.subr.mxu0 0.0
      %3069 = vmatpush1.xpose.msra.mxu0 %v3026
      %3070 = vmatprep.subr.mxu0 0.0
      %3071 = vmatpush1.xpose.msra.mxu0 %v3024
      %3072 = vmatprep.subr.mxu0 0.0
      %3073 = vmatpush2.xpose.msra.mxu0 0.0
      %3074 = vmatprep.subr.mxu0 0.0
      %3075 = vmatpush2.xpose.msra.mxu0 0.0
      %3076 = vmatprep.subr.mxu0 0.0
      %3077 = vmatpush2.xpose.msra.mxu0 0.0
      %3078 = vmatprep.subr.mxu0 0.0
      %3079 = vmatpush2.xpose.msra.mxu0 0.0
      %3080 = vmatprep.subr.mxu0 0.0
      %3081 = vmatpush2.xpose.msra.mxu0 0.0
      %3082 = vmatprep.subr.mxu0 0.0
      %3083 = vmatpush2.xpose.msra.mxu0 0.0
      %3084 = vmatprep.subr.mxu0 0.0
      %3085 = vmatpush2.xpose.msra.mxu0 0.0
      %3086 = vmatprep.subr.mxu0 0.0
      %3087 = vmatpush2.xpose.msra.mxu0 0.0
      %3088 = vmatprep.subr.mxu0 0.0
      %3089 = vmatpush2.xpose.msra.mxu0 0.0
      %3090 = vmatprep.subr.mxu0 0.0
      %3091 = vmatpush2.xpose.msra.mxu0 0.0
      %3092 = vmatprep.subr.mxu0 0.0
      %3093 = vmatpush2.xpose.msra.mxu0 0.0
      %3094 = vmatprep.subr.mxu0 0.0
      %3095 = vmatpush2.xpose.msra.mxu0 0.0
      %3096 = vmatprep.subr.mxu0 0.0
      %3097 = vmatpush2.xpose.msra.mxu0 0.0
      %3098 = vmatprep.subr.mxu0 0.0
      %3099 = vmatpush2.xpose.msra.mxu0 0.0
      %3100 = vmatprep.subr.mxu0 0.0
      %3101 = vmatpush2.xpose.msra.mxu0 0.0
      %3102 = vmatprep.subr.mxu0 0.0
      %3103 = vmatpush2.xpose.msra.mxu0 0.0
      %3104 = vmatprep.mubr.f32.mxu0 0.0
      %3105 = vmatmul.mubr.f32.gmra.mxu0 %v3008
      %v3106 = vpop.f32.mrf.mxu0
      %v3107 = vadd.f32 %v2429, %v3106
      %v3108 = vpop.f32.mrf.mxu0
      %3109 = vmatprep.mubr.f32.mxu0 0.0
      %3110 = vmatmul.mubr.f32.gmra.mxu0 %v3010
      %v3111 = vpop.f32.mrf.mxu0
      %v3112 = vadd.f32 %v2430, %v3111
      %v3113 = vpop.f32.mrf.mxu0
      %3114 = vmatprep.mubr.f32.mxu0 0.0
      %3115 = vmatmul.mubr.f32.gmra.mxu0 %v3012
      %v3116 = vpop.f32.mrf.mxu0
      %v3117 = vadd.f32 %v2431, %v3116
      %v3118 = vpop.f32.mrf.mxu0
      %3119 = vmatprep.mubr.f32.mxu0 0.0
      %3120 = vmatmul.mubr.f32.gmra.mxu0 %v3014
      %v3121 = vpop.f32.mrf.mxu0
      %v3122 = vadd.f32 %v2432, %v3121
      %v3123 = vpop.f32.mrf.mxu0
      %3124 = vmatprep.mubr.f32.mxu0 0.0
      %3125 = vmatmul.mubr.f32.gmra.mxu0 %v3016
      %v3126 = vpop.f32.mrf.mxu0
      %v3127 = vadd.f32 %v2433, %v3126
      %v3128 = vpop.f32.mrf.mxu0
      %3129 = vmatprep.mubr.f32.mxu0 0.0
      %3130 = vmatmul.mubr.f32.gmra.mxu0 %v3018
      %v3131 = vpop.f32.mrf.mxu0
      %v3132 = vadd.f32 %v2434, %v3131
      %v3133 = vpop.f32.mrf.mxu0
      %3134 = vmatprep.mubr.f32.mxu0 0.0
      %3135 = vmatmul.mubr.f32.gmra.mxu0 %v3020
      %v3136 = vpop.f32.mrf.mxu0
      %v3137 = vadd.f32 %v2435, %v3136
      %v3138 = vpop.f32.mrf.mxu0
      %3139 = vmatprep.mubr.f32.mxu0 0.0
      %3140 = vmatmul.mubr.f32.gmra.mxu0 %v3022
      %v3141 = vpop.f32.mrf.mxu0
      %v3142 = vadd.f32 %v2436, %v3141
      %v3143 = vpop.f32.mrf.mxu0
      %3144 = vdwg.mxu0
      %v3145 = vsel %vm1399, %v2576, -inf
      %3146 = vmax.xlane.f32.xlu0 %v3145
      %v3147 = vpop.xlane.xlu0 %3146
      %v3148 = vsel %vm1399, %v2581, -inf
      %3149 = vmax.xlane.f32.xlu0 %v3148
      %v3150 = vpop.xlane.xlu0 %3149
      %v3151 = vsel %vm1399, %v2586, -inf
      %3152 = vmax.xlane.f32.xlu0 %v3151
      %v3153 = vpop.xlane.xlu0 %3152
      %v3154 = vsel %vm1399, %v2591, -inf
      %3155 = vmax.xlane.f32.xlu0 %v3154
      %v3156 = vpop.xlane.xlu0 %3155
      %v3157 = vsel %vm1399, %v2596, -inf
      %3158 = vmax.xlane.f32.xlu0 %v3157
      %v3159 = vpop.xlane.xlu0 %3158
      %v3160 = vsel %vm1399, %v2601, -inf
      %3161 = vmax.xlane.f32.xlu0 %v3160
      %v3162 = vpop.xlane.xlu0 %3161
      %v3163 = vsel %vm1399, %v2606, -inf
      %3164 = vmax.xlane.f32.xlu0 %v3163
      %v3165 = vpop.xlane.xlu0 %3164
      %v3166 = vsel %vm1399, %v2611, -inf
      %3167 = vmax.xlane.f32.xlu0 %v3166
      %v3168 = vpop.xlane.xlu0 %3167
      %v3169 = vsel %vm1399, %v2753, -inf
      %3170 = vmax.xlane.f32.xlu0 %v3169
      %v3171 = vpop.xlane.xlu0 %3170
      %v3172 = vsel %vm1399, %v2758, -inf
      %3173 = vmax.xlane.f32.xlu0 %v3172
      %v3174 = vpop.xlane.xlu0 %3173
      %v3175 = vsel %vm1399, %v2763, -inf
      %3176 = vmax.xlane.f32.xlu0 %v3175
      %v3177 = vpop.xlane.xlu0 %3176
      %v3178 = vsel %vm1399, %v2768, -inf
      %3179 = vmax.xlane.f32.xlu0 %v3178
      %v3180 = vpop.xlane.xlu0 %3179
      %v3181 = vsel %vm1399, %v2773, -inf
      %3182 = vmax.xlane.f32.xlu0 %v3181
      %v3183 = vpop.xlane.xlu0 %3182
      %v3184 = vsel %vm1399, %v2778, -inf
      %3185 = vmax.xlane.f32.xlu0 %v3184
      %v3186 = vpop.xlane.xlu0 %3185
      %v3187 = vsel %vm1399, %v2783, -inf
      %3188 = vmax.xlane.f32.xlu0 %v3187
      %v3189 = vpop.xlane.xlu0 %3188
      %v3190 = vsel %vm1399, %v2788, -inf
      %3191 = vmax.xlane.f32.xlu0 %v3190
      %v3192 = vpop.xlane.xlu0 %3191
      %v3193 = vsel %vm1399, %v2930, -inf
      %3194 = vmax.xlane.f32.xlu0 %v3193
      %v3195 = vpop.xlane.xlu0 %3194
      %v3196 = vsel %vm1399, %v2935, -inf
      %3197 = vmax.xlane.f32.xlu0 %v3196
      %v3198 = vpop.xlane.xlu0 %3197
      %v3199 = vsel %vm1399, %v2940, -inf
      %3200 = vmax.xlane.f32.xlu0 %v3199
      %v3201 = vpop.xlane.xlu0 %3200
      %v3202 = vsel %vm1399, %v2945, -inf
      %3203 = vmax.xlane.f32.xlu0 %v3202
      %v3204 = vpop.xlane.xlu0 %3203
      %v3205 = vsel %vm1399, %v2950, -inf
      %3206 = vmax.xlane.f32.xlu0 %v3205
      %v3207 = vpop.xlane.xlu0 %3206
      %v3208 = vsel %vm1399, %v2955, -inf
      %3209 = vmax.xlane.f32.xlu0 %v3208
      %v3210 = vpop.xlane.xlu0 %3209
      %v3211 = vsel %vm1399, %v2960, -inf
      %3212 = vmax.xlane.f32.xlu0 %v3211
      %v3213 = vpop.xlane.xlu0 %3212
      %v3214 = vsel %vm1399, %v2965, -inf
      %3215 = vmax.xlane.f32.xlu0 %v3214
      %v3216 = vpop.xlane.xlu0 %3215
      %v3217 = vsel %vm1399, %v3107, -inf
      %3218 = vmax.xlane.f32.xlu0 %v3217
      %v3219 = vpop.xlane.xlu0 %3218
      %v3220 = vsel %vm1399, %v3112, -inf
      %3221 = vmax.xlane.f32.xlu0 %v3220
      %v3222 = vpop.xlane.xlu0 %3221
      %v3223 = vsel %vm1399, %v3117, -inf
      %3224 = vmax.xlane.f32.xlu0 %v3223
      %v3225 = vpop.xlane.xlu0 %3224
      %v3226 = vsel %vm1399, %v3122, -inf
      %3227 = vmax.xlane.f32.xlu0 %v3226
      %v3228 = vpop.xlane.xlu0 %3227
      %v3229 = vsel %vm1399, %v3127, -inf
      %3230 = vmax.xlane.f32.xlu0 %v3229
      %v3231 = vpop.xlane.xlu0 %3230
      %v3232 = vsel %vm1399, %v3132, -inf
      %3233 = vmax.xlane.f32.xlu0 %v3232
      %v3234 = vpop.xlane.xlu0 %3233
      %v3235 = vsel %vm1399, %v3137, -inf
      %3236 = vmax.xlane.f32.xlu0 %v3235
      %v3237 = vpop.xlane.xlu0 %3236
      %v3238 = vsel %vm1399, %v3142, -inf
      %3239 = vmax.xlane.f32.xlu0 %v3238
      %v3240 = vpop.xlane.xlu0 %3239
      %v3241 = vsub.f32 %v2576, %v3147
      %v3242 = vsub.f32 %v2581, %v3150
      %v3243 = vsub.f32 %v2586, %v3153
      %v3244 = vsub.f32 %v2591, %v3156
      %v3245 = vsub.f32 %v2596, %v3159
      %v3246 = vsub.f32 %v2601, %v3162
      %v3247 = vsub.f32 %v2606, %v3165
      %v3248 = vsub.f32 %v2611, %v3168
      %v3249 = vsub.f32 %v2753, %v3171
      %v3250 = vsub.f32 %v2758, %v3174
      %v3251 = vsub.f32 %v2763, %v3177
      %v3252 = vsub.f32 %v2768, %v3180
      %v3253 = vsub.f32 %v2773, %v3183
      %v3254 = vsub.f32 %v2778, %v3186
      %v3255 = vsub.f32 %v2783, %v3189
      %v3256 = vsub.f32 %v2788, %v3192
      %v3257 = vsub.f32 %v2930, %v3195
      %v3258 = vsub.f32 %v2935, %v3198
      %v3259 = vsub.f32 %v2940, %v3201
      %v3260 = vsub.f32 %v2945, %v3204
      %v3261 = vsub.f32 %v2950, %v3207
      %v3262 = vsub.f32 %v2955, %v3210
      %v3263 = vsub.f32 %v2960, %v3213
      %v3264 = vsub.f32 %v2965, %v3216
      %v3265 = vsub.f32 %v3107, %v3219
      %v3266 = vsub.f32 %v3112, %v3222
      %v3267 = vsub.f32 %v3117, %v3225
      %v3268 = vsub.f32 %v3122, %v3228
      %v3269 = vsub.f32 %v3127, %v3231
      %v3270 = vsub.f32 %v3132, %v3234
      %v3271 = vsub.f32 %v3137, %v3237
      %v3272 = vsub.f32 %v3142, %v3240
      %v3273 = vmul.f32 %v3241, 1.442695
      %v3274 = vpow.pop %v3273
      %v3275 = vmul.f32 %v3242, 1.442695
      %v3276 = vpow.pop %v3275
      %v3277 = vmul.f32 %v3243, 1.442695
      %v3278 = vpow.pop %v3277
      %v3279 = vmul.f32 %v3244, 1.442695
      %v3280 = vpow.pop %v3279
      %v3281 = vmul.f32 %v3245, 1.442695
      %v3282 = vpow.pop %v3281
      %v3283 = vmul.f32 %v3246, 1.442695
      %v3284 = vpow.pop %v3283
      %v3285 = vmul.f32 %v3247, 1.442695
      %v3286 = vpow.pop %v3285
      %v3287 = vmul.f32 %v3248, 1.442695
      %v3288 = vpow.pop %v3287
      %v3289 = vmul.f32 %v3249, 1.442695
      %v3290 = vpow.pop %v3289
      %v3291 = vmul.f32 %v3250, 1.442695
      %v3292 = vpow.pop %v3291
      %v3293 = vmul.f32 %v3251, 1.442695
      %v3294 = vpow.pop %v3293
      %v3295 = vmul.f32 %v3252, 1.442695
      %v3296 = vpow.pop %v3295
      %v3297 = vmul.f32 %v3253, 1.442695
      %v3298 = vpow.pop %v3297
      %v3299 = vmul.f32 %v3254, 1.442695
      %v3300 = vpow.pop %v3299
      %v3301 = vmul.f32 %v3255, 1.442695
      %v3302 = vpow.pop %v3301
      %v3303 = vmul.f32 %v3256, 1.442695
      %v3304 = vpow.pop %v3303
      %v3305 = vmul.f32 %v3257, 1.442695
      %v3306 = vpow.pop %v3305
      %v3307 = vmul.f32 %v3258, 1.442695
      %v3308 = vpow.pop %v3307
      %v3309 = vmul.f32 %v3259, 1.442695
      %v3310 = vpow.pop %v3309
      %v3311 = vmul.f32 %v3260, 1.442695
      %v3312 = vpow.pop %v3311
      %v3313 = vmul.f32 %v3261, 1.442695
      %v3314 = vpow.pop %v3313
      %v3315 = vmul.f32 %v3262, 1.442695
      %v3316 = vpow.pop %v3315
      %v3317 = vmul.f32 %v3263, 1.442695
      %v3318 = vpow.pop %v3317
      %v3319 = vmul.f32 %v3264, 1.442695
      %v3320 = vpow.pop %v3319
      %v3321 = vmul.f32 %v3265, 1.442695
      %v3322 = vpow.pop %v3321
      %v3323 = vmul.f32 %v3266, 1.442695
      %v3324 = vpow.pop %v3323
      %v3325 = vmul.f32 %v3267, 1.442695
      %v3326 = vpow.pop %v3325
      %v3327 = vmul.f32 %v3268, 1.442695
      %v3328 = vpow.pop %v3327
      %v3329 = vmul.f32 %v3269, 1.442695
      %v3330 = vpow.pop %v3329
      %v3331 = vmul.f32 %v3270, 1.442695
      %v3332 = vpow.pop %v3331
      %v3333 = vmul.f32 %v3271, 1.442695
      %v3334 = vpow.pop %v3333
      %v3335 = vmul.f32 %v3272, 1.442695
      %v3336 = vpow.pop %v3335
      %v3337 = vsel %vm1399, %v3274, 0.0
      %3338 = vadd.xlane.f32.xlu0 %v3337
      %v3339 = vpop.xlane.xlu0 %3338
      %v3340 = vsel %vm1399, %v3276, 0.0
      %3341 = vadd.xlane.f32.xlu0 %v3340
      %v3342 = vpop.xlane.xlu0 %3341
      %v3343 = vsel %vm1399, %v3278, 0.0
      %3344 = vadd.xlane.f32.xlu0 %v3343
      %v3345 = vpop.xlane.xlu0 %3344
      %v3346 = vsel %vm1399, %v3280, 0.0
      %3347 = vadd.xlane.f32.xlu0 %v3346
      %v3348 = vpop.xlane.xlu0 %3347
      %v3349 = vsel %vm1399, %v3282, 0.0
      %3350 = vadd.xlane.f32.xlu0 %v3349
      %v3351 = vpop.xlane.xlu0 %3350
      %v3352 = vsel %vm1399, %v3284, 0.0
      %3353 = vadd.xlane.f32.xlu0 %v3352
      %v3354 = vpop.xlane.xlu0 %3353
      %v3355 = vsel %vm1399, %v3286, 0.0
      %3356 = vadd.xlane.f32.xlu0 %v3355
      %v3357 = vpop.xlane.xlu0 %3356
      %v3358 = vsel %vm1399, %v3288, 0.0
      %3359 = vadd.xlane.f32.xlu0 %v3358
      %v3360 = vpop.xlane.xlu0 %3359
      %v3361 = vsel %vm1399, %v3290, 0.0
      %3362 = vadd.xlane.f32.xlu0 %v3361
      %v3363 = vpop.xlane.xlu0 %3362
      %v3364 = vsel %vm1399, %v3292, 0.0
      %3365 = vadd.xlane.f32.xlu0 %v3364
      %v3366 = vpop.xlane.xlu0 %3365
      %v3367 = vsel %vm1399, %v3294, 0.0
      %3368 = vadd.xlane.f32.xlu0 %v3367
      %v3369 = vpop.xlane.xlu0 %3368
      %v3370 = vsel %vm1399, %v3296, 0.0
      %3371 = vadd.xlane.f32.xlu0 %v3370
      %v3372 = vpop.xlane.xlu0 %3371
      %v3373 = vsel %vm1399, %v3298, 0.0
      %3374 = vadd.xlane.f32.xlu0 %v3373
      %v3375 = vpop.xlane.xlu0 %3374
      %v3376 = vsel %vm1399, %v3300, 0.0
      %3377 = vadd.xlane.f32.xlu0 %v3376
      %v3378 = vpop.xlane.xlu0 %3377
      %v3379 = vsel %vm1399, %v3302, 0.0
      %3380 = vadd.xlane.f32.xlu0 %v3379
      %v3381 = vpop.xlane.xlu0 %3380
      %v3382 = vsel %vm1399, %v3304, 0.0
      %3383 = vadd.xlane.f32.xlu0 %v3382
      %v3384 = vpop.xlane.xlu0 %3383
      %v3385 = vsel %vm1399, %v3306, 0.0
      %3386 = vadd.xlane.f32.xlu0 %v3385
      %v3387 = vpop.xlane.xlu0 %3386
      %v3388 = vsel %vm1399, %v3308, 0.0
      %3389 = vadd.xlane.f32.xlu0 %v3388
      %v3390 = vpop.xlane.xlu0 %3389
      %v3391 = vsel %vm1399, %v3310, 0.0
      %3392 = vadd.xlane.f32.xlu0 %v3391
      %v3393 = vpop.xlane.xlu0 %3392
      %v3394 = vsel %vm1399, %v3312, 0.0
      %3395 = vadd.xlane.f32.xlu0 %v3394
      %v3396 = vpop.xlane.xlu0 %3395
      %v3397 = vsel %vm1399, %v3314, 0.0
      %3398 = vadd.xlane.f32.xlu0 %v3397
      %v3399 = vpop.xlane.xlu0 %3398
      %v3400 = vsel %vm1399, %v3316, 0.0
      %3401 = vadd.xlane.f32.xlu0 %v3400
      %v3402 = vpop.xlane.xlu0 %3401
      %v3403 = vsel %vm1399, %v3318, 0.0
      %3404 = vadd.xlane.f32.xlu0 %v3403
      %v3405 = vpop.xlane.xlu0 %3404
      %v3406 = vsel %vm1399, %v3320, 0.0
      %3407 = vadd.xlane.f32.xlu0 %v3406
      %v3408 = vpop.xlane.xlu0 %3407
      %v3409 = vsel %vm1399, %v3322, 0.0
      %3410 = vadd.xlane.f32.xlu0 %v3409
      %v3411 = vpop.xlane.xlu0 %3410
      %v3412 = vsel %vm1399, %v3324, 0.0
      %3413 = vadd.xlane.f32.xlu0 %v3412
      %v3414 = vpop.xlane.xlu0 %3413
      %v3415 = vsel %vm1399, %v3326, 0.0
      %3416 = vadd.xlane.f32.xlu0 %v3415
      %v3417 = vpop.xlane.xlu0 %3416
      %v3418 = vsel %vm1399, %v3328, 0.0
      %3419 = vadd.xlane.f32.xlu0 %v3418
      %v3420 = vpop.xlane.xlu0 %3419
      %v3421 = vsel %vm1399, %v3330, 0.0
      %3422 = vadd.xlane.f32.xlu0 %v3421
      %v3423 = vpop.xlane.xlu0 %3422
      %v3424 = vsel %vm1399, %v3332, 0.0
      %3425 = vadd.xlane.f32.xlu0 %v3424
      %v3426 = vpop.xlane.xlu0 %3425
      %v3427 = vsel %vm1399, %v3334, 0.0
      %3428 = vadd.xlane.f32.xlu0 %v3427
      %v3429 = vpop.xlane.xlu0 %3428
      %v3430 = vsel %vm1399, %v3336, 0.0
      %3431 = vadd.xlane.f32.xlu0 %v3430
      %v3432 = vpop.xlane.xlu0 %3431
      %v3433 = vrcp.pop %v3339
      %v3434 = vrcp.pop %v3342
      %v3435 = vrcp.pop %v3345
      %v3436 = vrcp.pop %v3348
      %v3437 = vrcp.pop %v3351
      %v3438 = vrcp.pop %v3354
      %v3439 = vrcp.pop %v3357
      %v3440 = vrcp.pop %v3360
      %v3441 = vrcp.pop %v3363
      %v3442 = vrcp.pop %v3366
      %v3443 = vrcp.pop %v3369
      %v3444 = vrcp.pop %v3372
      %v3445 = vrcp.pop %v3375
      %v3446 = vrcp.pop %v3378
      %v3447 = vrcp.pop %v3381
      %v3448 = vrcp.pop %v3384
      %v3449 = vrcp.pop %v3387
      %v3450 = vrcp.pop %v3390
      %v3451 = vrcp.pop %v3393
      %v3452 = vrcp.pop %v3396
      %v3453 = vrcp.pop %v3399
      %v3454 = vrcp.pop %v3402
      %v3455 = vrcp.pop %v3405
      %v3456 = vrcp.pop %v3408
      %v3457 = vrcp.pop %v3411
      %v3458 = vrcp.pop %v3414
      %v3459 = vrcp.pop %v3417
      %v3460 = vrcp.pop %v3420
      %v3461 = vrcp.pop %v3423
      %v3462 = vrcp.pop %v3426
      %v3463 = vrcp.pop %v3429
      %v3464 = vrcp.pop %v3432
      %v3465 = vmul.f32 %v3274, %v3433
      %v3466 = vmul.f32 %v3276, %v3434
      %v3467 = vmul.f32 %v3278, %v3435
      %v3468 = vmul.f32 %v3280, %v3436
      %v3469 = vmul.f32 %v3282, %v3437
      %v3470 = vmul.f32 %v3284, %v3438
      %v3471 = vmul.f32 %v3286, %v3439
      %v3472 = vmul.f32 %v3288, %v3440
      %v3473 = vmul.f32 %v3290, %v3441
      %v3474 = vmul.f32 %v3292, %v3442
      %v3475 = vmul.f32 %v3294, %v3443
      %v3476 = vmul.f32 %v3296, %v3444
      %v3477 = vmul.f32 %v3298, %v3445
      %v3478 = vmul.f32 %v3300, %v3446
      %v3479 = vmul.f32 %v3302, %v3447
      %v3480 = vmul.f32 %v3304, %v3448
      %v3481 = vmul.f32 %v3306, %v3449
      %v3482 = vmul.f32 %v3308, %v3450
      %v3483 = vmul.f32 %v3310, %v3451
      %v3484 = vmul.f32 %v3312, %v3452
      %v3485 = vmul.f32 %v3314, %v3453
      %v3486 = vmul.f32 %v3316, %v3454
      %v3487 = vmul.f32 %v3318, %v3455
      %v3488 = vmul.f32 %v3320, %v3456
      %v3489 = vmul.f32 %v3322, %v3457
      %v3490 = vmul.f32 %v3324, %v3458
      %v3491 = vmul.f32 %v3326, %v3459
      %v3492 = vmul.f32 %v3328, %v3460
      %v3493 = vmul.f32 %v3330, %v3461
      %v3494 = vmul.f32 %v3332, %v3462
      %v3495 = vmul.f32 %v3334, %v3463
      %v3496 = vmul.f32 %v3336, %v3464
      %3497 = vrot.lane.b32.xlu0 %v2396, 56
      %v3498 = vpop.permute.xlu0 %3497
      %3499 = vrot.lane.b32.xlu0 %v2397, 56
      %v3500 = vpop.permute.xlu0 %3499
      %3501 = vrot.lane.b32.xlu0 %v2398, 56
      %v3502 = vpop.permute.xlu0 %3501
      %3503 = vrot.lane.b32.xlu0 %v2399, 56
      %v3504 = vpop.permute.xlu0 %3503
      %3505 = vrot.lane.b32.xlu0 %v2400, 56
      %v3506 = vpop.permute.xlu0 %3505
      %3507 = vrot.lane.b32.xlu0 %v2401, 56
      %v3508 = vpop.permute.xlu0 %3507
      %3509 = vrot.lane.b32.xlu0 %v2402, 56
      %v3510 = vpop.permute.xlu0 %3509
      %3511 = vrot.lane.b32.xlu0 %v2403, 56
      %v3512 = vpop.permute.xlu0 %3511
      %v3522 = vsel %vm1399, %v3465, 0
      %v3525 = vsel %vm1399, %v3466, 0
      %v3528 = vsel %vm1399, %v3467, 0
      %v3531 = vsel %vm1399, %v3468, 0
      %v3534 = vsel %vm1399, %v3469, 0
      %v3537 = vsel %vm1399, %v3470, 0
      %v3540 = vsel %vm1399, %v3471, 0
      %v3543 = vsel %vm1399, %v3472, 0
      %3545 = vmatprep.subr.mxu0 0.0
      %3546 = vmatpush1.msra.mxu0 0.0
      %3547 = vmatprep.subr.mxu0 0.0
      %3548 = vmatpush1.msra.mxu0 0.0
      %3549 = vmatprep.subr.mxu0 0.0
      %3550 = vmatpush1.msra.mxu0 0.0
      %3551 = vmatprep.subr.mxu0 0.0
      %3552 = vmatpush1.msra.mxu0 0.0
      %3553 = vmatprep.subr.mxu0 0.0
      %3554 = vmatpush1.msra.mxu0 0.0
      %3555 = vmatprep.subr.mxu0 0.0
      %3556 = vmatpush1.msra.mxu0 0.0
      %3557 = vmatprep.subr.mxu0 0.0
      %3558 = vmatpush1.msra.mxu0 0.0
      %3559 = vmatprep.subr.mxu0 0.0
      %3560 = vmatpush1.msra.mxu0 0.0
      %3561 = vmatprep.subr.mxu0 0.0
      %3562 = vmatpush1.msra.mxu0 %v3512
      %3563 = vmatprep.subr.mxu0 0.0
      %3564 = vmatpush1.msra.mxu0 %v3510
      %3565 = vmatprep.subr.mxu0 0.0
      %3566 = vmatpush1.msra.mxu0 %v3508
      %3567 = vmatprep.subr.mxu0 0.0
      %3568 = vmatpush1.msra.mxu0 %v3506
      %3569 = vmatprep.subr.mxu0 0.0
      %3570 = vmatpush1.msra.mxu0 %v3504
      %3571 = vmatprep.subr.mxu0 0.0
      %3572 = vmatpush1.msra.mxu0 %v3502
      %3573 = vmatprep.subr.mxu0 0.0
      %3574 = vmatpush1.msra.mxu0 %v3500
      %3575 = vmatprep.subr.mxu0 0.0
      %3576 = vmatpush1.msra.mxu0 %v3498
      %3577 = vmatprep.subr.mxu0 0.0
      %3578 = vmatpush2.msra.mxu0 0.0
      %3579 = vmatprep.subr.mxu0 0.0
      %3580 = vmatpush2.msra.mxu0 0.0
      %3581 = vmatprep.subr.mxu0 0.0
      %3582 = vmatpush2.msra.mxu0 0.0
      %3583 = vmatprep.subr.mxu0 0.0
      %3584 = vmatpush2.msra.mxu0 0.0
      %3585 = vmatprep.subr.mxu0 0.0
      %3586 = vmatpush2.msra.mxu0 0.0
      %3587 = vmatprep.subr.mxu0 0.0
      %3588 = vmatpush2.msra.mxu0 0.0
      %3589 = vmatprep.subr.mxu0 0.0
      %3590 = vmatpush2.msra.mxu0 0.0
      %3591 = vmatprep.subr.mxu0 0.0
      %3592 = vmatpush2.msra.mxu0 0.0
      %3593 = vmatprep.subr.mxu0 0.0
      %3594 = vmatpush2.msra.mxu0 0.0
      %3595 = vmatprep.subr.mxu0 0.0
      %3596 = vmatpush2.msra.mxu0 0.0
      %3597 = vmatprep.subr.mxu0 0.0
      %3598 = vmatpush2.msra.mxu0 0.0
      %3599 = vmatprep.subr.mxu0 0.0
      %3600 = vmatpush2.msra.mxu0 0.0
      %3601 = vmatprep.subr.mxu0 0.0
      %3602 = vmatpush2.msra.mxu0 0.0
      %3603 = vmatprep.subr.mxu0 0.0
      %3604 = vmatpush2.msra.mxu0 0.0
      %3605 = vmatprep.subr.mxu0 0.0
      %3606 = vmatpush2.msra.mxu0 0.0
      %3607 = vmatprep.subr.mxu0 0.0
      %3608 = vmatpush2.msra.mxu0 0.0
      %3609 = vmatprep.mubr.f32.mxu0 0.0
      %3610 = vmatmul.mubr.f32.gmra.mxu0 %v3522
      %v3611 = vpop.f32.mrf.mxu0
      %v3612 = vadd.f32 0.0, %v3611
      %v3613 = vpop.f32.mrf.mxu0
      %3614 = vmatprep.mubr.f32.mxu0 0.0
      %3615 = vmatmul.mubr.f32.gmra.mxu0 %v3525
      %v3616 = vpop.f32.mrf.mxu0
      %v3617 = vadd.f32 0.0, %v3616
      %v3618 = vpop.f32.mrf.mxu0
      %3619 = vmatprep.mubr.f32.mxu0 0.0
      %3620 = vmatmul.mubr.f32.gmra.mxu0 %v3528
      %v3621 = vpop.f32.mrf.mxu0
      %v3622 = vadd.f32 0.0, %v3621
      %v3623 = vpop.f32.mrf.mxu0
      %3624 = vmatprep.mubr.f32.mxu0 0.0
      %3625 = vmatmul.mubr.f32.gmra.mxu0 %v3531
      %v3626 = vpop.f32.mrf.mxu0
      %v3627 = vadd.f32 0.0, %v3626
      %v3628 = vpop.f32.mrf.mxu0
      %3629 = vmatprep.mubr.f32.mxu0 0.0
      %3630 = vmatmul.mubr.f32.gmra.mxu0 %v3534
      %v3631 = vpop.f32.mrf.mxu0
      %v3632 = vadd.f32 0.0, %v3631
      %v3633 = vpop.f32.mrf.mxu0
      %3634 = vmatprep.mubr.f32.mxu0 0.0
      %3635 = vmatmul.mubr.f32.gmra.mxu0 %v3537
      %v3636 = vpop.f32.mrf.mxu0
      %v3637 = vadd.f32 0.0, %v3636
      %v3638 = vpop.f32.mrf.mxu0
      %3639 = vmatprep.mubr.f32.mxu0 0.0
      %3640 = vmatmul.mubr.f32.gmra.mxu0 %v3540
      %v3641 = vpop.f32.mrf.mxu0
      %v3642 = vadd.f32 0.0, %v3641
      %v3643 = vpop.f32.mrf.mxu0
      %3644 = vmatprep.mubr.f32.mxu0 0.0
      %3645 = vmatmul.mubr.f32.gmra.mxu0 %v3543
      %v3646 = vpop.f32.mrf.mxu0
      %v3647 = vadd.f32 0.0, %v3646
      %v3648 = vpop.f32.mrf.mxu0
      %3649 = vdwg.mxu0
      %3650 = vrot.lane.b32.xlu0 %v2404, 56
      %v3651 = vpop.permute.xlu0 %3650
      %3652 = vrot.lane.b32.xlu0 %v2405, 56
      %v3653 = vpop.permute.xlu0 %3652
      %3654 = vrot.lane.b32.xlu0 %v2406, 56
      %v3655 = vpop.permute.xlu0 %3654
      %3656 = vrot.lane.b32.xlu0 %v2407, 56
      %v3657 = vpop.permute.xlu0 %3656
      %3658 = vrot.lane.b32.xlu0 %v2408, 56
      %v3659 = vpop.permute.xlu0 %3658
      %3660 = vrot.lane.b32.xlu0 %v2409, 56
      %v3661 = vpop.permute.xlu0 %3660
      %3662 = vrot.lane.b32.xlu0 %v2410, 56
      %v3663 = vpop.permute.xlu0 %3662
      %3664 = vrot.lane.b32.xlu0 %v2411, 56
      %v3665 = vpop.permute.xlu0 %3664
      %v3675 = vsel %vm1399, %v3473, 0
      %v3678 = vsel %vm1399, %v3474, 0
      %v3681 = vsel %vm1399, %v3475, 0
      %v3684 = vsel %vm1399, %v3476, 0
      %v3687 = vsel %vm1399, %v3477, 0
      %v3690 = vsel %vm1399, %v3478, 0
      %v3693 = vsel %vm1399, %v3479, 0
      %v3696 = vsel %vm1399, %v3480, 0
      %3698 = vmatprep.subr.mxu0 0.0
      %3699 = vmatpush1.msra.mxu0 0.0
      %3700 = vmatprep.subr.mxu0 0.0
      %3701 = vmatpush1.msra.mxu0 0.0
      %3702 = vmatprep.subr.mxu0 0.0
      %3703 = vmatpush1.msra.mxu0 0.0
      %3704 = vmatprep.subr.mxu0 0.0
      %3705 = vmatpush1.msra.mxu0 0.0
      %3706 = vmatprep.subr.mxu0 0.0
      %3707 = vmatpush1.msra.mxu0 0.0
      %3708 = vmatprep.subr.mxu0 0.0
      %3709 = vmatpush1.msra.mxu0 0.0
      %3710 = vmatprep.subr.mxu0 0.0
      %3711 = vmatpush1.msra.mxu0 0.0
      %3712 = vmatprep.subr.mxu0 0.0
      %3713 = vmatpush1.msra.mxu0 0.0
      %3714 = vmatprep.subr.mxu0 0.0
      %3715 = vmatpush1.msra.mxu0 %v3665
      %3716 = vmatprep.subr.mxu0 0.0
      %3717 = vmatpush1.msra.mxu0 %v3663
      %3718 = vmatprep.subr.mxu0 0.0
      %3719 = vmatpush1.msra.mxu0 %v3661
      %3720 = vmatprep.subr.mxu0 0.0
      %3721 = vmatpush1.msra.mxu0 %v3659
      %3722 = vmatprep.subr.mxu0 0.0
      %3723 = vmatpush1.msra.mxu0 %v3657
      %3724 = vmatprep.subr.mxu0 0.0
      %3725 = vmatpush1.msra.mxu0 %v3655
      %3726 = vmatprep.subr.mxu0 0.0
      %3727 = vmatpush1.msra.mxu0 %v3653
      %3728 = vmatprep.subr.mxu0 0.0
      %3729 = vmatpush1.msra.mxu0 %v3651
      %3730 = vmatprep.subr.mxu0 0.0
      %3731 = vmatpush2.msra.mxu0 0.0
      %3732 = vmatprep.subr.mxu0 0.0
      %3733 = vmatpush2.msra.mxu0 0.0
      %3734 = vmatprep.subr.mxu0 0.0
      %3735 = vmatpush2.msra.mxu0 0.0
      %3736 = vmatprep.subr.mxu0 0.0
      %3737 = vmatpush2.msra.mxu0 0.0
      %3738 = vmatprep.subr.mxu0 0.0
      %3739 = vmatpush2.msra.mxu0 0.0
      %3740 = vmatprep.subr.mxu0 0.0
      %3741 = vmatpush2.msra.mxu0 0.0
      %3742 = vmatprep.subr.mxu0 0.0
      %3743 = vmatpush2.msra.mxu0 0.0
      %3744 = vmatprep.subr.mxu0 0.0
      %3745 = vmatpush2.msra.mxu0 0.0
      %3746 = vmatprep.subr.mxu0 0.0
      %3747 = vmatpush2.msra.mxu0 0.0
      %3748 = vmatprep.subr.mxu0 0.0
      %3749 = vmatpush2.msra.mxu0 0.0
      %3750 = vmatprep.subr.mxu0 0.0
      %3751 = vmatpush2.msra.mxu0 0.0
      %3752 = vmatprep.subr.mxu0 0.0
      %3753 = vmatpush2.msra.mxu0 0.0
      %3754 = vmatprep.subr.mxu0 0.0
      %3755 = vmatpush2.msra.mxu0 0.0
      %3756 = vmatprep.subr.mxu0 0.0
      %3757 = vmatpush2.msra.mxu0 0.0
      %3758 = vmatprep.subr.mxu0 0.0
      %3759 = vmatpush2.msra.mxu0 0.0
      %3760 = vmatprep.subr.mxu0 0.0
      %3761 = vmatpush2.msra.mxu0 0.0
      %3762 = vmatprep.mubr.f32.mxu0 0.0
      %3763 = vmatmul.mubr.f32.gmra.mxu0 %v3675
      %v3764 = vpop.f32.mrf.mxu0
      %v3765 = vadd.f32 0.0, %v3764
      %v3766 = vpop.f32.mrf.mxu0
      %3767 = vmatprep.mubr.f32.mxu0 0.0
      %3768 = vmatmul.mubr.f32.gmra.mxu0 %v3678
      %v3769 = vpop.f32.mrf.mxu0
      %v3770 = vadd.f32 0.0, %v3769
      %v3771 = vpop.f32.mrf.mxu0
      %3772 = vmatprep.mubr.f32.mxu0 0.0
      %3773 = vmatmul.mubr.f32.gmra.mxu0 %v3681
      %v3774 = vpop.f32.mrf.mxu0
      %v3775 = vadd.f32 0.0, %v3774
      %v3776 = vpop.f32.mrf.mxu0
      %3777 = vmatprep.mubr.f32.mxu0 0.0
      %3778 = vmatmul.mubr.f32.gmra.mxu0 %v3684
      %v3779 = vpop.f32.mrf.mxu0
      %v3780 = vadd.f32 0.0, %v3779
      %v3781 = vpop.f32.mrf.mxu0
      %3782 = vmatprep.mubr.f32.mxu0 0.0
      %3783 = vmatmul.mubr.f32.gmra.mxu0 %v3687
      %v3784 = vpop.f32.mrf.mxu0
      %v3785 = vadd.f32 0.0, %v3784
      %v3786 = vpop.f32.mrf.mxu0
      %3787 = vmatprep.mubr.f32.mxu0 0.0
      %3788 = vmatmul.mubr.f32.gmra.mxu0 %v3690
      %v3789 = vpop.f32.mrf.mxu0
      %v3790 = vadd.f32 0.0, %v3789
      %v3791 = vpop.f32.mrf.mxu0
      %3792 = vmatprep.mubr.f32.mxu0 0.0
      %3793 = vmatmul.mubr.f32.gmra.mxu0 %v3693
      %v3794 = vpop.f32.mrf.mxu0
      %v3795 = vadd.f32 0.0, %v3794
      %v3796 = vpop.f32.mrf.mxu0
      %3797 = vmatprep.mubr.f32.mxu0 0.0
      %3798 = vmatmul.mubr.f32.gmra.mxu0 %v3696
      %v3799 = vpop.f32.mrf.mxu0
      %v3800 = vadd.f32 0.0, %v3799
      %v3801 = vpop.f32.mrf.mxu0
      %3802 = vdwg.mxu0
      %3803 = vrot.lane.b32.xlu0 %v2412, 56
      %v3804 = vpop.permute.xlu0 %3803
      %3805 = vrot.lane.b32.xlu0 %v2413, 56
      %v3806 = vpop.permute.xlu0 %3805
      %3807 = vrot.lane.b32.xlu0 %v2414, 56
      %v3808 = vpop.permute.xlu0 %3807
      %3809 = vrot.lane.b32.xlu0 %v2415, 56
      %v3810 = vpop.permute.xlu0 %3809
      %3811 = vrot.lane.b32.xlu0 %v2416, 56
      %v3812 = vpop.permute.xlu0 %3811
      %3813 = vrot.lane.b32.xlu0 %v2417, 56
      %v3814 = vpop.permute.xlu0 %3813
      %3815 = vrot.lane.b32.xlu0 %v2418, 56
      %v3816 = vpop.permute.xlu0 %3815
      %3817 = vrot.lane.b32.xlu0 %v2419, 56
      %v3818 = vpop.permute.xlu0 %3817
      %v3828 = vsel %vm1399, %v3481, 0
      %v3831 = vsel %vm1399, %v3482, 0
      %v3834 = vsel %vm1399, %v3483, 0
      %v3837 = vsel %vm1399, %v3484, 0
      %v3840 = vsel %vm1399, %v3485, 0
      %v3843 = vsel %vm1399, %v3486, 0
      %v3846 = vsel %vm1399, %v3487, 0
      %v3849 = vsel %vm1399, %v3488, 0
      %3851 = vmatprep.subr.mxu0 0.0
      %3852 = vmatpush1.msra.mxu0 0.0
      %3853 = vmatprep.subr.mxu0 0.0
      %3854 = vmatpush1.msra.mxu0 0.0
      %3855 = vmatprep.subr.mxu0 0.0
      %3856 = vmatpush1.msra.mxu0 0.0
      %3857 = vmatprep.subr.mxu0 0.0
      %3858 = vmatpush1.msra.mxu0 0.0
      %3859 = vmatprep.subr.mxu0 0.0
      %3860 = vmatpush1.msra.mxu0 0.0
      %3861 = vmatprep.subr.mxu0 0.0
      %3862 = vmatpush1.msra.mxu0 0.0
      %3863 = vmatprep.subr.mxu0 0.0
      %3864 = vmatpush1.msra.mxu0 0.0
      %3865 = vmatprep.subr.mxu0 0.0
      %3866 = vmatpush1.msra.mxu0 0.0
      %3867 = vmatprep.subr.mxu0 0.0
      %3868 = vmatpush1.msra.mxu0 %v3818
      %3869 = vmatprep.subr.mxu0 0.0
      %3870 = vmatpush1.msra.mxu0 %v3816
      %3871 = vmatprep.subr.mxu0 0.0
      %3872 = vmatpush1.msra.mxu0 %v3814
      %3873 = vmatprep.subr.mxu0 0.0
      %3874 = vmatpush1.msra.mxu0 %v3812
      %3875 = vmatprep.subr.mxu0 0.0
      %3876 = vmatpush1.msra.mxu0 %v3810
      %3877 = vmatprep.subr.mxu0 0.0
      %3878 = vmatpush1.msra.mxu0 %v3808
      %3879 = vmatprep.subr.mxu0 0.0
      %3880 = vmatpush1.msra.mxu0 %v3806
      %3881 = vmatprep.subr.mxu0 0.0
      %3882 = vmatpush1.msra.mxu0 %v3804
      %3883 = vmatprep.subr.mxu0 0.0
      %3884 = vmatpush2.msra.mxu0 0.0
      %3885 = vmatprep.subr.mxu0 0.0
      %3886 = vmatpush2.msra.mxu0 0.0
      %3887 = vmatprep.subr.mxu0 0.0
      %3888 = vmatpush2.msra.mxu0 0.0
      %3889 = vmatprep.subr.mxu0 0.0
      %3890 = vmatpush2.msra.mxu0 0.0
      %3891 = vmatprep.subr.mxu0 0.0
      %3892 = vmatpush2.msra.mxu0 0.0
      %3893 = vmatprep.subr.mxu0 0.0
      %3894 = vmatpush2.msra.mxu0 0.0
      %3895 = vmatprep.subr.mxu0 0.0
      %3896 = vmatpush2.msra.mxu0 0.0
      %3897 = vmatprep.subr.mxu0 0.0
      %3898 = vmatpush2.msra.mxu0 0.0
      %3899 = vmatprep.subr.mxu0 0.0
      %3900 = vmatpush2.msra.mxu0 0.0
      %3901 = vmatprep.subr.mxu0 0.0
      %3902 = vmatpush2.msra.mxu0 0.0
      %3903 = vmatprep.subr.mxu0 0.0
      %3904 = vmatpush2.msra.mxu0 0.0
      %3905 = vmatprep.subr.mxu0 0.0
      %3906 = vmatpush2.msra.mxu0 0.0
      %3907 = vmatprep.subr.mxu0 0.0
      %3908 = vmatpush2.msra.mxu0 0.0
      %3909 = vmatprep.subr.mxu0 0.0
      %3910 = vmatpush2.msra.mxu0 0.0
      %3911 = vmatprep.subr.mxu0 0.0
      %3912 = vmatpush2.msra.mxu0 0.0
      %3913 = vmatprep.subr.mxu0 0.0
      %3914 = vmatpush2.msra.mxu0 0.0
      %3915 = vmatprep.mubr.f32.mxu0 0.0
      %3916 = vmatmul.mubr.f32.gmra.mxu0 %v3828
      %v3917 = vpop.f32.mrf.mxu0
      %v3918 = vadd.f32 0.0, %v3917
      %v3919 = vpop.f32.mrf.mxu0
      %3920 = vmatprep.mubr.f32.mxu0 0.0
      %3921 = vmatmul.mubr.f32.gmra.mxu0 %v3831
      %v3922 = vpop.f32.mrf.mxu0
      %v3923 = vadd.f32 0.0, %v3922
      %v3924 = vpop.f32.mrf.mxu0
      %3925 = vmatprep.mubr.f32.mxu0 0.0
      %3926 = vmatmul.mubr.f32.gmra.mxu0 %v3834
      %v3927 = vpop.f32.mrf.mxu0
      %v3928 = vadd.f32 0.0, %v3927
      %v3929 = vpop.f32.mrf.mxu0
      %3930 = vmatprep.mubr.f32.mxu0 0.0
      %3931 = vmatmul.mubr.f32.gmra.mxu0 %v3837
      %v3932 = vpop.f32.mrf.mxu0
      %v3933 = vadd.f32 0.0, %v3932
      %v3934 = vpop.f32.mrf.mxu0
      %3935 = vmatprep.mubr.f32.mxu0 0.0
      %3936 = vmatmul.mubr.f32.gmra.mxu0 %v3840
      %v3937 = vpop.f32.mrf.mxu0
      %v3938 = vadd.f32 0.0, %v3937
      %v3939 = vpop.f32.mrf.mxu0
      %3940 = vmatprep.mubr.f32.mxu0 0.0
      %3941 = vmatmul.mubr.f32.gmra.mxu0 %v3843
      %v3942 = vpop.f32.mrf.mxu0
      %v3943 = vadd.f32 0.0, %v3942
      %v3944 = vpop.f32.mrf.mxu0
      %3945 = vmatprep.mubr.f32.mxu0 0.0
      %3946 = vmatmul.mubr.f32.gmra.mxu0 %v3846
      %v3947 = vpop.f32.mrf.mxu0
      %v3948 = vadd.f32 0.0, %v3947
      %v3949 = vpop.f32.mrf.mxu0
      %3950 = vmatprep.mubr.f32.mxu0 0.0
      %3951 = vmatmul.mubr.f32.gmra.mxu0 %v3849
      %v3952 = vpop.f32.mrf.mxu0
      %v3953 = vadd.f32 0.0, %v3952
      %v3954 = vpop.f32.mrf.mxu0
      %3955 = vdwg.mxu0
      %3956 = vrot.lane.b32.xlu0 %v2420, 56
      %v3957 = vpop.permute.xlu0 %3956
      %3958 = vrot.lane.b32.xlu0 %v2421, 56
      %v3959 = vpop.permute.xlu0 %3958
      %3960 = vrot.lane.b32.xlu0 %v2422, 56
      %v3961 = vpop.permute.xlu0 %3960
      %3962 = vrot.lane.b32.xlu0 %v2423, 56
      %v3963 = vpop.permute.xlu0 %3962
      %3964 = vrot.lane.b32.xlu0 %v2424, 56
      %v3965 = vpop.permute.xlu0 %3964
      %3966 = vrot.lane.b32.xlu0 %v2425, 56
      %v3967 = vpop.permute.xlu0 %3966
      %3968 = vrot.lane.b32.xlu0 %v2426, 56
      %v3969 = vpop.permute.xlu0 %3968
      %3970 = vrot.lane.b32.xlu0 %v2427, 56
      %v3971 = vpop.permute.xlu0 %3970
      %v3981 = vsel %vm1399, %v3489, 0
      %v3984 = vsel %vm1399, %v3490, 0
      %v3987 = vsel %vm1399, %v3491, 0
      %v3990 = vsel %vm1399, %v3492, 0
      %v3993 = vsel %vm1399, %v3493, 0
      %v3996 = vsel %vm1399, %v3494, 0
      %v3999 = vsel %vm1399, %v3495, 0
      %v4002 = vsel %vm1399, %v3496, 0
      %4004 = vmatprep.subr.mxu0 0.0
      %4005 = vmatpush1.msra.mxu0 0.0
      %4006 = vmatprep.subr.mxu0 0.0
      %4007 = vmatpush1.msra.mxu0 0.0
      %4008 = vmatprep.subr.mxu0 0.0
      %4009 = vmatpush1.msra.mxu0 0.0
      %4010 = vmatprep.subr.mxu0 0.0
      %4011 = vmatpush1.msra.mxu0 0.0
      %4012 = vmatprep.subr.mxu0 0.0
      %4013 = vmatpush1.msra.mxu0 0.0
      %4014 = vmatprep.subr.mxu0 0.0
      %4015 = vmatpush1.msra.mxu0 0.0
      %4016 = vmatprep.subr.mxu0 0.0
      %4017 = vmatpush1.msra.mxu0 0.0
      %4018 = vmatprep.subr.mxu0 0.0
      %4019 = vmatpush1.msra.mxu0 0.0
      %4020 = vmatprep.subr.mxu0 0.0
      %4021 = vmatpush1.msra.mxu0 %v3971
      %4022 = vmatprep.subr.mxu0 0.0
      %4023 = vmatpush1.msra.mxu0 %v3969
      %4024 = vmatprep.subr.mxu0 0.0
      %4025 = vmatpush1.msra.mxu0 %v3967
      %4026 = vmatprep.subr.mxu0 0.0
      %4027 = vmatpush1.msra.mxu0 %v3965
      %4028 = vmatprep.subr.mxu0 0.0
      %4029 = vmatpush1.msra.mxu0 %v3963
      %4030 = vmatprep.subr.mxu0 0.0
      %4031 = vmatpush1.msra.mxu0 %v3961
      %4032 = vmatprep.subr.mxu0 0.0
      %4033 = vmatpush1.msra.mxu0 %v3959
      %4034 = vmatprep.subr.mxu0 0.0
      %4035 = vmatpush1.msra.mxu0 %v3957
      %4036 = vmatprep.subr.mxu0 0.0
      %4037 = vmatpush2.msra.mxu0 0.0
      %4038 = vmatprep.subr.mxu0 0.0
      %4039 = vmatpush2.msra.mxu0 0.0
      %4040 = vmatprep.subr.mxu0 0.0
      %4041 = vmatpush2.msra.mxu0 0.0
      %4042 = vmatprep.subr.mxu0 0.0
      %4043 = vmatpush2.msra.mxu0 0.0
      %4044 = vmatprep.subr.mxu0 0.0
      %4045 = vmatpush2.msra.mxu0 0.0
      %4046 = vmatprep.subr.mxu0 0.0
      %4047 = vmatpush2.msra.mxu0 0.0
      %4048 = vmatprep.subr.mxu0 0.0
      %4049 = vmatpush2.msra.mxu0 0.0
      %4050 = vmatprep.subr.mxu0 0.0
      %4051 = vmatpush2.msra.mxu0 0.0
      %4052 = vmatprep.subr.mxu0 0.0
      %4053 = vmatpush2.msra.mxu0 0.0
      %4054 = vmatprep.subr.mxu0 0.0
      %4055 = vmatpush2.msra.mxu0 0.0
      %4056 = vmatprep.subr.mxu0 0.0
      %4057 = vmatpush2.msra.mxu0 0.0
      %4058 = vmatprep.subr.mxu0 0.0
      %4059 = vmatpush2.msra.mxu0 0.0
      %4060 = vmatprep.subr.mxu0 0.0
      %4061 = vmatpush2.msra.mxu0 0.0
      %4062 = vmatprep.subr.mxu0 0.0
      %4063 = vmatpush2.msra.mxu0 0.0
      %4064 = vmatprep.subr.mxu0 0.0
      %4065 = vmatpush2.msra.mxu0 0.0
      %4066 = vmatprep.subr.mxu0 0.0
      %4067 = vmatpush2.msra.mxu0 0.0
      %4068 = vmatprep.mubr.f32.mxu0 0.0
      %4069 = vmatmul.mubr.f32.gmra.mxu0 %v3981
      %v4070 = vpop.f32.mrf.mxu0
      %v4071 = vadd.f32 0.0, %v4070
      %v4072 = vpop.f32.mrf.mxu0
      %4073 = vmatprep.mubr.f32.mxu0 0.0
      %4074 = vmatmul.mubr.f32.gmra.mxu0 %v3984
      %v4075 = vpop.f32.mrf.mxu0
      %v4076 = vadd.f32 0.0, %v4075
      %v4077 = vpop.f32.mrf.mxu0
      %4078 = vmatprep.mubr.f32.mxu0 0.0
      %4079 = vmatmul.mubr.f32.gmra.mxu0 %v3987
      %v4080 = vpop.f32.mrf.mxu0
      %v4081 = vadd.f32 0.0, %v4080
      %v4082 = vpop.f32.mrf.mxu0
      %4083 = vmatprep.mubr.f32.mxu0 0.0
      %4084 = vmatmul.mubr.f32.gmra.mxu0 %v3990
      %v4085 = vpop.f32.mrf.mxu0
      %v4086 = vadd.f32 0.0, %v4085
      %v4087 = vpop.f32.mrf.mxu0
      %4088 = vmatprep.mubr.f32.mxu0 0.0
      %4089 = vmatmul.mubr.f32.gmra.mxu0 %v3993
      %v4090 = vpop.f32.mrf.mxu0
      %v4091 = vadd.f32 0.0, %v4090
      %v4092 = vpop.f32.mrf.mxu0
      %4093 = vmatprep.mubr.f32.mxu0 0.0
      %4094 = vmatmul.mubr.f32.gmra.mxu0 %v3996
      %v4095 = vpop.f32.mrf.mxu0
      %v4096 = vadd.f32 0.0, %v4095
      %v4097 = vpop.f32.mrf.mxu0
      %4098 = vmatprep.mubr.f32.mxu0 0.0
      %4099 = vmatmul.mubr.f32.gmra.mxu0 %v3999
      %v4100 = vpop.f32.mrf.mxu0
      %v4101 = vadd.f32 0.0, %v4100
      %v4102 = vpop.f32.mrf.mxu0
      %4103 = vmatprep.mubr.f32.mxu0 0.0
      %4104 = vmatmul.mubr.f32.gmra.mxu0 %v4002
      %v4105 = vpop.f32.mrf.mxu0
      %v4106 = vadd.f32 0.0, %v4105
      %v4107 = vpop.f32.mrf.mxu0
      %4108 = vdwg.mxu0
      %4141 = vrot.lane.b32.xlu0 %v3612, 8
      %v4142 = vpop.permute.xlu0 %4141
      %4143 = vrot.lane.b32.xlu0 %v3617, 8
      %v4144 = vpop.permute.xlu0 %4143
      %4145 = vrot.lane.b32.xlu0 %v3622, 8
      %v4146 = vpop.permute.xlu0 %4145
      %4147 = vrot.lane.b32.xlu0 %v3627, 8
      %v4148 = vpop.permute.xlu0 %4147
      %4149 = vrot.lane.b32.xlu0 %v3632, 8
      %v4150 = vpop.permute.xlu0 %4149
      %4151 = vrot.lane.b32.xlu0 %v3637, 8
      %v4152 = vpop.permute.xlu0 %4151
      %4153 = vrot.lane.b32.xlu0 %v3642, 8
      %v4154 = vpop.permute.xlu0 %4153
      %4155 = vrot.lane.b32.xlu0 %v3647, 8
      %v4156 = vpop.permute.xlu0 %4155
      %4157 = vrot.lane.b32.xlu0 %v3765, 8
      %v4158 = vpop.permute.xlu0 %4157
      %4159 = vrot.lane.b32.xlu0 %v3770, 8
      %v4160 = vpop.permute.xlu0 %4159
      %4161 = vrot.lane.b32.xlu0 %v3775, 8
      %v4162 = vpop.permute.xlu0 %4161
      %4163 = vrot.lane.b32.xlu0 %v3780, 8
      %v4164 = vpop.permute.xlu0 %4163
      %4165 = vrot.lane.b32.xlu0 %v3785, 8
      %v4166 = vpop.permute.xlu0 %4165
      %4167 = vrot.lane.b32.xlu0 %v3790, 8
      %v4168 = vpop.permute.xlu0 %4167
      %4169 = vrot.lane.b32.xlu0 %v3795, 8
      %v4170 = vpop.permute.xlu0 %4169
      %4171 = vrot.lane.b32.xlu0 %v3800, 8
      %v4172 = vpop.permute.xlu0 %4171
      %4173 = vrot.lane.b32.xlu0 %v3918, 8
      %v4174 = vpop.permute.xlu0 %4173
      %4175 = vrot.lane.b32.xlu0 %v3923, 8
      %v4176 = vpop.permute.xlu0 %4175
      %4177 = vrot.lane.b32.xlu0 %v3928, 8
      %v4178 = vpop.permute.xlu0 %4177
      %4179 = vrot.lane.b32.xlu0 %v3933, 8
      %v4180 = vpop.permute.xlu0 %4179
      %4181 = vrot.lane.b32.xlu0 %v3938, 8
      %v4182 = vpop.permute.xlu0 %4181
      %4183 = vrot.lane.b32.xlu0 %v3943, 8
      %v4184 = vpop.permute.xlu0 %4183
      %4185 = vrot.lane.b32.xlu0 %v3948, 8
      %v4186 = vpop.permute.xlu0 %4185
      %4187 = vrot.lane.b32.xlu0 %v3953, 8
      %v4188 = vpop.permute.xlu0 %4187
      %4189 = vrot.lane.b32.xlu0 %v4071, 8
      %v4190 = vpop.permute.xlu0 %4189
      %4191 = vrot.lane.b32.xlu0 %v4076, 8
      %v4192 = vpop.permute.xlu0 %4191
      %4193 = vrot.lane.b32.xlu0 %v4081, 8
      %v4194 = vpop.permute.xlu0 %4193
      %4195 = vrot.lane.b32.xlu0 %v4086, 8
      %v4196 = vpop.permute.xlu0 %4195
      %4197 = vrot.lane.b32.xlu0 %v4091, 8
      %v4198 = vpop.permute.xlu0 %4197
      %4199 = vrot.lane.b32.xlu0 %v4096, 8
      %v4200 = vpop.permute.xlu0 %4199
      %4201 = vrot.lane.b32.xlu0 %v4101, 8
      %v4202 = vpop.permute.xlu0 %4201
      %4203 = vrot.lane.b32.xlu0 %v4106, 8
      %v4204 = vpop.permute.xlu0 %4203
      %vm4237 = vcmask 130112
      %4238 = vst.msk [vmem:[#allocation3] sm:$0xff] %vm4237, %v4142
      %4239 = vst.msk [vmem:[#allocation3 + $0x8] sm:$0xff] %vm4237, %v4144
      %4240 = vst.msk [vmem:[#allocation3 + $0x10] sm:$0xff] %vm4237, %v4146
      %4241 = vst.msk [vmem:[#allocation3 + $0x18] sm:$0xff] %vm4237, %v4148
      %4242 = vst.msk [vmem:[#allocation3 + $0x20] sm:$0xff] %vm4237, %v4150
      %4243 = vst.msk [vmem:[#allocation3 + $0x28] sm:$0xff] %vm4237, %v4152
      %4244 = vst.msk [vmem:[#allocation3 + $0x30] sm:$0xff] %vm4237, %v4154
      %4245 = vst.msk [vmem:[#allocation3 + $0x38] sm:$0xff] %vm4237, %v4156
      %4246 = vst.msk [vmem:[#allocation3 + $0x40] sm:$0xff] %vm4237, %v4158
      %4247 = vst.msk [vmem:[#allocation3 + $0x48] sm:$0xff] %vm4237, %v4160
      %4248 = vst.msk [vmem:[#allocation3 + $0x50] sm:$0xff] %vm4237, %v4162
      %4249 = vst.msk [vmem:[#allocation3 + $0x58] sm:$0xff] %vm4237, %v4164
      %4250 = vst.msk [vmem:[#allocation3 + $0x60] sm:$0xff] %vm4237, %v4166
      %4251 = vst.msk [vmem:[#allocation3 + $0x68] sm:$0xff] %vm4237, %v4168
      %4252 = vst.msk [vmem:[#allocation3 + $0x70] sm:$0xff] %vm4237, %v4170
      %4253 = vst.msk [vmem:[#allocation3 + $0x78] sm:$0xff] %vm4237, %v4172
      %4254 = vst.msk [vmem:[#allocation3 + $0x80] sm:$0xff] %vm4237, %v4174
      %4255 = vst.msk [vmem:[#allocation3 + $0x88] sm:$0xff] %vm4237, %v4176
      %4256 = vst.msk [vmem:[#allocation3 + $0x90] sm:$0xff] %vm4237, %v4178
      %4257 = vst.msk [vmem:[#allocation3 + $0x98] sm:$0xff] %vm4237, %v4180
      %4258 = vst.msk [vmem:[#allocation3 + $0xa0] sm:$0xff] %vm4237, %v4182
      %4259 = vst.msk [vmem:[#allocation3 + $0xa8] sm:$0xff] %vm4237, %v4184
      %4260 = vst.msk [vmem:[#allocation3 + $0xb0] sm:$0xff] %vm4237, %v4186
      %4261 = vst.msk [vmem:[#allocation3 + $0xb8] sm:$0xff] %vm4237, %v4188
      %4262 = vst.msk [vmem:[#allocation3 + $0xc0] sm:$0xff] %vm4237, %v4190
      %4263 = vst.msk [vmem:[#allocation3 + $0xc8] sm:$0xff] %vm4237, %v4192
      %4264 = vst.msk [vmem:[#allocation3 + $0xd0] sm:$0xff] %vm4237, %v4194
      %4265 = vst.msk [vmem:[#allocation3 + $0xd8] sm:$0xff] %vm4237, %v4196
      %4266 = vst.msk [vmem:[#allocation3 + $0xe0] sm:$0xff] %vm4237, %v4198
      %4267 = vst.msk [vmem:[#allocation3 + $0xe8] sm:$0xff] %vm4237, %v4200
      %4268 = vst.msk [vmem:[#allocation3 + $0xf0] sm:$0xff] %vm4237, %v4202
      %4269 = vst.msk [vmem:[#allocation3 + $0xf8] sm:$0xff] %vm4237, %v4204
      %v4270 = vld [vmem:[#allocation2] sm:$0xff]
      %v4271 = vld [vmem:[#allocation2 + $0x8] sm:$0xff]
      %v4272 = vld [vmem:[#allocation2 + $0x10] sm:$0xff]
      %v4273 = vld [vmem:[#allocation2 + $0x18] sm:$0xff]
      %v4274 = vld [vmem:[#allocation2 + $0x20] sm:$0xff]
      %v4275 = vld [vmem:[#allocation2 + $0x28] sm:$0xff]
      %v4276 = vld [vmem:[#allocation2 + $0x30] sm:$0xff]
      %v4277 = vld [vmem:[#allocation2 + $0x38] sm:$0xff]
      %v4278 = vld [vmem:[#allocation2 + $0x40] sm:$0xff]
      %v4279 = vld [vmem:[#allocation2 + $0x48] sm:$0xff]
      %v4280 = vld [vmem:[#allocation2 + $0x50] sm:$0xff]
      %v4281 = vld [vmem:[#allocation2 + $0x58] sm:$0xff]
      %v4282 = vld [vmem:[#allocation2 + $0x60] sm:$0xff]
      %v4283 = vld [vmem:[#allocation2 + $0x68] sm:$0xff]
      %v4284 = vld [vmem:[#allocation2 + $0x70] sm:$0xff]
      %v4285 = vld [vmem:[#allocation2 + $0x78] sm:$0xff]
      %v4286 = vld [vmem:[#allocation2 + $0x80] sm:$0xff]
      %v4287 = vld [vmem:[#allocation2 + $0x88] sm:$0xff]
      %v4288 = vld [vmem:[#allocation2 + $0x90] sm:$0xff]
      %v4289 = vld [vmem:[#allocation2 + $0x98] sm:$0xff]
      %v4290 = vld [vmem:[#allocation2 + $0xa0] sm:$0xff]
      %v4291 = vld [vmem:[#allocation2 + $0xa8] sm:$0xff]
      %v4292 = vld [vmem:[#allocation2 + $0xb0] sm:$0xff]
      %v4293 = vld [vmem:[#allocation2 + $0xb8] sm:$0xff]
      %v4294 = vld [vmem:[#allocation2 + $0xc0] sm:$0xff]
      %v4295 = vld [vmem:[#allocation2 + $0xc8] sm:$0xff]
      %v4296 = vld [vmem:[#allocation2 + $0xd0] sm:$0xff]
      %v4297 = vld [vmem:[#allocation2 + $0xd8] sm:$0xff]
      %v4298 = vld [vmem:[#allocation2 + $0xe0] sm:$0xff]
      %v4299 = vld [vmem:[#allocation2 + $0xe8] sm:$0xff]
      %v4300 = vld [vmem:[#allocation2 + $0xf0] sm:$0xff]
      %v4301 = vld [vmem:[#allocation2 + $0xf8] sm:$0xff]
      %s4302 = scalar_lea.vmem %s304, 128
      %v4303 = vld [vmem:[%s4302] sm:$0xff]
      %v4304 = vld [vmem:[%s4302 + $0x8] sm:$0xff]
      %v4305 = vld [vmem:[%s4302 + $0x10] sm:$0xff]
      %v4306 = vld [vmem:[%s4302 + $0x18] sm:$0xff]
      %v4307 = vld [vmem:[%s4302 + $0x20] sm:$0xff]
      %v4308 = vld [vmem:[%s4302 + $0x28] sm:$0xff]
      %v4309 = vld [vmem:[%s4302 + $0x30] sm:$0xff]
      %v4310 = vld [vmem:[%s4302 + $0x38] sm:$0xff]
      %4319 = vrot.lane.b32.xlu0 %v4270, 112
      %v4320 = vpop.permute.xlu0 %4319
      %4321 = vrot.lane.b32.xlu0 %v4271, 112
      %v4322 = vpop.permute.xlu0 %4321
      %4323 = vrot.lane.b32.xlu0 %v4272, 112
      %v4324 = vpop.permute.xlu0 %4323
      %4325 = vrot.lane.b32.xlu0 %v4273, 112
      %v4326 = vpop.permute.xlu0 %4325
      %4327 = vrot.lane.b32.xlu0 %v4274, 112
      %v4328 = vpop.permute.xlu0 %4327
      %4329 = vrot.lane.b32.xlu0 %v4275, 112
      %v4330 = vpop.permute.xlu0 %4329
      %4331 = vrot.lane.b32.xlu0 %v4276, 112
      %v4332 = vpop.permute.xlu0 %4331
      %4333 = vrot.lane.b32.xlu0 %v4277, 112
      %v4334 = vpop.permute.xlu0 %4333
      %4335 = vrot.lane.b32.xlu0 %v4270, 80
      %v4336 = vpop.permute.xlu0 %4335
      %4337 = vrot.lane.b32.xlu0 %v4271, 80
      %v4338 = vpop.permute.xlu0 %4337
      %4339 = vrot.lane.b32.xlu0 %v4272, 80
      %v4340 = vpop.permute.xlu0 %4339
      %4341 = vrot.lane.b32.xlu0 %v4273, 80
      %v4342 = vpop.permute.xlu0 %4341
      %4343 = vrot.lane.b32.xlu0 %v4274, 80
      %v4344 = vpop.permute.xlu0 %4343
      %4345 = vrot.lane.b32.xlu0 %v4275, 80
      %v4346 = vpop.permute.xlu0 %4345
      %4347 = vrot.lane.b32.xlu0 %v4276, 80
      %v4348 = vpop.permute.xlu0 %4347
      %4349 = vrot.lane.b32.xlu0 %v4277, 80
      %v4350 = vpop.permute.xlu0 %4349
      %v4351 = vsel %vm778, %v4320, 0
      %v4353 = vsel %vm778, %v4322, 0
      %v4355 = vsel %vm778, %v4324, 0
      %v4357 = vsel %vm778, %v4326, 0
      %v4359 = vsel %vm778, %v4328, 0
      %v4361 = vsel %vm778, %v4330, 0
      %v4363 = vsel %vm778, %v4332, 0
      %v4365 = vsel %vm778, %v4334, 0
      %v4367 = vsel %vm778, %v4336, 0
      %v4369 = vsel %vm778, %v4338, 0
      %v4371 = vsel %vm778, %v4340, 0
      %v4373 = vsel %vm778, %v4342, 0
      %v4375 = vsel %vm778, %v4344, 0
      %v4377 = vsel %vm778, %v4346, 0
      %v4379 = vsel %vm778, %v4348, 0
      %v4381 = vsel %vm778, %v4350, 0
      %4383 = vmatprep.subr.mxu0 0.0
      %4384 = vmatpush1.xpose.msra.mxu0 0.0
      %4385 = vmatprep.subr.mxu0 0.0
      %4386 = vmatpush1.xpose.msra.mxu0 0.0
      %4387 = vmatprep.subr.mxu0 0.0
      %4388 = vmatpush1.xpose.msra.mxu0 0.0
      %4389 = vmatprep.subr.mxu0 0.0
      %4390 = vmatpush1.xpose.msra.mxu0 0.0
      %4391 = vmatprep.subr.mxu0 0.0
      %4392 = vmatpush1.xpose.msra.mxu0 0.0
      %4393 = vmatprep.subr.mxu0 0.0
      %4394 = vmatpush1.xpose.msra.mxu0 0.0
      %4395 = vmatprep.subr.mxu0 0.0
      %4396 = vmatpush1.xpose.msra.mxu0 0.0
      %4397 = vmatprep.subr.mxu0 0.0
      %4398 = vmatpush1.xpose.msra.mxu0 0.0
      %4399 = vmatprep.subr.mxu0 0.0
      %4400 = vmatpush1.xpose.msra.mxu0 %v4381
      %4401 = vmatprep.subr.mxu0 0.0
      %4402 = vmatpush1.xpose.msra.mxu0 %v4379
      %4403 = vmatprep.subr.mxu0 0.0
      %4404 = vmatpush1.xpose.msra.mxu0 %v4377
      %4405 = vmatprep.subr.mxu0 0.0
      %4406 = vmatpush1.xpose.msra.mxu0 %v4375
      %4407 = vmatprep.subr.mxu0 0.0
      %4408 = vmatpush1.xpose.msra.mxu0 %v4373
      %4409 = vmatprep.subr.mxu0 0.0
      %4410 = vmatpush1.xpose.msra.mxu0 %v4371
      %4411 = vmatprep.subr.mxu0 0.0
      %4412 = vmatpush1.xpose.msra.mxu0 %v4369
      %4413 = vmatprep.subr.mxu0 0.0
      %4414 = vmatpush1.xpose.msra.mxu0 %v4367
      %4415 = vmatprep.subr.mxu0 0.0
      %4416 = vmatpush2.xpose.msra.mxu0 0.0
      %4417 = vmatprep.subr.mxu0 0.0
      %4418 = vmatpush2.xpose.msra.mxu0 0.0
      %4419 = vmatprep.subr.mxu0 0.0
      %4420 = vmatpush2.xpose.msra.mxu0 0.0
      %4421 = vmatprep.subr.mxu0 0.0
      %4422 = vmatpush2.xpose.msra.mxu0 0.0
      %4423 = vmatprep.subr.mxu0 0.0
      %4424 = vmatpush2.xpose.msra.mxu0 0.0
      %4425 = vmatprep.subr.mxu0 0.0
      %4426 = vmatpush2.xpose.msra.mxu0 0.0
      %4427 = vmatprep.subr.mxu0 0.0
      %4428 = vmatpush2.xpose.msra.mxu0 0.0
      %4429 = vmatprep.subr.mxu0 0.0
      %4430 = vmatpush2.xpose.msra.mxu0 0.0
      %4431 = vmatprep.subr.mxu0 0.0
      %4432 = vmatpush2.xpose.msra.mxu0 0.0
      %4433 = vmatprep.subr.mxu0 0.0
      %4434 = vmatpush2.xpose.msra.mxu0 0.0
      %4435 = vmatprep.subr.mxu0 0.0
      %4436 = vmatpush2.xpose.msra.mxu0 0.0
      %4437 = vmatprep.subr.mxu0 0.0
      %4438 = vmatpush2.xpose.msra.mxu0 0.0
      %4439 = vmatprep.subr.mxu0 0.0
      %4440 = vmatpush2.xpose.msra.mxu0 0.0
      %4441 = vmatprep.subr.mxu0 0.0
      %4442 = vmatpush2.xpose.msra.mxu0 0.0
      %4443 = vmatprep.subr.mxu0 0.0
      %4444 = vmatpush2.xpose.msra.mxu0 0.0
      %4445 = vmatprep.subr.mxu0 0.0
      %4446 = vmatpush2.xpose.msra.mxu0 0.0
      %4447 = vmatprep.mubr.f32.mxu0 0.0
      %4448 = vmatmul.mubr.f32.gmra.mxu0 %v4351
      %v4449 = vpop.f32.mrf.mxu0
      %v4450 = vadd.f32 %v4303, %v4449
      %v4451 = vpop.f32.mrf.mxu0
      %4452 = vmatprep.mubr.f32.mxu0 0.0
      %4453 = vmatmul.mubr.f32.gmra.mxu0 %v4353
      %v4454 = vpop.f32.mrf.mxu0
      %v4455 = vadd.f32 %v4304, %v4454
      %v4456 = vpop.f32.mrf.mxu0
      %4457 = vmatprep.mubr.f32.mxu0 0.0
      %4458 = vmatmul.mubr.f32.gmra.mxu0 %v4355
      %v4459 = vpop.f32.mrf.mxu0
      %v4460 = vadd.f32 %v4305, %v4459
      %v4461 = vpop.f32.mrf.mxu0
      %4462 = vmatprep.mubr.f32.mxu0 0.0
      %4463 = vmatmul.mubr.f32.gmra.mxu0 %v4357
      %v4464 = vpop.f32.mrf.mxu0
      %v4465 = vadd.f32 %v4306, %v4464
      %v4466 = vpop.f32.mrf.mxu0
      %4467 = vmatprep.mubr.f32.mxu0 0.0
      %4468 = vmatmul.mubr.f32.gmra.mxu0 %v4359
      %v4469 = vpop.f32.mrf.mxu0
      %v4470 = vadd.f32 %v4307, %v4469
      %v4471 = vpop.f32.mrf.mxu0
      %4472 = vmatprep.mubr.f32.mxu0 0.0
      %4473 = vmatmul.mubr.f32.gmra.mxu0 %v4361
      %v4474 = vpop.f32.mrf.mxu0
      %v4475 = vadd.f32 %v4308, %v4474
      %v4476 = vpop.f32.mrf.mxu0
      %4477 = vmatprep.mubr.f32.mxu0 0.0
      %4478 = vmatmul.mubr.f32.gmra.mxu0 %v4363
      %v4479 = vpop.f32.mrf.mxu0
      %v4480 = vadd.f32 %v4309, %v4479
      %v4481 = vpop.f32.mrf.mxu0
      %4482 = vmatprep.mubr.f32.mxu0 0.0
      %4483 = vmatmul.mubr.f32.gmra.mxu0 %v4365
      %v4484 = vpop.f32.mrf.mxu0
      %v4485 = vadd.f32 %v4310, %v4484
      %v4486 = vpop.f32.mrf.mxu0
      %4487 = vdwg.mxu0
      %4496 = vrot.lane.b32.xlu0 %v4278, 112
      %v4497 = vpop.permute.xlu0 %4496
      %4498 = vrot.lane.b32.xlu0 %v4279, 112
      %v4499 = vpop.permute.xlu0 %4498
      %4500 = vrot.lane.b32.xlu0 %v4280, 112
      %v4501 = vpop.permute.xlu0 %4500
      %4502 = vrot.lane.b32.xlu0 %v4281, 112
      %v4503 = vpop.permute.xlu0 %4502
      %4504 = vrot.lane.b32.xlu0 %v4282, 112
      %v4505 = vpop.permute.xlu0 %4504
      %4506 = vrot.lane.b32.xlu0 %v4283, 112
      %v4507 = vpop.permute.xlu0 %4506
      %4508 = vrot.lane.b32.xlu0 %v4284, 112
      %v4509 = vpop.permute.xlu0 %4508
      %4510 = vrot.lane.b32.xlu0 %v4285, 112
      %v4511 = vpop.permute.xlu0 %4510
      %4512 = vrot.lane.b32.xlu0 %v4278, 80
      %v4513 = vpop.permute.xlu0 %4512
      %4514 = vrot.lane.b32.xlu0 %v4279, 80
      %v4515 = vpop.permute.xlu0 %4514
      %4516 = vrot.lane.b32.xlu0 %v4280, 80
      %v4517 = vpop.permute.xlu0 %4516
      %4518 = vrot.lane.b32.xlu0 %v4281, 80
      %v4519 = vpop.permute.xlu0 %4518
      %4520 = vrot.lane.b32.xlu0 %v4282, 80
      %v4521 = vpop.permute.xlu0 %4520
      %4522 = vrot.lane.b32.xlu0 %v4283, 80
      %v4523 = vpop.permute.xlu0 %4522
      %4524 = vrot.lane.b32.xlu0 %v4284, 80
      %v4525 = vpop.permute.xlu0 %4524
      %4526 = vrot.lane.b32.xlu0 %v4285, 80
      %v4527 = vpop.permute.xlu0 %4526
      %v4528 = vsel %vm778, %v4497, 0
      %v4530 = vsel %vm778, %v4499, 0
      %v4532 = vsel %vm778, %v4501, 0
      %v4534 = vsel %vm778, %v4503, 0
      %v4536 = vsel %vm778, %v4505, 0
      %v4538 = vsel %vm778, %v4507, 0
      %v4540 = vsel %vm778, %v4509, 0
      %v4542 = vsel %vm778, %v4511, 0
      %v4544 = vsel %vm778, %v4513, 0
      %v4546 = vsel %vm778, %v4515, 0
      %v4548 = vsel %vm778, %v4517, 0
      %v4550 = vsel %vm778, %v4519, 0
      %v4552 = vsel %vm778, %v4521, 0
      %v4554 = vsel %vm778, %v4523, 0
      %v4556 = vsel %vm778, %v4525, 0
      %v4558 = vsel %vm778, %v4527, 0
      %4560 = vmatprep.subr.mxu0 0.0
      %4561 = vmatpush1.xpose.msra.mxu0 0.0
      %4562 = vmatprep.subr.mxu0 0.0
      %4563 = vmatpush1.xpose.msra.mxu0 0.0
      %4564 = vmatprep.subr.mxu0 0.0
      %4565 = vmatpush1.xpose.msra.mxu0 0.0
      %4566 = vmatprep.subr.mxu0 0.0
      %4567 = vmatpush1.xpose.msra.mxu0 0.0
      %4568 = vmatprep.subr.mxu0 0.0
      %4569 = vmatpush1.xpose.msra.mxu0 0.0
      %4570 = vmatprep.subr.mxu0 0.0
      %4571 = vmatpush1.xpose.msra.mxu0 0.0
      %4572 = vmatprep.subr.mxu0 0.0
      %4573 = vmatpush1.xpose.msra.mxu0 0.0
      %4574 = vmatprep.subr.mxu0 0.0
      %4575 = vmatpush1.xpose.msra.mxu0 0.0
      %4576 = vmatprep.subr.mxu0 0.0
      %4577 = vmatpush1.xpose.msra.mxu0 %v4558
      %4578 = vmatprep.subr.mxu0 0.0
      %4579 = vmatpush1.xpose.msra.mxu0 %v4556
      %4580 = vmatprep.subr.mxu0 0.0
      %4581 = vmatpush1.xpose.msra.mxu0 %v4554
      %4582 = vmatprep.subr.mxu0 0.0
      %4583 = vmatpush1.xpose.msra.mxu0 %v4552
      %4584 = vmatprep.subr.mxu0 0.0
      %4585 = vmatpush1.xpose.msra.mxu0 %v4550
      %4586 = vmatprep.subr.mxu0 0.0
      %4587 = vmatpush1.xpose.msra.mxu0 %v4548
      %4588 = vmatprep.subr.mxu0 0.0
      %4589 = vmatpush1.xpose.msra.mxu0 %v4546
      %4590 = vmatprep.subr.mxu0 0.0
      %4591 = vmatpush1.xpose.msra.mxu0 %v4544
      %4592 = vmatprep.subr.mxu0 0.0
      %4593 = vmatpush2.xpose.msra.mxu0 0.0
      %4594 = vmatprep.subr.mxu0 0.0
      %4595 = vmatpush2.xpose.msra.mxu0 0.0
      %4596 = vmatprep.subr.mxu0 0.0
      %4597 = vmatpush2.xpose.msra.mxu0 0.0
      %4598 = vmatprep.subr.mxu0 0.0
      %4599 = vmatpush2.xpose.msra.mxu0 0.0
      %4600 = vmatprep.subr.mxu0 0.0
      %4601 = vmatpush2.xpose.msra.mxu0 0.0
      %4602 = vmatprep.subr.mxu0 0.0
      %4603 = vmatpush2.xpose.msra.mxu0 0.0
      %4604 = vmatprep.subr.mxu0 0.0
      %4605 = vmatpush2.xpose.msra.mxu0 0.0
      %4606 = vmatprep.subr.mxu0 0.0
      %4607 = vmatpush2.xpose.msra.mxu0 0.0
      %4608 = vmatprep.subr.mxu0 0.0
      %4609 = vmatpush2.xpose.msra.mxu0 0.0
      %4610 = vmatprep.subr.mxu0 0.0
      %4611 = vmatpush2.xpose.msra.mxu0 0.0
      %4612 = vmatprep.subr.mxu0 0.0
      %4613 = vmatpush2.xpose.msra.mxu0 0.0
      %4614 = vmatprep.subr.mxu0 0.0
      %4615 = vmatpush2.xpose.msra.mxu0 0.0
      %4616 = vmatprep.subr.mxu0 0.0
      %4617 = vmatpush2.xpose.msra.mxu0 0.0
      %4618 = vmatprep.subr.mxu0 0.0
      %4619 = vmatpush2.xpose.msra.mxu0 0.0
      %4620 = vmatprep.subr.mxu0 0.0
      %4621 = vmatpush2.xpose.msra.mxu0 0.0
      %4622 = vmatprep.subr.mxu0 0.0
      %4623 = vmatpush2.xpose.msra.mxu0 0.0
      %4624 = vmatprep.mubr.f32.mxu0 0.0
      %4625 = vmatmul.mubr.f32.gmra.mxu0 %v4528
      %v4626 = vpop.f32.mrf.mxu0
      %v4627 = vadd.f32 %v4303, %v4626
      %v4628 = vpop.f32.mrf.mxu0
      %4629 = vmatprep.mubr.f32.mxu0 0.0
      %4630 = vmatmul.mubr.f32.gmra.mxu0 %v4530
      %v4631 = vpop.f32.mrf.mxu0
      %v4632 = vadd.f32 %v4304, %v4631
      %v4633 = vpop.f32.mrf.mxu0
      %4634 = vmatprep.mubr.f32.mxu0 0.0
      %4635 = vmatmul.mubr.f32.gmra.mxu0 %v4532
      %v4636 = vpop.f32.mrf.mxu0
      %v4637 = vadd.f32 %v4305, %v4636
      %v4638 = vpop.f32.mrf.mxu0
      %4639 = vmatprep.mubr.f32.mxu0 0.0
      %4640 = vmatmul.mubr.f32.gmra.mxu0 %v4534
      %v4641 = vpop.f32.mrf.mxu0
      %v4642 = vadd.f32 %v4306, %v4641
      %v4643 = vpop.f32.mrf.mxu0
      %4644 = vmatprep.mubr.f32.mxu0 0.0
      %4645 = vmatmul.mubr.f32.gmra.mxu0 %v4536
      %v4646 = vpop.f32.mrf.mxu0
      %v4647 = vadd.f32 %v4307, %v4646
      %v4648 = vpop.f32.mrf.mxu0
      %4649 = vmatprep.mubr.f32.mxu0 0.0
      %4650 = vmatmul.mubr.f32.gmra.mxu0 %v4538
      %v4651 = vpop.f32.mrf.mxu0
      %v4652 = vadd.f32 %v4308, %v4651
      %v4653 = vpop.f32.mrf.mxu0
      %4654 = vmatprep.mubr.f32.mxu0 0.0
      %4655 = vmatmul.mubr.f32.gmra.mxu0 %v4540
      %v4656 = vpop.f32.mrf.mxu0
      %v4657 = vadd.f32 %v4309, %v4656
      %v4658 = vpop.f32.mrf.mxu0
      %4659 = vmatprep.mubr.f32.mxu0 0.0
      %4660 = vmatmul.mubr.f32.gmra.mxu0 %v4542
      %v4661 = vpop.f32.mrf.mxu0
      %v4662 = vadd.f32 %v4310, %v4661
      %v4663 = vpop.f32.mrf.mxu0
      %4664 = vdwg.mxu0
      %4673 = vrot.lane.b32.xlu0 %v4286, 112
      %v4674 = vpop.permute.xlu0 %4673
      %4675 = vrot.lane.b32.xlu0 %v4287, 112
      %v4676 = vpop.permute.xlu0 %4675
      %4677 = vrot.lane.b32.xlu0 %v4288, 112
      %v4678 = vpop.permute.xlu0 %4677
      %4679 = vrot.lane.b32.xlu0 %v4289, 112
      %v4680 = vpop.permute.xlu0 %4679
      %4681 = vrot.lane.b32.xlu0 %v4290, 112
      %v4682 = vpop.permute.xlu0 %4681
      %4683 = vrot.lane.b32.xlu0 %v4291, 112
      %v4684 = vpop.permute.xlu0 %4683
      %4685 = vrot.lane.b32.xlu0 %v4292, 112
      %v4686 = vpop.permute.xlu0 %4685
      %4687 = vrot.lane.b32.xlu0 %v4293, 112
      %v4688 = vpop.permute.xlu0 %4687
      %4689 = vrot.lane.b32.xlu0 %v4286, 80
      %v4690 = vpop.permute.xlu0 %4689
      %4691 = vrot.lane.b32.xlu0 %v4287, 80
      %v4692 = vpop.permute.xlu0 %4691
      %4693 = vrot.lane.b32.xlu0 %v4288, 80
      %v4694 = vpop.permute.xlu0 %4693
      %4695 = vrot.lane.b32.xlu0 %v4289, 80
      %v4696 = vpop.permute.xlu0 %4695
      %4697 = vrot.lane.b32.xlu0 %v4290, 80
      %v4698 = vpop.permute.xlu0 %4697
      %4699 = vrot.lane.b32.xlu0 %v4291, 80
      %v4700 = vpop.permute.xlu0 %4699
      %4701 = vrot.lane.b32.xlu0 %v4292, 80
      %v4702 = vpop.permute.xlu0 %4701
      %4703 = vrot.lane.b32.xlu0 %v4293, 80
      %v4704 = vpop.permute.xlu0 %4703
      %v4705 = vsel %vm778, %v4674, 0
      %v4707 = vsel %vm778, %v4676, 0
      %v4709 = vsel %vm778, %v4678, 0
      %v4711 = vsel %vm778, %v4680, 0
      %v4713 = vsel %vm778, %v4682, 0
      %v4715 = vsel %vm778, %v4684, 0
      %v4717 = vsel %vm778, %v4686, 0
      %v4719 = vsel %vm778, %v4688, 0
      %v4721 = vsel %vm778, %v4690, 0
      %v4723 = vsel %vm778, %v4692, 0
      %v4725 = vsel %vm778, %v4694, 0
      %v4727 = vsel %vm778, %v4696, 0
      %v4729 = vsel %vm778, %v4698, 0
      %v4731 = vsel %vm778, %v4700, 0
      %v4733 = vsel %vm778, %v4702, 0
      %v4735 = vsel %vm778, %v4704, 0
      %4737 = vmatprep.subr.mxu0 0.0
      %4738 = vmatpush1.xpose.msra.mxu0 0.0
      %4739 = vmatprep.subr.mxu0 0.0
      %4740 = vmatpush1.xpose.msra.mxu0 0.0
      %4741 = vmatprep.subr.mxu0 0.0
      %4742 = vmatpush1.xpose.msra.mxu0 0.0
      %4743 = vmatprep.subr.mxu0 0.0
      %4744 = vmatpush1.xpose.msra.mxu0 0.0
      %4745 = vmatprep.subr.mxu0 0.0
      %4746 = vmatpush1.xpose.msra.mxu0 0.0
      %4747 = vmatprep.subr.mxu0 0.0
      %4748 = vmatpush1.xpose.msra.mxu0 0.0
      %4749 = vmatprep.subr.mxu0 0.0
      %4750 = vmatpush1.xpose.msra.mxu0 0.0
      %4751 = vmatprep.subr.mxu0 0.0
      %4752 = vmatpush1.xpose.msra.mxu0 0.0
      %4753 = vmatprep.subr.mxu0 0.0
      %4754 = vmatpush1.xpose.msra.mxu0 %v4735
      %4755 = vmatprep.subr.mxu0 0.0
      %4756 = vmatpush1.xpose.msra.mxu0 %v4733
      %4757 = vmatprep.subr.mxu0 0.0
      %4758 = vmatpush1.xpose.msra.mxu0 %v4731
      %4759 = vmatprep.subr.mxu0 0.0
      %4760 = vmatpush1.xpose.msra.mxu0 %v4729
      %4761 = vmatprep.subr.mxu0 0.0
      %4762 = vmatpush1.xpose.msra.mxu0 %v4727
      %4763 = vmatprep.subr.mxu0 0.0
      %4764 = vmatpush1.xpose.msra.mxu0 %v4725
      %4765 = vmatprep.subr.mxu0 0.0
      %4766 = vmatpush1.xpose.msra.mxu0 %v4723
      %4767 = vmatprep.subr.mxu0 0.0
      %4768 = vmatpush1.xpose.msra.mxu0 %v4721
      %4769 = vmatprep.subr.mxu0 0.0
      %4770 = vmatpush2.xpose.msra.mxu0 0.0
      %4771 = vmatprep.subr.mxu0 0.0
      %4772 = vmatpush2.xpose.msra.mxu0 0.0
      %4773 = vmatprep.subr.mxu0 0.0
      %4774 = vmatpush2.xpose.msra.mxu0 0.0
      %4775 = vmatprep.subr.mxu0 0.0
      %4776 = vmatpush2.xpose.msra.mxu0 0.0
      %4777 = vmatprep.subr.mxu0 0.0
      %4778 = vmatpush2.xpose.msra.mxu0 0.0
      %4779 = vmatprep.subr.mxu0 0.0
      %4780 = vmatpush2.xpose.msra.mxu0 0.0
      %4781 = vmatprep.subr.mxu0 0.0
      %4782 = vmatpush2.xpose.msra.mxu0 0.0
      %4783 = vmatprep.subr.mxu0 0.0
      %4784 = vmatpush2.xpose.msra.mxu0 0.0
      %4785 = vmatprep.subr.mxu0 0.0
      %4786 = vmatpush2.xpose.msra.mxu0 0.0
      %4787 = vmatprep.subr.mxu0 0.0
      %4788 = vmatpush2.xpose.msra.mxu0 0.0
      %4789 = vmatprep.subr.mxu0 0.0
      %4790 = vmatpush2.xpose.msra.mxu0 0.0
      %4791 = vmatprep.subr.mxu0 0.0
      %4792 = vmatpush2.xpose.msra.mxu0 0.0
      %4793 = vmatprep.subr.mxu0 0.0
      %4794 = vmatpush2.xpose.msra.mxu0 0.0
      %4795 = vmatprep.subr.mxu0 0.0
      %4796 = vmatpush2.xpose.msra.mxu0 0.0
      %4797 = vmatprep.subr.mxu0 0.0
      %4798 = vmatpush2.xpose.msra.mxu0 0.0
      %4799 = vmatprep.subr.mxu0 0.0
      %4800 = vmatpush2.xpose.msra.mxu0 0.0
      %4801 = vmatprep.mubr.f32.mxu0 0.0
      %4802 = vmatmul.mubr.f32.gmra.mxu0 %v4705
      %v4803 = vpop.f32.mrf.mxu0
      %v4804 = vadd.f32 %v4303, %v4803
      %v4805 = vpop.f32.mrf.mxu0
      %4806 = vmatprep.mubr.f32.mxu0 0.0
      %4807 = vmatmul.mubr.f32.gmra.mxu0 %v4707
      %v4808 = vpop.f32.mrf.mxu0
      %v4809 = vadd.f32 %v4304, %v4808
      %v4810 = vpop.f32.mrf.mxu0
      %4811 = vmatprep.mubr.f32.mxu0 0.0
      %4812 = vmatmul.mubr.f32.gmra.mxu0 %v4709
      %v4813 = vpop.f32.mrf.mxu0
      %v4814 = vadd.f32 %v4305, %v4813
      %v4815 = vpop.f32.mrf.mxu0
      %4816 = vmatprep.mubr.f32.mxu0 0.0
      %4817 = vmatmul.mubr.f32.gmra.mxu0 %v4711
      %v4818 = vpop.f32.mrf.mxu0
      %v4819 = vadd.f32 %v4306, %v4818
      %v4820 = vpop.f32.mrf.mxu0
      %4821 = vmatprep.mubr.f32.mxu0 0.0
      %4822 = vmatmul.mubr.f32.gmra.mxu0 %v4713
      %v4823 = vpop.f32.mrf.mxu0
      %v4824 = vadd.f32 %v4307, %v4823
      %v4825 = vpop.f32.mrf.mxu0
      %4826 = vmatprep.mubr.f32.mxu0 0.0
      %4827 = vmatmul.mubr.f32.gmra.mxu0 %v4715
      %v4828 = vpop.f32.mrf.mxu0
      %v4829 = vadd.f32 %v4308, %v4828
      %v4830 = vpop.f32.mrf.mxu0
      %4831 = vmatprep.mubr.f32.mxu0 0.0
      %4832 = vmatmul.mubr.f32.gmra.mxu0 %v4717
      %v4833 = vpop.f32.mrf.mxu0
      %v4834 = vadd.f32 %v4309, %v4833
      %v4835 = vpop.f32.mrf.mxu0
      %4836 = vmatprep.mubr.f32.mxu0 0.0
      %4837 = vmatmul.mubr.f32.gmra.mxu0 %v4719
      %v4838 = vpop.f32.mrf.mxu0
      %v4839 = vadd.f32 %v4310, %v4838
      %v4840 = vpop.f32.mrf.mxu0
      %4841 = vdwg.mxu0
      %4850 = vrot.lane.b32.xlu0 %v4294, 112
      %v4851 = vpop.permute.xlu0 %4850
      %4852 = vrot.lane.b32.xlu0 %v4295, 112
      %v4853 = vpop.permute.xlu0 %4852
      %4854 = vrot.lane.b32.xlu0 %v4296, 112
      %v4855 = vpop.permute.xlu0 %4854
      %4856 = vrot.lane.b32.xlu0 %v4297, 112
      %v4857 = vpop.permute.xlu0 %4856
      %4858 = vrot.lane.b32.xlu0 %v4298, 112
      %v4859 = vpop.permute.xlu0 %4858
      %4860 = vrot.lane.b32.xlu0 %v4299, 112
      %v4861 = vpop.permute.xlu0 %4860
      %4862 = vrot.lane.b32.xlu0 %v4300, 112
      %v4863 = vpop.permute.xlu0 %4862
      %4864 = vrot.lane.b32.xlu0 %v4301, 112
      %v4865 = vpop.permute.xlu0 %4864
      %4866 = vrot.lane.b32.xlu0 %v4294, 80
      %v4867 = vpop.permute.xlu0 %4866
      %4868 = vrot.lane.b32.xlu0 %v4295, 80
      %v4869 = vpop.permute.xlu0 %4868
      %4870 = vrot.lane.b32.xlu0 %v4296, 80
      %v4871 = vpop.permute.xlu0 %4870
      %4872 = vrot.lane.b32.xlu0 %v4297, 80
      %v4873 = vpop.permute.xlu0 %4872
      %4874 = vrot.lane.b32.xlu0 %v4298, 80
      %v4875 = vpop.permute.xlu0 %4874
      %4876 = vrot.lane.b32.xlu0 %v4299, 80
      %v4877 = vpop.permute.xlu0 %4876
      %4878 = vrot.lane.b32.xlu0 %v4300, 80
      %v4879 = vpop.permute.xlu0 %4878
      %4880 = vrot.lane.b32.xlu0 %v4301, 80
      %v4881 = vpop.permute.xlu0 %4880
      %v4882 = vsel %vm778, %v4851, 0
      %v4884 = vsel %vm778, %v4853, 0
      %v4886 = vsel %vm778, %v4855, 0
      %v4888 = vsel %vm778, %v4857, 0
      %v4890 = vsel %vm778, %v4859, 0
      %v4892 = vsel %vm778, %v4861, 0
      %v4894 = vsel %vm778, %v4863, 0
      %v4896 = vsel %vm778, %v4865, 0
      %v4898 = vsel %vm778, %v4867, 0
      %v4900 = vsel %vm778, %v4869, 0
      %v4902 = vsel %vm778, %v4871, 0
      %v4904 = vsel %vm778, %v4873, 0
      %v4906 = vsel %vm778, %v4875, 0
      %v4908 = vsel %vm778, %v4877, 0
      %v4910 = vsel %vm778, %v4879, 0
      %v4912 = vsel %vm778, %v4881, 0
      %4914 = vmatprep.subr.mxu0 0.0
      %4915 = vmatpush1.xpose.msra.mxu0 0.0
      %4916 = vmatprep.subr.mxu0 0.0
      %4917 = vmatpush1.xpose.msra.mxu0 0.0
      %4918 = vmatprep.subr.mxu0 0.0
      %4919 = vmatpush1.xpose.msra.mxu0 0.0
      %4920 = vmatprep.subr.mxu0 0.0
      %4921 = vmatpush1.xpose.msra.mxu0 0.0
      %4922 = vmatprep.subr.mxu0 0.0
      %4923 = vmatpush1.xpose.msra.mxu0 0.0
      %4924 = vmatprep.subr.mxu0 0.0
      %4925 = vmatpush1.xpose.msra.mxu0 0.0
      %4926 = vmatprep.subr.mxu0 0.0
      %4927 = vmatpush1.xpose.msra.mxu0 0.0
      %4928 = vmatprep.subr.mxu0 0.0
      %4929 = vmatpush1.xpose.msra.mxu0 0.0
      %4930 = vmatprep.subr.mxu0 0.0
      %4931 = vmatpush1.xpose.msra.mxu0 %v4912
      %4932 = vmatprep.subr.mxu0 0.0
      %4933 = vmatpush1.xpose.msra.mxu0 %v4910
      %4934 = vmatprep.subr.mxu0 0.0
      %4935 = vmatpush1.xpose.msra.mxu0 %v4908
      %4936 = vmatprep.subr.mxu0 0.0
      %4937 = vmatpush1.xpose.msra.mxu0 %v4906
      %4938 = vmatprep.subr.mxu0 0.0
      %4939 = vmatpush1.xpose.msra.mxu0 %v4904
      %4940 = vmatprep.subr.mxu0 0.0
      %4941 = vmatpush1.xpose.msra.mxu0 %v4902
      %4942 = vmatprep.subr.mxu0 0.0
      %4943 = vmatpush1.xpose.msra.mxu0 %v4900
      %4944 = vmatprep.subr.mxu0 0.0
      %4945 = vmatpush1.xpose.msra.mxu0 %v4898
      %4946 = vmatprep.subr.mxu0 0.0
      %4947 = vmatpush2.xpose.msra.mxu0 0.0
      %4948 = vmatprep.subr.mxu0 0.0
      %4949 = vmatpush2.xpose.msra.mxu0 0.0
      %4950 = vmatprep.subr.mxu0 0.0
      %4951 = vmatpush2.xpose.msra.mxu0 0.0
      %4952 = vmatprep.subr.mxu0 0.0
      %4953 = vmatpush2.xpose.msra.mxu0 0.0
      %4954 = vmatprep.subr.mxu0 0.0
      %4955 = vmatpush2.xpose.msra.mxu0 0.0
      %4956 = vmatprep.subr.mxu0 0.0
      %4957 = vmatpush2.xpose.msra.mxu0 0.0
      %4958 = vmatprep.subr.mxu0 0.0
      %4959 = vmatpush2.xpose.msra.mxu0 0.0
      %4960 = vmatprep.subr.mxu0 0.0
      %4961 = vmatpush2.xpose.msra.mxu0 0.0
      %4962 = vmatprep.subr.mxu0 0.0
      %4963 = vmatpush2.xpose.msra.mxu0 0.0
      %4964 = vmatprep.subr.mxu0 0.0
      %4965 = vmatpush2.xpose.msra.mxu0 0.0
      %4966 = vmatprep.subr.mxu0 0.0
      %4967 = vmatpush2.xpose.msra.mxu0 0.0
      %4968 = vmatprep.subr.mxu0 0.0
      %4969 = vmatpush2.xpose.msra.mxu0 0.0
      %4970 = vmatprep.subr.mxu0 0.0
      %4971 = vmatpush2.xpose.msra.mxu0 0.0
      %4972 = vmatprep.subr.mxu0 0.0
      %4973 = vmatpush2.xpose.msra.mxu0 0.0
      %4974 = vmatprep.subr.mxu0 0.0
      %4975 = vmatpush2.xpose.msra.mxu0 0.0
      %4976 = vmatprep.subr.mxu0 0.0
      %4977 = vmatpush2.xpose.msra.mxu0 0.0
      %4978 = vmatprep.mubr.f32.mxu0 0.0
      %4979 = vmatmul.mubr.f32.gmra.mxu0 %v4882
      %v4980 = vpop.f32.mrf.mxu0
      %v4981 = vadd.f32 %v4303, %v4980
      %v4982 = vpop.f32.mrf.mxu0
      %4983 = vmatprep.mubr.f32.mxu0 0.0
      %4984 = vmatmul.mubr.f32.gmra.mxu0 %v4884
      %v4985 = vpop.f32.mrf.mxu0
      %v4986 = vadd.f32 %v4304, %v4985
      %v4987 = vpop.f32.mrf.mxu0
      %4988 = vmatprep.mubr.f32.mxu0 0.0
      %4989 = vmatmul.mubr.f32.gmra.mxu0 %v4886
      %v4990 = vpop.f32.mrf.mxu0
      %v4991 = vadd.f32 %v4305, %v4990
      %v4992 = vpop.f32.mrf.mxu0
      %4993 = vmatprep.mubr.f32.mxu0 0.0
      %4994 = vmatmul.mubr.f32.gmra.mxu0 %v4888
      %v4995 = vpop.f32.mrf.mxu0
      %v4996 = vadd.f32 %v4306, %v4995
      %v4997 = vpop.f32.mrf.mxu0
      %4998 = vmatprep.mubr.f32.mxu0 0.0
      %4999 = vmatmul.mubr.f32.gmra.mxu0 %v4890
      %v5000 = vpop.f32.mrf.mxu0
      %v5001 = vadd.f32 %v4307, %v5000
      %v5002 = vpop.f32.mrf.mxu0
      %5003 = vmatprep.mubr.f32.mxu0 0.0
      %5004 = vmatmul.mubr.f32.gmra.mxu0 %v4892
      %v5005 = vpop.f32.mrf.mxu0
      %v5006 = vadd.f32 %v4308, %v5005
      %v5007 = vpop.f32.mrf.mxu0
      %5008 = vmatprep.mubr.f32.mxu0 0.0
      %5009 = vmatmul.mubr.f32.gmra.mxu0 %v4894
      %v5010 = vpop.f32.mrf.mxu0
      %v5011 = vadd.f32 %v4309, %v5010
      %v5012 = vpop.f32.mrf.mxu0
      %5013 = vmatprep.mubr.f32.mxu0 0.0
      %5014 = vmatmul.mubr.f32.gmra.mxu0 %v4896
      %v5015 = vpop.f32.mrf.mxu0
      %v5016 = vadd.f32 %v4310, %v5015
      %v5017 = vpop.f32.mrf.mxu0
      %5018 = vdwg.mxu0
      %v5019 = vsel %vm1399, %v4450, -inf
      %5020 = vmax.xlane.f32.xlu0 %v5019
      %v5021 = vpop.xlane.xlu0 %5020
      %v5022 = vsel %vm1399, %v4455, -inf
      %5023 = vmax.xlane.f32.xlu0 %v5022
      %v5024 = vpop.xlane.xlu0 %5023
      %v5025 = vsel %vm1399, %v4460, -inf
      %5026 = vmax.xlane.f32.xlu0 %v5025
      %v5027 = vpop.xlane.xlu0 %5026
      %v5028 = vsel %vm1399, %v4465, -inf
      %5029 = vmax.xlane.f32.xlu0 %v5028
      %v5030 = vpop.xlane.xlu0 %5029
      %v5031 = vsel %vm1399, %v4470, -inf
      %5032 = vmax.xlane.f32.xlu0 %v5031
      %v5033 = vpop.xlane.xlu0 %5032
      %v5034 = vsel %vm1399, %v4475, -inf
      %5035 = vmax.xlane.f32.xlu0 %v5034
      %v5036 = vpop.xlane.xlu0 %5035
      %v5037 = vsel %vm1399, %v4480, -inf
      %5038 = vmax.xlane.f32.xlu0 %v5037
      %v5039 = vpop.xlane.xlu0 %5038
      %v5040 = vsel %vm1399, %v4485, -inf
      %5041 = vmax.xlane.f32.xlu0 %v5040
      %v5042 = vpop.xlane.xlu0 %5041
      %v5043 = vsel %vm1399, %v4627, -inf
      %5044 = vmax.xlane.f32.xlu0 %v5043
      %v5045 = vpop.xlane.xlu0 %5044
      %v5046 = vsel %vm1399, %v4632, -inf
      %5047 = vmax.xlane.f32.xlu0 %v5046
      %v5048 = vpop.xlane.xlu0 %5047
      %v5049 = vsel %vm1399, %v4637, -inf
      %5050 = vmax.xlane.f32.xlu0 %v5049
      %v5051 = vpop.xlane.xlu0 %5050
      %v5052 = vsel %vm1399, %v4642, -inf
      %5053 = vmax.xlane.f32.xlu0 %v5052
      %v5054 = vpop.xlane.xlu0 %5053
      %v5055 = vsel %vm1399, %v4647, -inf
      %5056 = vmax.xlane.f32.xlu0 %v5055
      %v5057 = vpop.xlane.xlu0 %5056
      %v5058 = vsel %vm1399, %v4652, -inf
      %5059 = vmax.xlane.f32.xlu0 %v5058
      %v5060 = vpop.xlane.xlu0 %5059
      %v5061 = vsel %vm1399, %v4657, -inf
      %5062 = vmax.xlane.f32.xlu0 %v5061
      %v5063 = vpop.xlane.xlu0 %5062
      %v5064 = vsel %vm1399, %v4662, -inf
      %5065 = vmax.xlane.f32.xlu0 %v5064
      %v5066 = vpop.xlane.xlu0 %5065
      %v5067 = vsel %vm1399, %v4804, -inf
      %5068 = vmax.xlane.f32.xlu0 %v5067
      %v5069 = vpop.xlane.xlu0 %5068
      %v5070 = vsel %vm1399, %v4809, -inf
      %5071 = vmax.xlane.f32.xlu0 %v5070
      %v5072 = vpop.xlane.xlu0 %5071
      %v5073 = vsel %vm1399, %v4814, -inf
      %5074 = vmax.xlane.f32.xlu0 %v5073
      %v5075 = vpop.xlane.xlu0 %5074
      %v5076 = vsel %vm1399, %v4819, -inf
      %5077 = vmax.xlane.f32.xlu0 %v5076
      %v5078 = vpop.xlane.xlu0 %5077
      %v5079 = vsel %vm1399, %v4824, -inf
      %5080 = vmax.xlane.f32.xlu0 %v5079
      %v5081 = vpop.xlane.xlu0 %5080
      %v5082 = vsel %vm1399, %v4829, -inf
      %5083 = vmax.xlane.f32.xlu0 %v5082
      %v5084 = vpop.xlane.xlu0 %5083
      %v5085 = vsel %vm1399, %v4834, -inf
      %5086 = vmax.xlane.f32.xlu0 %v5085
      %v5087 = vpop.xlane.xlu0 %5086
      %v5088 = vsel %vm1399, %v4839, -inf
      %5089 = vmax.xlane.f32.xlu0 %v5088
      %v5090 = vpop.xlane.xlu0 %5089
      %v5091 = vsel %vm1399, %v4981, -inf
      %5092 = vmax.xlane.f32.xlu0 %v5091
      %v5093 = vpop.xlane.xlu0 %5092
      %v5094 = vsel %vm1399, %v4986, -inf
      %5095 = vmax.xlane.f32.xlu0 %v5094
      %v5096 = vpop.xlane.xlu0 %5095
      %v5097 = vsel %vm1399, %v4991, -inf
      %5098 = vmax.xlane.f32.xlu0 %v5097
      %v5099 = vpop.xlane.xlu0 %5098
      %v5100 = vsel %vm1399, %v4996, -inf
      %5101 = vmax.xlane.f32.xlu0 %v5100
      %v5102 = vpop.xlane.xlu0 %5101
      %v5103 = vsel %vm1399, %v5001, -inf
      %5104 = vmax.xlane.f32.xlu0 %v5103
      %v5105 = vpop.xlane.xlu0 %5104
      %v5106 = vsel %vm1399, %v5006, -inf
      %5107 = vmax.xlane.f32.xlu0 %v5106
      %v5108 = vpop.xlane.xlu0 %5107
      %v5109 = vsel %vm1399, %v5011, -inf
      %5110 = vmax.xlane.f32.xlu0 %v5109
      %v5111 = vpop.xlane.xlu0 %5110
      %v5112 = vsel %vm1399, %v5016, -inf
      %5113 = vmax.xlane.f32.xlu0 %v5112
      %v5114 = vpop.xlane.xlu0 %5113
      %v5115 = vsub.f32 %v4450, %v5021
      %v5116 = vsub.f32 %v4455, %v5024
      %v5117 = vsub.f32 %v4460, %v5027
      %v5118 = vsub.f32 %v4465, %v5030
      %v5119 = vsub.f32 %v4470, %v5033
      %v5120 = vsub.f32 %v4475, %v5036
      %v5121 = vsub.f32 %v4480, %v5039
      %v5122 = vsub.f32 %v4485, %v5042
      %v5123 = vsub.f32 %v4627, %v5045
      %v5124 = vsub.f32 %v4632, %v5048
      %v5125 = vsub.f32 %v4637, %v5051
      %v5126 = vsub.f32 %v4642, %v5054
      %v5127 = vsub.f32 %v4647, %v5057
      %v5128 = vsub.f32 %v4652, %v5060
      %v5129 = vsub.f32 %v4657, %v5063
      %v5130 = vsub.f32 %v4662, %v5066
      %v5131 = vsub.f32 %v4804, %v5069
      %v5132 = vsub.f32 %v4809, %v5072
      %v5133 = vsub.f32 %v4814, %v5075
      %v5134 = vsub.f32 %v4819, %v5078
      %v5135 = vsub.f32 %v4824, %v5081
      %v5136 = vsub.f32 %v4829, %v5084
      %v5137 = vsub.f32 %v4834, %v5087
      %v5138 = vsub.f32 %v4839, %v5090
      %v5139 = vsub.f32 %v4981, %v5093
      %v5140 = vsub.f32 %v4986, %v5096
      %v5141 = vsub.f32 %v4991, %v5099
      %v5142 = vsub.f32 %v4996, %v5102
      %v5143 = vsub.f32 %v5001, %v5105
      %v5144 = vsub.f32 %v5006, %v5108
      %v5145 = vsub.f32 %v5011, %v5111
      %v5146 = vsub.f32 %v5016, %v5114
      %v5147 = vmul.f32 %v5115, 1.442695
      %v5148 = vpow.pop %v5147
      %v5149 = vmul.f32 %v5116, 1.442695
      %v5150 = vpow.pop %v5149
      %v5151 = vmul.f32 %v5117, 1.442695
      %v5152 = vpow.pop %v5151
      %v5153 = vmul.f32 %v5118, 1.442695
      %v5154 = vpow.pop %v5153
      %v5155 = vmul.f32 %v5119, 1.442695
      %v5156 = vpow.pop %v5155
      %v5157 = vmul.f32 %v5120, 1.442695
      %v5158 = vpow.pop %v5157
      %v5159 = vmul.f32 %v5121, 1.442695
      %v5160 = vpow.pop %v5159
      %v5161 = vmul.f32 %v5122, 1.442695
      %v5162 = vpow.pop %v5161
      %v5163 = vmul.f32 %v5123, 1.442695
      %v5164 = vpow.pop %v5163
      %v5165 = vmul.f32 %v5124, 1.442695
      %v5166 = vpow.pop %v5165
      %v5167 = vmul.f32 %v5125, 1.442695
      %v5168 = vpow.pop %v5167
      %v5169 = vmul.f32 %v5126, 1.442695
      %v5170 = vpow.pop %v5169
      %v5171 = vmul.f32 %v5127, 1.442695
      %v5172 = vpow.pop %v5171
      %v5173 = vmul.f32 %v5128, 1.442695
      %v5174 = vpow.pop %v5173
      %v5175 = vmul.f32 %v5129, 1.442695
      %v5176 = vpow.pop %v5175
      %v5177 = vmul.f32 %v5130, 1.442695
      %v5178 = vpow.pop %v5177
      %v5179 = vmul.f32 %v5131, 1.442695
      %v5180 = vpow.pop %v5179
      %v5181 = vmul.f32 %v5132, 1.442695
      %v5182 = vpow.pop %v5181
      %v5183 = vmul.f32 %v5133, 1.442695
      %v5184 = vpow.pop %v5183
      %v5185 = vmul.f32 %v5134, 1.442695
      %v5186 = vpow.pop %v5185
      %v5187 = vmul.f32 %v5135, 1.442695
      %v5188 = vpow.pop %v5187
      %v5189 = vmul.f32 %v5136, 1.442695
      %v5190 = vpow.pop %v5189
      %v5191 = vmul.f32 %v5137, 1.442695
      %v5192 = vpow.pop %v5191
      %v5193 = vmul.f32 %v5138, 1.442695
      %v5194 = vpow.pop %v5193
      %v5195 = vmul.f32 %v5139, 1.442695
      %v5196 = vpow.pop %v5195
      %v5197 = vmul.f32 %v5140, 1.442695
      %v5198 = vpow.pop %v5197
      %v5199 = vmul.f32 %v5141, 1.442695
      %v5200 = vpow.pop %v5199
      %v5201 = vmul.f32 %v5142, 1.442695
      %v5202 = vpow.pop %v5201
      %v5203 = vmul.f32 %v5143, 1.442695
      %v5204 = vpow.pop %v5203
      %v5205 = vmul.f32 %v5144, 1.442695
      %v5206 = vpow.pop %v5205
      %v5207 = vmul.f32 %v5145, 1.442695
      %v5208 = vpow.pop %v5207
      %v5209 = vmul.f32 %v5146, 1.442695
      %v5210 = vpow.pop %v5209
      %v5211 = vsel %vm1399, %v5148, 0.0
      %5212 = vadd.xlane.f32.xlu0 %v5211
      %v5213 = vpop.xlane.xlu0 %5212
      %v5214 = vsel %vm1399, %v5150, 0.0
      %5215 = vadd.xlane.f32.xlu0 %v5214
      %v5216 = vpop.xlane.xlu0 %5215
      %v5217 = vsel %vm1399, %v5152, 0.0
      %5218 = vadd.xlane.f32.xlu0 %v5217
      %v5219 = vpop.xlane.xlu0 %5218
      %v5220 = vsel %vm1399, %v5154, 0.0
      %5221 = vadd.xlane.f32.xlu0 %v5220
      %v5222 = vpop.xlane.xlu0 %5221
      %v5223 = vsel %vm1399, %v5156, 0.0
      %5224 = vadd.xlane.f32.xlu0 %v5223
      %v5225 = vpop.xlane.xlu0 %5224
      %v5226 = vsel %vm1399, %v5158, 0.0
      %5227 = vadd.xlane.f32.xlu0 %v5226
      %v5228 = vpop.xlane.xlu0 %5227
      %v5229 = vsel %vm1399, %v5160, 0.0
      %5230 = vadd.xlane.f32.xlu0 %v5229
      %v5231 = vpop.xlane.xlu0 %5230
      %v5232 = vsel %vm1399, %v5162, 0.0
      %5233 = vadd.xlane.f32.xlu0 %v5232
      %v5234 = vpop.xlane.xlu0 %5233
      %v5235 = vsel %vm1399, %v5164, 0.0
      %5236 = vadd.xlane.f32.xlu0 %v5235
      %v5237 = vpop.xlane.xlu0 %5236
      %v5238 = vsel %vm1399, %v5166, 0.0
      %5239 = vadd.xlane.f32.xlu0 %v5238
      %v5240 = vpop.xlane.xlu0 %5239
      %v5241 = vsel %vm1399, %v5168, 0.0
      %5242 = vadd.xlane.f32.xlu0 %v5241
      %v5243 = vpop.xlane.xlu0 %5242
      %v5244 = vsel %vm1399, %v5170, 0.0
      %5245 = vadd.xlane.f32.xlu0 %v5244
      %v5246 = vpop.xlane.xlu0 %5245
      %v5247 = vsel %vm1399, %v5172, 0.0
      %5248 = vadd.xlane.f32.xlu0 %v5247
      %v5249 = vpop.xlane.xlu0 %5248
      %v5250 = vsel %vm1399, %v5174, 0.0
      %5251 = vadd.xlane.f32.xlu0 %v5250
      %v5252 = vpop.xlane.xlu0 %5251
      %v5253 = vsel %vm1399, %v5176, 0.0
      %5254 = vadd.xlane.f32.xlu0 %v5253
      %v5255 = vpop.xlane.xlu0 %5254
      %v5256 = vsel %vm1399, %v5178, 0.0
      %5257 = vadd.xlane.f32.xlu0 %v5256
      %v5258 = vpop.xlane.xlu0 %5257
      %v5259 = vsel %vm1399, %v5180, 0.0
      %5260 = vadd.xlane.f32.xlu0 %v5259
      %v5261 = vpop.xlane.xlu0 %5260
      %v5262 = vsel %vm1399, %v5182, 0.0
      %5263 = vadd.xlane.f32.xlu0 %v5262
      %v5264 = vpop.xlane.xlu0 %5263
      %v5265 = vsel %vm1399, %v5184, 0.0
      %5266 = vadd.xlane.f32.xlu0 %v5265
      %v5267 = vpop.xlane.xlu0 %5266
      %v5268 = vsel %vm1399, %v5186, 0.0
      %5269 = vadd.xlane.f32.xlu0 %v5268
      %v5270 = vpop.xlane.xlu0 %5269
      %v5271 = vsel %vm1399, %v5188, 0.0
      %5272 = vadd.xlane.f32.xlu0 %v5271
      %v5273 = vpop.xlane.xlu0 %5272
      %v5274 = vsel %vm1399, %v5190, 0.0
      %5275 = vadd.xlane.f32.xlu0 %v5274
      %v5276 = vpop.xlane.xlu0 %5275
      %v5277 = vsel %vm1399, %v5192, 0.0
      %5278 = vadd.xlane.f32.xlu0 %v5277
      %v5279 = vpop.xlane.xlu0 %5278
      %v5280 = vsel %vm1399, %v5194, 0.0
      %5281 = vadd.xlane.f32.xlu0 %v5280
      %v5282 = vpop.xlane.xlu0 %5281
      %v5283 = vsel %vm1399, %v5196, 0.0
      %5284 = vadd.xlane.f32.xlu0 %v5283
      %v5285 = vpop.xlane.xlu0 %5284
      %v5286 = vsel %vm1399, %v5198, 0.0
      %5287 = vadd.xlane.f32.xlu0 %v5286
      %v5288 = vpop.xlane.xlu0 %5287
      %v5289 = vsel %vm1399, %v5200, 0.0
      %5290 = vadd.xlane.f32.xlu0 %v5289
      %v5291 = vpop.xlane.xlu0 %5290
      %v5292 = vsel %vm1399, %v5202, 0.0
      %5293 = vadd.xlane.f32.xlu0 %v5292
      %v5294 = vpop.xlane.xlu0 %5293
      %v5295 = vsel %vm1399, %v5204, 0.0
      %5296 = vadd.xlane.f32.xlu0 %v5295
      %v5297 = vpop.xlane.xlu0 %5296
      %v5298 = vsel %vm1399, %v5206, 0.0
      %5299 = vadd.xlane.f32.xlu0 %v5298
      %v5300 = vpop.xlane.xlu0 %5299
      %v5301 = vsel %vm1399, %v5208, 0.0
      %5302 = vadd.xlane.f32.xlu0 %v5301
      %v5303 = vpop.xlane.xlu0 %5302
      %v5304 = vsel %vm1399, %v5210, 0.0
      %5305 = vadd.xlane.f32.xlu0 %v5304
      %v5306 = vpop.xlane.xlu0 %5305
      %v5307 = vrcp.pop %v5213
      %v5308 = vrcp.pop %v5216
      %v5309 = vrcp.pop %v5219
      %v5310 = vrcp.pop %v5222
      %v5311 = vrcp.pop %v5225
      %v5312 = vrcp.pop %v5228
      %v5313 = vrcp.pop %v5231
      %v5314 = vrcp.pop %v5234
      %v5315 = vrcp.pop %v5237
      %v5316 = vrcp.pop %v5240
      %v5317 = vrcp.pop %v5243
      %v5318 = vrcp.pop %v5246
      %v5319 = vrcp.pop %v5249
      %v5320 = vrcp.pop %v5252
      %v5321 = vrcp.pop %v5255
      %v5322 = vrcp.pop %v5258
      %v5323 = vrcp.pop %v5261
      %v5324 = vrcp.pop %v5264
      %v5325 = vrcp.pop %v5267
      %v5326 = vrcp.pop %v5270
      %v5327 = vrcp.pop %v5273
      %v5328 = vrcp.pop %v5276
      %v5329 = vrcp.pop %v5279
      %v5330 = vrcp.pop %v5282
      %v5331 = vrcp.pop %v5285
      %v5332 = vrcp.pop %v5288
      %v5333 = vrcp.pop %v5291
      %v5334 = vrcp.pop %v5294
      %v5335 = vrcp.pop %v5297
      %v5336 = vrcp.pop %v5300
      %v5337 = vrcp.pop %v5303
      %v5338 = vrcp.pop %v5306
      %v5339 = vmul.f32 %v5148, %v5307
      %v5340 = vmul.f32 %v5150, %v5308
      %v5341 = vmul.f32 %v5152, %v5309
      %v5342 = vmul.f32 %v5154, %v5310
      %v5343 = vmul.f32 %v5156, %v5311
      %v5344 = vmul.f32 %v5158, %v5312
      %v5345 = vmul.f32 %v5160, %v5313
      %v5346 = vmul.f32 %v5162, %v5314
      %v5347 = vmul.f32 %v5164, %v5315
      %v5348 = vmul.f32 %v5166, %v5316
      %v5349 = vmul.f32 %v5168, %v5317
      %v5350 = vmul.f32 %v5170, %v5318
      %v5351 = vmul.f32 %v5172, %v5319
      %v5352 = vmul.f32 %v5174, %v5320
      %v5353 = vmul.f32 %v5176, %v5321
      %v5354 = vmul.f32 %v5178, %v5322
      %v5355 = vmul.f32 %v5180, %v5323
      %v5356 = vmul.f32 %v5182, %v5324
      %v5357 = vmul.f32 %v5184, %v5325
      %v5358 = vmul.f32 %v5186, %v5326
      %v5359 = vmul.f32 %v5188, %v5327
      %v5360 = vmul.f32 %v5190, %v5328
      %v5361 = vmul.f32 %v5192, %v5329
      %v5362 = vmul.f32 %v5194, %v5330
      %v5363 = vmul.f32 %v5196, %v5331
      %v5364 = vmul.f32 %v5198, %v5332
      %v5365 = vmul.f32 %v5200, %v5333
      %v5366 = vmul.f32 %v5202, %v5334
      %v5367 = vmul.f32 %v5204, %v5335
      %v5368 = vmul.f32 %v5206, %v5336
      %v5369 = vmul.f32 %v5208, %v5337
      %v5370 = vmul.f32 %v5210, %v5338
      %5371 = vrot.lane.b32.xlu0 %v4270, 48
      %v5372 = vpop.permute.xlu0 %5371
      %5373 = vrot.lane.b32.xlu0 %v4271, 48
      %v5374 = vpop.permute.xlu0 %5373
      %5375 = vrot.lane.b32.xlu0 %v4272, 48
      %v5376 = vpop.permute.xlu0 %5375
      %5377 = vrot.lane.b32.xlu0 %v4273, 48
      %v5378 = vpop.permute.xlu0 %5377
      %5379 = vrot.lane.b32.xlu0 %v4274, 48
      %v5380 = vpop.permute.xlu0 %5379
      %5381 = vrot.lane.b32.xlu0 %v4275, 48
      %v5382 = vpop.permute.xlu0 %5381
      %5383 = vrot.lane.b32.xlu0 %v4276, 48
      %v5384 = vpop.permute.xlu0 %5383
      %5385 = vrot.lane.b32.xlu0 %v4277, 48
      %v5386 = vpop.permute.xlu0 %5385
      %v5396 = vsel %vm1399, %v5339, 0
      %v5399 = vsel %vm1399, %v5340, 0
      %v5402 = vsel %vm1399, %v5341, 0
      %v5405 = vsel %vm1399, %v5342, 0
      %v5408 = vsel %vm1399, %v5343, 0
      %v5411 = vsel %vm1399, %v5344, 0
      %v5414 = vsel %vm1399, %v5345, 0
      %v5417 = vsel %vm1399, %v5346, 0
      %5419 = vmatprep.subr.mxu0 0.0
      %5420 = vmatpush1.msra.mxu0 0.0
      %5421 = vmatprep.subr.mxu0 0.0
      %5422 = vmatpush1.msra.mxu0 0.0
      %5423 = vmatprep.subr.mxu0 0.0
      %5424 = vmatpush1.msra.mxu0 0.0
      %5425 = vmatprep.subr.mxu0 0.0
      %5426 = vmatpush1.msra.mxu0 0.0
      %5427 = vmatprep.subr.mxu0 0.0
      %5428 = vmatpush1.msra.mxu0 0.0
      %5429 = vmatprep.subr.mxu0 0.0
      %5430 = vmatpush1.msra.mxu0 0.0
      %5431 = vmatprep.subr.mxu0 0.0
      %5432 = vmatpush1.msra.mxu0 0.0
      %5433 = vmatprep.subr.mxu0 0.0
      %5434 = vmatpush1.msra.mxu0 0.0
      %5435 = vmatprep.subr.mxu0 0.0
      %5436 = vmatpush1.msra.mxu0 %v5386
      %5437 = vmatprep.subr.mxu0 0.0
      %5438 = vmatpush1.msra.mxu0 %v5384
      %5439 = vmatprep.subr.mxu0 0.0
      %5440 = vmatpush1.msra.mxu0 %v5382
      %5441 = vmatprep.subr.mxu0 0.0
      %5442 = vmatpush1.msra.mxu0 %v5380
      %5443 = vmatprep.subr.mxu0 0.0
      %5444 = vmatpush1.msra.mxu0 %v5378
      %5445 = vmatprep.subr.mxu0 0.0
      %5446 = vmatpush1.msra.mxu0 %v5376
      %5447 = vmatprep.subr.mxu0 0.0
      %5448 = vmatpush1.msra.mxu0 %v5374
      %5449 = vmatprep.subr.mxu0 0.0
      %5450 = vmatpush1.msra.mxu0 %v5372
      %5451 = vmatprep.subr.mxu0 0.0
      %5452 = vmatpush2.msra.mxu0 0.0
      %5453 = vmatprep.subr.mxu0 0.0
      %5454 = vmatpush2.msra.mxu0 0.0
      %5455 = vmatprep.subr.mxu0 0.0
      %5456 = vmatpush2.msra.mxu0 0.0
      %5457 = vmatprep.subr.mxu0 0.0
      %5458 = vmatpush2.msra.mxu0 0.0
      %5459 = vmatprep.subr.mxu0 0.0
      %5460 = vmatpush2.msra.mxu0 0.0
      %5461 = vmatprep.subr.mxu0 0.0
      %5462 = vmatpush2.msra.mxu0 0.0
      %5463 = vmatprep.subr.mxu0 0.0
      %5464 = vmatpush2.msra.mxu0 0.0
      %5465 = vmatprep.subr.mxu0 0.0
      %5466 = vmatpush2.msra.mxu0 0.0
      %5467 = vmatprep.subr.mxu0 0.0
      %5468 = vmatpush2.msra.mxu0 0.0
      %5469 = vmatprep.subr.mxu0 0.0
      %5470 = vmatpush2.msra.mxu0 0.0
      %5471 = vmatprep.subr.mxu0 0.0
      %5472 = vmatpush2.msra.mxu0 0.0
      %5473 = vmatprep.subr.mxu0 0.0
      %5474 = vmatpush2.msra.mxu0 0.0
      %5475 = vmatprep.subr.mxu0 0.0
      %5476 = vmatpush2.msra.mxu0 0.0
      %5477 = vmatprep.subr.mxu0 0.0
      %5478 = vmatpush2.msra.mxu0 0.0
      %5479 = vmatprep.subr.mxu0 0.0
      %5480 = vmatpush2.msra.mxu0 0.0
      %5481 = vmatprep.subr.mxu0 0.0
      %5482 = vmatpush2.msra.mxu0 0.0
      %5483 = vmatprep.mubr.f32.mxu0 0.0
      %5484 = vmatmul.mubr.f32.gmra.mxu0 %v5396
      %v5485 = vpop.f32.mrf.mxu0
      %v5486 = vadd.f32 0.0, %v5485
      %v5487 = vpop.f32.mrf.mxu0
      %5488 = vmatprep.mubr.f32.mxu0 0.0
      %5489 = vmatmul.mubr.f32.gmra.mxu0 %v5399
      %v5490 = vpop.f32.mrf.mxu0
      %v5491 = vadd.f32 0.0, %v5490
      %v5492 = vpop.f32.mrf.mxu0
      %5493 = vmatprep.mubr.f32.mxu0 0.0
      %5494 = vmatmul.mubr.f32.gmra.mxu0 %v5402
      %v5495 = vpop.f32.mrf.mxu0
      %v5496 = vadd.f32 0.0, %v5495
      %v5497 = vpop.f32.mrf.mxu0
      %5498 = vmatprep.mubr.f32.mxu0 0.0
      %5499 = vmatmul.mubr.f32.gmra.mxu0 %v5405
      %v5500 = vpop.f32.mrf.mxu0
      %v5501 = vadd.f32 0.0, %v5500
      %v5502 = vpop.f32.mrf.mxu0
      %5503 = vmatprep.mubr.f32.mxu0 0.0
      %5504 = vmatmul.mubr.f32.gmra.mxu0 %v5408
      %v5505 = vpop.f32.mrf.mxu0
      %v5506 = vadd.f32 0.0, %v5505
      %v5507 = vpop.f32.mrf.mxu0
      %5508 = vmatprep.mubr.f32.mxu0 0.0
      %5509 = vmatmul.mubr.f32.gmra.mxu0 %v5411
      %v5510 = vpop.f32.mrf.mxu0
      %v5511 = vadd.f32 0.0, %v5510
      %v5512 = vpop.f32.mrf.mxu0
      %5513 = vmatprep.mubr.f32.mxu0 0.0
      %5514 = vmatmul.mubr.f32.gmra.mxu0 %v5414
      %v5515 = vpop.f32.mrf.mxu0
      %v5516 = vadd.f32 0.0, %v5515
      %v5517 = vpop.f32.mrf.mxu0
      %5518 = vmatprep.mubr.f32.mxu0 0.0
      %5519 = vmatmul.mubr.f32.gmra.mxu0 %v5417
      %v5520 = vpop.f32.mrf.mxu0
      %v5521 = vadd.f32 0.0, %v5520
      %v5522 = vpop.f32.mrf.mxu0
      %5523 = vdwg.mxu0
      %5524 = vrot.lane.b32.xlu0 %v4278, 48
      %v5525 = vpop.permute.xlu0 %5524
      %5526 = vrot.lane.b32.xlu0 %v4279, 48
      %v5527 = vpop.permute.xlu0 %5526
      %5528 = vrot.lane.b32.xlu0 %v4280, 48
      %v5529 = vpop.permute.xlu0 %5528
      %5530 = vrot.lane.b32.xlu0 %v4281, 48
      %v5531 = vpop.permute.xlu0 %5530
      %5532 = vrot.lane.b32.xlu0 %v4282, 48
      %v5533 = vpop.permute.xlu0 %5532
      %5534 = vrot.lane.b32.xlu0 %v4283, 48
      %v5535 = vpop.permute.xlu0 %5534
      %5536 = vrot.lane.b32.xlu0 %v4284, 48
      %v5537 = vpop.permute.xlu0 %5536
      %5538 = vrot.lane.b32.xlu0 %v4285, 48
      %v5539 = vpop.permute.xlu0 %5538
      %v5549 = vsel %vm1399, %v5347, 0
      %v5552 = vsel %vm1399, %v5348, 0
      %v5555 = vsel %vm1399, %v5349, 0
      %v5558 = vsel %vm1399, %v5350, 0
      %v5561 = vsel %vm1399, %v5351, 0
      %v5564 = vsel %vm1399, %v5352, 0
      %v5567 = vsel %vm1399, %v5353, 0
      %v5570 = vsel %vm1399, %v5354, 0
      %5572 = vmatprep.subr.mxu0 0.0
      %5573 = vmatpush1.msra.mxu0 0.0
      %5574 = vmatprep.subr.mxu0 0.0
      %5575 = vmatpush1.msra.mxu0 0.0
      %5576 = vmatprep.subr.mxu0 0.0
      %5577 = vmatpush1.msra.mxu0 0.0
      %5578 = vmatprep.subr.mxu0 0.0
      %5579 = vmatpush1.msra.mxu0 0.0
      %5580 = vmatprep.subr.mxu0 0.0
      %5581 = vmatpush1.msra.mxu0 0.0
      %5582 = vmatprep.subr.mxu0 0.0
      %5583 = vmatpush1.msra.mxu0 0.0
      %5584 = vmatprep.subr.mxu0 0.0
      %5585 = vmatpush1.msra.mxu0 0.0
      %5586 = vmatprep.subr.mxu0 0.0
      %5587 = vmatpush1.msra.mxu0 0.0
      %5588 = vmatprep.subr.mxu0 0.0
      %5589 = vmatpush1.msra.mxu0 %v5539
      %5590 = vmatprep.subr.mxu0 0.0
      %5591 = vmatpush1.msra.mxu0 %v5537
      %5592 = vmatprep.subr.mxu0 0.0
      %5593 = vmatpush1.msra.mxu0 %v5535
      %5594 = vmatprep.subr.mxu0 0.0
      %5595 = vmatpush1.msra.mxu0 %v5533
      %5596 = vmatprep.subr.mxu0 0.0
      %5597 = vmatpush1.msra.mxu0 %v5531
      %5598 = vmatprep.subr.mxu0 0.0
      %5599 = vmatpush1.msra.mxu0 %v5529
      %5600 = vmatprep.subr.mxu0 0.0
      %5601 = vmatpush1.msra.mxu0 %v5527
      %5602 = vmatprep.subr.mxu0 0.0
      %5603 = vmatpush1.msra.mxu0 %v5525
      %5604 = vmatprep.subr.mxu0 0.0
      %5605 = vmatpush2.msra.mxu0 0.0
      %5606 = vmatprep.subr.mxu0 0.0
      %5607 = vmatpush2.msra.mxu0 0.0
      %5608 = vmatprep.subr.mxu0 0.0
      %5609 = vmatpush2.msra.mxu0 0.0
      %5610 = vmatprep.subr.mxu0 0.0
      %5611 = vmatpush2.msra.mxu0 0.0
      %5612 = vmatprep.subr.mxu0 0.0
      %5613 = vmatpush2.msra.mxu0 0.0
      %5614 = vmatprep.subr.mxu0 0.0
      %5615 = vmatpush2.msra.mxu0 0.0
      %5616 = vmatprep.subr.mxu0 0.0
      %5617 = vmatpush2.msra.mxu0 0.0
      %5618 = vmatprep.subr.mxu0 0.0
      %5619 = vmatpush2.msra.mxu0 0.0
      %5620 = vmatprep.subr.mxu0 0.0
      %5621 = vmatpush2.msra.mxu0 0.0
      %5622 = vmatprep.subr.mxu0 0.0
      %5623 = vmatpush2.msra.mxu0 0.0
      %5624 = vmatprep.subr.mxu0 0.0
      %5625 = vmatpush2.msra.mxu0 0.0
      %5626 = vmatprep.subr.mxu0 0.0
      %5627 = vmatpush2.msra.mxu0 0.0
      %5628 = vmatprep.subr.mxu0 0.0
      %5629 = vmatpush2.msra.mxu0 0.0
      %5630 = vmatprep.subr.mxu0 0.0
      %5631 = vmatpush2.msra.mxu0 0.0
      %5632 = vmatprep.subr.mxu0 0.0
      %5633 = vmatpush2.msra.mxu0 0.0
      %5634 = vmatprep.subr.mxu0 0.0
      %5635 = vmatpush2.msra.mxu0 0.0
      %5636 = vmatprep.mubr.f32.mxu0 0.0
      %5637 = vmatmul.mubr.f32.gmra.mxu0 %v5549
      %v5638 = vpop.f32.mrf.mxu0
      %v5639 = vadd.f32 0.0, %v5638
      %v5640 = vpop.f32.mrf.mxu0
      %5641 = vmatprep.mubr.f32.mxu0 0.0
      %5642 = vmatmul.mubr.f32.gmra.mxu0 %v5552
      %v5643 = vpop.f32.mrf.mxu0
      %v5644 = vadd.f32 0.0, %v5643
      %v5645 = vpop.f32.mrf.mxu0
      %5646 = vmatprep.mubr.f32.mxu0 0.0
      %5647 = vmatmul.mubr.f32.gmra.mxu0 %v5555
      %v5648 = vpop.f32.mrf.mxu0
      %v5649 = vadd.f32 0.0, %v5648
      %v5650 = vpop.f32.mrf.mxu0
      %5651 = vmatprep.mubr.f32.mxu0 0.0
      %5652 = vmatmul.mubr.f32.gmra.mxu0 %v5558
      %v5653 = vpop.f32.mrf.mxu0
      %v5654 = vadd.f32 0.0, %v5653
      %v5655 = vpop.f32.mrf.mxu0
      %5656 = vmatprep.mubr.f32.mxu0 0.0
      %5657 = vmatmul.mubr.f32.gmra.mxu0 %v5561
      %v5658 = vpop.f32.mrf.mxu0
      %v5659 = vadd.f32 0.0, %v5658
      %v5660 = vpop.f32.mrf.mxu0
      %5661 = vmatprep.mubr.f32.mxu0 0.0
      %5662 = vmatmul.mubr.f32.gmra.mxu0 %v5564
      %v5663 = vpop.f32.mrf.mxu0
      %v5664 = vadd.f32 0.0, %v5663
      %v5665 = vpop.f32.mrf.mxu0
      %5666 = vmatprep.mubr.f32.mxu0 0.0
      %5667 = vmatmul.mubr.f32.gmra.mxu0 %v5567
      %v5668 = vpop.f32.mrf.mxu0
      %v5669 = vadd.f32 0.0, %v5668
      %v5670 = vpop.f32.mrf.mxu0
      %5671 = vmatprep.mubr.f32.mxu0 0.0
      %5672 = vmatmul.mubr.f32.gmra.mxu0 %v5570
      %v5673 = vpop.f32.mrf.mxu0
      %v5674 = vadd.f32 0.0, %v5673
      %v5675 = vpop.f32.mrf.mxu0
      %5676 = vdwg.mxu0
      %5677 = vrot.lane.b32.xlu0 %v4286, 48
      %v5678 = vpop.permute.xlu0 %5677
      %5679 = vrot.lane.b32.xlu0 %v4287, 48
      %v5680 = vpop.permute.xlu0 %5679
      %5681 = vrot.lane.b32.xlu0 %v4288, 48
      %v5682 = vpop.permute.xlu0 %5681
      %5683 = vrot.lane.b32.xlu0 %v4289, 48
      %v5684 = vpop.permute.xlu0 %5683
      %5685 = vrot.lane.b32.xlu0 %v4290, 48
      %v5686 = vpop.permute.xlu0 %5685
      %5687 = vrot.lane.b32.xlu0 %v4291, 48
      %v5688 = vpop.permute.xlu0 %5687
      %5689 = vrot.lane.b32.xlu0 %v4292, 48
      %v5690 = vpop.permute.xlu0 %5689
      %5691 = vrot.lane.b32.xlu0 %v4293, 48
      %v5692 = vpop.permute.xlu0 %5691
      %v5702 = vsel %vm1399, %v5355, 0
      %v5705 = vsel %vm1399, %v5356, 0
      %v5708 = vsel %vm1399, %v5357, 0
      %v5711 = vsel %vm1399, %v5358, 0
      %v5714 = vsel %vm1399, %v5359, 0
      %v5717 = vsel %vm1399, %v5360, 0
      %v5720 = vsel %vm1399, %v5361, 0
      %v5723 = vsel %vm1399, %v5362, 0
      %5725 = vmatprep.subr.mxu0 0.0
      %5726 = vmatpush1.msra.mxu0 0.0
      %5727 = vmatprep.subr.mxu0 0.0
      %5728 = vmatpush1.msra.mxu0 0.0
      %5729 = vmatprep.subr.mxu0 0.0
      %5730 = vmatpush1.msra.mxu0 0.0
      %5731 = vmatprep.subr.mxu0 0.0
      %5732 = vmatpush1.msra.mxu0 0.0
      %5733 = vmatprep.subr.mxu0 0.0
      %5734 = vmatpush1.msra.mxu0 0.0
      %5735 = vmatprep.subr.mxu0 0.0
      %5736 = vmatpush1.msra.mxu0 0.0
      %5737 = vmatprep.subr.mxu0 0.0
      %5738 = vmatpush1.msra.mxu0 0.0
      %5739 = vmatprep.subr.mxu0 0.0
      %5740 = vmatpush1.msra.mxu0 0.0
      %5741 = vmatprep.subr.mxu0 0.0
      %5742 = vmatpush1.msra.mxu0 %v5692
      %5743 = vmatprep.subr.mxu0 0.0
      %5744 = vmatpush1.msra.mxu0 %v5690
      %5745 = vmatprep.subr.mxu0 0.0
      %5746 = vmatpush1.msra.mxu0 %v5688
      %5747 = vmatprep.subr.mxu0 0.0
      %5748 = vmatpush1.msra.mxu0 %v5686
      %5749 = vmatprep.subr.mxu0 0.0
      %5750 = vmatpush1.msra.mxu0 %v5684
      %5751 = vmatprep.subr.mxu0 0.0
      %5752 = vmatpush1.msra.mxu0 %v5682
      %5753 = vmatprep.subr.mxu0 0.0
      %5754 = vmatpush1.msra.mxu0 %v5680
      %5755 = vmatprep.subr.mxu0 0.0
      %5756 = vmatpush1.msra.mxu0 %v5678
      %5757 = vmatprep.subr.mxu0 0.0
      %5758 = vmatpush2.msra.mxu0 0.0
      %5759 = vmatprep.subr.mxu0 0.0
      %5760 = vmatpush2.msra.mxu0 0.0
      %5761 = vmatprep.subr.mxu0 0.0
      %5762 = vmatpush2.msra.mxu0 0.0
      %5763 = vmatprep.subr.mxu0 0.0
      %5764 = vmatpush2.msra.mxu0 0.0
      %5765 = vmatprep.subr.mxu0 0.0
      %5766 = vmatpush2.msra.mxu0 0.0
      %5767 = vmatprep.subr.mxu0 0.0
      %5768 = vmatpush2.msra.mxu0 0.0
      %5769 = vmatprep.subr.mxu0 0.0
      %5770 = vmatpush2.msra.mxu0 0.0
      %5771 = vmatprep.subr.mxu0 0.0
      %5772 = vmatpush2.msra.mxu0 0.0
      %5773 = vmatprep.subr.mxu0 0.0
      %5774 = vmatpush2.msra.mxu0 0.0
      %5775 = vmatprep.subr.mxu0 0.0
      %5776 = vmatpush2.msra.mxu0 0.0
      %5777 = vmatprep.subr.mxu0 0.0
      %5778 = vmatpush2.msra.mxu0 0.0
      %5779 = vmatprep.subr.mxu0 0.0
      %5780 = vmatpush2.msra.mxu0 0.0
      %5781 = vmatprep.subr.mxu0 0.0
      %5782 = vmatpush2.msra.mxu0 0.0
      %5783 = vmatprep.subr.mxu0 0.0
      %5784 = vmatpush2.msra.mxu0 0.0
      %5785 = vmatprep.subr.mxu0 0.0
      %5786 = vmatpush2.msra.mxu0 0.0
      %5787 = vmatprep.subr.mxu0 0.0
      %5788 = vmatpush2.msra.mxu0 0.0
      %5789 = vmatprep.mubr.f32.mxu0 0.0
      %5790 = vmatmul.mubr.f32.gmra.mxu0 %v5702
      %v5791 = vpop.f32.mrf.mxu0
      %v5792 = vadd.f32 0.0, %v5791
      %v5793 = vpop.f32.mrf.mxu0
      %5794 = vmatprep.mubr.f32.mxu0 0.0
      %5795 = vmatmul.mubr.f32.gmra.mxu0 %v5705
      %v5796 = vpop.f32.mrf.mxu0
      %v5797 = vadd.f32 0.0, %v5796
      %v5798 = vpop.f32.mrf.mxu0
      %5799 = vmatprep.mubr.f32.mxu0 0.0
      %5800 = vmatmul.mubr.f32.gmra.mxu0 %v5708
      %v5801 = vpop.f32.mrf.mxu0
      %v5802 = vadd.f32 0.0, %v5801
      %v5803 = vpop.f32.mrf.mxu0
      %5804 = vmatprep.mubr.f32.mxu0 0.0
      %5805 = vmatmul.mubr.f32.gmra.mxu0 %v5711
      %v5806 = vpop.f32.mrf.mxu0
      %v5807 = vadd.f32 0.0, %v5806
      %v5808 = vpop.f32.mrf.mxu0
      %5809 = vmatprep.mubr.f32.mxu0 0.0
      %5810 = vmatmul.mubr.f32.gmra.mxu0 %v5714
      %v5811 = vpop.f32.mrf.mxu0
      %v5812 = vadd.f32 0.0, %v5811
      %v5813 = vpop.f32.mrf.mxu0
      %5814 = vmatprep.mubr.f32.mxu0 0.0
      %5815 = vmatmul.mubr.f32.gmra.mxu0 %v5717
      %v5816 = vpop.f32.mrf.mxu0
      %v5817 = vadd.f32 0.0, %v5816
      %v5818 = vpop.f32.mrf.mxu0
      %5819 = vmatprep.mubr.f32.mxu0 0.0
      %5820 = vmatmul.mubr.f32.gmra.mxu0 %v5720
      %v5821 = vpop.f32.mrf.mxu0
      %v5822 = vadd.f32 0.0, %v5821
      %v5823 = vpop.f32.mrf.mxu0
      %5824 = vmatprep.mubr.f32.mxu0 0.0
      %5825 = vmatmul.mubr.f32.gmra.mxu0 %v5723
      %v5826 = vpop.f32.mrf.mxu0
      %v5827 = vadd.f32 0.0, %v5826
      %v5828 = vpop.f32.mrf.mxu0
      %5829 = vdwg.mxu0
      %5830 = vrot.lane.b32.xlu0 %v4294, 48
      %v5831 = vpop.permute.xlu0 %5830
      %5832 = vrot.lane.b32.xlu0 %v4295, 48
      %v5833 = vpop.permute.xlu0 %5832
      %5834 = vrot.lane.b32.xlu0 %v4296, 48
      %v5835 = vpop.permute.xlu0 %5834
      %5836 = vrot.lane.b32.xlu0 %v4297, 48
      %v5837 = vpop.permute.xlu0 %5836
      %5838 = vrot.lane.b32.xlu0 %v4298, 48
      %v5839 = vpop.permute.xlu0 %5838
      %5840 = vrot.lane.b32.xlu0 %v4299, 48
      %v5841 = vpop.permute.xlu0 %5840
      %5842 = vrot.lane.b32.xlu0 %v4300, 48
      %v5843 = vpop.permute.xlu0 %5842
      %5844 = vrot.lane.b32.xlu0 %v4301, 48
      %v5845 = vpop.permute.xlu0 %5844
      %v5855 = vsel %vm1399, %v5363, 0
      %v5858 = vsel %vm1399, %v5364, 0
      %v5861 = vsel %vm1399, %v5365, 0
      %v5864 = vsel %vm1399, %v5366, 0
      %v5867 = vsel %vm1399, %v5367, 0
      %v5870 = vsel %vm1399, %v5368, 0
      %v5873 = vsel %vm1399, %v5369, 0
      %v5876 = vsel %vm1399, %v5370, 0
      %5878 = vmatprep.subr.mxu0 0.0
      %5879 = vmatpush1.msra.mxu0 0.0
      %5880 = vmatprep.subr.mxu0 0.0
      %5881 = vmatpush1.msra.mxu0 0.0
      %5882 = vmatprep.subr.mxu0 0.0
      %5883 = vmatpush1.msra.mxu0 0.0
      %5884 = vmatprep.subr.mxu0 0.0
      %5885 = vmatpush1.msra.mxu0 0.0
      %5886 = vmatprep.subr.mxu0 0.0
      %5887 = vmatpush1.msra.mxu0 0.0
      %5888 = vmatprep.subr.mxu0 0.0
      %5889 = vmatpush1.msra.mxu0 0.0
      %5890 = vmatprep.subr.mxu0 0.0
      %5891 = vmatpush1.msra.mxu0 0.0
      %5892 = vmatprep.subr.mxu0 0.0
      %5893 = vmatpush1.msra.mxu0 0.0
      %5894 = vmatprep.subr.mxu0 0.0
      %5895 = vmatpush1.msra.mxu0 %v5845
      %5896 = vmatprep.subr.mxu0 0.0
      %5897 = vmatpush1.msra.mxu0 %v5843
      %5898 = vmatprep.subr.mxu0 0.0
      %5899 = vmatpush1.msra.mxu0 %v5841
      %5900 = vmatprep.subr.mxu0 0.0
      %5901 = vmatpush1.msra.mxu0 %v5839
      %5902 = vmatprep.subr.mxu0 0.0
      %5903 = vmatpush1.msra.mxu0 %v5837
      %5904 = vmatprep.subr.mxu0 0.0
      %5905 = vmatpush1.msra.mxu0 %v5835
      %5906 = vmatprep.subr.mxu0 0.0
      %5907 = vmatpush1.msra.mxu0 %v5833
      %5908 = vmatprep.subr.mxu0 0.0
      %5909 = vmatpush1.msra.mxu0 %v5831
      %5910 = vmatprep.subr.mxu0 0.0
      %5911 = vmatpush2.msra.mxu0 0.0
      %5912 = vmatprep.subr.mxu0 0.0
      %5913 = vmatpush2.msra.mxu0 0.0
      %5914 = vmatprep.subr.mxu0 0.0
      %5915 = vmatpush2.msra.mxu0 0.0
      %5916 = vmatprep.subr.mxu0 0.0
      %5917 = vmatpush2.msra.mxu0 0.0
      %5918 = vmatprep.subr.mxu0 0.0
      %5919 = vmatpush2.msra.mxu0 0.0
      %5920 = vmatprep.subr.mxu0 0.0
      %5921 = vmatpush2.msra.mxu0 0.0
      %5922 = vmatprep.subr.mxu0 0.0
      %5923 = vmatpush2.msra.mxu0 0.0
      %5924 = vmatprep.subr.mxu0 0.0
      %5925 = vmatpush2.msra.mxu0 0.0
      %5926 = vmatprep.subr.mxu0 0.0
      %5927 = vmatpush2.msra.mxu0 0.0
      %5928 = vmatprep.subr.mxu0 0.0
      %5929 = vmatpush2.msra.mxu0 0.0
      %5930 = vmatprep.subr.mxu0 0.0
      %5931 = vmatpush2.msra.mxu0 0.0
      %5932 = vmatprep.subr.mxu0 0.0
      %5933 = vmatpush2.msra.mxu0 0.0
      %5934 = vmatprep.subr.mxu0 0.0
      %5935 = vmatpush2.msra.mxu0 0.0
      %5936 = vmatprep.subr.mxu0 0.0
      %5937 = vmatpush2.msra.mxu0 0.0
      %5938 = vmatprep.subr.mxu0 0.0
      %5939 = vmatpush2.msra.mxu0 0.0
      %5940 = vmatprep.subr.mxu0 0.0
      %5941 = vmatpush2.msra.mxu0 0.0
      %5942 = vmatprep.mubr.f32.mxu0 0.0
      %5943 = vmatmul.mubr.f32.gmra.mxu0 %v5855
      %v5944 = vpop.f32.mrf.mxu0
      %v5945 = vadd.f32 0.0, %v5944
      %v5946 = vpop.f32.mrf.mxu0
      %5947 = vmatprep.mubr.f32.mxu0 0.0
      %5948 = vmatmul.mubr.f32.gmra.mxu0 %v5858
      %v5949 = vpop.f32.mrf.mxu0
      %v5950 = vadd.f32 0.0, %v5949
      %v5951 = vpop.f32.mrf.mxu0
      %5952 = vmatprep.mubr.f32.mxu0 0.0
      %5953 = vmatmul.mubr.f32.gmra.mxu0 %v5861
      %v5954 = vpop.f32.mrf.mxu0
      %v5955 = vadd.f32 0.0, %v5954
      %v5956 = vpop.f32.mrf.mxu0
      %5957 = vmatprep.mubr.f32.mxu0 0.0
      %5958 = vmatmul.mubr.f32.gmra.mxu0 %v5864
      %v5959 = vpop.f32.mrf.mxu0
      %v5960 = vadd.f32 0.0, %v5959
      %v5961 = vpop.f32.mrf.mxu0
      %5962 = vmatprep.mubr.f32.mxu0 0.0
      %5963 = vmatmul.mubr.f32.gmra.mxu0 %v5867
      %v5964 = vpop.f32.mrf.mxu0
      %v5965 = vadd.f32 0.0, %v5964
      %v5966 = vpop.f32.mrf.mxu0
      %5967 = vmatprep.mubr.f32.mxu0 0.0
      %5968 = vmatmul.mubr.f32.gmra.mxu0 %v5870
      %v5969 = vpop.f32.mrf.mxu0
      %v5970 = vadd.f32 0.0, %v5969
      %v5971 = vpop.f32.mrf.mxu0
      %5972 = vmatprep.mubr.f32.mxu0 0.0
      %5973 = vmatmul.mubr.f32.gmra.mxu0 %v5873
      %v5974 = vpop.f32.mrf.mxu0
      %v5975 = vadd.f32 0.0, %v5974
      %v5976 = vpop.f32.mrf.mxu0
      %5977 = vmatprep.mubr.f32.mxu0 0.0
      %5978 = vmatmul.mubr.f32.gmra.mxu0 %v5876
      %v5979 = vpop.f32.mrf.mxu0
      %v5980 = vadd.f32 0.0, %v5979
      %v5981 = vpop.f32.mrf.mxu0
      %5982 = vdwg.mxu0
      %6015 = vrot.lane.b32.xlu0 %v5486, 16
      %v6016 = vpop.permute.xlu0 %6015
      %6017 = vrot.lane.b32.xlu0 %v5491, 16
      %v6018 = vpop.permute.xlu0 %6017
      %6019 = vrot.lane.b32.xlu0 %v5496, 16
      %v6020 = vpop.permute.xlu0 %6019
      %6021 = vrot.lane.b32.xlu0 %v5501, 16
      %v6022 = vpop.permute.xlu0 %6021
      %6023 = vrot.lane.b32.xlu0 %v5506, 16
      %v6024 = vpop.permute.xlu0 %6023
      %6025 = vrot.lane.b32.xlu0 %v5511, 16
      %v6026 = vpop.permute.xlu0 %6025
      %6027 = vrot.lane.b32.xlu0 %v5516, 16
      %v6028 = vpop.permute.xlu0 %6027
      %6029 = vrot.lane.b32.xlu0 %v5521, 16
      %v6030 = vpop.permute.xlu0 %6029
      %6031 = vrot.lane.b32.xlu0 %v5639, 16
      %v6032 = vpop.permute.xlu0 %6031
      %6033 = vrot.lane.b32.xlu0 %v5644, 16
      %v6034 = vpop.permute.xlu0 %6033
      %6035 = vrot.lane.b32.xlu0 %v5649, 16
      %v6036 = vpop.permute.xlu0 %6035
      %6037 = vrot.lane.b32.xlu0 %v5654, 16
      %v6038 = vpop.permute.xlu0 %6037
      %6039 = vrot.lane.b32.xlu0 %v5659, 16
      %v6040 = vpop.permute.xlu0 %6039
      %6041 = vrot.lane.b32.xlu0 %v5664, 16
      %v6042 = vpop.permute.xlu0 %6041
      %6043 = vrot.lane.b32.xlu0 %v5669, 16
      %v6044 = vpop.permute.xlu0 %6043
      %6045 = vrot.lane.b32.xlu0 %v5674, 16
      %v6046 = vpop.permute.xlu0 %6045
      %6047 = vrot.lane.b32.xlu0 %v5792, 16
      %v6048 = vpop.permute.xlu0 %6047
      %6049 = vrot.lane.b32.xlu0 %v5797, 16
      %v6050 = vpop.permute.xlu0 %6049
      %6051 = vrot.lane.b32.xlu0 %v5802, 16
      %v6052 = vpop.permute.xlu0 %6051
      %6053 = vrot.lane.b32.xlu0 %v5807, 16
      %v6054 = vpop.permute.xlu0 %6053
      %6055 = vrot.lane.b32.xlu0 %v5812, 16
      %v6056 = vpop.permute.xlu0 %6055
      %6057 = vrot.lane.b32.xlu0 %v5817, 16
      %v6058 = vpop.permute.xlu0 %6057
      %6059 = vrot.lane.b32.xlu0 %v5822, 16
      %v6060 = vpop.permute.xlu0 %6059
      %6061 = vrot.lane.b32.xlu0 %v5827, 16
      %v6062 = vpop.permute.xlu0 %6061
      %6063 = vrot.lane.b32.xlu0 %v5945, 16
      %v6064 = vpop.permute.xlu0 %6063
      %6065 = vrot.lane.b32.xlu0 %v5950, 16
      %v6066 = vpop.permute.xlu0 %6065
      %6067 = vrot.lane.b32.xlu0 %v5955, 16
      %v6068 = vpop.permute.xlu0 %6067
      %6069 = vrot.lane.b32.xlu0 %v5960, 16
      %v6070 = vpop.permute.xlu0 %6069
      %6071 = vrot.lane.b32.xlu0 %v5965, 16
      %v6072 = vpop.permute.xlu0 %6071
      %6073 = vrot.lane.b32.xlu0 %v5970, 16
      %v6074 = vpop.permute.xlu0 %6073
      %6075 = vrot.lane.b32.xlu0 %v5975, 16
      %v6076 = vpop.permute.xlu0 %6075
      %6077 = vrot.lane.b32.xlu0 %v5980, 16
      %v6078 = vpop.permute.xlu0 %6077
      %vm6111 = vcmask 195712
      %6112 = vst.msk [vmem:[#allocation3] sm:$0xff] %vm6111, %v6016
      %6113 = vst.msk [vmem:[#allocation3 + $0x8] sm:$0xff] %vm6111, %v6018
      %6114 = vst.msk [vmem:[#allocation3 + $0x10] sm:$0xff] %vm6111, %v6020
      %6115 = vst.msk [vmem:[#allocation3 + $0x18] sm:$0xff] %vm6111, %v6022
      %6116 = vst.msk [vmem:[#allocation3 + $0x20] sm:$0xff] %vm6111, %v6024
      %6117 = vst.msk [vmem:[#allocation3 + $0x28] sm:$0xff] %vm6111, %v6026
      %6118 = vst.msk [vmem:[#allocation3 + $0x30] sm:$0xff] %vm6111, %v6028
      %6119 = vst.msk [vmem:[#allocation3 + $0x38] sm:$0xff] %vm6111, %v6030
      %6120 = vst.msk [vmem:[#allocation3 + $0x40] sm:$0xff] %vm6111, %v6032
      %6121 = vst.msk [vmem:[#allocation3 + $0x48] sm:$0xff] %vm6111, %v6034
      %6122 = vst.msk [vmem:[#allocation3 + $0x50] sm:$0xff] %vm6111, %v6036
      %6123 = vst.msk [vmem:[#allocation3 + $0x58] sm:$0xff] %vm6111, %v6038
      %6124 = vst.msk [vmem:[#allocation3 + $0x60] sm:$0xff] %vm6111, %v6040
      %6125 = vst.msk [vmem:[#allocation3 + $0x68] sm:$0xff] %vm6111, %v6042
      %6126 = vst.msk [vmem:[#allocation3 + $0x70] sm:$0xff] %vm6111, %v6044
      %6127 = vst.msk [vmem:[#allocation3 + $0x78] sm:$0xff] %vm6111, %v6046
      %6128 = vst.msk [vmem:[#allocation3 + $0x80] sm:$0xff] %vm6111, %v6048
      %6129 = vst.msk [vmem:[#allocation3 + $0x88] sm:$0xff] %vm6111, %v6050
      %6130 = vst.msk [vmem:[#allocation3 + $0x90] sm:$0xff] %vm6111, %v6052
      %6131 = vst.msk [vmem:[#allocation3 + $0x98] sm:$0xff] %vm6111, %v6054
      %6132 = vst.msk [vmem:[#allocation3 + $0xa0] sm:$0xff] %vm6111, %v6056
      %6133 = vst.msk [vmem:[#allocation3 + $0xa8] sm:$0xff] %vm6111, %v6058
      %6134 = vst.msk [vmem:[#allocation3 + $0xb0] sm:$0xff] %vm6111, %v6060
      %6135 = vst.msk [vmem:[#allocation3 + $0xb8] sm:$0xff] %vm6111, %v6062
      %6136 = vst.msk [vmem:[#allocation3 + $0xc0] sm:$0xff] %vm6111, %v6064
      %6137 = vst.msk [vmem:[#allocation3 + $0xc8] sm:$0xff] %vm6111, %v6066
      %6138 = vst.msk [vmem:[#allocation3 + $0xd0] sm:$0xff] %vm6111, %v6068
      %6139 = vst.msk [vmem:[#allocation3 + $0xd8] sm:$0xff] %vm6111, %v6070
      %6140 = vst.msk [vmem:[#allocation3 + $0xe0] sm:$0xff] %vm6111, %v6072
      %6141 = vst.msk [vmem:[#allocation3 + $0xe8] sm:$0xff] %vm6111, %v6074
      %6142 = vst.msk [vmem:[#allocation3 + $0xf0] sm:$0xff] %vm6111, %v6076
      %6143 = vst.msk [vmem:[#allocation3 + $0xf8] sm:$0xff] %vm6111, %v6078
      %v6144 = vld [vmem:[#allocation2] sm:$0xff]
      %v6145 = vld [vmem:[#allocation2 + $0x8] sm:$0xff]
      %v6146 = vld [vmem:[#allocation2 + $0x10] sm:$0xff]
      %v6147 = vld [vmem:[#allocation2 + $0x18] sm:$0xff]
      %v6148 = vld [vmem:[#allocation2 + $0x20] sm:$0xff]
      %v6149 = vld [vmem:[#allocation2 + $0x28] sm:$0xff]
      %v6150 = vld [vmem:[#allocation2 + $0x30] sm:$0xff]
      %v6151 = vld [vmem:[#allocation2 + $0x38] sm:$0xff]
      %v6152 = vld [vmem:[#allocation2 + $0x40] sm:$0xff]
      %v6153 = vld [vmem:[#allocation2 + $0x48] sm:$0xff]
      %v6154 = vld [vmem:[#allocation2 + $0x50] sm:$0xff]
      %v6155 = vld [vmem:[#allocation2 + $0x58] sm:$0xff]
      %v6156 = vld [vmem:[#allocation2 + $0x60] sm:$0xff]
      %v6157 = vld [vmem:[#allocation2 + $0x68] sm:$0xff]
      %v6158 = vld [vmem:[#allocation2 + $0x70] sm:$0xff]
      %v6159 = vld [vmem:[#allocation2 + $0x78] sm:$0xff]
      %v6160 = vld [vmem:[#allocation2 + $0x80] sm:$0xff]
      %v6161 = vld [vmem:[#allocation2 + $0x88] sm:$0xff]
      %v6162 = vld [vmem:[#allocation2 + $0x90] sm:$0xff]
      %v6163 = vld [vmem:[#allocation2 + $0x98] sm:$0xff]
      %v6164 = vld [vmem:[#allocation2 + $0xa0] sm:$0xff]
      %v6165 = vld [vmem:[#allocation2 + $0xa8] sm:$0xff]
      %v6166 = vld [vmem:[#allocation2 + $0xb0] sm:$0xff]
      %v6167 = vld [vmem:[#allocation2 + $0xb8] sm:$0xff]
      %v6168 = vld [vmem:[#allocation2 + $0xc0] sm:$0xff]
      %v6169 = vld [vmem:[#allocation2 + $0xc8] sm:$0xff]
      %v6170 = vld [vmem:[#allocation2 + $0xd0] sm:$0xff]
      %v6171 = vld [vmem:[#allocation2 + $0xd8] sm:$0xff]
      %v6172 = vld [vmem:[#allocation2 + $0xe0] sm:$0xff]
      %v6173 = vld [vmem:[#allocation2 + $0xe8] sm:$0xff]
      %v6174 = vld [vmem:[#allocation2 + $0xf0] sm:$0xff]
      %v6175 = vld [vmem:[#allocation2 + $0xf8] sm:$0xff]
      %s6176 = scalar_lea.vmem %s304, 192
      %v6177 = vld [vmem:[%s6176] sm:$0xff]
      %v6178 = vld [vmem:[%s6176 + $0x8] sm:$0xff]
      %v6179 = vld [vmem:[%s6176 + $0x10] sm:$0xff]
      %v6180 = vld [vmem:[%s6176 + $0x18] sm:$0xff]
      %v6181 = vld [vmem:[%s6176 + $0x20] sm:$0xff]
      %v6182 = vld [vmem:[%s6176 + $0x28] sm:$0xff]
      %v6183 = vld [vmem:[%s6176 + $0x30] sm:$0xff]
      %v6184 = vld [vmem:[%s6176 + $0x38] sm:$0xff]
      %6193 = vrot.lane.b32.xlu0 %v6144, 104
      %v6194 = vpop.permute.xlu0 %6193
      %6195 = vrot.lane.b32.xlu0 %v6145, 104
      %v6196 = vpop.permute.xlu0 %6195
      %6197 = vrot.lane.b32.xlu0 %v6146, 104
      %v6198 = vpop.permute.xlu0 %6197
      %6199 = vrot.lane.b32.xlu0 %v6147, 104
      %v6200 = vpop.permute.xlu0 %6199
      %6201 = vrot.lane.b32.xlu0 %v6148, 104
      %v6202 = vpop.permute.xlu0 %6201
      %6203 = vrot.lane.b32.xlu0 %v6149, 104
      %v6204 = vpop.permute.xlu0 %6203
      %6205 = vrot.lane.b32.xlu0 %v6150, 104
      %v6206 = vpop.permute.xlu0 %6205
      %6207 = vrot.lane.b32.xlu0 %v6151, 104
      %v6208 = vpop.permute.xlu0 %6207
      %6209 = vrot.lane.b32.xlu0 %v6144, 72
      %v6210 = vpop.permute.xlu0 %6209
      %6211 = vrot.lane.b32.xlu0 %v6145, 72
      %v6212 = vpop.permute.xlu0 %6211
      %6213 = vrot.lane.b32.xlu0 %v6146, 72
      %v6214 = vpop.permute.xlu0 %6213
      %6215 = vrot.lane.b32.xlu0 %v6147, 72
      %v6216 = vpop.permute.xlu0 %6215
      %6217 = vrot.lane.b32.xlu0 %v6148, 72
      %v6218 = vpop.permute.xlu0 %6217
      %6219 = vrot.lane.b32.xlu0 %v6149, 72
      %v6220 = vpop.permute.xlu0 %6219
      %6221 = vrot.lane.b32.xlu0 %v6150, 72
      %v6222 = vpop.permute.xlu0 %6221
      %6223 = vrot.lane.b32.xlu0 %v6151, 72
      %v6224 = vpop.permute.xlu0 %6223
      %v6225 = vsel %vm778, %v6194, 0
      %v6227 = vsel %vm778, %v6196, 0
      %v6229 = vsel %vm778, %v6198, 0
      %v6231 = vsel %vm778, %v6200, 0
      %v6233 = vsel %vm778, %v6202, 0
      %v6235 = vsel %vm778, %v6204, 0
      %v6237 = vsel %vm778, %v6206, 0
      %v6239 = vsel %vm778, %v6208, 0
      %v6241 = vsel %vm778, %v6210, 0
      %v6243 = vsel %vm778, %v6212, 0
      %v6245 = vsel %vm778, %v6214, 0
      %v6247 = vsel %vm778, %v6216, 0
      %v6249 = vsel %vm778, %v6218, 0
      %v6251 = vsel %vm778, %v6220, 0
      %v6253 = vsel %vm778, %v6222, 0
      %v6255 = vsel %vm778, %v6224, 0
      %6257 = vmatprep.subr.mxu0 0.0
      %6258 = vmatpush1.xpose.msra.mxu0 0.0
      %6259 = vmatprep.subr.mxu0 0.0
      %6260 = vmatpush1.xpose.msra.mxu0 0.0
      %6261 = vmatprep.subr.mxu0 0.0
      %6262 = vmatpush1.xpose.msra.mxu0 0.0
      %6263 = vmatprep.subr.mxu0 0.0
      %6264 = vmatpush1.xpose.msra.mxu0 0.0
      %6265 = vmatprep.subr.mxu0 0.0
      %6266 = vmatpush1.xpose.msra.mxu0 0.0
      %6267 = vmatprep.subr.mxu0 0.0
      %6268 = vmatpush1.xpose.msra.mxu0 0.0
      %6269 = vmatprep.subr.mxu0 0.0
      %6270 = vmatpush1.xpose.msra.mxu0 0.0
      %6271 = vmatprep.subr.mxu0 0.0
      %6272 = vmatpush1.xpose.msra.mxu0 0.0
      %6273 = vmatprep.subr.mxu0 0.0
      %6274 = vmatpush1.xpose.msra.mxu0 %v6255
      %6275 = vmatprep.subr.mxu0 0.0
      %6276 = vmatpush1.xpose.msra.mxu0 %v6253
      %6277 = vmatprep.subr.mxu0 0.0
      %6278 = vmatpush1.xpose.msra.mxu0 %v6251
      %6279 = vmatprep.subr.mxu0 0.0
      %6280 = vmatpush1.xpose.msra.mxu0 %v6249
      %6281 = vmatprep.subr.mxu0 0.0
      %6282 = vmatpush1.xpose.msra.mxu0 %v6247
      %6283 = vmatprep.subr.mxu0 0.0
      %6284 = vmatpush1.xpose.msra.mxu0 %v6245
      %6285 = vmatprep.subr.mxu0 0.0
      %6286 = vmatpush1.xpose.msra.mxu0 %v6243
      %6287 = vmatprep.subr.mxu0 0.0
      %6288 = vmatpush1.xpose.msra.mxu0 %v6241
      %6289 = vmatprep.subr.mxu0 0.0
      %6290 = vmatpush2.xpose.msra.mxu0 0.0
      %6291 = vmatprep.subr.mxu0 0.0
      %6292 = vmatpush2.xpose.msra.mxu0 0.0
      %6293 = vmatprep.subr.mxu0 0.0
      %6294 = vmatpush2.xpose.msra.mxu0 0.0
      %6295 = vmatprep.subr.mxu0 0.0
      %6296 = vmatpush2.xpose.msra.mxu0 0.0
      %6297 = vmatprep.subr.mxu0 0.0
      %6298 = vmatpush2.xpose.msra.mxu0 0.0
      %6299 = vmatprep.subr.mxu0 0.0
      %6300 = vmatpush2.xpose.msra.mxu0 0.0
      %6301 = vmatprep.subr.mxu0 0.0
      %6302 = vmatpush2.xpose.msra.mxu0 0.0
      %6303 = vmatprep.subr.mxu0 0.0
      %6304 = vmatpush2.xpose.msra.mxu0 0.0
      %6305 = vmatprep.subr.mxu0 0.0
      %6306 = vmatpush2.xpose.msra.mxu0 0.0
      %6307 = vmatprep.subr.mxu0 0.0
      %6308 = vmatpush2.xpose.msra.mxu0 0.0
      %6309 = vmatprep.subr.mxu0 0.0
      %6310 = vmatpush2.xpose.msra.mxu0 0.0
      %6311 = vmatprep.subr.mxu0 0.0
      %6312 = vmatpush2.xpose.msra.mxu0 0.0
      %6313 = vmatprep.subr.mxu0 0.0
      %6314 = vmatpush2.xpose.msra.mxu0 0.0
      %6315 = vmatprep.subr.mxu0 0.0
      %6316 = vmatpush2.xpose.msra.mxu0 0.0
      %6317 = vmatprep.subr.mxu0 0.0
      %6318 = vmatpush2.xpose.msra.mxu0 0.0
      %6319 = vmatprep.subr.mxu0 0.0
      %6320 = vmatpush2.xpose.msra.mxu0 0.0
      %6321 = vmatprep.mubr.f32.mxu0 0.0
      %6322 = vmatmul.mubr.f32.gmra.mxu0 %v6225
      %v6323 = vpop.f32.mrf.mxu0
      %v6324 = vadd.f32 %v6177, %v6323
      %v6325 = vpop.f32.mrf.mxu0
      %6326 = vmatprep.mubr.f32.mxu0 0.0
      %6327 = vmatmul.mubr.f32.gmra.mxu0 %v6227
      %v6328 = vpop.f32.mrf.mxu0
      %v6329 = vadd.f32 %v6178, %v6328
      %v6330 = vpop.f32.mrf.mxu0
      %6331 = vmatprep.mubr.f32.mxu0 0.0
      %6332 = vmatmul.mubr.f32.gmra.mxu0 %v6229
      %v6333 = vpop.f32.mrf.mxu0
      %v6334 = vadd.f32 %v6179, %v6333
      %v6335 = vpop.f32.mrf.mxu0
      %6336 = vmatprep.mubr.f32.mxu0 0.0
      %6337 = vmatmul.mubr.f32.gmra.mxu0 %v6231
      %v6338 = vpop.f32.mrf.mxu0
      %v6339 = vadd.f32 %v6180, %v6338
      %v6340 = vpop.f32.mrf.mxu0
      %6341 = vmatprep.mubr.f32.mxu0 0.0
      %6342 = vmatmul.mubr.f32.gmra.mxu0 %v6233
      %v6343 = vpop.f32.mrf.mxu0
      %v6344 = vadd.f32 %v6181, %v6343
      %v6345 = vpop.f32.mrf.mxu0
      %6346 = vmatprep.mubr.f32.mxu0 0.0
      %6347 = vmatmul.mubr.f32.gmra.mxu0 %v6235
      %v6348 = vpop.f32.mrf.mxu0
      %v6349 = vadd.f32 %v6182, %v6348
      %v6350 = vpop.f32.mrf.mxu0
      %6351 = vmatprep.mubr.f32.mxu0 0.0
      %6352 = vmatmul.mubr.f32.gmra.mxu0 %v6237
      %v6353 = vpop.f32.mrf.mxu0
      %v6354 = vadd.f32 %v6183, %v6353
      %v6355 = vpop.f32.mrf.mxu0
      %6356 = vmatprep.mubr.f32.mxu0 0.0
      %6357 = vmatmul.mubr.f32.gmra.mxu0 %v6239
      %v6358 = vpop.f32.mrf.mxu0
      %v6359 = vadd.f32 %v6184, %v6358
      %v6360 = vpop.f32.mrf.mxu0
      %6361 = vdwg.mxu0
      %6370 = vrot.lane.b32.xlu0 %v6152, 104
      %v6371 = vpop.permute.xlu0 %6370
      %6372 = vrot.lane.b32.xlu0 %v6153, 104
      %v6373 = vpop.permute.xlu0 %6372
      %6374 = vrot.lane.b32.xlu0 %v6154, 104
      %v6375 = vpop.permute.xlu0 %6374
      %6376 = vrot.lane.b32.xlu0 %v6155, 104
      %v6377 = vpop.permute.xlu0 %6376
      %6378 = vrot.lane.b32.xlu0 %v6156, 104
      %v6379 = vpop.permute.xlu0 %6378
      %6380 = vrot.lane.b32.xlu0 %v6157, 104
      %v6381 = vpop.permute.xlu0 %6380
      %6382 = vrot.lane.b32.xlu0 %v6158, 104
      %v6383 = vpop.permute.xlu0 %6382
      %6384 = vrot.lane.b32.xlu0 %v6159, 104
      %v6385 = vpop.permute.xlu0 %6384
      %6386 = vrot.lane.b32.xlu0 %v6152, 72
      %v6387 = vpop.permute.xlu0 %6386
      %6388 = vrot.lane.b32.xlu0 %v6153, 72
      %v6389 = vpop.permute.xlu0 %6388
      %6390 = vrot.lane.b32.xlu0 %v6154, 72
      %v6391 = vpop.permute.xlu0 %6390
      %6392 = vrot.lane.b32.xlu0 %v6155, 72
      %v6393 = vpop.permute.xlu0 %6392
      %6394 = vrot.lane.b32.xlu0 %v6156, 72
      %v6395 = vpop.permute.xlu0 %6394
      %6396 = vrot.lane.b32.xlu0 %v6157, 72
      %v6397 = vpop.permute.xlu0 %6396
      %6398 = vrot.lane.b32.xlu0 %v6158, 72
      %v6399 = vpop.permute.xlu0 %6398
      %6400 = vrot.lane.b32.xlu0 %v6159, 72
      %v6401 = vpop.permute.xlu0 %6400
      %v6402 = vsel %vm778, %v6371, 0
      %v6404 = vsel %vm778, %v6373, 0
      %v6406 = vsel %vm778, %v6375, 0
      %v6408 = vsel %vm778, %v6377, 0
      %v6410 = vsel %vm778, %v6379, 0
      %v6412 = vsel %vm778, %v6381, 0
      %v6414 = vsel %vm778, %v6383, 0
      %v6416 = vsel %vm778, %v6385, 0
      %v6418 = vsel %vm778, %v6387, 0
      %v6420 = vsel %vm778, %v6389, 0
      %v6422 = vsel %vm778, %v6391, 0
      %v6424 = vsel %vm778, %v6393, 0
      %v6426 = vsel %vm778, %v6395, 0
      %v6428 = vsel %vm778, %v6397, 0
      %v6430 = vsel %vm778, %v6399, 0
      %v6432 = vsel %vm778, %v6401, 0
      %6434 = vmatprep.subr.mxu0 0.0
      %6435 = vmatpush1.xpose.msra.mxu0 0.0
      %6436 = vmatprep.subr.mxu0 0.0
      %6437 = vmatpush1.xpose.msra.mxu0 0.0
      %6438 = vmatprep.subr.mxu0 0.0
      %6439 = vmatpush1.xpose.msra.mxu0 0.0
      %6440 = vmatprep.subr.mxu0 0.0
      %6441 = vmatpush1.xpose.msra.mxu0 0.0
      %6442 = vmatprep.subr.mxu0 0.0
      %6443 = vmatpush1.xpose.msra.mxu0 0.0
      %6444 = vmatprep.subr.mxu0 0.0
      %6445 = vmatpush1.xpose.msra.mxu0 0.0
      %6446 = vmatprep.subr.mxu0 0.0
      %6447 = vmatpush1.xpose.msra.mxu0 0.0
      %6448 = vmatprep.subr.mxu0 0.0
      %6449 = vmatpush1.xpose.msra.mxu0 0.0
      %6450 = vmatprep.subr.mxu0 0.0
      %6451 = vmatpush1.xpose.msra.mxu0 %v6432
      %6452 = vmatprep.subr.mxu0 0.0
      %6453 = vmatpush1.xpose.msra.mxu0 %v6430
      %6454 = vmatprep.subr.mxu0 0.0
      %6455 = vmatpush1.xpose.msra.mxu0 %v6428
      %6456 = vmatprep.subr.mxu0 0.0
      %6457 = vmatpush1.xpose.msra.mxu0 %v6426
      %6458 = vmatprep.subr.mxu0 0.0
      %6459 = vmatpush1.xpose.msra.mxu0 %v6424
      %6460 = vmatprep.subr.mxu0 0.0
      %6461 = vmatpush1.xpose.msra.mxu0 %v6422
      %6462 = vmatprep.subr.mxu0 0.0
      %6463 = vmatpush1.xpose.msra.mxu0 %v6420
      %6464 = vmatprep.subr.mxu0 0.0
      %6465 = vmatpush1.xpose.msra.mxu0 %v6418
      %6466 = vmatprep.subr.mxu0 0.0
      %6467 = vmatpush2.xpose.msra.mxu0 0.0
      %6468 = vmatprep.subr.mxu0 0.0
      %6469 = vmatpush2.xpose.msra.mxu0 0.0
      %6470 = vmatprep.subr.mxu0 0.0
      %6471 = vmatpush2.xpose.msra.mxu0 0.0
      %6472 = vmatprep.subr.mxu0 0.0
      %6473 = vmatpush2.xpose.msra.mxu0 0.0
      %6474 = vmatprep.subr.mxu0 0.0
      %6475 = vmatpush2.xpose.msra.mxu0 0.0
      %6476 = vmatprep.subr.mxu0 0.0
      %6477 = vmatpush2.xpose.msra.mxu0 0.0
      %6478 = vmatprep.subr.mxu0 0.0
      %6479 = vmatpush2.xpose.msra.mxu0 0.0
      %6480 = vmatprep.subr.mxu0 0.0
      %6481 = vmatpush2.xpose.msra.mxu0 0.0
      %6482 = vmatprep.subr.mxu0 0.0
      %6483 = vmatpush2.xpose.msra.mxu0 0.0
      %6484 = vmatprep.subr.mxu0 0.0
      %6485 = vmatpush2.xpose.msra.mxu0 0.0
      %6486 = vmatprep.subr.mxu0 0.0
      %6487 = vmatpush2.xpose.msra.mxu0 0.0
      %6488 = vmatprep.subr.mxu0 0.0
      %6489 = vmatpush2.xpose.msra.mxu0 0.0
      %6490 = vmatprep.subr.mxu0 0.0
      %6491 = vmatpush2.xpose.msra.mxu0 0.0
      %6492 = vmatprep.subr.mxu0 0.0
      %6493 = vmatpush2.xpose.msra.mxu0 0.0
      %6494 = vmatprep.subr.mxu0 0.0
      %6495 = vmatpush2.xpose.msra.mxu0 0.0
      %6496 = vmatprep.subr.mxu0 0.0
      %6497 = vmatpush2.xpose.msra.mxu0 0.0
      %6498 = vmatprep.mubr.f32.mxu0 0.0
      %6499 = vmatmul.mubr.f32.gmra.mxu0 %v6402
      %v6500 = vpop.f32.mrf.mxu0
      %v6501 = vadd.f32 %v6177, %v6500
      %v6502 = vpop.f32.mrf.mxu0
      %6503 = vmatprep.mubr.f32.mxu0 0.0
      %6504 = vmatmul.mubr.f32.gmra.mxu0 %v6404
      %v6505 = vpop.f32.mrf.mxu0
      %v6506 = vadd.f32 %v6178, %v6505
      %v6507 = vpop.f32.mrf.mxu0
      %6508 = vmatprep.mubr.f32.mxu0 0.0
      %6509 = vmatmul.mubr.f32.gmra.mxu0 %v6406
      %v6510 = vpop.f32.mrf.mxu0
      %v6511 = vadd.f32 %v6179, %v6510
      %v6512 = vpop.f32.mrf.mxu0
      %6513 = vmatprep.mubr.f32.mxu0 0.0
      %6514 = vmatmul.mubr.f32.gmra.mxu0 %v6408
      %v6515 = vpop.f32.mrf.mxu0
      %v6516 = vadd.f32 %v6180, %v6515
      %v6517 = vpop.f32.mrf.mxu0
      %6518 = vmatprep.mubr.f32.mxu0 0.0
      %6519 = vmatmul.mubr.f32.gmra.mxu0 %v6410
      %v6520 = vpop.f32.mrf.mxu0
      %v6521 = vadd.f32 %v6181, %v6520
      %v6522 = vpop.f32.mrf.mxu0
      %6523 = vmatprep.mubr.f32.mxu0 0.0
      %6524 = vmatmul.mubr.f32.gmra.mxu0 %v6412
      %v6525 = vpop.f32.mrf.mxu0
      %v6526 = vadd.f32 %v6182, %v6525
      %v6527 = vpop.f32.mrf.mxu0
      %6528 = vmatprep.mubr.f32.mxu0 0.0
      %6529 = vmatmul.mubr.f32.gmra.mxu0 %v6414
      %v6530 = vpop.f32.mrf.mxu0
      %v6531 = vadd.f32 %v6183, %v6530
      %v6532 = vpop.f32.mrf.mxu0
      %6533 = vmatprep.mubr.f32.mxu0 0.0
      %6534 = vmatmul.mubr.f32.gmra.mxu0 %v6416
      %v6535 = vpop.f32.mrf.mxu0
      %v6536 = vadd.f32 %v6184, %v6535
      %v6537 = vpop.f32.mrf.mxu0
      %6538 = vdwg.mxu0
      %6547 = vrot.lane.b32.xlu0 %v6160, 104
      %v6548 = vpop.permute.xlu0 %6547
      %6549 = vrot.lane.b32.xlu0 %v6161, 104
      %v6550 = vpop.permute.xlu0 %6549
      %6551 = vrot.lane.b32.xlu0 %v6162, 104
      %v6552 = vpop.permute.xlu0 %6551
      %6553 = vrot.lane.b32.xlu0 %v6163, 104
      %v6554 = vpop.permute.xlu0 %6553
      %6555 = vrot.lane.b32.xlu0 %v6164, 104
      %v6556 = vpop.permute.xlu0 %6555
      %6557 = vrot.lane.b32.xlu0 %v6165, 104
      %v6558 = vpop.permute.xlu0 %6557
      %6559 = vrot.lane.b32.xlu0 %v6166, 104
      %v6560 = vpop.permute.xlu0 %6559
      %6561 = vrot.lane.b32.xlu0 %v6167, 104
      %v6562 = vpop.permute.xlu0 %6561
      %6563 = vrot.lane.b32.xlu0 %v6160, 72
      %v6564 = vpop.permute.xlu0 %6563
      %6565 = vrot.lane.b32.xlu0 %v6161, 72
      %v6566 = vpop.permute.xlu0 %6565
      %6567 = vrot.lane.b32.xlu0 %v6162, 72
      %v6568 = vpop.permute.xlu0 %6567
      %6569 = vrot.lane.b32.xlu0 %v6163, 72
      %v6570 = vpop.permute.xlu0 %6569
      %6571 = vrot.lane.b32.xlu0 %v6164, 72
      %v6572 = vpop.permute.xlu0 %6571
      %6573 = vrot.lane.b32.xlu0 %v6165, 72
      %v6574 = vpop.permute.xlu0 %6573
      %6575 = vrot.lane.b32.xlu0 %v6166, 72
      %v6576 = vpop.permute.xlu0 %6575
      %6577 = vrot.lane.b32.xlu0 %v6167, 72
      %v6578 = vpop.permute.xlu0 %6577
      %v6579 = vsel %vm778, %v6548, 0
      %v6581 = vsel %vm778, %v6550, 0
      %v6583 = vsel %vm778, %v6552, 0
      %v6585 = vsel %vm778, %v6554, 0
      %v6587 = vsel %vm778, %v6556, 0
      %v6589 = vsel %vm778, %v6558, 0
      %v6591 = vsel %vm778, %v6560, 0
      %v6593 = vsel %vm778, %v6562, 0
      %v6595 = vsel %vm778, %v6564, 0
      %v6597 = vsel %vm778, %v6566, 0
      %v6599 = vsel %vm778, %v6568, 0
      %v6601 = vsel %vm778, %v6570, 0
      %v6603 = vsel %vm778, %v6572, 0
      %v6605 = vsel %vm778, %v6574, 0
      %v6607 = vsel %vm778, %v6576, 0
      %v6609 = vsel %vm778, %v6578, 0
      %6611 = vmatprep.subr.mxu0 0.0
      %6612 = vmatpush1.xpose.msra.mxu0 0.0
      %6613 = vmatprep.subr.mxu0 0.0
      %6614 = vmatpush1.xpose.msra.mxu0 0.0
      %6615 = vmatprep.subr.mxu0 0.0
      %6616 = vmatpush1.xpose.msra.mxu0 0.0
      %6617 = vmatprep.subr.mxu0 0.0
      %6618 = vmatpush1.xpose.msra.mxu0 0.0
      %6619 = vmatprep.subr.mxu0 0.0
      %6620 = vmatpush1.xpose.msra.mxu0 0.0
      %6621 = vmatprep.subr.mxu0 0.0
      %6622 = vmatpush1.xpose.msra.mxu0 0.0
      %6623 = vmatprep.subr.mxu0 0.0
      %6624 = vmatpush1.xpose.msra.mxu0 0.0
      %6625 = vmatprep.subr.mxu0 0.0
      %6626 = vmatpush1.xpose.msra.mxu0 0.0
      %6627 = vmatprep.subr.mxu0 0.0
      %6628 = vmatpush1.xpose.msra.mxu0 %v6609
      %6629 = vmatprep.subr.mxu0 0.0
      %6630 = vmatpush1.xpose.msra.mxu0 %v6607
      %6631 = vmatprep.subr.mxu0 0.0
      %6632 = vmatpush1.xpose.msra.mxu0 %v6605
      %6633 = vmatprep.subr.mxu0 0.0
      %6634 = vmatpush1.xpose.msra.mxu0 %v6603
      %6635 = vmatprep.subr.mxu0 0.0
      %6636 = vmatpush1.xpose.msra.mxu0 %v6601
      %6637 = vmatprep.subr.mxu0 0.0
      %6638 = vmatpush1.xpose.msra.mxu0 %v6599
      %6639 = vmatprep.subr.mxu0 0.0
      %6640 = vmatpush1.xpose.msra.mxu0 %v6597
      %6641 = vmatprep.subr.mxu0 0.0
      %6642 = vmatpush1.xpose.msra.mxu0 %v6595
      %6643 = vmatprep.subr.mxu0 0.0
      %6644 = vmatpush2.xpose.msra.mxu0 0.0
      %6645 = vmatprep.subr.mxu0 0.0
      %6646 = vmatpush2.xpose.msra.mxu0 0.0
      %6647 = vmatprep.subr.mxu0 0.0
      %6648 = vmatpush2.xpose.msra.mxu0 0.0
      %6649 = vmatprep.subr.mxu0 0.0
      %6650 = vmatpush2.xpose.msra.mxu0 0.0
      %6651 = vmatprep.subr.mxu0 0.0
      %6652 = vmatpush2.xpose.msra.mxu0 0.0
      %6653 = vmatprep.subr.mxu0 0.0
      %6654 = vmatpush2.xpose.msra.mxu0 0.0
      %6655 = vmatprep.subr.mxu0 0.0
      %6656 = vmatpush2.xpose.msra.mxu0 0.0
      %6657 = vmatprep.subr.mxu0 0.0
      %6658 = vmatpush2.xpose.msra.mxu0 0.0
      %6659 = vmatprep.subr.mxu0 0.0
      %6660 = vmatpush2.xpose.msra.mxu0 0.0
      %6661 = vmatprep.subr.mxu0 0.0
      %6662 = vmatpush2.xpose.msra.mxu0 0.0
      %6663 = vmatprep.subr.mxu0 0.0
      %6664 = vmatpush2.xpose.msra.mxu0 0.0
      %6665 = vmatprep.subr.mxu0 0.0
      %6666 = vmatpush2.xpose.msra.mxu0 0.0
      %6667 = vmatprep.subr.mxu0 0.0
      %6668 = vmatpush2.xpose.msra.mxu0 0.0
      %6669 = vmatprep.subr.mxu0 0.0
      %6670 = vmatpush2.xpose.msra.mxu0 0.0
      %6671 = vmatprep.subr.mxu0 0.0
      %6672 = vmatpush2.xpose.msra.mxu0 0.0
      %6673 = vmatprep.subr.mxu0 0.0
      %6674 = vmatpush2.xpose.msra.mxu0 0.0
      %6675 = vmatprep.mubr.f32.mxu0 0.0
      %6676 = vmatmul.mubr.f32.gmra.mxu0 %v6579
      %v6677 = vpop.f32.mrf.mxu0
      %v6678 = vadd.f32 %v6177, %v6677
      %v6679 = vpop.f32.mrf.mxu0
      %6680 = vmatprep.mubr.f32.mxu0 0.0
      %6681 = vmatmul.mubr.f32.gmra.mxu0 %v6581
      %v6682 = vpop.f32.mrf.mxu0
      %v6683 = vadd.f32 %v6178, %v6682
      %v6684 = vpop.f32.mrf.mxu0
      %6685 = vmatprep.mubr.f32.mxu0 0.0
      %6686 = vmatmul.mubr.f32.gmra.mxu0 %v6583
      %v6687 = vpop.f32.mrf.mxu0
      %v6688 = vadd.f32 %v6179, %v6687
      %v6689 = vpop.f32.mrf.mxu0
      %6690 = vmatprep.mubr.f32.mxu0 0.0
      %6691 = vmatmul.mubr.f32.gmra.mxu0 %v6585
      %v6692 = vpop.f32.mrf.mxu0
      %v6693 = vadd.f32 %v6180, %v6692
      %v6694 = vpop.f32.mrf.mxu0
      %6695 = vmatprep.mubr.f32.mxu0 0.0
      %6696 = vmatmul.mubr.f32.gmra.mxu0 %v6587
      %v6697 = vpop.f32.mrf.mxu0
      %v6698 = vadd.f32 %v6181, %v6697
      %v6699 = vpop.f32.mrf.mxu0
      %6700 = vmatprep.mubr.f32.mxu0 0.0
      %6701 = vmatmul.mubr.f32.gmra.mxu0 %v6589
      %v6702 = vpop.f32.mrf.mxu0
      %v6703 = vadd.f32 %v6182, %v6702
      %v6704 = vpop.f32.mrf.mxu0
      %6705 = vmatprep.mubr.f32.mxu0 0.0
      %6706 = vmatmul.mubr.f32.gmra.mxu0 %v6591
      %v6707 = vpop.f32.mrf.mxu0
      %v6708 = vadd.f32 %v6183, %v6707
      %v6709 = vpop.f32.mrf.mxu0
      %6710 = vmatprep.mubr.f32.mxu0 0.0
      %6711 = vmatmul.mubr.f32.gmra.mxu0 %v6593
      %v6712 = vpop.f32.mrf.mxu0
      %v6713 = vadd.f32 %v6184, %v6712
      %v6714 = vpop.f32.mrf.mxu0
      %6715 = vdwg.mxu0
      %6724 = vrot.lane.b32.xlu0 %v6168, 104
      %v6725 = vpop.permute.xlu0 %6724
      %6726 = vrot.lane.b32.xlu0 %v6169, 104
      %v6727 = vpop.permute.xlu0 %6726
      %6728 = vrot.lane.b32.xlu0 %v6170, 104
      %v6729 = vpop.permute.xlu0 %6728
      %6730 = vrot.lane.b32.xlu0 %v6171, 104
      %v6731 = vpop.permute.xlu0 %6730
      %6732 = vrot.lane.b32.xlu0 %v6172, 104
      %v6733 = vpop.permute.xlu0 %6732
      %6734 = vrot.lane.b32.xlu0 %v6173, 104
      %v6735 = vpop.permute.xlu0 %6734
      %6736 = vrot.lane.b32.xlu0 %v6174, 104
      %v6737 = vpop.permute.xlu0 %6736
      %6738 = vrot.lane.b32.xlu0 %v6175, 104
      %v6739 = vpop.permute.xlu0 %6738
      %6740 = vrot.lane.b32.xlu0 %v6168, 72
      %v6741 = vpop.permute.xlu0 %6740
      %6742 = vrot.lane.b32.xlu0 %v6169, 72
      %v6743 = vpop.permute.xlu0 %6742
      %6744 = vrot.lane.b32.xlu0 %v6170, 72
      %v6745 = vpop.permute.xlu0 %6744
      %6746 = vrot.lane.b32.xlu0 %v6171, 72
      %v6747 = vpop.permute.xlu0 %6746
      %6748 = vrot.lane.b32.xlu0 %v6172, 72
      %v6749 = vpop.permute.xlu0 %6748
      %6750 = vrot.lane.b32.xlu0 %v6173, 72
      %v6751 = vpop.permute.xlu0 %6750
      %6752 = vrot.lane.b32.xlu0 %v6174, 72
      %v6753 = vpop.permute.xlu0 %6752
      %6754 = vrot.lane.b32.xlu0 %v6175, 72
      %v6755 = vpop.permute.xlu0 %6754
      %v6756 = vsel %vm778, %v6725, 0
      %v6758 = vsel %vm778, %v6727, 0
      %v6760 = vsel %vm778, %v6729, 0
      %v6762 = vsel %vm778, %v6731, 0
      %v6764 = vsel %vm778, %v6733, 0
      %v6766 = vsel %vm778, %v6735, 0
      %v6768 = vsel %vm778, %v6737, 0
      %v6770 = vsel %vm778, %v6739, 0
      %v6772 = vsel %vm778, %v6741, 0
      %v6774 = vsel %vm778, %v6743, 0
      %v6776 = vsel %vm778, %v6745, 0
      %v6778 = vsel %vm778, %v6747, 0
      %v6780 = vsel %vm778, %v6749, 0
      %v6782 = vsel %vm778, %v6751, 0
      %v6784 = vsel %vm778, %v6753, 0
      %v6786 = vsel %vm778, %v6755, 0
      %6788 = vmatprep.subr.mxu0 0.0
      %6789 = vmatpush1.xpose.msra.mxu0 0.0
      %6790 = vmatprep.subr.mxu0 0.0
      %6791 = vmatpush1.xpose.msra.mxu0 0.0
      %6792 = vmatprep.subr.mxu0 0.0
      %6793 = vmatpush1.xpose.msra.mxu0 0.0
      %6794 = vmatprep.subr.mxu0 0.0
      %6795 = vmatpush1.xpose.msra.mxu0 0.0
      %6796 = vmatprep.subr.mxu0 0.0
      %6797 = vmatpush1.xpose.msra.mxu0 0.0
      %6798 = vmatprep.subr.mxu0 0.0
      %6799 = vmatpush1.xpose.msra.mxu0 0.0
      %6800 = vmatprep.subr.mxu0 0.0
      %6801 = vmatpush1.xpose.msra.mxu0 0.0
      %6802 = vmatprep.subr.mxu0 0.0
      %6803 = vmatpush1.xpose.msra.mxu0 0.0
      %6804 = vmatprep.subr.mxu0 0.0
      %6805 = vmatpush1.xpose.msra.mxu0 %v6786
      %6806 = vmatprep.subr.mxu0 0.0
      %6807 = vmatpush1.xpose.msra.mxu0 %v6784
      %6808 = vmatprep.subr.mxu0 0.0
      %6809 = vmatpush1.xpose.msra.mxu0 %v6782
      %6810 = vmatprep.subr.mxu0 0.0
      %6811 = vmatpush1.xpose.msra.mxu0 %v6780
      %6812 = vmatprep.subr.mxu0 0.0
      %6813 = vmatpush1.xpose.msra.mxu0 %v6778
      %6814 = vmatprep.subr.mxu0 0.0
      %6815 = vmatpush1.xpose.msra.mxu0 %v6776
      %6816 = vmatprep.subr.mxu0 0.0
      %6817 = vmatpush1.xpose.msra.mxu0 %v6774
      %6818 = vmatprep.subr.mxu0 0.0
      %6819 = vmatpush1.xpose.msra.mxu0 %v6772
      %6820 = vmatprep.subr.mxu0 0.0
      %6821 = vmatpush2.xpose.msra.mxu0 0.0
      %6822 = vmatprep.subr.mxu0 0.0
      %6823 = vmatpush2.xpose.msra.mxu0 0.0
      %6824 = vmatprep.subr.mxu0 0.0
      %6825 = vmatpush2.xpose.msra.mxu0 0.0
      %6826 = vmatprep.subr.mxu0 0.0
      %6827 = vmatpush2.xpose.msra.mxu0 0.0
      %6828 = vmatprep.subr.mxu0 0.0
      %6829 = vmatpush2.xpose.msra.mxu0 0.0
      %6830 = vmatprep.subr.mxu0 0.0
      %6831 = vmatpush2.xpose.msra.mxu0 0.0
      %6832 = vmatprep.subr.mxu0 0.0
      %6833 = vmatpush2.xpose.msra.mxu0 0.0
      %6834 = vmatprep.subr.mxu0 0.0
      %6835 = vmatpush2.xpose.msra.mxu0 0.0
      %6836 = vmatprep.subr.mxu0 0.0
      %6837 = vmatpush2.xpose.msra.mxu0 0.0
      %6838 = vmatprep.subr.mxu0 0.0
      %6839 = vmatpush2.xpose.msra.mxu0 0.0
      %6840 = vmatprep.subr.mxu0 0.0
      %6841 = vmatpush2.xpose.msra.mxu0 0.0
      %6842 = vmatprep.subr.mxu0 0.0
      %6843 = vmatpush2.xpose.msra.mxu0 0.0
      %6844 = vmatprep.subr.mxu0 0.0
      %6845 = vmatpush2.xpose.msra.mxu0 0.0
      %6846 = vmatprep.subr.mxu0 0.0
      %6847 = vmatpush2.xpose.msra.mxu0 0.0
      %6848 = vmatprep.subr.mxu0 0.0
      %6849 = vmatpush2.xpose.msra.mxu0 0.0
      %6850 = vmatprep.subr.mxu0 0.0
      %6851 = vmatpush2.xpose.msra.mxu0 0.0
      %6852 = vmatprep.mubr.f32.mxu0 0.0
      %6853 = vmatmul.mubr.f32.gmra.mxu0 %v6756
      %v6854 = vpop.f32.mrf.mxu0
      %v6855 = vadd.f32 %v6177, %v6854
      %v6856 = vpop.f32.mrf.mxu0
      %6857 = vmatprep.mubr.f32.mxu0 0.0
      %6858 = vmatmul.mubr.f32.gmra.mxu0 %v6758
      %v6859 = vpop.f32.mrf.mxu0
      %v6860 = vadd.f32 %v6178, %v6859
      %v6861 = vpop.f32.mrf.mxu0
      %6862 = vmatprep.mubr.f32.mxu0 0.0
      %6863 = vmatmul.mubr.f32.gmra.mxu0 %v6760
      %v6864 = vpop.f32.mrf.mxu0
      %v6865 = vadd.f32 %v6179, %v6864
      %v6866 = vpop.f32.mrf.mxu0
      %6867 = vmatprep.mubr.f32.mxu0 0.0
      %6868 = vmatmul.mubr.f32.gmra.mxu0 %v6762
      %v6869 = vpop.f32.mrf.mxu0
      %v6870 = vadd.f32 %v6180, %v6869
      %v6871 = vpop.f32.mrf.mxu0
      %6872 = vmatprep.mubr.f32.mxu0 0.0
      %6873 = vmatmul.mubr.f32.gmra.mxu0 %v6764
      %v6874 = vpop.f32.mrf.mxu0
      %v6875 = vadd.f32 %v6181, %v6874
      %v6876 = vpop.f32.mrf.mxu0
      %6877 = vmatprep.mubr.f32.mxu0 0.0
      %6878 = vmatmul.mubr.f32.gmra.mxu0 %v6766
      %v6879 = vpop.f32.mrf.mxu0
      %v6880 = vadd.f32 %v6182, %v6879
      %v6881 = vpop.f32.mrf.mxu0
      %6882 = vmatprep.mubr.f32.mxu0 0.0
      %6883 = vmatmul.mubr.f32.gmra.mxu0 %v6768
      %v6884 = vpop.f32.mrf.mxu0
      %v6885 = vadd.f32 %v6183, %v6884
      %v6886 = vpop.f32.mrf.mxu0
      %6887 = vmatprep.mubr.f32.mxu0 0.0
      %6888 = vmatmul.mubr.f32.gmra.mxu0 %v6770
      %v6889 = vpop.f32.mrf.mxu0
      %v6890 = vadd.f32 %v6184, %v6889
      %v6891 = vpop.f32.mrf.mxu0
      %6892 = vdwg.mxu0
      %v6893 = vsel %vm1399, %v6324, -inf
      %6894 = vmax.xlane.f32.xlu0 %v6893
      %v6895 = vpop.xlane.xlu0 %6894
      %v6896 = vsel %vm1399, %v6329, -inf
      %6897 = vmax.xlane.f32.xlu0 %v6896
      %v6898 = vpop.xlane.xlu0 %6897
      %v6899 = vsel %vm1399, %v6334, -inf
      %6900 = vmax.xlane.f32.xlu0 %v6899
      %v6901 = vpop.xlane.xlu0 %6900
      %v6902 = vsel %vm1399, %v6339, -inf
      %6903 = vmax.xlane.f32.xlu0 %v6902
      %v6904 = vpop.xlane.xlu0 %6903
      %v6905 = vsel %vm1399, %v6344, -inf
      %6906 = vmax.xlane.f32.xlu0 %v6905
      %v6907 = vpop.xlane.xlu0 %6906
      %v6908 = vsel %vm1399, %v6349, -inf
      %6909 = vmax.xlane.f32.xlu0 %v6908
      %v6910 = vpop.xlane.xlu0 %6909
      %v6911 = vsel %vm1399, %v6354, -inf
      %6912 = vmax.xlane.f32.xlu0 %v6911
      %v6913 = vpop.xlane.xlu0 %6912
      %v6914 = vsel %vm1399, %v6359, -inf
      %6915 = vmax.xlane.f32.xlu0 %v6914
      %v6916 = vpop.xlane.xlu0 %6915
      %v6917 = vsel %vm1399, %v6501, -inf
      %6918 = vmax.xlane.f32.xlu0 %v6917
      %v6919 = vpop.xlane.xlu0 %6918
      %v6920 = vsel %vm1399, %v6506, -inf
      %6921 = vmax.xlane.f32.xlu0 %v6920
      %v6922 = vpop.xlane.xlu0 %6921
      %v6923 = vsel %vm1399, %v6511, -inf
      %6924 = vmax.xlane.f32.xlu0 %v6923
      %v6925 = vpop.xlane.xlu0 %6924
      %v6926 = vsel %vm1399, %v6516, -inf
      %6927 = vmax.xlane.f32.xlu0 %v6926
      %v6928 = vpop.xlane.xlu0 %6927
      %v6929 = vsel %vm1399, %v6521, -inf
      %6930 = vmax.xlane.f32.xlu0 %v6929
      %v6931 = vpop.xlane.xlu0 %6930
      %v6932 = vsel %vm1399, %v6526, -inf
      %6933 = vmax.xlane.f32.xlu0 %v6932
      %v6934 = vpop.xlane.xlu0 %6933
      %v6935 = vsel %vm1399, %v6531, -inf
      %6936 = vmax.xlane.f32.xlu0 %v6935
      %v6937 = vpop.xlane.xlu0 %6936
      %v6938 = vsel %vm1399, %v6536, -inf
      %6939 = vmax.xlane.f32.xlu0 %v6938
      %v6940 = vpop.xlane.xlu0 %6939
      %v6941 = vsel %vm1399, %v6678, -inf
      %6942 = vmax.xlane.f32.xlu0 %v6941
      %v6943 = vpop.xlane.xlu0 %6942
      %v6944 = vsel %vm1399, %v6683, -inf
      %6945 = vmax.xlane.f32.xlu0 %v6944
      %v6946 = vpop.xlane.xlu0 %6945
      %v6947 = vsel %vm1399, %v6688, -inf
      %6948 = vmax.xlane.f32.xlu0 %v6947
      %v6949 = vpop.xlane.xlu0 %6948
      %v6950 = vsel %vm1399, %v6693, -inf
      %6951 = vmax.xlane.f32.xlu0 %v6950
      %v6952 = vpop.xlane.xlu0 %6951
      %v6953 = vsel %vm1399, %v6698, -inf
      %6954 = vmax.xlane.f32.xlu0 %v6953
      %v6955 = vpop.xlane.xlu0 %6954
      %v6956 = vsel %vm1399, %v6703, -inf
      %6957 = vmax.xlane.f32.xlu0 %v6956
      %v6958 = vpop.xlane.xlu0 %6957
      %v6959 = vsel %vm1399, %v6708, -inf
      %6960 = vmax.xlane.f32.xlu0 %v6959
      %v6961 = vpop.xlane.xlu0 %6960
      %v6962 = vsel %vm1399, %v6713, -inf
      %6963 = vmax.xlane.f32.xlu0 %v6962
      %v6964 = vpop.xlane.xlu0 %6963
      %v6965 = vsel %vm1399, %v6855, -inf
      %6966 = vmax.xlane.f32.xlu0 %v6965
      %v6967 = vpop.xlane.xlu0 %6966
      %v6968 = vsel %vm1399, %v6860, -inf
      %6969 = vmax.xlane.f32.xlu0 %v6968
      %v6970 = vpop.xlane.xlu0 %6969
      %v6971 = vsel %vm1399, %v6865, -inf
      %6972 = vmax.xlane.f32.xlu0 %v6971
      %v6973 = vpop.xlane.xlu0 %6972
      %v6974 = vsel %vm1399, %v6870, -inf
      %6975 = vmax.xlane.f32.xlu0 %v6974
      %v6976 = vpop.xlane.xlu0 %6975
      %v6977 = vsel %vm1399, %v6875, -inf
      %6978 = vmax.xlane.f32.xlu0 %v6977
      %v6979 = vpop.xlane.xlu0 %6978
      %v6980 = vsel %vm1399, %v6880, -inf
      %6981 = vmax.xlane.f32.xlu0 %v6980
      %v6982 = vpop.xlane.xlu0 %6981
      %v6983 = vsel %vm1399, %v6885, -inf
      %6984 = vmax.xlane.f32.xlu0 %v6983
      %v6985 = vpop.xlane.xlu0 %6984
      %v6986 = vsel %vm1399, %v6890, -inf
      %6987 = vmax.xlane.f32.xlu0 %v6986
      %v6988 = vpop.xlane.xlu0 %6987
      %v6989 = vsub.f32 %v6324, %v6895
      %v6990 = vsub.f32 %v6329, %v6898
      %v6991 = vsub.f32 %v6334, %v6901
      %v6992 = vsub.f32 %v6339, %v6904
      %v6993 = vsub.f32 %v6344, %v6907
      %v6994 = vsub.f32 %v6349, %v6910
      %v6995 = vsub.f32 %v6354, %v6913
      %v6996 = vsub.f32 %v6359, %v6916
      %v6997 = vsub.f32 %v6501, %v6919
      %v6998 = vsub.f32 %v6506, %v6922
      %v6999 = vsub.f32 %v6511, %v6925
      %v7000 = vsub.f32 %v6516, %v6928
      %v7001 = vsub.f32 %v6521, %v6931
      %v7002 = vsub.f32 %v6526, %v6934
      %v7003 = vsub.f32 %v6531, %v6937
      %v7004 = vsub.f32 %v6536, %v6940
      %v7005 = vsub.f32 %v6678, %v6943
      %v7006 = vsub.f32 %v6683, %v6946
      %v7007 = vsub.f32 %v6688, %v6949
      %v7008 = vsub.f32 %v6693, %v6952
      %v7009 = vsub.f32 %v6698, %v6955
      %v7010 = vsub.f32 %v6703, %v6958
      %v7011 = vsub.f32 %v6708, %v6961
      %v7012 = vsub.f32 %v6713, %v6964
      %v7013 = vsub.f32 %v6855, %v6967
      %v7014 = vsub.f32 %v6860, %v6970
      %v7015 = vsub.f32 %v6865, %v6973
      %v7016 = vsub.f32 %v6870, %v6976
      %v7017 = vsub.f32 %v6875, %v6979
      %v7018 = vsub.f32 %v6880, %v6982
      %v7019 = vsub.f32 %v6885, %v6985
      %v7020 = vsub.f32 %v6890, %v6988
      %v7021 = vmul.f32 %v6989, 1.442695
      %v7022 = vpow.pop %v7021
      %v7023 = vmul.f32 %v6990, 1.442695
      %v7024 = vpow.pop %v7023
      %v7025 = vmul.f32 %v6991, 1.442695
      %v7026 = vpow.pop %v7025
      %v7027 = vmul.f32 %v6992, 1.442695
      %v7028 = vpow.pop %v7027
      %v7029 = vmul.f32 %v6993, 1.442695
      %v7030 = vpow.pop %v7029
      %v7031 = vmul.f32 %v6994, 1.442695
      %v7032 = vpow.pop %v7031
      %v7033 = vmul.f32 %v6995, 1.442695
      %v7034 = vpow.pop %v7033
      %v7035 = vmul.f32 %v6996, 1.442695
      %v7036 = vpow.pop %v7035
      %v7037 = vmul.f32 %v6997, 1.442695
      %v7038 = vpow.pop %v7037
      %v7039 = vmul.f32 %v6998, 1.442695
      %v7040 = vpow.pop %v7039
      %v7041 = vmul.f32 %v6999, 1.442695
      %v7042 = vpow.pop %v7041
      %v7043 = vmul.f32 %v7000, 1.442695
      %v7044 = vpow.pop %v7043
      %v7045 = vmul.f32 %v7001, 1.442695
      %v7046 = vpow.pop %v7045
      %v7047 = vmul.f32 %v7002, 1.442695
      %v7048 = vpow.pop %v7047
      %v7049 = vmul.f32 %v7003, 1.442695
      %v7050 = vpow.pop %v7049
      %v7051 = vmul.f32 %v7004, 1.442695
      %v7052 = vpow.pop %v7051
      %v7053 = vmul.f32 %v7005, 1.442695
      %v7054 = vpow.pop %v7053
      %v7055 = vmul.f32 %v7006, 1.442695
      %v7056 = vpow.pop %v7055
      %v7057 = vmul.f32 %v7007, 1.442695
      %v7058 = vpow.pop %v7057
      %v7059 = vmul.f32 %v7008, 1.442695
      %v7060 = vpow.pop %v7059
      %v7061 = vmul.f32 %v7009, 1.442695
      %v7062 = vpow.pop %v7061
      %v7063 = vmul.f32 %v7010, 1.442695
      %v7064 = vpow.pop %v7063
      %v7065 = vmul.f32 %v7011, 1.442695
      %v7066 = vpow.pop %v7065
      %v7067 = vmul.f32 %v7012, 1.442695
      %v7068 = vpow.pop %v7067
      %v7069 = vmul.f32 %v7013, 1.442695
      %v7070 = vpow.pop %v7069
      %v7071 = vmul.f32 %v7014, 1.442695
      %v7072 = vpow.pop %v7071
      %v7073 = vmul.f32 %v7015, 1.442695
      %v7074 = vpow.pop %v7073
      %v7075 = vmul.f32 %v7016, 1.442695
      %v7076 = vpow.pop %v7075
      %v7077 = vmul.f32 %v7017, 1.442695
      %v7078 = vpow.pop %v7077
      %v7079 = vmul.f32 %v7018, 1.442695
      %v7080 = vpow.pop %v7079
      %v7081 = vmul.f32 %v7019, 1.442695
      %v7082 = vpow.pop %v7081
      %v7083 = vmul.f32 %v7020, 1.442695
      %v7084 = vpow.pop %v7083
      %v7085 = vsel %vm1399, %v7022, 0.0
      %7086 = vadd.xlane.f32.xlu0 %v7085
      %v7087 = vpop.xlane.xlu0 %7086
      %v7088 = vsel %vm1399, %v7024, 0.0
      %7089 = vadd.xlane.f32.xlu0 %v7088
      %v7090 = vpop.xlane.xlu0 %7089
      %v7091 = vsel %vm1399, %v7026, 0.0
      %7092 = vadd.xlane.f32.xlu0 %v7091
      %v7093 = vpop.xlane.xlu0 %7092
      %v7094 = vsel %vm1399, %v7028, 0.0
      %7095 = vadd.xlane.f32.xlu0 %v7094
      %v7096 = vpop.xlane.xlu0 %7095
      %v7097 = vsel %vm1399, %v7030, 0.0
      %7098 = vadd.xlane.f32.xlu0 %v7097
      %v7099 = vpop.xlane.xlu0 %7098
      %v7100 = vsel %vm1399, %v7032, 0.0
      %7101 = vadd.xlane.f32.xlu0 %v7100
      %v7102 = vpop.xlane.xlu0 %7101
      %v7103 = vsel %vm1399, %v7034, 0.0
      %7104 = vadd.xlane.f32.xlu0 %v7103
      %v7105 = vpop.xlane.xlu0 %7104
      %v7106 = vsel %vm1399, %v7036, 0.0
      %7107 = vadd.xlane.f32.xlu0 %v7106
      %v7108 = vpop.xlane.xlu0 %7107
      %v7109 = vsel %vm1399, %v7038, 0.0
      %7110 = vadd.xlane.f32.xlu0 %v7109
      %v7111 = vpop.xlane.xlu0 %7110
      %v7112 = vsel %vm1399, %v7040, 0.0
      %7113 = vadd.xlane.f32.xlu0 %v7112
      %v7114 = vpop.xlane.xlu0 %7113
      %v7115 = vsel %vm1399, %v7042, 0.0
      %7116 = vadd.xlane.f32.xlu0 %v7115
      %v7117 = vpop.xlane.xlu0 %7116
      %v7118 = vsel %vm1399, %v7044, 0.0
      %7119 = vadd.xlane.f32.xlu0 %v7118
      %v7120 = vpop.xlane.xlu0 %7119
      %v7121 = vsel %vm1399, %v7046, 0.0
      %7122 = vadd.xlane.f32.xlu0 %v7121
      %v7123 = vpop.xlane.xlu0 %7122
      %v7124 = vsel %vm1399, %v7048, 0.0
      %7125 = vadd.xlane.f32.xlu0 %v7124
      %v7126 = vpop.xlane.xlu0 %7125
      %v7127 = vsel %vm1399, %v7050, 0.0
      %7128 = vadd.xlane.f32.xlu0 %v7127
      %v7129 = vpop.xlane.xlu0 %7128
      %v7130 = vsel %vm1399, %v7052, 0.0
      %7131 = vadd.xlane.f32.xlu0 %v7130
      %v7132 = vpop.xlane.xlu0 %7131
      %v7133 = vsel %vm1399, %v7054, 0.0
      %7134 = vadd.xlane.f32.xlu0 %v7133
      %v7135 = vpop.xlane.xlu0 %7134
      %v7136 = vsel %vm1399, %v7056, 0.0
      %7137 = vadd.xlane.f32.xlu0 %v7136
      %v7138 = vpop.xlane.xlu0 %7137
      %v7139 = vsel %vm1399, %v7058, 0.0
      %7140 = vadd.xlane.f32.xlu0 %v7139
      %v7141 = vpop.xlane.xlu0 %7140
      %v7142 = vsel %vm1399, %v7060, 0.0
      %7143 = vadd.xlane.f32.xlu0 %v7142
      %v7144 = vpop.xlane.xlu0 %7143
      %v7145 = vsel %vm1399, %v7062, 0.0
      %7146 = vadd.xlane.f32.xlu0 %v7145
      %v7147 = vpop.xlane.xlu0 %7146
      %v7148 = vsel %vm1399, %v7064, 0.0
      %7149 = vadd.xlane.f32.xlu0 %v7148
      %v7150 = vpop.xlane.xlu0 %7149
      %v7151 = vsel %vm1399, %v7066, 0.0
      %7152 = vadd.xlane.f32.xlu0 %v7151
      %v7153 = vpop.xlane.xlu0 %7152
      %v7154 = vsel %vm1399, %v7068, 0.0
      %7155 = vadd.xlane.f32.xlu0 %v7154
      %v7156 = vpop.xlane.xlu0 %7155
      %v7157 = vsel %vm1399, %v7070, 0.0
      %7158 = vadd.xlane.f32.xlu0 %v7157
      %v7159 = vpop.xlane.xlu0 %7158
      %v7160 = vsel %vm1399, %v7072, 0.0
      %7161 = vadd.xlane.f32.xlu0 %v7160
      %v7162 = vpop.xlane.xlu0 %7161
      %v7163 = vsel %vm1399, %v7074, 0.0
      %7164 = vadd.xlane.f32.xlu0 %v7163
      %v7165 = vpop.xlane.xlu0 %7164
      %v7166 = vsel %vm1399, %v7076, 0.0
      %7167 = vadd.xlane.f32.xlu0 %v7166
      %v7168 = vpop.xlane.xlu0 %7167
      %v7169 = vsel %vm1399, %v7078, 0.0
      %7170 = vadd.xlane.f32.xlu0 %v7169
      %v7171 = vpop.xlane.xlu0 %7170
      %v7172 = vsel %vm1399, %v7080, 0.0
      %7173 = vadd.xlane.f32.xlu0 %v7172
      %v7174 = vpop.xlane.xlu0 %7173
      %v7175 = vsel %vm1399, %v7082, 0.0
      %7176 = vadd.xlane.f32.xlu0 %v7175
      %v7177 = vpop.xlane.xlu0 %7176
      %v7178 = vsel %vm1399, %v7084, 0.0
      %7179 = vadd.xlane.f32.xlu0 %v7178
      %v7180 = vpop.xlane.xlu0 %7179
      %v7181 = vrcp.pop %v7087
      %v7182 = vrcp.pop %v7090
      %v7183 = vrcp.pop %v7093
      %v7184 = vrcp.pop %v7096
      %v7185 = vrcp.pop %v7099
      %v7186 = vrcp.pop %v7102
      %v7187 = vrcp.pop %v7105
      %v7188 = vrcp.pop %v7108
      %v7189 = vrcp.pop %v7111
      %v7190 = vrcp.pop %v7114
      %v7191 = vrcp.pop %v7117
      %v7192 = vrcp.pop %v7120
      %v7193 = vrcp.pop %v7123
      %v7194 = vrcp.pop %v7126
      %v7195 = vrcp.pop %v7129
      %v7196 = vrcp.pop %v7132
      %v7197 = vrcp.pop %v7135
      %v7198 = vrcp.pop %v7138
      %v7199 = vrcp.pop %v7141
      %v7200 = vrcp.pop %v7144
      %v7201 = vrcp.pop %v7147
      %v7202 = vrcp.pop %v7150
      %v7203 = vrcp.pop %v7153
      %v7204 = vrcp.pop %v7156
      %v7205 = vrcp.pop %v7159
      %v7206 = vrcp.pop %v7162
      %v7207 = vrcp.pop %v7165
      %v7208 = vrcp.pop %v7168
      %v7209 = vrcp.pop %v7171
      %v7210 = vrcp.pop %v7174
      %v7211 = vrcp.pop %v7177
      %v7212 = vrcp.pop %v7180
      %v7213 = vmul.f32 %v7022, %v7181
      %v7214 = vmul.f32 %v7024, %v7182
      %v7215 = vmul.f32 %v7026, %v7183
      %v7216 = vmul.f32 %v7028, %v7184
      %v7217 = vmul.f32 %v7030, %v7185
      %v7218 = vmul.f32 %v7032, %v7186
      %v7219 = vmul.f32 %v7034, %v7187
      %v7220 = vmul.f32 %v7036, %v7188
      %v7221 = vmul.f32 %v7038, %v7189
      %v7222 = vmul.f32 %v7040, %v7190
      %v7223 = vmul.f32 %v7042, %v7191
      %v7224 = vmul.f32 %v7044, %v7192
      %v7225 = vmul.f32 %v7046, %v7193
      %v7226 = vmul.f32 %v7048, %v7194
      %v7227 = vmul.f32 %v7050, %v7195
      %v7228 = vmul.f32 %v7052, %v7196
      %v7229 = vmul.f32 %v7054, %v7197
      %v7230 = vmul.f32 %v7056, %v7198
      %v7231 = vmul.f32 %v7058, %v7199
      %v7232 = vmul.f32 %v7060, %v7200
      %v7233 = vmul.f32 %v7062, %v7201
      %v7234 = vmul.f32 %v7064, %v7202
      %v7235 = vmul.f32 %v7066, %v7203
      %v7236 = vmul.f32 %v7068, %v7204
      %v7237 = vmul.f32 %v7070, %v7205
      %v7238 = vmul.f32 %v7072, %v7206
      %v7239 = vmul.f32 %v7074, %v7207
      %v7240 = vmul.f32 %v7076, %v7208
      %v7241 = vmul.f32 %v7078, %v7209
      %v7242 = vmul.f32 %v7080, %v7210
      %v7243 = vmul.f32 %v7082, %v7211
      %v7244 = vmul.f32 %v7084, %v7212
      %7245 = vrot.lane.b32.xlu0 %v6144, 40
      %v7246 = vpop.permute.xlu0 %7245
      %7247 = vrot.lane.b32.xlu0 %v6145, 40
      %v7248 = vpop.permute.xlu0 %7247
      %7249 = vrot.lane.b32.xlu0 %v6146, 40
      %v7250 = vpop.permute.xlu0 %7249
      %7251 = vrot.lane.b32.xlu0 %v6147, 40
      %v7252 = vpop.permute.xlu0 %7251
      %7253 = vrot.lane.b32.xlu0 %v6148, 40
      %v7254 = vpop.permute.xlu0 %7253
      %7255 = vrot.lane.b32.xlu0 %v6149, 40
      %v7256 = vpop.permute.xlu0 %7255
      %7257 = vrot.lane.b32.xlu0 %v6150, 40
      %v7258 = vpop.permute.xlu0 %7257
      %7259 = vrot.lane.b32.xlu0 %v6151, 40
      %v7260 = vpop.permute.xlu0 %7259
      %v7270 = vsel %vm1399, %v7213, 0
      %v7273 = vsel %vm1399, %v7214, 0
      %v7276 = vsel %vm1399, %v7215, 0
      %v7279 = vsel %vm1399, %v7216, 0
      %v7282 = vsel %vm1399, %v7217, 0
      %v7285 = vsel %vm1399, %v7218, 0
      %v7288 = vsel %vm1399, %v7219, 0
      %v7291 = vsel %vm1399, %v7220, 0
      %7293 = vmatprep.subr.mxu0 0.0
      %7294 = vmatpush1.msra.mxu0 0.0
      %7295 = vmatprep.subr.mxu0 0.0
      %7296 = vmatpush1.msra.mxu0 0.0
      %7297 = vmatprep.subr.mxu0 0.0
      %7298 = vmatpush1.msra.mxu0 0.0
      %7299 = vmatprep.subr.mxu0 0.0
      %7300 = vmatpush1.msra.mxu0 0.0
      %7301 = vmatprep.subr.mxu0 0.0
      %7302 = vmatpush1.msra.mxu0 0.0
      %7303 = vmatprep.subr.mxu0 0.0
      %7304 = vmatpush1.msra.mxu0 0.0
      %7305 = vmatprep.subr.mxu0 0.0
      %7306 = vmatpush1.msra.mxu0 0.0
      %7307 = vmatprep.subr.mxu0 0.0
      %7308 = vmatpush1.msra.mxu0 0.0
      %7309 = vmatprep.subr.mxu0 0.0
      %7310 = vmatpush1.msra.mxu0 %v7260
      %7311 = vmatprep.subr.mxu0 0.0
      %7312 = vmatpush1.msra.mxu0 %v7258
      %7313 = vmatprep.subr.mxu0 0.0
      %7314 = vmatpush1.msra.mxu0 %v7256
      %7315 = vmatprep.subr.mxu0 0.0
      %7316 = vmatpush1.msra.mxu0 %v7254
      %7317 = vmatprep.subr.mxu0 0.0
      %7318 = vmatpush1.msra.mxu0 %v7252
      %7319 = vmatprep.subr.mxu0 0.0
      %7320 = vmatpush1.msra.mxu0 %v7250
      %7321 = vmatprep.subr.mxu0 0.0
      %7322 = vmatpush1.msra.mxu0 %v7248
      %7323 = vmatprep.subr.mxu0 0.0
      %7324 = vmatpush1.msra.mxu0 %v7246
      %7325 = vmatprep.subr.mxu0 0.0
      %7326 = vmatpush2.msra.mxu0 0.0
      %7327 = vmatprep.subr.mxu0 0.0
      %7328 = vmatpush2.msra.mxu0 0.0
      %7329 = vmatprep.subr.mxu0 0.0
      %7330 = vmatpush2.msra.mxu0 0.0
      %7331 = vmatprep.subr.mxu0 0.0
      %7332 = vmatpush2.msra.mxu0 0.0
      %7333 = vmatprep.subr.mxu0 0.0
      %7334 = vmatpush2.msra.mxu0 0.0
      %7335 = vmatprep.subr.mxu0 0.0
      %7336 = vmatpush2.msra.mxu0 0.0
      %7337 = vmatprep.subr.mxu0 0.0
      %7338 = vmatpush2.msra.mxu0 0.0
      %7339 = vmatprep.subr.mxu0 0.0
      %7340 = vmatpush2.msra.mxu0 0.0
      %7341 = vmatprep.subr.mxu0 0.0
      %7342 = vmatpush2.msra.mxu0 0.0
      %7343 = vmatprep.subr.mxu0 0.0
      %7344 = vmatpush2.msra.mxu0 0.0
      %7345 = vmatprep.subr.mxu0 0.0
      %7346 = vmatpush2.msra.mxu0 0.0
      %7347 = vmatprep.subr.mxu0 0.0
      %7348 = vmatpush2.msra.mxu0 0.0
      %7349 = vmatprep.subr.mxu0 0.0
      %7350 = vmatpush2.msra.mxu0 0.0
      %7351 = vmatprep.subr.mxu0 0.0
      %7352 = vmatpush2.msra.mxu0 0.0
      %7353 = vmatprep.subr.mxu0 0.0
      %7354 = vmatpush2.msra.mxu0 0.0
      %7355 = vmatprep.subr.mxu0 0.0
      %7356 = vmatpush2.msra.mxu0 0.0
      %7357 = vmatprep.mubr.f32.mxu0 0.0
      %7358 = vmatmul.mubr.f32.gmra.mxu0 %v7270
      %v7359 = vpop.f32.mrf.mxu0
      %v7360 = vadd.f32 0.0, %v7359
      %v7361 = vpop.f32.mrf.mxu0
      %7362 = vmatprep.mubr.f32.mxu0 0.0
      %7363 = vmatmul.mubr.f32.gmra.mxu0 %v7273
      %v7364 = vpop.f32.mrf.mxu0
      %v7365 = vadd.f32 0.0, %v7364
      %v7366 = vpop.f32.mrf.mxu0
      %7367 = vmatprep.mubr.f32.mxu0 0.0
      %7368 = vmatmul.mubr.f32.gmra.mxu0 %v7276
      %v7369 = vpop.f32.mrf.mxu0
      %v7370 = vadd.f32 0.0, %v7369
      %v7371 = vpop.f32.mrf.mxu0
      %7372 = vmatprep.mubr.f32.mxu0 0.0
      %7373 = vmatmul.mubr.f32.gmra.mxu0 %v7279
      %v7374 = vpop.f32.mrf.mxu0
      %v7375 = vadd.f32 0.0, %v7374
      %v7376 = vpop.f32.mrf.mxu0
      %7377 = vmatprep.mubr.f32.mxu0 0.0
      %7378 = vmatmul.mubr.f32.gmra.mxu0 %v7282
      %v7379 = vpop.f32.mrf.mxu0
      %v7380 = vadd.f32 0.0, %v7379
      %v7381 = vpop.f32.mrf.mxu0
      %7382 = vmatprep.mubr.f32.mxu0 0.0
      %7383 = vmatmul.mubr.f32.gmra.mxu0 %v7285
      %v7384 = vpop.f32.mrf.mxu0
      %v7385 = vadd.f32 0.0, %v7384
      %v7386 = vpop.f32.mrf.mxu0
      %7387 = vmatprep.mubr.f32.mxu0 0.0
      %7388 = vmatmul.mubr.f32.gmra.mxu0 %v7288
      %v7389 = vpop.f32.mrf.mxu0
      %v7390 = vadd.f32 0.0, %v7389
      %v7391 = vpop.f32.mrf.mxu0
      %7392 = vmatprep.mubr.f32.mxu0 0.0
      %7393 = vmatmul.mubr.f32.gmra.mxu0 %v7291
      %v7394 = vpop.f32.mrf.mxu0
      %v7395 = vadd.f32 0.0, %v7394
      %v7396 = vpop.f32.mrf.mxu0
      %7397 = vdwg.mxu0
      %7398 = vrot.lane.b32.xlu0 %v6152, 40
      %v7399 = vpop.permute.xlu0 %7398
      %7400 = vrot.lane.b32.xlu0 %v6153, 40
      %v7401 = vpop.permute.xlu0 %7400
      %7402 = vrot.lane.b32.xlu0 %v6154, 40
      %v7403 = vpop.permute.xlu0 %7402
      %7404 = vrot.lane.b32.xlu0 %v6155, 40
      %v7405 = vpop.permute.xlu0 %7404
      %7406 = vrot.lane.b32.xlu0 %v6156, 40
      %v7407 = vpop.permute.xlu0 %7406
      %7408 = vrot.lane.b32.xlu0 %v6157, 40
      %v7409 = vpop.permute.xlu0 %7408
      %7410 = vrot.lane.b32.xlu0 %v6158, 40
      %v7411 = vpop.permute.xlu0 %7410
      %7412 = vrot.lane.b32.xlu0 %v6159, 40
      %v7413 = vpop.permute.xlu0 %7412
      %v7423 = vsel %vm1399, %v7221, 0
      %v7426 = vsel %vm1399, %v7222, 0
      %v7429 = vsel %vm1399, %v7223, 0
      %v7432 = vsel %vm1399, %v7224, 0
      %v7435 = vsel %vm1399, %v7225, 0
      %v7438 = vsel %vm1399, %v7226, 0
      %v7441 = vsel %vm1399, %v7227, 0
      %v7444 = vsel %vm1399, %v7228, 0
      %7446 = vmatprep.subr.mxu0 0.0
      %7447 = vmatpush1.msra.mxu0 0.0
      %7448 = vmatprep.subr.mxu0 0.0
      %7449 = vmatpush1.msra.mxu0 0.0
      %7450 = vmatprep.subr.mxu0 0.0
      %7451 = vmatpush1.msra.mxu0 0.0
      %7452 = vmatprep.subr.mxu0 0.0
      %7453 = vmatpush1.msra.mxu0 0.0
      %7454 = vmatprep.subr.mxu0 0.0
      %7455 = vmatpush1.msra.mxu0 0.0
      %7456 = vmatprep.subr.mxu0 0.0
      %7457 = vmatpush1.msra.mxu0 0.0
      %7458 = vmatprep.subr.mxu0 0.0
      %7459 = vmatpush1.msra.mxu0 0.0
      %7460 = vmatprep.subr.mxu0 0.0
      %7461 = vmatpush1.msra.mxu0 0.0
      %7462 = vmatprep.subr.mxu0 0.0
      %7463 = vmatpush1.msra.mxu0 %v7413
      %7464 = vmatprep.subr.mxu0 0.0
      %7465 = vmatpush1.msra.mxu0 %v7411
      %7466 = vmatprep.subr.mxu0 0.0
      %7467 = vmatpush1.msra.mxu0 %v7409
      %7468 = vmatprep.subr.mxu0 0.0
      %7469 = vmatpush1.msra.mxu0 %v7407
      %7470 = vmatprep.subr.mxu0 0.0
      %7471 = vmatpush1.msra.mxu0 %v7405
      %7472 = vmatprep.subr.mxu0 0.0
      %7473 = vmatpush1.msra.mxu0 %v7403
      %7474 = vmatprep.subr.mxu0 0.0
      %7475 = vmatpush1.msra.mxu0 %v7401
      %7476 = vmatprep.subr.mxu0 0.0
      %7477 = vmatpush1.msra.mxu0 %v7399
      %7478 = vmatprep.subr.mxu0 0.0
      %7479 = vmatpush2.msra.mxu0 0.0
      %7480 = vmatprep.subr.mxu0 0.0
      %7481 = vmatpush2.msra.mxu0 0.0
      %7482 = vmatprep.subr.mxu0 0.0
      %7483 = vmatpush2.msra.mxu0 0.0
      %7484 = vmatprep.subr.mxu0 0.0
      %7485 = vmatpush2.msra.mxu0 0.0
      %7486 = vmatprep.subr.mxu0 0.0
      %7487 = vmatpush2.msra.mxu0 0.0
      %7488 = vmatprep.subr.mxu0 0.0
      %7489 = vmatpush2.msra.mxu0 0.0
      %7490 = vmatprep.subr.mxu0 0.0
      %7491 = vmatpush2.msra.mxu0 0.0
      %7492 = vmatprep.subr.mxu0 0.0
      %7493 = vmatpush2.msra.mxu0 0.0
      %7494 = vmatprep.subr.mxu0 0.0
      %7495 = vmatpush2.msra.mxu0 0.0
      %7496 = vmatprep.subr.mxu0 0.0
      %7497 = vmatpush2.msra.mxu0 0.0
      %7498 = vmatprep.subr.mxu0 0.0
      %7499 = vmatpush2.msra.mxu0 0.0
      %7500 = vmatprep.subr.mxu0 0.0
      %7501 = vmatpush2.msra.mxu0 0.0
      %7502 = vmatprep.subr.mxu0 0.0
      %7503 = vmatpush2.msra.mxu0 0.0
      %7504 = vmatprep.subr.mxu0 0.0
      %7505 = vmatpush2.msra.mxu0 0.0
      %7506 = vmatprep.subr.mxu0 0.0
      %7507 = vmatpush2.msra.mxu0 0.0
      %7508 = vmatprep.subr.mxu0 0.0
      %7509 = vmatpush2.msra.mxu0 0.0
      %7510 = vmatprep.mubr.f32.mxu0 0.0
      %7511 = vmatmul.mubr.f32.gmra.mxu0 %v7423
      %v7512 = vpop.f32.mrf.mxu0
      %v7513 = vadd.f32 0.0, %v7512
      %v7514 = vpop.f32.mrf.mxu0
      %7515 = vmatprep.mubr.f32.mxu0 0.0
      %7516 = vmatmul.mubr.f32.gmra.mxu0 %v7426
      %v7517 = vpop.f32.mrf.mxu0
      %v7518 = vadd.f32 0.0, %v7517
      %v7519 = vpop.f32.mrf.mxu0
      %7520 = vmatprep.mubr.f32.mxu0 0.0
      %7521 = vmatmul.mubr.f32.gmra.mxu0 %v7429
      %v7522 = vpop.f32.mrf.mxu0
      %v7523 = vadd.f32 0.0, %v7522
      %v7524 = vpop.f32.mrf.mxu0
      %7525 = vmatprep.mubr.f32.mxu0 0.0
      %7526 = vmatmul.mubr.f32.gmra.mxu0 %v7432
      %v7527 = vpop.f32.mrf.mxu0
      %v7528 = vadd.f32 0.0, %v7527
      %v7529 = vpop.f32.mrf.mxu0
      %7530 = vmatprep.mubr.f32.mxu0 0.0
      %7531 = vmatmul.mubr.f32.gmra.mxu0 %v7435
      %v7532 = vpop.f32.mrf.mxu0
      %v7533 = vadd.f32 0.0, %v7532
      %v7534 = vpop.f32.mrf.mxu0
      %7535 = vmatprep.mubr.f32.mxu0 0.0
      %7536 = vmatmul.mubr.f32.gmra.mxu0 %v7438
      %v7537 = vpop.f32.mrf.mxu0
      %v7538 = vadd.f32 0.0, %v7537
      %v7539 = vpop.f32.mrf.mxu0
      %7540 = vmatprep.mubr.f32.mxu0 0.0
      %7541 = vmatmul.mubr.f32.gmra.mxu0 %v7441
      %v7542 = vpop.f32.mrf.mxu0
      %v7543 = vadd.f32 0.0, %v7542
      %v7544 = vpop.f32.mrf.mxu0
      %7545 = vmatprep.mubr.f32.mxu0 0.0
      %7546 = vmatmul.mubr.f32.gmra.mxu0 %v7444
      %v7547 = vpop.f32.mrf.mxu0
      %v7548 = vadd.f32 0.0, %v7547
      %v7549 = vpop.f32.mrf.mxu0
      %7550 = vdwg.mxu0
      %7551 = vrot.lane.b32.xlu0 %v6160, 40
      %v7552 = vpop.permute.xlu0 %7551
      %7553 = vrot.lane.b32.xlu0 %v6161, 40
      %v7554 = vpop.permute.xlu0 %7553
      %7555 = vrot.lane.b32.xlu0 %v6162, 40
      %v7556 = vpop.permute.xlu0 %7555
      %7557 = vrot.lane.b32.xlu0 %v6163, 40
      %v7558 = vpop.permute.xlu0 %7557
      %7559 = vrot.lane.b32.xlu0 %v6164, 40
      %v7560 = vpop.permute.xlu0 %7559
      %7561 = vrot.lane.b32.xlu0 %v6165, 40
      %v7562 = vpop.permute.xlu0 %7561
      %7563 = vrot.lane.b32.xlu0 %v6166, 40
      %v7564 = vpop.permute.xlu0 %7563
      %7565 = vrot.lane.b32.xlu0 %v6167, 40
      %v7566 = vpop.permute.xlu0 %7565
      %v7576 = vsel %vm1399, %v7229, 0
      %v7579 = vsel %vm1399, %v7230, 0
      %v7582 = vsel %vm1399, %v7231, 0
      %v7585 = vsel %vm1399, %v7232, 0
      %v7588 = vsel %vm1399, %v7233, 0
      %v7591 = vsel %vm1399, %v7234, 0
      %v7594 = vsel %vm1399, %v7235, 0
      %v7597 = vsel %vm1399, %v7236, 0
      %7599 = vmatprep.subr.mxu0 0.0
      %7600 = vmatpush1.msra.mxu0 0.0
      %7601 = vmatprep.subr.mxu0 0.0
      %7602 = vmatpush1.msra.mxu0 0.0
      %7603 = vmatprep.subr.mxu0 0.0
      %7604 = vmatpush1.msra.mxu0 0.0
      %7605 = vmatprep.subr.mxu0 0.0
      %7606 = vmatpush1.msra.mxu0 0.0
      %7607 = vmatprep.subr.mxu0 0.0
      %7608 = vmatpush1.msra.mxu0 0.0
      %7609 = vmatprep.subr.mxu0 0.0
      %7610 = vmatpush1.msra.mxu0 0.0
      %7611 = vmatprep.subr.mxu0 0.0
      %7612 = vmatpush1.msra.mxu0 0.0
      %7613 = vmatprep.subr.mxu0 0.0
      %7614 = vmatpush1.msra.mxu0 0.0
      %7615 = vmatprep.subr.mxu0 0.0
      %7616 = vmatpush1.msra.mxu0 %v7566
      %7617 = vmatprep.subr.mxu0 0.0
      %7618 = vmatpush1.msra.mxu0 %v7564
      %7619 = vmatprep.subr.mxu0 0.0
      %7620 = vmatpush1.msra.mxu0 %v7562
      %7621 = vmatprep.subr.mxu0 0.0
      %7622 = vmatpush1.msra.mxu0 %v7560
      %7623 = vmatprep.subr.mxu0 0.0
      %7624 = vmatpush1.msra.mxu0 %v7558
      %7625 = vmatprep.subr.mxu0 0.0
      %7626 = vmatpush1.msra.mxu0 %v7556
      %7627 = vmatprep.subr.mxu0 0.0
      %7628 = vmatpush1.msra.mxu0 %v7554
      %7629 = vmatprep.subr.mxu0 0.0
      %7630 = vmatpush1.msra.mxu0 %v7552
      %7631 = vmatprep.subr.mxu0 0.0
      %7632 = vmatpush2.msra.mxu0 0.0
      %7633 = vmatprep.subr.mxu0 0.0
      %7634 = vmatpush2.msra.mxu0 0.0
      %7635 = vmatprep.subr.mxu0 0.0
      %7636 = vmatpush2.msra.mxu0 0.0
      %7637 = vmatprep.subr.mxu0 0.0
      %7638 = vmatpush2.msra.mxu0 0.0
      %7639 = vmatprep.subr.mxu0 0.0
      %7640 = vmatpush2.msra.mxu0 0.0
      %7641 = vmatprep.subr.mxu0 0.0
      %7642 = vmatpush2.msra.mxu0 0.0
      %7643 = vmatprep.subr.mxu0 0.0
      %7644 = vmatpush2.msra.mxu0 0.0
      %7645 = vmatprep.subr.mxu0 0.0
      %7646 = vmatpush2.msra.mxu0 0.0
      %7647 = vmatprep.subr.mxu0 0.0
      %7648 = vmatpush2.msra.mxu0 0.0
      %7649 = vmatprep.subr.mxu0 0.0
      %7650 = vmatpush2.msra.mxu0 0.0
      %7651 = vmatprep.subr.mxu0 0.0
      %7652 = vmatpush2.msra.mxu0 0.0
      %7653 = vmatprep.subr.mxu0 0.0
      %7654 = vmatpush2.msra.mxu0 0.0
      %7655 = vmatprep.subr.mxu0 0.0
      %7656 = vmatpush2.msra.mxu0 0.0
      %7657 = vmatprep.subr.mxu0 0.0
      %7658 = vmatpush2.msra.mxu0 0.0
      %7659 = vmatprep.subr.mxu0 0.0
      %7660 = vmatpush2.msra.mxu0 0.0
      %7661 = vmatprep.subr.mxu0 0.0
      %7662 = vmatpush2.msra.mxu0 0.0
      %7663 = vmatprep.mubr.f32.mxu0 0.0
      %7664 = vmatmul.mubr.f32.gmra.mxu0 %v7576
      %v7665 = vpop.f32.mrf.mxu0
      %v7666 = vadd.f32 0.0, %v7665
      %v7667 = vpop.f32.mrf.mxu0
      %7668 = vmatprep.mubr.f32.mxu0 0.0
      %7669 = vmatmul.mubr.f32.gmra.mxu0 %v7579
      %v7670 = vpop.f32.mrf.mxu0
      %v7671 = vadd.f32 0.0, %v7670
      %v7672 = vpop.f32.mrf.mxu0
      %7673 = vmatprep.mubr.f32.mxu0 0.0
      %7674 = vmatmul.mubr.f32.gmra.mxu0 %v7582
      %v7675 = vpop.f32.mrf.mxu0
      %v7676 = vadd.f32 0.0, %v7675
      %v7677 = vpop.f32.mrf.mxu0
      %7678 = vmatprep.mubr.f32.mxu0 0.0
      %7679 = vmatmul.mubr.f32.gmra.mxu0 %v7585
      %v7680 = vpop.f32.mrf.mxu0
      %v7681 = vadd.f32 0.0, %v7680
      %v7682 = vpop.f32.mrf.mxu0
      %7683 = vmatprep.mubr.f32.mxu0 0.0
      %7684 = vmatmul.mubr.f32.gmra.mxu0 %v7588
      %v7685 = vpop.f32.mrf.mxu0
      %v7686 = vadd.f32 0.0, %v7685
      %v7687 = vpop.f32.mrf.mxu0
      %7688 = vmatprep.mubr.f32.mxu0 0.0
      %7689 = vmatmul.mubr.f32.gmra.mxu0 %v7591
      %v7690 = vpop.f32.mrf.mxu0
      %v7691 = vadd.f32 0.0, %v7690
      %v7692 = vpop.f32.mrf.mxu0
      %7693 = vmatprep.mubr.f32.mxu0 0.0
      %7694 = vmatmul.mubr.f32.gmra.mxu0 %v7594
      %v7695 = vpop.f32.mrf.mxu0
      %v7696 = vadd.f32 0.0, %v7695
      %v7697 = vpop.f32.mrf.mxu0
      %7698 = vmatprep.mubr.f32.mxu0 0.0
      %7699 = vmatmul.mubr.f32.gmra.mxu0 %v7597
      %v7700 = vpop.f32.mrf.mxu0
      %v7701 = vadd.f32 0.0, %v7700
      %v7702 = vpop.f32.mrf.mxu0
      %7703 = vdwg.mxu0
      %7704 = vrot.lane.b32.xlu0 %v6168, 40
      %v7705 = vpop.permute.xlu0 %7704
      %7706 = vrot.lane.b32.xlu0 %v6169, 40
      %v7707 = vpop.permute.xlu0 %7706
      %7708 = vrot.lane.b32.xlu0 %v6170, 40
      %v7709 = vpop.permute.xlu0 %7708
      %7710 = vrot.lane.b32.xlu0 %v6171, 40
      %v7711 = vpop.permute.xlu0 %7710
      %7712 = vrot.lane.b32.xlu0 %v6172, 40
      %v7713 = vpop.permute.xlu0 %7712
      %7714 = vrot.lane.b32.xlu0 %v6173, 40
      %v7715 = vpop.permute.xlu0 %7714
      %7716 = vrot.lane.b32.xlu0 %v6174, 40
      %v7717 = vpop.permute.xlu0 %7716
      %7718 = vrot.lane.b32.xlu0 %v6175, 40
      %v7719 = vpop.permute.xlu0 %7718
      %v7729 = vsel %vm1399, %v7237, 0
      %v7732 = vsel %vm1399, %v7238, 0
      %v7735 = vsel %vm1399, %v7239, 0
      %v7738 = vsel %vm1399, %v7240, 0
      %v7741 = vsel %vm1399, %v7241, 0
      %v7744 = vsel %vm1399, %v7242, 0
      %v7747 = vsel %vm1399, %v7243, 0
      %v7750 = vsel %vm1399, %v7244, 0
      %7752 = vmatprep.subr.mxu0 0.0
      %7753 = vmatpush1.msra.mxu0 0.0
      %7754 = vmatprep.subr.mxu0 0.0
      %7755 = vmatpush1.msra.mxu0 0.0
      %7756 = vmatprep.subr.mxu0 0.0
      %7757 = vmatpush1.msra.mxu0 0.0
      %7758 = vmatprep.subr.mxu0 0.0
      %7759 = vmatpush1.msra.mxu0 0.0
      %7760 = vmatprep.subr.mxu0 0.0
      %7761 = vmatpush1.msra.mxu0 0.0
      %7762 = vmatprep.subr.mxu0 0.0
      %7763 = vmatpush1.msra.mxu0 0.0
      %7764 = vmatprep.subr.mxu0 0.0
      %7765 = vmatpush1.msra.mxu0 0.0
      %7766 = vmatprep.subr.mxu0 0.0
      %7767 = vmatpush1.msra.mxu0 0.0
      %7768 = vmatprep.subr.mxu0 0.0
      %7769 = vmatpush1.msra.mxu0 %v7719
      %7770 = vmatprep.subr.mxu0 0.0
      %7771 = vmatpush1.msra.mxu0 %v7717
      %7772 = vmatprep.subr.mxu0 0.0
      %7773 = vmatpush1.msra.mxu0 %v7715
      %7774 = vmatprep.subr.mxu0 0.0
      %7775 = vmatpush1.msra.mxu0 %v7713
      %7776 = vmatprep.subr.mxu0 0.0
      %7777 = vmatpush1.msra.mxu0 %v7711
      %7778 = vmatprep.subr.mxu0 0.0
      %7779 = vmatpush1.msra.mxu0 %v7709
      %7780 = vmatprep.subr.mxu0 0.0
      %7781 = vmatpush1.msra.mxu0 %v7707
      %7782 = vmatprep.subr.mxu0 0.0
      %7783 = vmatpush1.msra.mxu0 %v7705
      %7784 = vmatprep.subr.mxu0 0.0
      %7785 = vmatpush2.msra.mxu0 0.0
      %7786 = vmatprep.subr.mxu0 0.0
      %7787 = vmatpush2.msra.mxu0 0.0
      %7788 = vmatprep.subr.mxu0 0.0
      %7789 = vmatpush2.msra.mxu0 0.0
      %7790 = vmatprep.subr.mxu0 0.0
      %7791 = vmatpush2.msra.mxu0 0.0
      %7792 = vmatprep.subr.mxu0 0.0
      %7793 = vmatpush2.msra.mxu0 0.0
      %7794 = vmatprep.subr.mxu0 0.0
      %7795 = vmatpush2.msra.mxu0 0.0
      %7796 = vmatprep.subr.mxu0 0.0
      %7797 = vmatpush2.msra.mxu0 0.0
      %7798 = vmatprep.subr.mxu0 0.0
      %7799 = vmatpush2.msra.mxu0 0.0
      %7800 = vmatprep.subr.mxu0 0.0
      %7801 = vmatpush2.msra.mxu0 0.0
      %7802 = vmatprep.subr.mxu0 0.0
      %7803 = vmatpush2.msra.mxu0 0.0
      %7804 = vmatprep.subr.mxu0 0.0
      %7805 = vmatpush2.msra.mxu0 0.0
      %7806 = vmatprep.subr.mxu0 0.0
      %7807 = vmatpush2.msra.mxu0 0.0
      %7808 = vmatprep.subr.mxu0 0.0
      %7809 = vmatpush2.msra.mxu0 0.0
      %7810 = vmatprep.subr.mxu0 0.0
      %7811 = vmatpush2.msra.mxu0 0.0
      %7812 = vmatprep.subr.mxu0 0.0
      %7813 = vmatpush2.msra.mxu0 0.0
      %7814 = vmatprep.subr.mxu0 0.0
      %7815 = vmatpush2.msra.mxu0 0.0
      %7816 = vmatprep.mubr.f32.mxu0 0.0
      %7817 = vmatmul.mubr.f32.gmra.mxu0 %v7729
      %v7818 = vpop.f32.mrf.mxu0
      %v7819 = vadd.f32 0.0, %v7818
      %v7820 = vpop.f32.mrf.mxu0
      %7821 = vmatprep.mubr.f32.mxu0 0.0
      %7822 = vmatmul.mubr.f32.gmra.mxu0 %v7732
      %v7823 = vpop.f32.mrf.mxu0
      %v7824 = vadd.f32 0.0, %v7823
      %v7825 = vpop.f32.mrf.mxu0
      %7826 = vmatprep.mubr.f32.mxu0 0.0
      %7827 = vmatmul.mubr.f32.gmra.mxu0 %v7735
      %v7828 = vpop.f32.mrf.mxu0
      %v7829 = vadd.f32 0.0, %v7828
      %v7830 = vpop.f32.mrf.mxu0
      %7831 = vmatprep.mubr.f32.mxu0 0.0
      %7832 = vmatmul.mubr.f32.gmra.mxu0 %v7738
      %v7833 = vpop.f32.mrf.mxu0
      %v7834 = vadd.f32 0.0, %v7833
      %v7835 = vpop.f32.mrf.mxu0
      %7836 = vmatprep.mubr.f32.mxu0 0.0
      %7837 = vmatmul.mubr.f32.gmra.mxu0 %v7741
      %v7838 = vpop.f32.mrf.mxu0
      %v7839 = vadd.f32 0.0, %v7838
      %v7840 = vpop.f32.mrf.mxu0
      %7841 = vmatprep.mubr.f32.mxu0 0.0
      %7842 = vmatmul.mubr.f32.gmra.mxu0 %v7744
      %v7843 = vpop.f32.mrf.mxu0
      %v7844 = vadd.f32 0.0, %v7843
      %v7845 = vpop.f32.mrf.mxu0
      %7846 = vmatprep.mubr.f32.mxu0 0.0
      %7847 = vmatmul.mubr.f32.gmra.mxu0 %v7747
      %v7848 = vpop.f32.mrf.mxu0
      %v7849 = vadd.f32 0.0, %v7848
      %v7850 = vpop.f32.mrf.mxu0
      %7851 = vmatprep.mubr.f32.mxu0 0.0
      %7852 = vmatmul.mubr.f32.gmra.mxu0 %v7750
      %v7853 = vpop.f32.mrf.mxu0
      %v7854 = vadd.f32 0.0, %v7853
      %v7855 = vpop.f32.mrf.mxu0
      %7856 = vdwg.mxu0
      %7889 = vrot.lane.b32.xlu0 %v7360, 24
      %v7890 = vpop.permute.xlu0 %7889
      %7891 = vrot.lane.b32.xlu0 %v7365, 24
      %v7892 = vpop.permute.xlu0 %7891
      %7893 = vrot.lane.b32.xlu0 %v7370, 24
      %v7894 = vpop.permute.xlu0 %7893
      %7895 = vrot.lane.b32.xlu0 %v7375, 24
      %v7896 = vpop.permute.xlu0 %7895
      %7897 = vrot.lane.b32.xlu0 %v7380, 24
      %v7898 = vpop.permute.xlu0 %7897
      %7899 = vrot.lane.b32.xlu0 %v7385, 24
      %v7900 = vpop.permute.xlu0 %7899
      %7901 = vrot.lane.b32.xlu0 %v7390, 24
      %v7902 = vpop.permute.xlu0 %7901
      %7903 = vrot.lane.b32.xlu0 %v7395, 24
      %v7904 = vpop.permute.xlu0 %7903
      %7905 = vrot.lane.b32.xlu0 %v7513, 24
      %v7906 = vpop.permute.xlu0 %7905
      %7907 = vrot.lane.b32.xlu0 %v7518, 24
      %v7908 = vpop.permute.xlu0 %7907
      %7909 = vrot.lane.b32.xlu0 %v7523, 24
      %v7910 = vpop.permute.xlu0 %7909
      %7911 = vrot.lane.b32.xlu0 %v7528, 24
      %v7912 = vpop.permute.xlu0 %7911
      %7913 = vrot.lane.b32.xlu0 %v7533, 24
      %v7914 = vpop.permute.xlu0 %7913
      %7915 = vrot.lane.b32.xlu0 %v7538, 24
      %v7916 = vpop.permute.xlu0 %7915
      %7917 = vrot.lane.b32.xlu0 %v7543, 24
      %v7918 = vpop.permute.xlu0 %7917
      %7919 = vrot.lane.b32.xlu0 %v7548, 24
      %v7920 = vpop.permute.xlu0 %7919
      %7921 = vrot.lane.b32.xlu0 %v7666, 24
      %v7922 = vpop.permute.xlu0 %7921
      %7923 = vrot.lane.b32.xlu0 %v7671, 24
      %v7924 = vpop.permute.xlu0 %7923
      %7925 = vrot.lane.b32.xlu0 %v7676, 24
      %v7926 = vpop.permute.xlu0 %7925
      %7927 = vrot.lane.b32.xlu0 %v7681, 24
      %v7928 = vpop.permute.xlu0 %7927
      %7929 = vrot.lane.b32.xlu0 %v7686, 24
      %v7930 = vpop.permute.xlu0 %7929
      %7931 = vrot.lane.b32.xlu0 %v7691, 24
      %v7932 = vpop.permute.xlu0 %7931
      %7933 = vrot.lane.b32.xlu0 %v7696, 24
      %v7934 = vpop.permute.xlu0 %7933
      %7935 = vrot.lane.b32.xlu0 %v7701, 24
      %v7936 = vpop.permute.xlu0 %7935
      %7937 = vrot.lane.b32.xlu0 %v7819, 24
      %v7938 = vpop.permute.xlu0 %7937
      %7939 = vrot.lane.b32.xlu0 %v7824, 24
      %v7940 = vpop.permute.xlu0 %7939
      %7941 = vrot.lane.b32.xlu0 %v7829, 24
      %v7942 = vpop.permute.xlu0 %7941
      %7943 = vrot.lane.b32.xlu0 %v7834, 24
      %v7944 = vpop.permute.xlu0 %7943
      %7945 = vrot.lane.b32.xlu0 %v7839, 24
      %v7946 = vpop.permute.xlu0 %7945
      %7947 = vrot.lane.b32.xlu0 %v7844, 24
      %v7948 = vpop.permute.xlu0 %7947
      %7949 = vrot.lane.b32.xlu0 %v7849, 24
      %v7950 = vpop.permute.xlu0 %7949
      %7951 = vrot.lane.b32.xlu0 %v7854, 24
      %v7952 = vpop.permute.xlu0 %7951
      %vm7985 = vcmask 261312
      %7986 = vst.msk [vmem:[#allocation3] sm:$0xff] %vm7985, %v7890
      %7987 = vst.msk [vmem:[#allocation3 + $0x8] sm:$0xff] %vm7985, %v7892
      %7988 = vst.msk [vmem:[#allocation3 + $0x10] sm:$0xff] %vm7985, %v7894
      %7989 = vst.msk [vmem:[#allocation3 + $0x18] sm:$0xff] %vm7985, %v7896
      %7990 = vst.msk [vmem:[#allocation3 + $0x20] sm:$0xff] %vm7985, %v7898
      %7991 = vst.msk [vmem:[#allocation3 + $0x28] sm:$0xff] %vm7985, %v7900
      %7992 = vst.msk [vmem:[#allocation3 + $0x30] sm:$0xff] %vm7985, %v7902
      %7993 = vst.msk [vmem:[#allocation3 + $0x38] sm:$0xff] %vm7985, %v7904
      %7994 = vst.msk [vmem:[#allocation3 + $0x40] sm:$0xff] %vm7985, %v7906
      %7995 = vst.msk [vmem:[#allocation3 + $0x48] sm:$0xff] %vm7985, %v7908
      %7996 = vst.msk [vmem:[#allocation3 + $0x50] sm:$0xff] %vm7985, %v7910
      %7997 = vst.msk [vmem:[#allocation3 + $0x58] sm:$0xff] %vm7985, %v7912
      %7998 = vst.msk [vmem:[#allocation3 + $0x60] sm:$0xff] %vm7985, %v7914
      %7999 = vst.msk [vmem:[#allocation3 + $0x68] sm:$0xff] %vm7985, %v7916
      %8000 = vst.msk [vmem:[#allocation3 + $0x70] sm:$0xff] %vm7985, %v7918
      %8001 = vst.msk [vmem:[#allocation3 + $0x78] sm:$0xff] %vm7985, %v7920
      %8002 = vst.msk [vmem:[#allocation3 + $0x80] sm:$0xff] %vm7985, %v7922
      %8003 = vst.msk [vmem:[#allocation3 + $0x88] sm:$0xff] %vm7985, %v7924
      %8004 = vst.msk [vmem:[#allocation3 + $0x90] sm:$0xff] %vm7985, %v7926
      %8005 = vst.msk [vmem:[#allocation3 + $0x98] sm:$0xff] %vm7985, %v7928
      %8006 = vst.msk [vmem:[#allocation3 + $0xa0] sm:$0xff] %vm7985, %v7930
      %8007 = vst.msk [vmem:[#allocation3 + $0xa8] sm:$0xff] %vm7985, %v7932
      %8008 = vst.msk [vmem:[#allocation3 + $0xb0] sm:$0xff] %vm7985, %v7934
      %8009 = vst.msk [vmem:[#allocation3 + $0xb8] sm:$0xff] %vm7985, %v7936
      %8010 = vst.msk [vmem:[#allocation3 + $0xc0] sm:$0xff] %vm7985, %v7938
      %8011 = vst.msk [vmem:[#allocation3 + $0xc8] sm:$0xff] %vm7985, %v7940
      %8012 = vst.msk [vmem:[#allocation3 + $0xd0] sm:$0xff] %vm7985, %v7942
      %8013 = vst.msk [vmem:[#allocation3 + $0xd8] sm:$0xff] %vm7985, %v7944
      %8014 = vst.msk [vmem:[#allocation3 + $0xe0] sm:$0xff] %vm7985, %v7946
      %8015 = vst.msk [vmem:[#allocation3 + $0xe8] sm:$0xff] %vm7985, %v7948
      %8016 = vst.msk [vmem:[#allocation3 + $0xf0] sm:$0xff] %vm7985, %v7950
      %8017 = vst.msk [vmem:[#allocation3 + $0xf8] sm:$0xff] %vm7985, %v7952
      %v8018 = vld [vmem:[#allocation3] sm:$0xff]
      %v8019 = vld [vmem:[#allocation3 + $0x8] sm:$0xff]
      %v8020 = vld [vmem:[#allocation3 + $0x10] sm:$0xff]
      %v8021 = vld [vmem:[#allocation3 + $0x18] sm:$0xff]
      %v8022 = vld [vmem:[#allocation3 + $0x20] sm:$0xff]
      %v8023 = vld [vmem:[#allocation3 + $0x28] sm:$0xff]
      %v8024 = vld [vmem:[#allocation3 + $0x30] sm:$0xff]
      %v8025 = vld [vmem:[#allocation3 + $0x38] sm:$0xff]
      %v8026 = vld [vmem:[#allocation3 + $0x40] sm:$0xff]
      %v8027 = vld [vmem:[#allocation3 + $0x48] sm:$0xff]
      %v8028 = vld [vmem:[#allocation3 + $0x50] sm:$0xff]
      %v8029 = vld [vmem:[#allocation3 + $0x58] sm:$0xff]
      %v8030 = vld [vmem:[#allocation3 + $0x60] sm:$0xff]
      %v8031 = vld [vmem:[#allocation3 + $0x68] sm:$0xff]
      %v8032 = vld [vmem:[#allocation3 + $0x70] sm:$0xff]
      %v8033 = vld [vmem:[#allocation3 + $0x78] sm:$0xff]
      %v8034 = vld [vmem:[#allocation3 + $0x80] sm:$0xff]
      %v8035 = vld [vmem:[#allocation3 + $0x88] sm:$0xff]
      %v8036 = vld [vmem:[#allocation3 + $0x90] sm:$0xff]
      %v8037 = vld [vmem:[#allocation3 + $0x98] sm:$0xff]
      %v8038 = vld [vmem:[#allocation3 + $0xa0] sm:$0xff]
      %v8039 = vld [vmem:[#allocation3 + $0xa8] sm:$0xff]
      %v8040 = vld [vmem:[#allocation3 + $0xb0] sm:$0xff]
      %v8041 = vld [vmem:[#allocation3 + $0xb8] sm:$0xff]
      %v8042 = vld [vmem:[#allocation3 + $0xc0] sm:$0xff]
      %v8043 = vld [vmem:[#allocation3 + $0xc8] sm:$0xff]
      %v8044 = vld [vmem:[#allocation3 + $0xd0] sm:$0xff]
      %v8045 = vld [vmem:[#allocation3 + $0xd8] sm:$0xff]
      %v8046 = vld [vmem:[#allocation3 + $0xe0] sm:$0xff]
      %v8047 = vld [vmem:[#allocation3 + $0xe8] sm:$0xff]
      %v8048 = vld [vmem:[#allocation3 + $0xf0] sm:$0xff]
      %v8049 = vld [vmem:[#allocation3 + $0xf8] sm:$0xff]
      %v8050 = vld [vmem:[%s3] sm:$0xff]
      %v8051 = vld [vmem:[%s3 + $0x8] sm:$0xff]
      %v8052 = vld [vmem:[%s3 + $0x10] sm:$0xff]
      %v8053 = vld [vmem:[%s3 + $0x18] sm:$0xff]
      %v8054 = vld [vmem:[%s4] sm:$0x1]
      %v8056 = vlaneseq
      %v8057 = vshrl.u32 %v8056, 7
      %v8058 = vsub.s32 0, %v8057
      %v8059 = vrot.slane %v8054, %v8058
      %v8062 = vsel %vm359, %v8018, 0
      %v8065 = vsel %vm359, %v8019, 0
      %v8068 = vsel %vm359, %v8020, 0
      %v8071 = vsel %vm359, %v8021, 0
      %v8074 = vsel %vm359, %v8022, 0
      %v8077 = vsel %vm359, %v8023, 0
      %v8080 = vsel %vm359, %v8024, 0
      %v8083 = vsel %vm359, %v8025, 0
      %v8086 = vsel %vm359, %v8026, 0
      %v8089 = vsel %vm359, %v8027, 0
      %v8092 = vsel %vm359, %v8028, 0
      %v8095 = vsel %vm359, %v8029, 0
      %v8098 = vsel %vm359, %v8030, 0
      %v8101 = vsel %vm359, %v8031, 0
      %v8104 = vsel %vm359, %v8032, 0
      %v8107 = vsel %vm359, %v8033, 0
      %v8110 = vsel %vm359, %v8034, 0
      %v8113 = vsel %vm359, %v8035, 0
      %v8116 = vsel %vm359, %v8036, 0
      %v8119 = vsel %vm359, %v8037, 0
      %v8122 = vsel %vm359, %v8038, 0
      %v8125 = vsel %vm359, %v8039, 0
      %v8128 = vsel %vm359, %v8040, 0
      %v8131 = vsel %vm359, %v8041, 0
      %v8134 = vsel %vm359, %v8042, 0
      %v8137 = vsel %vm359, %v8043, 0
      %v8140 = vsel %vm359, %v8044, 0
      %v8143 = vsel %vm359, %v8045, 0
      %v8146 = vsel %vm359, %v8046, 0
      %v8149 = vsel %vm359, %v8047, 0
      %v8152 = vsel %vm359, %v8048, 0
      %v8155 = vsel %vm359, %v8049, 0
      %8157 = vmatprep.subr.mxu0 0.0
      %8158 = vmatpush1.msra.mxu0 0.0
      %8159 = vmatprep.subr.mxu0 0.0
      %8160 = vmatpush1.msra.mxu0 0.0
      %8161 = vmatprep.subr.mxu0 0.0
      %8162 = vmatpush1.msra.mxu0 0.0
      %8163 = vmatprep.subr.mxu0 0.0
      %8164 = vmatpush1.msra.mxu0 0.0
      %8165 = vmatprep.subr.mxu0 0.0
      %8166 = vmatpush1.msra.mxu0 0.0
      %8167 = vmatprep.subr.mxu0 0.0
      %8168 = vmatpush1.msra.mxu0 0.0
      %8169 = vmatprep.subr.mxu0 0.0
      %8170 = vmatpush1.msra.mxu0 0.0
      %8171 = vmatprep.subr.mxu0 0.0
      %8172 = vmatpush1.msra.mxu0 0.0
      %8173 = vmatprep.subr.mxu0 0.0
      %8174 = vmatpush1.msra.mxu0 0.0
      %8175 = vmatprep.subr.mxu0 0.0
      %8176 = vmatpush1.msra.mxu0 0.0
      %8177 = vmatprep.subr.mxu0 0.0
      %8178 = vmatpush1.msra.mxu0 0.0
      %8179 = vmatprep.subr.mxu0 0.0
      %8180 = vmatpush1.msra.mxu0 0.0
      %8181 = vmatprep.subr.mxu0 0.0
      %8182 = vmatpush1.msra.mxu0 %v8053
      %8183 = vmatprep.subr.mxu0 0.0
      %8184 = vmatpush1.msra.mxu0 %v8052
      %8185 = vmatprep.subr.mxu0 0.0
      %8186 = vmatpush1.msra.mxu0 %v8051
      %8187 = vmatprep.subr.mxu0 0.0
      %8188 = vmatpush1.msra.mxu0 %v8050
      %8189 = vmatprep.subr.mxu0 0.0
      %8190 = vmatpush2.msra.mxu0 0.0
      %8191 = vmatprep.subr.mxu0 0.0
      %8192 = vmatpush2.msra.mxu0 0.0
      %8193 = vmatprep.subr.mxu0 0.0
      %8194 = vmatpush2.msra.mxu0 0.0
      %8195 = vmatprep.subr.mxu0 0.0
      %8196 = vmatpush2.msra.mxu0 0.0
      %8197 = vmatprep.subr.mxu0 0.0
      %8198 = vmatpush2.msra.mxu0 0.0
      %8199 = vmatprep.subr.mxu0 0.0
      %8200 = vmatpush2.msra.mxu0 0.0
      %8201 = vmatprep.subr.mxu0 0.0
      %8202 = vmatpush2.msra.mxu0 0.0
      %8203 = vmatprep.subr.mxu0 0.0
      %8204 = vmatpush2.msra.mxu0 0.0
      %8205 = vmatprep.subr.mxu0 0.0
      %8206 = vmatpush2.msra.mxu0 0.0
      %8207 = vmatprep.subr.mxu0 0.0
      %8208 = vmatpush2.msra.mxu0 0.0
      %8209 = vmatprep.subr.mxu0 0.0
      %8210 = vmatpush2.msra.mxu0 0.0
      %8211 = vmatprep.subr.mxu0 0.0
      %8212 = vmatpush2.msra.mxu0 0.0
      %8213 = vmatprep.subr.mxu0 0.0
      %8214 = vmatpush2.msra.mxu0 0.0
      %8215 = vmatprep.subr.mxu0 0.0
      %8216 = vmatpush2.msra.mxu0 0.0
      %8217 = vmatprep.subr.mxu0 0.0
      %8218 = vmatpush2.msra.mxu0 0.0
      %8219 = vmatprep.subr.mxu0 0.0
      %8220 = vmatpush2.msra.mxu0 0.0
      %8221 = vmatprep.mubr.f32.mxu0 0.0
      %8222 = vmatmul.mubr.f32.gmra.mxu0 %v8062
      %v8223 = vpop.f32.mrf.mxu0
      %v8224 = vadd.f32 %v8059, %v8223
      %v8225 = vpop.f32.mrf.mxu0
      %8226 = vmatprep.mubr.f32.mxu0 0.0
      %8227 = vmatmul.mubr.f32.gmra.mxu0 %v8065
      %v8228 = vpop.f32.mrf.mxu0
      %v8229 = vadd.f32 %v8059, %v8228
      %v8230 = vpop.f32.mrf.mxu0
      %8231 = vmatprep.mubr.f32.mxu0 0.0
      %8232 = vmatmul.mubr.f32.gmra.mxu0 %v8068
      %v8233 = vpop.f32.mrf.mxu0
      %v8234 = vadd.f32 %v8059, %v8233
      %v8235 = vpop.f32.mrf.mxu0
      %8236 = vmatprep.mubr.f32.mxu0 0.0
      %8237 = vmatmul.mubr.f32.gmra.mxu0 %v8071
      %v8238 = vpop.f32.mrf.mxu0
      %v8239 = vadd.f32 %v8059, %v8238
      %v8240 = vpop.f32.mrf.mxu0
      %8241 = vmatprep.mubr.f32.mxu0 0.0
      %8242 = vmatmul.mubr.f32.gmra.mxu0 %v8074
      %v8243 = vpop.f32.mrf.mxu0
      %v8244 = vadd.f32 %v8059, %v8243
      %v8245 = vpop.f32.mrf.mxu0
      %8246 = vmatprep.mubr.f32.mxu0 0.0
      %8247 = vmatmul.mubr.f32.gmra.mxu0 %v8077
      %v8248 = vpop.f32.mrf.mxu0
      %v8249 = vadd.f32 %v8059, %v8248
      %v8250 = vpop.f32.mrf.mxu0
      %8251 = vmatprep.mubr.f32.mxu0 0.0
      %8252 = vmatmul.mubr.f32.gmra.mxu0 %v8080
      %v8253 = vpop.f32.mrf.mxu0
      %v8254 = vadd.f32 %v8059, %v8253
      %v8255 = vpop.f32.mrf.mxu0
      %8256 = vmatprep.mubr.f32.mxu0 0.0
      %8257 = vmatmul.mubr.f32.gmra.mxu0 %v8083
      %v8258 = vpop.f32.mrf.mxu0
      %v8259 = vadd.f32 %v8059, %v8258
      %v8260 = vpop.f32.mrf.mxu0
      %8261 = vmatprep.mubr.f32.mxu0 0.0
      %8262 = vmatmul.mubr.f32.gmra.mxu0 %v8086
      %v8263 = vpop.f32.mrf.mxu0
      %v8264 = vadd.f32 %v8059, %v8263
      %v8265 = vpop.f32.mrf.mxu0
      %8266 = vmatprep.mubr.f32.mxu0 0.0
      %8267 = vmatmul.mubr.f32.gmra.mxu0 %v8089
      %v8268 = vpop.f32.mrf.mxu0
      %v8269 = vadd.f32 %v8059, %v8268
      %v8270 = vpop.f32.mrf.mxu0
      %8271 = vmatprep.mubr.f32.mxu0 0.0
      %8272 = vmatmul.mubr.f32.gmra.mxu0 %v8092
      %v8273 = vpop.f32.mrf.mxu0
      %v8274 = vadd.f32 %v8059, %v8273
      %v8275 = vpop.f32.mrf.mxu0
      %8276 = vmatprep.mubr.f32.mxu0 0.0
      %8277 = vmatmul.mubr.f32.gmra.mxu0 %v8095
      %v8278 = vpop.f32.mrf.mxu0
      %v8279 = vadd.f32 %v8059, %v8278
      %v8280 = vpop.f32.mrf.mxu0
      %8281 = vmatprep.mubr.f32.mxu0 0.0
      %8282 = vmatmul.mubr.f32.gmra.mxu0 %v8098
      %v8283 = vpop.f32.mrf.mxu0
      %v8284 = vadd.f32 %v8059, %v8283
      %v8285 = vpop.f32.mrf.mxu0
      %8286 = vmatprep.mubr.f32.mxu0 0.0
      %8287 = vmatmul.mubr.f32.gmra.mxu0 %v8101
      %v8288 = vpop.f32.mrf.mxu0
      %v8289 = vadd.f32 %v8059, %v8288
      %v8290 = vpop.f32.mrf.mxu0
      %8291 = vmatprep.mubr.f32.mxu0 0.0
      %8292 = vmatmul.mubr.f32.gmra.mxu0 %v8104
      %v8293 = vpop.f32.mrf.mxu0
      %v8294 = vadd.f32 %v8059, %v8293
      %v8295 = vpop.f32.mrf.mxu0
      %8296 = vmatprep.mubr.f32.mxu0 0.0
      %8297 = vmatmul.mubr.f32.gmra.mxu0 %v8107
      %v8298 = vpop.f32.mrf.mxu0
      %v8299 = vadd.f32 %v8059, %v8298
      %v8300 = vpop.f32.mrf.mxu0
      %8301 = vmatprep.mubr.f32.mxu0 0.0
      %8302 = vmatmul.mubr.f32.gmra.mxu0 %v8110
      %v8303 = vpop.f32.mrf.mxu0
      %v8304 = vadd.f32 %v8059, %v8303
      %v8305 = vpop.f32.mrf.mxu0
      %8306 = vmatprep.mubr.f32.mxu0 0.0
      %8307 = vmatmul.mubr.f32.gmra.mxu0 %v8113
      %v8308 = vpop.f32.mrf.mxu0
      %v8309 = vadd.f32 %v8059, %v8308
      %v8310 = vpop.f32.mrf.mxu0
      %8311 = vmatprep.mubr.f32.mxu0 0.0
      %8312 = vmatmul.mubr.f32.gmra.mxu0 %v8116
      %v8313 = vpop.f32.mrf.mxu0
      %v8314 = vadd.f32 %v8059, %v8313
      %v8315 = vpop.f32.mrf.mxu0
      %8316 = vmatprep.mubr.f32.mxu0 0.0
      %8317 = vmatmul.mubr.f32.gmra.mxu0 %v8119
      %v8318 = vpop.f32.mrf.mxu0
      %v8319 = vadd.f32 %v8059, %v8318
      %v8320 = vpop.f32.mrf.mxu0
      %8321 = vmatprep.mubr.f32.mxu0 0.0
      %8322 = vmatmul.mubr.f32.gmra.mxu0 %v8122
      %v8323 = vpop.f32.mrf.mxu0
      %v8324 = vadd.f32 %v8059, %v8323
      %v8325 = vpop.f32.mrf.mxu0
      %8326 = vmatprep.mubr.f32.mxu0 0.0
      %8327 = vmatmul.mubr.f32.gmra.mxu0 %v8125
      %v8328 = vpop.f32.mrf.mxu0
      %v8329 = vadd.f32 %v8059, %v8328
      %v8330 = vpop.f32.mrf.mxu0
      %8331 = vmatprep.mubr.f32.mxu0 0.0
      %8332 = vmatmul.mubr.f32.gmra.mxu0 %v8128
      %v8333 = vpop.f32.mrf.mxu0
      %v8334 = vadd.f32 %v8059, %v8333
      %v8335 = vpop.f32.mrf.mxu0
      %8336 = vmatprep.mubr.f32.mxu0 0.0
      %8337 = vmatmul.mubr.f32.gmra.mxu0 %v8131
      %v8338 = vpop.f32.mrf.mxu0
      %v8339 = vadd.f32 %v8059, %v8338
      %v8340 = vpop.f32.mrf.mxu0
      %8341 = vmatprep.mubr.f32.mxu0 0.0
      %8342 = vmatmul.mubr.f32.gmra.mxu0 %v8134
      %v8343 = vpop.f32.mrf.mxu0
      %v8344 = vadd.f32 %v8059, %v8343
      %v8345 = vpop.f32.mrf.mxu0
      %8346 = vmatprep.mubr.f32.mxu0 0.0
      %8347 = vmatmul.mubr.f32.gmra.mxu0 %v8137
      %v8348 = vpop.f32.mrf.mxu0
      %v8349 = vadd.f32 %v8059, %v8348
      %v8350 = vpop.f32.mrf.mxu0
      %8351 = vmatprep.mubr.f32.mxu0 0.0
      %8352 = vmatmul.mubr.f32.gmra.mxu0 %v8140
      %v8353 = vpop.f32.mrf.mxu0
      %v8354 = vadd.f32 %v8059, %v8353
      %v8355 = vpop.f32.mrf.mxu0
      %8356 = vmatprep.mubr.f32.mxu0 0.0
      %8357 = vmatmul.mubr.f32.gmra.mxu0 %v8143
      %v8358 = vpop.f32.mrf.mxu0
      %v8359 = vadd.f32 %v8059, %v8358
      %v8360 = vpop.f32.mrf.mxu0
      %8361 = vmatprep.mubr.f32.mxu0 0.0
      %8362 = vmatmul.mubr.f32.gmra.mxu0 %v8146
      %v8363 = vpop.f32.mrf.mxu0
      %v8364 = vadd.f32 %v8059, %v8363
      %v8365 = vpop.f32.mrf.mxu0
      %8366 = vmatprep.mubr.f32.mxu0 0.0
      %8367 = vmatmul.mubr.f32.gmra.mxu0 %v8149
      %v8368 = vpop.f32.mrf.mxu0
      %v8369 = vadd.f32 %v8059, %v8368
      %v8370 = vpop.f32.mrf.mxu0
      %8371 = vmatprep.mubr.f32.mxu0 0.0
      %8372 = vmatmul.mubr.f32.gmra.mxu0 %v8152
      %v8373 = vpop.f32.mrf.mxu0
      %v8374 = vadd.f32 %v8059, %v8373
      %v8375 = vpop.f32.mrf.mxu0
      %8376 = vmatprep.mubr.f32.mxu0 0.0
      %8377 = vmatmul.mubr.f32.gmra.mxu0 %v8155
      %v8378 = vpop.f32.mrf.mxu0
      %v8379 = vadd.f32 %v8059, %v8378
      %v8380 = vpop.f32.mrf.mxu0
      %8381 = vdwg.mxu0
      %8382 = vst.msk [vmem:[%s314] sm:$0xff] %vm359, %v8224
      %8383 = vst.msk [vmem:[%s314 + $0x8] sm:$0xff] %vm359, %v8229
      %8384 = vst.msk [vmem:[%s314 + $0x10] sm:$0xff] %vm359, %v8234
      %8385 = vst.msk [vmem:[%s314 + $0x18] sm:$0xff] %vm359, %v8239
      %8386 = vst.msk [vmem:[%s314 + $0x20] sm:$0xff] %vm359, %v8244
      %8387 = vst.msk [vmem:[%s314 + $0x28] sm:$0xff] %vm359, %v8249
      %8388 = vst.msk [vmem:[%s314 + $0x30] sm:$0xff] %vm359, %v8254
      %8389 = vst.msk [vmem:[%s314 + $0x38] sm:$0xff] %vm359, %v8259
      %8390 = vst.msk [vmem:[%s314 + $0x40] sm:$0xff] %vm359, %v8264
      %8391 = vst.msk [vmem:[%s314 + $0x48] sm:$0xff] %vm359, %v8269
      %8392 = vst.msk [vmem:[%s314 + $0x50] sm:$0xff] %vm359, %v8274
      %8393 = vst.msk [vmem:[%s314 + $0x58] sm:$0xff] %vm359, %v8279
      %8394 = vst.msk [vmem:[%s314 + $0x60] sm:$0xff] %vm359, %v8284
      %8395 = vst.msk [vmem:[%s314 + $0x68] sm:$0xff] %vm359, %v8289
      %8396 = vst.msk [vmem:[%s314 + $0x70] sm:$0xff] %vm359, %v8294
      %8397 = vst.msk [vmem:[%s314 + $0x78] sm:$0xff] %vm359, %v8299
      %8398 = vst.msk [vmem:[%s314 + $0x80] sm:$0xff] %vm359, %v8304
      %8399 = vst.msk [vmem:[%s314 + $0x88] sm:$0xff] %vm359, %v8309
      %8400 = vst.msk [vmem:[%s314 + $0x90] sm:$0xff] %vm359, %v8314
      %8401 = vst.msk [vmem:[%s314 + $0x98] sm:$0xff] %vm359, %v8319
      %8402 = vst.msk [vmem:[%s314 + $0xa0] sm:$0xff] %vm359, %v8324
      %8403 = vst.msk [vmem:[%s314 + $0xa8] sm:$0xff] %vm359, %v8329
      %8404 = vst.msk [vmem:[%s314 + $0xb0] sm:$0xff] %vm359, %v8334
      %8405 = vst.msk [vmem:[%s314 + $0xb8] sm:$0xff] %vm359, %v8339
      %8406 = vst.msk [vmem:[%s314 + $0xc0] sm:$0xff] %vm359, %v8344
      %8407 = vst.msk [vmem:[%s314 + $0xc8] sm:$0xff] %vm359, %v8349
      %8408 = vst.msk [vmem:[%s314 + $0xd0] sm:$0xff] %vm359, %v8354
      %8409 = vst.msk [vmem:[%s314 + $0xd8] sm:$0xff] %vm359, %v8359
      %8410 = vst.msk [vmem:[%s314 + $0xe0] sm:$0xff] %vm359, %v8364
      %8411 = vst.msk [vmem:[%s314 + $0xe8] sm:$0xff] %vm359, %v8369
      %8412 = vst.msk [vmem:[%s314 + $0xf0] sm:$0xff] %vm359, %v8374
      %8413 = vst.msk [vmem:[%s314 + $0xf8] sm:$0xff] %vm359, %v8379
      %s8414 = smul.u32 4, %s22
      %p8415 = scmp.lt.s32.totalorder %s8414, 7
      %s8416 = scalar_select %p8415, %s8414, 7
      %p8417 = scmp.lt.s32.totalorder %s21, 0
      %s8418 = scalar_select %p8417, %s21, 0
      %s8419 = smul.addr %s8418, 8
      %s8420 = smul.addr %s8416, 8
      %s8421 = sadd.s32 %s8419, %s8420
      %s8422 = smul.addr %s8421, 8
      %s8423 = scalar_lea.vmem %s6, %s8422
      // Predicated region
      $region45: #{tpu_custom_call.1} parent=43 // pred_check
        %p8424 = pneg %p187
      $region46: #{tpu_custom_call.1} parent=43 // pred_check_branch
        %8426 = sbr.rel (%p8424) target = $region48
      $region47: #{tpu_custom_call.1} parent=43 // pred_region
        %s8427 = smul.u32 4, %s22
      $region48: #{tpu_custom_call.1} parent=43 // pred_fallthru
        _
    $region44: #{tpu_custom_call.1} parent=5 // pred_fallthru
      _
    %p8428 = scmp.le.s32.totalorder 2, %s12
    // Predicated region
    $region49: #{tpu_custom_call.1} parent=5 // pred_check
      %p8429 = pneg %p8428
    $region50: #{tpu_custom_call.1} parent=5 // pred_check_branch
      %8431 = sbr.rel (%p8429) target = $region52
    $region51: #{tpu_custom_call.1} parent=5 // pred_region
      %s8432 = ssub.s32 %s12, 2
      // Predicated region
      $region53: #{tpu_custom_call.1} parent=51 // pred_check
        %p8433 = pneg %p193
      $region54: #{tpu_custom_call.1} parent=51 // pred_check_branch
        %8435 = sbr.rel (%p8433) target = $region56
      $region55: #{tpu_custom_call.1} parent=51 // pred_region
        %s8436 = smul.u32 4, %s24
        %p8437 = scmp.lt.s32.totalorder %s8436, 7
        %s8438 = scalar_select %p8437, %s8436, 7
        %p8439 = scmp.lt.s32.totalorder %s23, 0
        %s8440 = scalar_select %p8439, %s23, 0
        %s8441 = smul.addr %s8440, 8
        %s8442 = smul.addr %s8438, 8
        %s8443 = sadd.s32 %s8441, %s8442
        %s8444 = smul.addr %s8443, 8
        %s8445 = scalar_lea.vmem %s6, %s8444
      $region56: #{tpu_custom_call.1} parent=51 // pred_fallthru
        _
    $region52: #{tpu_custom_call.1} parent=5 // pred_fallthru
      _
  $region6: #{tpu_custom_call.1} parent=0 // loop_footer
    %s16 = sadd.s32 1, %s12
  $region7: #{tpu_custom_call.1} parent=0 // loop_footer_branch
    %11 = sbr.rel target = $region3
  $region8: #{tpu_custom_call.1} parent=0 // loop_exit
    _

</llo_original>
